<compile_context>
chip_gen: v7x
topology: tpu7x:2x2x1
jax: 0.10.0
libtpu: 0.0.40
codegen_flags: <defaults>
</compile_context>

<pallas_src>
import functools

import jax
import jax.numpy as jnp
import numpy as np
from jax.experimental import pallas as pl
from jax.experimental.pallas import tpu as pltpu


VMEM_LIMIT_BYTES = 32 * 1024 * 1024  # > v5e 16 MiB default, <= v7x 64 MiB physical


# ----------------------------------------------------------------------------- helpers
def _round_up(x, m):
    return (x + m - 1) // m * m


def _largest_divisor(n, candidates):
    for c in candidates:
        if c <= n and n % c == 0:
            return c
    return n


def _pick_batch_tile(n, bytes_per_item, target_bytes=4 << 20):
    nb = max(1, min(n, target_bytes // max(1, bytes_per_item)))
    while n % nb:
        nb -= 1
    # Keep >= 2 grid steps so the 'parallel' batch axis can shard over v7x's 2 TensorCores.
    if n >= 2 and n // nb < 2:
        nb = max(1, nb // 2)
        while n % nb:
            nb -= 1
    return nb


# ------------------------------------------------------------------ 1x1 conv + bias + ReLU
def _conv1x1_relu_kernel(x_ref, w_ref, b_ref, o_ref):
    # x_ref: (1, Cin, HWC)  w_ref: (Cout, Cin)  b_ref: (Cout, 1)  o_ref: (1, Cout, HWC)
    x = x_ref[0].astype(jnp.float32)
    y = jnp.dot(w_ref[...], x, preferred_element_type=jnp.float32) + b_ref[...]
    o_ref[0] = jnp.maximum(y, 0.0).astype(o_ref.dtype)


def conv1x1_relu(x, w, b):
    """ReLU(Conv2d(kernel_size=1, padding=0)(x)).  x:(N,Cin,H,W) w:(Cout,Cin,1,1) b:(Cout,)."""
    n, cin, h, wd = x.shape
    cout = w.shape[0]
    hw = h * wd
    xf = x.reshape(n, cin, hw)                      # free reshape (contiguous NCHW)
    w2 = w.reshape(cout, cin).astype(jnp.float32)
    b2 = b.reshape(cout, 1).astype(jnp.float32)
    hwc = _largest_divisor(hw, (2048, 1024, 512, 256, 128))
    grid = (n, hw // hwc)
    # TODO(synk): for very large channel counts add a Cout/Cin tiling axis as well.
    out = pl.pallas_call(
        _conv1x1_relu_kernel,
        out_shape=jax.ShapeDtypeStruct((n, cout, hw), x.dtype),
        grid_spec=pltpu.PrefetchScalarGridSpec(
            num_scalar_prefetch=0,
            grid=grid,
            in_specs=[
                pl.BlockSpec((1, cin, hwc), lambda i, s: (i, 0, s)),
                pl.BlockSpec((cout, cin), lambda i, s: (0, 0)),
                pl.BlockSpec((cout, 1), lambda i, s: (0, 0)),
            ],
            out_specs=pl.BlockSpec((1, cout, hwc), lambda i, s: (i, 0, s)),
        ),
        compiler_params=pltpu.CompilerParams(
            dimension_semantics=("parallel", "parallel"),
            vmem_limit_bytes=VMEM_LIMIT_BYTES),
    )(xf, w2, b2)
    return out.reshape(n, cout, h, wd)


# ------------------------------------------------------------- 2x2 maxpool + residual add
def _maxpool2x2_add_kernel(y_ref, skip_ref, sel_ref, o_ref, *, width):
    # y_ref: (1, RC, 2W) -- each row holds two consecutive input rows side by side.
    v = y_ref[0].astype(jnp.float32)                        # (RC, 2W)
    rmax = jnp.maximum(v[:, :width], v[:, width:])          # vertical (row-pair) max
    cmax = jnp.maximum(rmax, jnp.roll(rmax, -1, axis=1))    # horizontal neighbour max (XLU)
    pooled = jnp.dot(cmax, sel_ref[...],                    # keep even columns (compaction)
                     preferred_element_type=jnp.float32)    # (RC, W//2)
    o_ref[0] = (pooled + skip_ref[0].astype(jnp.float32)).astype(o_ref.dtype)


def maxpool2x2_add(y, skip):
    """MaxPool2d(kernel_size=2, stride=2)(y) + skip."""
    n, c, h, wd = y.shape
    assert h % 2 == 0 and wd % 2 == 0
    ho, wo = h // 2, wd // 2
    r = c * ho
    yf = y.reshape(n, r, 2 * wd)        # free reshape: row pairs side-by-side
    sf = skip.reshape(n, r, wo)
    sel = np.zeros((wd, wo), np.float32)
    sel[2 * np.arange(wo), np.arange(wo)] = 1.0
    rc = _largest_divisor(r, (64, 56, 48, 40, 32, 24, 16, 8))   # keep vreg live-set small
    grid = (n, r // rc)
    out = pl.pallas_call(
        functools.partial(_maxpool2x2_add_kernel, width=wd),
        out_shape=jax.ShapeDtypeStruct((n, r, wo), y.dtype),
        grid_spec=pltpu.PrefetchScalarGridSpec(
            num_scalar_prefetch=0,
            grid=grid,
            in_specs=[
                pl.BlockSpec((1, rc, 2 * wd), lambda i, j: (i, j, 0)),
                pl.BlockSpec((1, rc, wo), lambda i, j: (i, j, 0)),
                pl.BlockSpec((wd, wo), lambda i, j: (0, 0)),
            ],
            out_specs=pl.BlockSpec((1, rc, wo), lambda i, j: (i, j, 0)),
        ),
        compiler_params=pltpu.CompilerParams(
            dimension_semantics=("parallel", "parallel"),
            vmem_limit_bytes=VMEM_LIMIT_BYTES),
    )(yf, sf, jnp.asarray(sel))
    return out.reshape(n, c, ho, wo)


# -------------------------------------------- SpatialAttention(k=5) fused with the residual
def _sa_residual_kernel(x_ref, ori_ref, cmask_ref, w_ref, o_ref, feat_ref, *,
                        ksize, width, hw, off, base, ck):
    # x_ref/ori_ref/o_ref: (NB, C, HW)   cmask_ref: (K, HW)   w_ref: SMEM (2*K*K,)
    # feat_ref: VMEM scratch (2*NB, LP) -- zero-padded flat feature buffers.
    nb, ch, _ = x_ref.shape
    nck = ch // ck
    inv_c = jnp.float32(1.0 / ch)
    unrolled = nck <= 8                                     # static trace-time decision

    # Load all conv-tap weights from SMEM once, before the unrolled vector loops.
    wv = [w_ref[t] for t in range(2 * ksize * ksize)]
    cmask = cmask_ref[...]                                  # (K, HW) column-validity masks

    # Zero the scratch ONCE (grid step 0): the zeros supply the 'same'-conv border
    # padding; only the interior [off, off+hw) is ever overwritten afterwards, so the
    # borders stay zero across all subsequent grid steps.
    @pl.when(pl.program_id(0) == 0)
    def _init_pad():
        feat_ref[...] = jnp.zeros_like(feat_ref)

    for i in range(nb):
        # ---- fused single-pass channel sum / max (chunked over C) ----
        def _reduce(ci, carry):
            s, m = carry
            c0 = pl.multiple_of(ci * ck, ck)
            v = x_ref[i, pl.ds(c0, ck), :].astype(jnp.float32)      # (ck, HW)
            return (s + jnp.sum(v, axis=0, keepdims=True),
                    jnp.maximum(m, jnp.max(v, axis=0, keepdims=True)))

        init = (jnp.zeros((1, hw), jnp.float32),
                jnp.full((1, hw), -jnp.inf, jnp.float32))
        if unrolled:
            carry = init
            for ci in range(nck):
                carry = _reduce(ci, carry)
            csum, cmx = carry
        else:
            csum, cmx = jax.lax.fori_loop(0, nck, _reduce, init)
        cavg = csum * inv_c

        # ---- write features into the zero-padded buffers (lane-aligned stores) ----
        feat_ref[pl.ds(2 * i, 1), pl.ds(off, hw)] = cavg
        feat_ref[pl.ds(2 * i + 1, 1), pl.ds(off, hw)] = cmx
        buf_a = feat_ref[pl.ds(2 * i, 1), :]                # (1, LP)
        buf_m = feat_ref[pl.ds(2 * i + 1, 1), :]

        # ---- KxK 'same' conv: 2*K*K shifted slices of the padded buffers.
        #      Only K hoisted column masks; no rolls, no per-tap iota/compare/select. ----
        acc = jnp.zeros((1, hw), jnp.float32)
        for kj in range(ksize):
            inner = jnp.zeros((1, hw), jnp.float32)
            for ki in range(ksize):
                tap = base + ki * width + kj
                inner = inner + wv[ki * ksize + kj] * buf_a[:, tap:tap + hw]
                inner = inner + wv[ksize * ksize + ki * ksize + kj] * buf_m[:, tap:tap + hw]
            acc = acc + cmask[kj:kj + 1, :] * inner
        att = jax.nn.sigmoid(acc)                           # (1, HW)

        # ---- fused residual: out = ori + att * x (chunked over C, broadcast hoisted) ----
        att_b = jnp.broadcast_to(att, (ck, hw))

        def _residual(ci, carry):
            c0 = pl.multiple_of(ci * ck, ck)
            xv = x_ref[i, pl.ds(c0, ck), :].astype(jnp.float32)
            ov = ori_ref[i, pl.ds(c0, ck), :].astype(jnp.float32)
            o_ref[i, pl.ds(c0, ck), :] = (ov + att_b * xv).astype(o_ref.dtype)
            return carry

        if unrolled:
            for ci in range(nck):
                _residual(ci, 0)
        else:
            jax.lax.fori_loop(0, nck, _residual, 0)


def spatial_attention_residual(x, ori, conv_w):
    """ori + sigmoid(Conv2d(2,1,K,pad=K//2,bias=False)([mean_c(x); max_c(x)])) * x."""
    n, c, h, wd = x.shape
    assert ori.shape == x.shape
    ksize = conv_w.shape[-1]
    assert conv_w.shape == (1, 2, ksize, ksize) and ksize in (3, 5)
    pad = ksize // 2
    hw = h * wd
    xf = x.reshape(n, c, hw)
    of = ori.reshape(n, c, hw)

    # Feature interior offset inside the flat scratch: multiple of 128 so the feature
    # *store* is lane-aligned; the tap *loads* absorb the (cheap) unalignment.
    off = _round_up(pad * (wd + 1), 128)
    base = off - pad * (wd + 1)
    buf_len = _round_up(off + hw + 2 * pad * wd + 2 * pad + 8, 128)

    # Column-validity masks for the K horizontal tap offsets (hoisted, static).
    col = np.arange(hw) % wd
    cmask = np.stack(
        [((col + kj - pad >= 0) & (col + kj - pad < wd)).astype(np.float32)
         for kj in range(ksize)], axis=0)                   # (K, HW)

    w_flat = conv_w.reshape(-1).astype(jnp.float32)         # (2*K*K,) -> SMEM

    nb = _pick_batch_tile(n, 3 * c * hw * 4)
    ck = _largest_divisor(c, (8, 4, 2, 1))
    # TODO(synk): for very large per-image C*H*W (deep PANet levels on v7x's 64 MiB VMEM),
    # add a C-chunk grid axis with running sum/max accumulators finalised via pl.when.

    kernel = functools.partial(_sa_residual_kernel, ksize=ksize, width=wd, hw=hw,
                               off=off, base=base, ck=ck)
    out = pl.pallas_call(
        kernel,
        out_shape=jax.ShapeDtypeStruct((n, c, hw), x.dtype),
        grid_spec=pltpu.PrefetchScalarGridSpec(
            num_scalar_prefetch=0,
            grid=(n // nb,),
            in_specs=[
                pl.BlockSpec((nb, c, hw), lambda i: (i, 0, 0)),
                pl.BlockSpec((nb, c, hw), lambda i: (i, 0, 0)),
                pl.BlockSpec((ksize, hw), lambda i: (0, 0)),
                pl.BlockSpec(memory_space=pltpu.SMEM),
            ],
            out_specs=pl.BlockSpec((nb, c, hw), lambda i: (i, 0, 0)),
            scratch_shapes=[pltpu.VMEM((2 * nb, buf_len), jnp.float32)],
        ),
        compiler_params=pltpu.CompilerParams(
            dimension_semantics=("parallel",),
            vmem_limit_bytes=VMEM_LIMIT_BYTES),
    )(xf, of, jnp.asarray(cmask), w_flat)
    return out.reshape(n, c, h, wd)


# ----------------------------------------------------------------------- PANet forward
def panet_forward(params, ori_lr_hsi, d1, d2, d3, d4):
    x1 = conv1x1_relu(d1, params["w1"], params["b1"])
    x2 = conv1x1_relu(d2, params["w2"], params["b2"])
    x3 = conv1x1_relu(d3, params["w3"], params["b3"])
    x4 = conv1x1_relu(d4, params["w4"], params["b4"])
    x3_td = maxpool2x2_add(conv1x1_relu(x4, params["w5"], params["b5"]), x3)
    x2_td = maxpool2x2_add(conv1x1_relu(x3_td, params["w6"], params["b6"]), x2)
    x1_td = maxpool2x2_add(conv1x1_relu(x2_td, params["w7"], params["b7"]), x1)
    return spatial_attention_residual(x1_td, ori_lr_hsi, params["wa"])


# -------------------------------------------------------------------- pure-JAX reference
def _conv1x1_relu_ref(x, w, b):
    y = jax.lax.conv_general_dilated(
        x, w, window_strides=(1, 1), padding="VALID",
        dimension_numbers=("NCHW", "OIHW", "NCHW"),
        precision=jax.lax.Precision.HIGHEST)
    return jnp.maximum(y + b.reshape(1, -1, 1, 1), 0.0)


def _maxpool2x2_ref(x):
    return jax.lax.reduce_window(x, -jnp.inf, jax.lax.max,
                                 (1, 1, 2, 2), (1, 1, 2, 2), "VALID")


def _spatial_attention_ref(x, w):
    avg = jnp.mean(x, axis=1, keepdims=True)
    mx = jnp.max(x, axis=1, keepdims=True)
    feat = jnp.concatenate([avg, mx], axis=1)
    pad = w.shape[-1] // 2
    y = jax.lax.conv_general_dilated(
        feat, w, window_strides=(1, 1), padding=((pad, pad), (pad, pad)),
        dimension_numbers=("NCHW", "OIHW", "NCHW"),
        precision=jax.lax.Precision.HIGHEST)
    return jax.nn.sigmoid(y)


def panet_ref(params, ori_lr_hsi, d1, d2, d3, d4):
    x1 = _conv1x1_relu_ref(d1, params["w1"], params["b1"])
    x2 = _conv1x1_relu_ref(d2, params["w2"], params["b2"])
    x3 = _conv1x1_relu_ref(d3, params["w3"], params["b3"])
    x4 = _conv1x1_relu_ref(d4, params["w4"], params["b4"])
    x3_td = _maxpool2x2_ref(_conv1x1_relu_ref(x4, params["w5"], params["b5"])) + x3
    x2_td = _maxpool2x2_ref(_conv1x1_relu_ref(x3_td, params["w6"], params["b6"])) + x2
    x1_td = _maxpool2x2_ref(_conv1x1_relu_ref(x2_td, params["w7"], params["b7"])) + x1
    w0 = _spatial_attention_ref(x1_td, params["wa"])
    return ori_lr_hsi + w0 * x1_td


# -------------------------------------------------------------------------------- main
if __name__ == "__main__":
    key = jax.random.PRNGKey(0)
    n, c_in, c_out = 2, 4, 8
    h1 = w1 = 16  # d1 resolution; d2/d3/d4 are 2x/4x/8x so the downsample path lines up

    ks = jax.random.split(key, 20)

    def conv_params(kw, kb, cout, cin):
        return (0.2 * jax.random.normal(kw, (cout, cin, 1, 1), jnp.float32),
                0.1 * jax.random.normal(kb, (cout,), jnp.float32))

    params = {}
    params["w1"], params["b1"] = conv_params(ks[0], ks[1], c_out, c_in)
    params["w2"], params["b2"] = conv_params(ks[2], ks[3], c_out, c_in)
    params["w3"], params["b3"] = conv_params(ks[4], ks[5], c_out, c_in)
    params["w4"], params["b4"] = conv_params(ks[6], ks[7], c_out, c_in)
    params["w5"], params["b5"] = conv_params(ks[8], ks[9], c_out, c_out)
    params["w6"], params["b6"] = conv_params(ks[10], ks[11], c_out, c_out)
    params["w7"], params["b7"] = conv_params(ks[12], ks[13], c_out, c_out)
    params["wa"] = 0.2 * jax.random.normal(ks[14], (1, 2, 5, 5), jnp.float32)  # attention1, k=5

    ori = jax.random.normal(ks[15], (n, c_out, h1, w1), jnp.float32)
    d1 = jax.random.normal(ks[16], (n, c_in, h1, w1), jnp.float32)
    d2 = jax.random.normal(ks[17], (n, c_in, 2 * h1, 2 * w1), jnp.float32)
    d3 = jax.random.normal(ks[18], (n, c_in, 4 * h1, 4 * w1), jnp.float32)
    d4 = jax.random.normal(ks[19], (n, c_in, 8 * h1, 8 * w1), jnp.float32)

    out = jax.block_until_ready(jax.jit(panet_forward)(params, ori, d1, d2, d3, d4))
    ref = jax.block_until_ready(jax.jit(panet_ref)(params, ori, d1, d2, d3, d4))

    assert out.shape == ori.shape
    np.testing.assert_allclose(np.asarray(out), np.asarray(ref), atol=2e-3, rtol=2e-3)
    print("KERNEL_OK")
</pallas_src>

<mosaic_0001>
module attributes {stable_mosaic.version = 11 : i64} {
  func.func @_conv1x1_relu_kernel(%arg0: i32, %arg1: i32, %arg2: memref<1x4x2048xf32, #tpu.memory_space<vmem>>, %arg3: memref<8x4xf32, #tpu.memory_space<vmem>>, %arg4: memref<8x1xf32, #tpu.memory_space<vmem>>, %arg5: memref<1x8x2048xf32, #tpu.memory_space<vmem>>) attributes {dimension_semantics = [#tpu.dimension_semantics<parallel>, #tpu.dimension_semantics<parallel>], iteration_bounds = array<i64: 2, 8>, scalar_prefetch = 0 : i64, scratch_operands = 0 : i64, tpu.core_type = #tpu.core_type<tc>, window_params = [{transform_indices = @transform_0, window_bounds = array<i64: 1, 4, 2048>}, {pipeline_mode = #tpu.pipeline_mode<synchronous>, transform_indices = @transform_1, window_bounds = array<i64: 8, 4>}, {pipeline_mode = #tpu.pipeline_mode<synchronous>, transform_indices = @transform_2, window_bounds = array<i64: 8, 1>}, {transform_indices = @transform_3, window_bounds = array<i64: 1, 8, 2048>}]} {
    %c0 = arith.constant 0 : index
    %c0_0 = arith.constant 0 : index
    %c0_1 = arith.constant 0 : index
    %0 = vector.load %arg2[%c0, %c0_0, %c0_1] : memref<1x4x2048xf32, #tpu.memory_space<vmem>>, vector<1x4x2048xf32>
    %1 = vector.shape_cast %0 : vector<1x4x2048xf32> to vector<4x2048xf32>
    %c0_2 = arith.constant 0 : index
    %c0_3 = arith.constant 0 : index
    %2 = vector.load %arg3[%c0_2, %c0_3] : memref<8x4xf32, #tpu.memory_space<vmem>>, vector<8x4xf32>
    %cst = arith.constant dense<0.000000e+00> : vector<8x2048xf32>
    %3 = tpu.matmul %2, %1, %cst {dimension_numbers = #tpu.dot_dimension_numbers<[1], [0], [0], [1], [0, 0, 1, 1], [], []>} : vector<8x4xf32>, vector<4x2048xf32>, vector<8x2048xf32> -> vector<8x2048xf32>
    %c0_4 = arith.constant 0 : index
    %c0_5 = arith.constant 0 : index
    %4 = vector.load %arg4[%c0_4, %c0_5] : memref<8x1xf32, #tpu.memory_space<vmem>>, vector<8x1xf32>
    %5 = vector.broadcast %4 : vector<8x1xf32> to vector<8x2048xf32>
    %6 = arith.addf %3, %5 : vector<8x2048xf32>
    %cst_6 = arith.constant 0.000000e+00 : f32
    %7 = vector.broadcast %cst_6 : f32 to vector<8x2048xf32>
    %8 = arith.maximumf %6, %7 : vector<8x2048xf32>
    %c0_7 = arith.constant 0 : index
    %c0_8 = arith.constant 0 : index
    %c0_9 = arith.constant 0 : index
    %9 = vector.load %arg5[%c0_7, %c0_8, %c0_9] : memref<1x8x2048xf32, #tpu.memory_space<vmem>>, vector<1x8x2048xf32>
    %10 = vector.shape_cast %9 : vector<1x8x2048xf32> to vector<8x2048xf32>
    %11 = vector.shape_cast %8 : vector<8x2048xf32> to vector<1x8x2048xf32>
    tpu.vector_store %arg5[%c0_7, %c0_8, %c0_9], %11 {strides = array<i32>} : memref<1x8x2048xf32, #tpu.memory_space<vmem>>, vector<1x8x2048xf32>,
    return
  }
  func.func @transform_0(%arg0: i32, %arg1: i32) -> (i32, i32, i32) {
    %c0_i32 = arith.constant 0 : i32
    %c0_i32_0 = arith.constant 0 : i32
    return %arg0, %c0_i32, %arg1 : i32, i32, i32
  }
  func.func @transform_1(%arg0: i32, %arg1: i32) -> (i32, i32) {
    %c0_i32 = arith.constant 0 : i32
    %c0_i32_0 = arith.constant 0 : i32
    %c0_i32_1 = arith.constant 0 : i32
    return %c0_i32, %c0_i32_0 : i32, i32
  }
  func.func @transform_2(%arg0: i32, %arg1: i32) -> (i32, i32) {
    %c0_i32 = arith.constant 0 : i32
    %c0_i32_0 = arith.constant 0 : i32
    %c0_i32_1 = arith.constant 0 : i32
    return %c0_i32, %c0_i32_0 : i32, i32
  }
  func.func @transform_3(%arg0: i32, %arg1: i32) -> (i32, i32, i32) {
    %c0_i32 = arith.constant 0 : i32
    %c0_i32_0 = arith.constant 0 : i32
    return %arg0, %c0_i32, %arg1 : i32, i32, i32
  }
}

module attributes {stable_mosaic.version = 11 : i64} {
  func.func @_conv1x1_relu_kernel(%arg0: i32, %arg1: i32, %arg2: memref<1x8x2048xf32, #tpu.memory_space<vmem>>, %arg3: memref<8x8xf32, #tpu.memory_space<vmem>>, %arg4: memref<8x1xf32, #tpu.memory_space<vmem>>, %arg5: memref<1x8x2048xf32, #tpu.memory_space<vmem>>) attributes {dimension_semantics = [#tpu.dimension_semantics<parallel>, #tpu.dimension_semantics<parallel>], iteration_bounds = array<i64: 2, 8>, scalar_prefetch = 0 : i64, scratch_operands = 0 : i64, tpu.core_type = #tpu.core_type<tc>, window_params = [{transform_indices = @transform_0, window_bounds = array<i64: 1, 8, 2048>}, {pipeline_mode = #tpu.pipeline_mode<synchronous>, transform_indices = @transform_1, window_bounds = array<i64: 8, 8>}, {pipeline_mode = #tpu.pipeline_mode<synchronous>, transform_indices = @transform_2, window_bounds = array<i64: 8, 1>}, {transform_indices = @transform_3, window_bounds = array<i64: 1, 8, 2048>}]} {
    %c0 = arith.constant 0 : index
    %c0_0 = arith.constant 0 : index
    %c0_1 = arith.constant 0 : index
    %0 = vector.load %arg2[%c0, %c0_0, %c0_1] : memref<1x8x2048xf32, #tpu.memory_space<vmem>>, vector<1x8x2048xf32>
    %1 = vector.shape_cast %0 : vector<1x8x2048xf32> to vector<8x2048xf32>
    %c0_2 = arith.constant 0 : index
    %c0_3 = arith.constant 0 : index
    %2 = vector.load %arg3[%c0_2, %c0_3] : memref<8x8xf32, #tpu.memory_space<vmem>>, vector<8x8xf32>
    %cst = arith.constant dense<0.000000e+00> : vector<8x2048xf32>
    %3 = tpu.matmul %2, %1, %cst {dimension_numbers = #tpu.dot_dimension_numbers<[1], [0], [0], [1], [0, 0, 1, 1], [], []>} : vector<8x8xf32>, vector<8x2048xf32>, vector<8x2048xf32> -> vector<8x2048xf32>
    %c0_4 = arith.constant 0 : index
    %c0_5 = arith.constant 0 : index
    %4 = vector.load %arg4[%c0_4, %c0_5] : memref<8x1xf32, #tpu.memory_space<vmem>>, vector<8x1xf32>
    %5 = vector.broadcast %4 : vector<8x1xf32> to vector<8x2048xf32>
    %6 = arith.addf %3, %5 : vector<8x2048xf32>
    %cst_6 = arith.constant 0.000000e+00 : f32
    %7 = vector.broadcast %cst_6 : f32 to vector<8x2048xf32>
    %8 = arith.maximumf %6, %7 : vector<8x2048xf32>
    %c0_7 = arith.constant 0 : index
    %c0_8 = arith.constant 0 : index
    %c0_9 = arith.constant 0 : index
    %9 = vector.load %arg5[%c0_7, %c0_8, %c0_9] : memref<1x8x2048xf32, #tpu.memory_space<vmem>>, vector<1x8x2048xf32>
    %10 = vector.shape_cast %9 : vector<1x8x2048xf32> to vector<8x2048xf32>
    %11 = vector.shape_cast %8 : vector<8x2048xf32> to vector<1x8x2048xf32>
    tpu.vector_store %arg5[%c0_7, %c0_8, %c0_9], %11 {strides = array<i32>} : memref<1x8x2048xf32, #tpu.memory_space<vmem>>, vector<1x8x2048xf32>,
    return
  }
  func.func @transform_0(%arg0: i32, %arg1: i32) -> (i32, i32, i32) {
    %c0_i32 = arith.constant 0 : i32
    %c0_i32_0 = arith.constant 0 : i32
    return %arg0, %c0_i32, %arg1 : i32, i32, i32
  }
  func.func @transform_1(%arg0: i32, %arg1: i32) -> (i32, i32) {
    %c0_i32 = arith.constant 0 : i32
    %c0_i32_0 = arith.constant 0 : i32
    %c0_i32_1 = arith.constant 0 : i32
    return %c0_i32, %c0_i32_0 : i32, i32
  }
  func.func @transform_2(%arg0: i32, %arg1: i32) -> (i32, i32) {
    %c0_i32 = arith.constant 0 : i32
    %c0_i32_0 = arith.constant 0 : i32
    %c0_i32_1 = arith.constant 0 : i32
    return %c0_i32, %c0_i32_0 : i32, i32
  }
  func.func @transform_3(%arg0: i32, %arg1: i32) -> (i32, i32, i32) {
    %c0_i32 = arith.constant 0 : i32
    %c0_i32_0 = arith.constant 0 : i32
    return %arg0, %c0_i32, %arg1 : i32, i32, i32
  }
}

module attributes {stable_mosaic.version = 11 : i64} {
  func.func @_conv1x1_relu_kernel(%arg0: i32, %arg1: i32, %arg2: memref<1x4x2048xf32, #tpu.memory_space<vmem>>, %arg3: memref<8x4xf32, #tpu.memory_space<vmem>>, %arg4: memref<8x1xf32, #tpu.memory_space<vmem>>, %arg5: memref<1x8x2048xf32, #tpu.memory_space<vmem>>) attributes {dimension_semantics = [#tpu.dimension_semantics<parallel>, #tpu.dimension_semantics<parallel>], iteration_bounds = array<i64: 2, 2>, scalar_prefetch = 0 : i64, scratch_operands = 0 : i64, tpu.core_type = #tpu.core_type<tc>, window_params = [{transform_indices = @transform_0, window_bounds = array<i64: 1, 4, 2048>}, {pipeline_mode = #tpu.pipeline_mode<synchronous>, transform_indices = @transform_1, window_bounds = array<i64: 8, 4>}, {pipeline_mode = #tpu.pipeline_mode<synchronous>, transform_indices = @transform_2, window_bounds = array<i64: 8, 1>}, {transform_indices = @transform_3, window_bounds = array<i64: 1, 8, 2048>}]} {
    %c0 = arith.constant 0 : index
    %c0_0 = arith.constant 0 : index
    %c0_1 = arith.constant 0 : index
    %0 = vector.load %arg2[%c0, %c0_0, %c0_1] : memref<1x4x2048xf32, #tpu.memory_space<vmem>>, vector<1x4x2048xf32>
    %1 = vector.shape_cast %0 : vector<1x4x2048xf32> to vector<4x2048xf32>
    %c0_2 = arith.constant 0 : index
    %c0_3 = arith.constant 0 : index
    %2 = vector.load %arg3[%c0_2, %c0_3] : memref<8x4xf32, #tpu.memory_space<vmem>>, vector<8x4xf32>
    %cst = arith.constant dense<0.000000e+00> : vector<8x2048xf32>
    %3 = tpu.matmul %2, %1, %cst {dimension_numbers = #tpu.dot_dimension_numbers<[1], [0], [0], [1], [0, 0, 1, 1], [], []>} : vector<8x4xf32>, vector<4x2048xf32>, vector<8x2048xf32> -> vector<8x2048xf32>
    %c0_4 = arith.constant 0 : index
    %c0_5 = arith.constant 0 : index
    %4 = vector.load %arg4[%c0_4, %c0_5] : memref<8x1xf32, #tpu.memory_space<vmem>>, vector<8x1xf32>
    %5 = vector.broadcast %4 : vector<8x1xf32> to vector<8x2048xf32>
    %6 = arith.addf %3, %5 : vector<8x2048xf32>
    %cst_6 = arith.constant 0.000000e+00 : f32
    %7 = vector.broadcast %cst_6 : f32 to vector<8x2048xf32>
    %8 = arith.maximumf %6, %7 : vector<8x2048xf32>
    %c0_7 = arith.constant 0 : index
    %c0_8 = arith.constant 0 : index
    %c0_9 = arith.constant 0 : index
    %9 = vector.load %arg5[%c0_7, %c0_8, %c0_9] : memref<1x8x2048xf32, #tpu.memory_space<vmem>>, vector<1x8x2048xf32>
    %10 = vector.shape_cast %9 : vector<1x8x2048xf32> to vector<8x2048xf32>
    %11 = vector.shape_cast %8 : vector<8x2048xf32> to vector<1x8x2048xf32>
    tpu.vector_store %arg5[%c0_7, %c0_8, %c0_9], %11 {strides = array<i32>} : memref<1x8x2048xf32, #tpu.memory_space<vmem>>, vector<1x8x2048xf32>,
    return
  }
  func.func @transform_0(%arg0: i32, %arg1: i32) -> (i32, i32, i32) {
    %c0_i32 = arith.constant 0 : i32
    %c0_i32_0 = arith.constant 0 : i32
    return %arg0, %c0_i32, %arg1 : i32, i32, i32
  }
  func.func @transform_1(%arg0: i32, %arg1: i32) -> (i32, i32) {
    %c0_i32 = arith.constant 0 : i32
    %c0_i32_0 = arith.constant 0 : i32
    %c0_i32_1 = arith.constant 0 : i32
    return %c0_i32, %c0_i32_0 : i32, i32
  }
  func.func @transform_2(%arg0: i32, %arg1: i32) -> (i32, i32) {
    %c0_i32 = arith.constant 0 : i32
    %c0_i32_0 = arith.constant 0 : i32
    %c0_i32_1 = arith.constant 0 : i32
    return %c0_i32, %c0_i32_0 : i32, i32
  }
  func.func @transform_3(%arg0: i32, %arg1: i32) -> (i32, i32, i32) {
    %c0_i32 = arith.constant 0 : i32
    %c0_i32_0 = arith.constant 0 : i32
    return %arg0, %c0_i32, %arg1 : i32, i32, i32
  }
}

module attributes {stable_mosaic.version = 11 : i64} {
  func.func @_maxpool2x2_add_kernel(%arg0: i32, %arg1: i32, %arg2: memref<1x64x256xf32, #tpu.memory_space<vmem>>, %arg3: memref<1x64x64xf32, #tpu.memory_space<vmem>>, %arg4: memref<128x64xf32, #tpu.memory_space<vmem>>, %arg5: memref<1x64x64xf32, #tpu.memory_space<vmem>>) attributes {dimension_semantics = [#tpu.dimension_semantics<parallel>, #tpu.dimension_semantics<parallel>], iteration_bounds = array<i64: 2, 8>, scalar_prefetch = 0 : i64, scratch_operands = 0 : i64, tpu.core_type = #tpu.core_type<tc>, window_params = [{transform_indices = @transform_0, window_bounds = array<i64: 1, 64, 256>}, {transform_indices = @transform_1, window_bounds = array<i64: 1, 64, 64>}, {pipeline_mode = #tpu.pipeline_mode<synchronous>, transform_indices = @transform_2, window_bounds = array<i64: 128, 64>}, {transform_indices = @transform_3, window_bounds = array<i64: 1, 64, 64>}]} {
    %c0 = arith.constant 0 : index
    %c0_0 = arith.constant 0 : index
    %c0_1 = arith.constant 0 : index
    %0 = vector.load %arg2[%c0, %c0_0, %c0_1] : memref<1x64x256xf32, #tpu.memory_space<vmem>>, vector<1x64x256xf32>
    %1 = vector.shape_cast %0 : vector<1x64x256xf32> to vector<64x256xf32>
    %2 = vector.extract_strided_slice %1 {offsets = [0, 0], sizes = [64, 128], strides = [1, 1]} : vector<64x256xf32> to vector<64x128xf32>
    %3 = vector.extract_strided_slice %1 {offsets = [0, 128], sizes = [64, 128], strides = [1, 1]} : vector<64x256xf32> to vector<64x128xf32>
    %4 = arith.maximumf %2, %3 : vector<64x128xf32>
    %5 = vector.extract_strided_slice %4 {offsets = [0, 1], sizes = [64, 127], strides = [1, 1]} : vector<64x128xf32> to vector<64x127xf32>
    %6 = vector.extract_strided_slice %4 {offsets = [0, 0], sizes = [64, 1], strides = [1, 1]} : vector<64x128xf32> to vector<64x1xf32>
    %7 = tpu.concatenate %5, %6 in 1 : vector<64x127xf32>, vector<64x1xf32> -> vector<64x128xf32>
    %8 = arith.maximumf %4, %7 : vector<64x128xf32>
    %c0_2 = arith.constant 0 : index
    %c0_3 = arith.constant 0 : index
    %9 = vector.load %arg4[%c0_2, %c0_3] : memref<128x64xf32, #tpu.memory_space<vmem>>, vector<128x64xf32>
    %cst = arith.constant dense<0.000000e+00> : vector<64x64xf32>
    %10 = tpu.matmul %8, %9, %cst {dimension_numbers = #tpu.dot_dimension_numbers<[1], [0], [0], [1], [0, 0, 1, 1], [], []>} : vector<64x128xf32>, vector<128x64xf32>, vector<64x64xf32> -> vector<64x64xf32>
    %c0_4 = arith.constant 0 : index
    %c0_5 = arith.constant 0 : index
    %c0_6 = arith.constant 0 : index
    %11 = vector.load %arg3[%c0_4, %c0_5, %c0_6] : memref<1x64x64xf32, #tpu.memory_space<vmem>>, vector<1x64x64xf32>
    %12 = vector.shape_cast %11 : vector<1x64x64xf32> to vector<64x64xf32>
    %13 = arith.addf %10, %12 : vector<64x64xf32>
    %c0_7 = arith.constant 0 : index
    %c0_8 = arith.constant 0 : index
    %c0_9 = arith.constant 0 : index
    %14 = vector.load %arg5[%c0_7, %c0_8, %c0_9] : memref<1x64x64xf32, #tpu.memory_space<vmem>>, vector<1x64x64xf32>
    %15 = vector.shape_cast %14 : vector<1x64x64xf32> to vector<64x64xf32>
    %16 = vector.shape_cast %13 : vector<64x64xf32> to vector<1x64x64xf32>
    tpu.vector_store %arg5[%c0_7, %c0_8, %c0_9], %16 {strides = array<i32>} : memref<1x64x64xf32, #tpu.memory_space<vmem>>, vector<1x64x64xf32>,
    return
  }
  func.func @transform_0(%arg0: i32, %arg1: i32) -> (i32, i32, i32) {
    %c0_i32 = arith.constant 0 : i32
    %c0_i32_0 = arith.constant 0 : i32
    return %arg0, %arg1, %c0_i32 : i32, i32, i32
  }
  func.func @transform_1(%arg0: i32, %arg1: i32) -> (i32, i32, i32) {
    %c0_i32 = arith.constant 0 : i32
    %c0_i32_0 = arith.constant 0 : i32
    return %arg0, %arg1, %c0_i32 : i32, i32, i32
  }
  func.func @transform_2(%arg0: i32, %arg1: i32) -> (i32, i32) {
    %c0_i32 = arith.constant 0 : i32
    %c0_i32_0 = arith.constant 0 : i32
    %c0_i32_1 = arith.constant 0 : i32
    return %c0_i32, %c0_i32_0 : i32, i32
  }
  func.func @transform_3(%arg0: i32, %arg1: i32) -> (i32, i32, i32) {
    %c0_i32 = arith.constant 0 : i32
    %c0_i32_0 = arith.constant 0 : i32
    return %arg0, %arg1, %c0_i32 : i32, i32, i32
  }
}

module attributes {stable_mosaic.version = 11 : i64} {
  func.func @_conv1x1_relu_kernel(%arg0: i32, %arg1: i32, %arg2: memref<1x8x2048xf32, #tpu.memory_space<vmem>>, %arg3: memref<8x8xf32, #tpu.memory_space<vmem>>, %arg4: memref<8x1xf32, #tpu.memory_space<vmem>>, %arg5: memref<1x8x2048xf32, #tpu.memory_space<vmem>>) attributes {dimension_semantics = [#tpu.dimension_semantics<parallel>, #tpu.dimension_semantics<parallel>], iteration_bounds = array<i64: 2, 2>, scalar_prefetch = 0 : i64, scratch_operands = 0 : i64, tpu.core_type = #tpu.core_type<tc>, window_params = [{transform_indices = @transform_0, window_bounds = array<i64: 1, 8, 2048>}, {pipeline_mode = #tpu.pipeline_mode<synchronous>, transform_indices = @transform_1, window_bounds = array<i64: 8, 8>}, {pipeline_mode = #tpu.pipeline_mode<synchronous>, transform_indices = @transform_2, window_bounds = array<i64: 8, 1>}, {transform_indices = @transform_3, window_bounds = array<i64: 1, 8, 2048>}]} {
    %c0 = arith.constant 0 : index
    %c0_0 = arith.constant 0 : index
    %c0_1 = arith.constant 0 : index
    %0 = vector.load %arg2[%c0, %c0_0, %c0_1] : memref<1x8x2048xf32, #tpu.memory_space<vmem>>, vector<1x8x2048xf32>
    %1 = vector.shape_cast %0 : vector<1x8x2048xf32> to vector<8x2048xf32>
    %c0_2 = arith.constant 0 : index
    %c0_3 = arith.constant 0 : index
    %2 = vector.load %arg3[%c0_2, %c0_3] : memref<8x8xf32, #tpu.memory_space<vmem>>, vector<8x8xf32>
    %cst = arith.constant dense<0.000000e+00> : vector<8x2048xf32>
    %3 = tpu.matmul %2, %1, %cst {dimension_numbers = #tpu.dot_dimension_numbers<[1], [0], [0], [1], [0, 0, 1, 1], [], []>} : vector<8x8xf32>, vector<8x2048xf32>, vector<8x2048xf32> -> vector<8x2048xf32>
    %c0_4 = arith.constant 0 : index
    %c0_5 = arith.constant 0 : index
    %4 = vector.load %arg4[%c0_4, %c0_5] : memref<8x1xf32, #tpu.memory_space<vmem>>, vector<8x1xf32>
    %5 = vector.broadcast %4 : vector<8x1xf32> to vector<8x2048xf32>
    %6 = arith.addf %3, %5 : vector<8x2048xf32>
    %cst_6 = arith.constant 0.000000e+00 : f32
    %7 = vector.broadcast %cst_6 : f32 to vector<8x2048xf32>
    %8 = arith.maximumf %6, %7 : vector<8x2048xf32>
    %c0_7 = arith.constant 0 : index
    %c0_8 = arith.constant 0 : index
    %c0_9 = arith.constant 0 : index
    %9 = vector.load %arg5[%c0_7, %c0_8, %c0_9] : memref<1x8x2048xf32, #tpu.memory_space<vmem>>, vector<1x8x2048xf32>
    %10 = vector.shape_cast %9 : vector<1x8x2048xf32> to vector<8x2048xf32>
    %11 = vector.shape_cast %8 : vector<8x2048xf32> to vector<1x8x2048xf32>
    tpu.vector_store %arg5[%c0_7, %c0_8, %c0_9], %11 {strides = array<i32>} : memref<1x8x2048xf32, #tpu.memory_space<vmem>>, vector<1x8x2048xf32>,
    return
  }
  func.func @transform_0(%arg0: i32, %arg1: i32) -> (i32, i32, i32) {
    %c0_i32 = arith.constant 0 : i32
    %c0_i32_0 = arith.constant 0 : i32
    return %arg0, %c0_i32, %arg1 : i32, i32, i32
  }
  func.func @transform_1(%arg0: i32, %arg1: i32) -> (i32, i32) {
    %c0_i32 = arith.constant 0 : i32
    %c0_i32_0 = arith.constant 0 : i32
    %c0_i32_1 = arith.constant 0 : i32
    return %c0_i32, %c0_i32_0 : i32, i32
  }
  func.func @transform_2(%arg0: i32, %arg1: i32) -> (i32, i32) {
    %c0_i32 = arith.constant 0 : i32
    %c0_i32_0 = arith.constant 0 : i32
    %c0_i32_1 = arith.constant 0 : i32
    return %c0_i32, %c0_i32_0 : i32, i32
  }
  func.func @transform_3(%arg0: i32, %arg1: i32) -> (i32, i32, i32) {
    %c0_i32 = arith.constant 0 : i32
    %c0_i32_0 = arith.constant 0 : i32
    return %arg0, %c0_i32, %arg1 : i32, i32, i32
  }
}

module attributes {stable_mosaic.version = 11 : i64} {
  func.func @_conv1x1_relu_kernel(%arg0: i32, %arg1: i32, %arg2: memref<1x4x1024xf32, #tpu.memory_space<vmem>>, %arg3: memref<8x4xf32, #tpu.memory_space<vmem>>, %arg4: memref<8x1xf32, #tpu.memory_space<vmem>>, %arg5: memref<1x8x1024xf32, #tpu.memory_space<vmem>>) attributes {dimension_semantics = [#tpu.dimension_semantics<parallel>, #tpu.dimension_semantics<parallel>], iteration_bounds = array<i64: 2, 1>, scalar_prefetch = 0 : i64, scratch_operands = 0 : i64, tpu.core_type = #tpu.core_type<tc>, window_params = [{transform_indices = @transform_0, window_bounds = array<i64: 1, 4, 1024>}, {pipeline_mode = #tpu.pipeline_mode<synchronous>, transform_indices = @transform_1, window_bounds = array<i64: 8, 4>}, {pipeline_mode = #tpu.pipeline_mode<synchronous>, transform_indices = @transform_2, window_bounds = array<i64: 8, 1>}, {transform_indices = @transform_3, window_bounds = array<i64: 1, 8, 1024>}]} {
    %c0 = arith.constant 0 : index
    %c0_0 = arith.constant 0 : index
    %c0_1 = arith.constant 0 : index
    %0 = vector.load %arg2[%c0, %c0_0, %c0_1] : memref<1x4x1024xf32, #tpu.memory_space<vmem>>, vector<1x4x1024xf32>
    %1 = vector.shape_cast %0 : vector<1x4x1024xf32> to vector<4x1024xf32>
    %c0_2 = arith.constant 0 : index
    %c0_3 = arith.constant 0 : index
    %2 = vector.load %arg3[%c0_2, %c0_3] : memref<8x4xf32, #tpu.memory_space<vmem>>, vector<8x4xf32>
    %cst = arith.constant dense<0.000000e+00> : vector<8x1024xf32>
    %3 = tpu.matmul %2, %1, %cst {dimension_numbers = #tpu.dot_dimension_numbers<[1], [0], [0], [1], [0, 0, 1, 1], [], []>} : vector<8x4xf32>, vector<4x1024xf32>, vector<8x1024xf32> -> vector<8x1024xf32>
    %c0_4 = arith.constant 0 : index
    %c0_5 = arith.constant 0 : index
    %4 = vector.load %arg4[%c0_4, %c0_5] : memref<8x1xf32, #tpu.memory_space<vmem>>, vector<8x1xf32>
    %5 = vector.broadcast %4 : vector<8x1xf32> to vector<8x1024xf32>
    %6 = arith.addf %3, %5 : vector<8x1024xf32>
    %cst_6 = arith.constant 0.000000e+00 : f32
    %7 = vector.broadcast %cst_6 : f32 to vector<8x1024xf32>
    %8 = arith.maximumf %6, %7 : vector<8x1024xf32>
    %c0_7 = arith.constant 0 : index
    %c0_8 = arith.constant 0 : index
    %c0_9 = arith.constant 0 : index
    %9 = vector.load %arg5[%c0_7, %c0_8, %c0_9] : memref<1x8x1024xf32, #tpu.memory_space<vmem>>, vector<1x8x1024xf32>
    %10 = vector.shape_cast %9 : vector<1x8x1024xf32> to vector<8x1024xf32>
    %11 = vector.shape_cast %8 : vector<8x1024xf32> to vector<1x8x1024xf32>
    tpu.vector_store %arg5[%c0_7, %c0_8, %c0_9], %11 {strides = array<i32>} : memref<1x8x1024xf32, #tpu.memory_space<vmem>>, vector<1x8x1024xf32>,
    return
  }
  func.func @transform_0(%arg0: i32, %arg1: i32) -> (i32, i32, i32) {
    %c0_i32 = arith.constant 0 : i32
    %c0_i32_0 = arith.constant 0 : i32
    return %arg0, %c0_i32, %arg1 : i32, i32, i32
  }
  func.func @transform_1(%arg0: i32, %arg1: i32) -> (i32, i32) {
    %c0_i32 = arith.constant 0 : i32
    %c0_i32_0 = arith.constant 0 : i32
    %c0_i32_1 = arith.constant 0 : i32
    return %c0_i32, %c0_i32_0 : i32, i32
  }
  func.func @transform_2(%arg0: i32, %arg1: i32) -> (i32, i32) {
    %c0_i32 = arith.constant 0 : i32
    %c0_i32_0 = arith.constant 0 : i32
    %c0_i32_1 = arith.constant 0 : i32
    return %c0_i32, %c0_i32_0 : i32, i32
  }
  func.func @transform_3(%arg0: i32, %arg1: i32) -> (i32, i32, i32) {
    %c0_i32 = arith.constant 0 : i32
    %c0_i32_0 = arith.constant 0 : i32
    return %arg0, %c0_i32, %arg1 : i32, i32, i32
  }
}

module attributes {stable_mosaic.version = 11 : i64} {
  func.func @_maxpool2x2_add_kernel(%arg0: i32, %arg1: i32, %arg2: memref<1x64x128xf32, #tpu.memory_space<vmem>>, %arg3: memref<1x64x32xf32, #tpu.memory_space<vmem>>, %arg4: memref<64x32xf32, #tpu.memory_space<vmem>>, %arg5: memref<1x64x32xf32, #tpu.memory_space<vmem>>) attributes {dimension_semantics = [#tpu.dimension_semantics<parallel>, #tpu.dimension_semantics<parallel>], iteration_bounds = array<i64: 2, 4>, scalar_prefetch = 0 : i64, scratch_operands = 0 : i64, tpu.core_type = #tpu.core_type<tc>, window_params = [{transform_indices = @transform_0, window_bounds = array<i64: 1, 64, 128>}, {transform_indices = @transform_1, window_bounds = array<i64: 1, 64, 32>}, {pipeline_mode = #tpu.pipeline_mode<synchronous>, transform_indices = @transform_2, window_bounds = array<i64: 64, 32>}, {transform_indices = @transform_3, window_bounds = array<i64: 1, 64, 32>}]} {
    %c0 = arith.constant 0 : index
    %c0_0 = arith.constant 0 : index
    %c0_1 = arith.constant 0 : index
    %0 = vector.load %arg2[%c0, %c0_0, %c0_1] : memref<1x64x128xf32, #tpu.memory_space<vmem>>, vector<1x64x128xf32>
    %1 = vector.shape_cast %0 : vector<1x64x128xf32> to vector<64x128xf32>
    %2 = vector.extract_strided_slice %1 {offsets = [0, 0], sizes = [64, 64], strides = [1, 1]} : vector<64x128xf32> to vector<64x64xf32>
    %3 = vector.extract_strided_slice %1 {offsets = [0, 64], sizes = [64, 64], strides = [1, 1]} : vector<64x128xf32> to vector<64x64xf32>
    %4 = arith.maximumf %2, %3 : vector<64x64xf32>
    %5 = vector.extract_strided_slice %4 {offsets = [0, 1], sizes = [64, 63], strides = [1, 1]} : vector<64x64xf32> to vector<64x63xf32>
    %6 = vector.extract_strided_slice %4 {offsets = [0, 0], sizes = [64, 1], strides = [1, 1]} : vector<64x64xf32> to vector<64x1xf32>
    %7 = tpu.concatenate %5, %6 in 1 : vector<64x63xf32>, vector<64x1xf32> -> vector<64x64xf32>
    %8 = arith.maximumf %4, %7 : vector<64x64xf32>
    %c0_2 = arith.constant 0 : index
    %c0_3 = arith.constant 0 : index
    %9 = vector.load %arg4[%c0_2, %c0_3] : memref<64x32xf32, #tpu.memory_space<vmem>>, vector<64x32xf32>
    %cst = arith.constant dense<0.000000e+00> : vector<64x32xf32>
    %10 = tpu.matmul %8, %9, %cst {dimension_numbers = #tpu.dot_dimension_numbers<[1], [0], [0], [1], [0, 0, 1, 1], [], []>} : vector<64x64xf32>, vector<64x32xf32>, vector<64x32xf32> -> vector<64x32xf32>
    %c0_4 = arith.constant 0 : index
    %c0_5 = arith.constant 0 : index
    %c0_6 = arith.constant 0 : index
    %11 = vector.load %arg3[%c0_4, %c0_5, %c0_6] : memref<1x64x32xf32, #tpu.memory_space<vmem>>, vector<1x64x32xf32>
    %12 = vector.shape_cast %11 : vector<1x64x32xf32> to vector<64x32xf32>
    %13 = arith.addf %10, %12 : vector<64x32xf32>
    %c0_7 = arith.constant 0 : index
    %c0_8 = arith.constant 0 : index
    %c0_9 = arith.constant 0 : index
    %14 = vector.load %arg5[%c0_7, %c0_8, %c0_9] : memref<1x64x32xf32, #tpu.memory_space<vmem>>, vector<1x64x32xf32>
    %15 = vector.shape_cast %14 : vector<1x64x32xf32> to vector<64x32xf32>
    %16 = vector.shape_cast %13 : vector<64x32xf32> to vector<1x64x32xf32>
    tpu.vector_store %arg5[%c0_7, %c0_8, %c0_9], %16 {strides = array<i32>} : memref<1x64x32xf32, #tpu.memory_space<vmem>>, vector<1x64x32xf32>,
    return
  }
  func.func @transform_0(%arg0: i32, %arg1: i32) -> (i32, i32, i32) {
    %c0_i32 = arith.constant 0 : i32
    %c0_i32_0 = arith.constant 0 : i32
    return %arg0, %arg1, %c0_i32 : i32, i32, i32
  }
  func.func @transform_1(%arg0: i32, %arg1: i32) -> (i32, i32, i32) {
    %c0_i32 = arith.constant 0 : i32
    %c0_i32_0 = arith.constant 0 : i32
    return %arg0, %arg1, %c0_i32 : i32, i32, i32
  }
  func.func @transform_2(%arg0: i32, %arg1: i32) -> (i32, i32) {
    %c0_i32 = arith.constant 0 : i32
    %c0_i32_0 = arith.constant 0 : i32
    %c0_i32_1 = arith.constant 0 : i32
    return %c0_i32, %c0_i32_0 : i32, i32
  }
  func.func @transform_3(%arg0: i32, %arg1: i32) -> (i32, i32, i32) {
    %c0_i32 = arith.constant 0 : i32
    %c0_i32_0 = arith.constant 0 : i32
    return %arg0, %arg1, %c0_i32 : i32, i32, i32
  }
}

module attributes {stable_mosaic.version = 11 : i64} {
  func.func @_conv1x1_relu_kernel(%arg0: i32, %arg1: i32, %arg2: memref<1x8x1024xf32, #tpu.memory_space<vmem>>, %arg3: memref<8x8xf32, #tpu.memory_space<vmem>>, %arg4: memref<8x1xf32, #tpu.memory_space<vmem>>, %arg5: memref<1x8x1024xf32, #tpu.memory_space<vmem>>) attributes {dimension_semantics = [#tpu.dimension_semantics<parallel>, #tpu.dimension_semantics<parallel>], iteration_bounds = array<i64: 2, 1>, scalar_prefetch = 0 : i64, scratch_operands = 0 : i64, tpu.core_type = #tpu.core_type<tc>, window_params = [{transform_indices = @transform_0, window_bounds = array<i64: 1, 8, 1024>}, {pipeline_mode = #tpu.pipeline_mode<synchronous>, transform_indices = @transform_1, window_bounds = array<i64: 8, 8>}, {pipeline_mode = #tpu.pipeline_mode<synchronous>, transform_indices = @transform_2, window_bounds = array<i64: 8, 1>}, {transform_indices = @transform_3, window_bounds = array<i64: 1, 8, 1024>}]} {
    %c0 = arith.constant 0 : index
    %c0_0 = arith.constant 0 : index
    %c0_1 = arith.constant 0 : index
    %0 = vector.load %arg2[%c0, %c0_0, %c0_1] : memref<1x8x1024xf32, #tpu.memory_space<vmem>>, vector<1x8x1024xf32>
    %1 = vector.shape_cast %0 : vector<1x8x1024xf32> to vector<8x1024xf32>
    %c0_2 = arith.constant 0 : index
    %c0_3 = arith.constant 0 : index
    %2 = vector.load %arg3[%c0_2, %c0_3] : memref<8x8xf32, #tpu.memory_space<vmem>>, vector<8x8xf32>
    %cst = arith.constant dense<0.000000e+00> : vector<8x1024xf32>
    %3 = tpu.matmul %2, %1, %cst {dimension_numbers = #tpu.dot_dimension_numbers<[1], [0], [0], [1], [0, 0, 1, 1], [], []>} : vector<8x8xf32>, vector<8x1024xf32>, vector<8x1024xf32> -> vector<8x1024xf32>
    %c0_4 = arith.constant 0 : index
    %c0_5 = arith.constant 0 : index
    %4 = vector.load %arg4[%c0_4, %c0_5] : memref<8x1xf32, #tpu.memory_space<vmem>>, vector<8x1xf32>
    %5 = vector.broadcast %4 : vector<8x1xf32> to vector<8x1024xf32>
    %6 = arith.addf %3, %5 : vector<8x1024xf32>
    %cst_6 = arith.constant 0.000000e+00 : f32
    %7 = vector.broadcast %cst_6 : f32 to vector<8x1024xf32>
    %8 = arith.maximumf %6, %7 : vector<8x1024xf32>
    %c0_7 = arith.constant 0 : index
    %c0_8 = arith.constant 0 : index
    %c0_9 = arith.constant 0 : index
    %9 = vector.load %arg5[%c0_7, %c0_8, %c0_9] : memref<1x8x1024xf32, #tpu.memory_space<vmem>>, vector<1x8x1024xf32>
    %10 = vector.shape_cast %9 : vector<1x8x1024xf32> to vector<8x1024xf32>
    %11 = vector.shape_cast %8 : vector<8x1024xf32> to vector<1x8x1024xf32>
    tpu.vector_store %arg5[%c0_7, %c0_8, %c0_9], %11 {strides = array<i32>} : memref<1x8x1024xf32, #tpu.memory_space<vmem>>, vector<1x8x1024xf32>,
    return
  }
  func.func @transform_0(%arg0: i32, %arg1: i32) -> (i32, i32, i32) {
    %c0_i32 = arith.constant 0 : i32
    %c0_i32_0 = arith.constant 0 : i32
    return %arg0, %c0_i32, %arg1 : i32, i32, i32
  }
  func.func @transform_1(%arg0: i32, %arg1: i32) -> (i32, i32) {
    %c0_i32 = arith.constant 0 : i32
    %c0_i32_0 = arith.constant 0 : i32
    %c0_i32_1 = arith.constant 0 : i32
    return %c0_i32, %c0_i32_0 : i32, i32
  }
  func.func @transform_2(%arg0: i32, %arg1: i32) -> (i32, i32) {
    %c0_i32 = arith.constant 0 : i32
    %c0_i32_0 = arith.constant 0 : i32
    %c0_i32_1 = arith.constant 0 : i32
    return %c0_i32, %c0_i32_0 : i32, i32
  }
  func.func @transform_3(%arg0: i32, %arg1: i32) -> (i32, i32, i32) {
    %c0_i32 = arith.constant 0 : i32
    %c0_i32_0 = arith.constant 0 : i32
    return %arg0, %c0_i32, %arg1 : i32, i32, i32
  }
}

module attributes {stable_mosaic.version = 11 : i64} {
  func.func @_conv1x1_relu_kernel(%arg0: i32, %arg1: i32, %arg2: memref<1x4x256xf32, #tpu.memory_space<vmem>>, %arg3: memref<8x4xf32, #tpu.memory_space<vmem>>, %arg4: memref<8x1xf32, #tpu.memory_space<vmem>>, %arg5: memref<1x8x256xf32, #tpu.memory_space<vmem>>) attributes {dimension_semantics = [#tpu.dimension_semantics<parallel>, #tpu.dimension_semantics<parallel>], iteration_bounds = array<i64: 2, 1>, scalar_prefetch = 0 : i64, scratch_operands = 0 : i64, tpu.core_type = #tpu.core_type<tc>, window_params = [{transform_indices = @transform_0, window_bounds = array<i64: 1, 4, 256>}, {pipeline_mode = #tpu.pipeline_mode<synchronous>, transform_indices = @transform_1, window_bounds = array<i64: 8, 4>}, {pipeline_mode = #tpu.pipeline_mode<synchronous>, transform_indices = @transform_2, window_bounds = array<i64: 8, 1>}, {transform_indices = @transform_3, window_bounds = array<i64: 1, 8, 256>}]} {
    %c0 = arith.constant 0 : index
    %c0_0 = arith.constant 0 : index
    %c0_1 = arith.constant 0 : index
    %0 = vector.load %arg2[%c0, %c0_0, %c0_1] : memref<1x4x256xf32, #tpu.memory_space<vmem>>, vector<1x4x256xf32>
    %1 = vector.shape_cast %0 : vector<1x4x256xf32> to vector<4x256xf32>
    %c0_2 = arith.constant 0 : index
    %c0_3 = arith.constant 0 : index
    %2 = vector.load %arg3[%c0_2, %c0_3] : memref<8x4xf32, #tpu.memory_space<vmem>>, vector<8x4xf32>
    %cst = arith.constant dense<0.000000e+00> : vector<8x256xf32>
    %3 = tpu.matmul %2, %1, %cst {dimension_numbers = #tpu.dot_dimension_numbers<[1], [0], [0], [1], [0, 0, 1, 1], [], []>} : vector<8x4xf32>, vector<4x256xf32>, vector<8x256xf32> -> vector<8x256xf32>
    %c0_4 = arith.constant 0 : index
    %c0_5 = arith.constant 0 : index
    %4 = vector.load %arg4[%c0_4, %c0_5] : memref<8x1xf32, #tpu.memory_space<vmem>>, vector<8x1xf32>
    %5 = vector.broadcast %4 : vector<8x1xf32> to vector<8x256xf32>
    %6 = arith.addf %3, %5 : vector<8x256xf32>
    %cst_6 = arith.constant 0.000000e+00 : f32
    %7 = vector.broadcast %cst_6 : f32 to vector<8x256xf32>
    %8 = arith.maximumf %6, %7 : vector<8x256xf32>
    %c0_7 = arith.constant 0 : index
    %c0_8 = arith.constant 0 : index
    %c0_9 = arith.constant 0 : index
    %9 = vector.load %arg5[%c0_7, %c0_8, %c0_9] : memref<1x8x256xf32, #tpu.memory_space<vmem>>, vector<1x8x256xf32>
    %10 = vector.shape_cast %9 : vector<1x8x256xf32> to vector<8x256xf32>
    %11 = vector.shape_cast %8 : vector<8x256xf32> to vector<1x8x256xf32>
    tpu.vector_store %arg5[%c0_7, %c0_8, %c0_9], %11 {strides = array<i32>} : memref<1x8x256xf32, #tpu.memory_space<vmem>>, vector<1x8x256xf32>,
    return
  }
  func.func @transform_0(%arg0: i32, %arg1: i32) -> (i32, i32, i32) {
    %c0_i32 = arith.constant 0 : i32
    %c0_i32_0 = arith.constant 0 : i32
    return %arg0, %c0_i32, %arg1 : i32, i32, i32
  }
  func.func @transform_1(%arg0: i32, %arg1: i32) -> (i32, i32) {
    %c0_i32 = arith.constant 0 : i32
    %c0_i32_0 = arith.constant 0 : i32
    %c0_i32_1 = arith.constant 0 : i32
    return %c0_i32, %c0_i32_0 : i32, i32
  }
  func.func @transform_2(%arg0: i32, %arg1: i32) -> (i32, i32) {
    %c0_i32 = arith.constant 0 : i32
    %c0_i32_0 = arith.constant 0 : i32
    %c0_i32_1 = arith.constant 0 : i32
    return %c0_i32, %c0_i32_0 : i32, i32
  }
  func.func @transform_3(%arg0: i32, %arg1: i32) -> (i32, i32, i32) {
    %c0_i32 = arith.constant 0 : i32
    %c0_i32_0 = arith.constant 0 : i32
    return %arg0, %c0_i32, %arg1 : i32, i32, i32
  }
}

module attributes {stable_mosaic.version = 11 : i64} {
  func.func @_maxpool2x2_add_kernel(%arg0: i32, %arg1: i32, %arg2: memref<1x64x64xf32, #tpu.memory_space<vmem>>, %arg3: memref<1x64x16xf32, #tpu.memory_space<vmem>>, %arg4: memref<32x16xf32, #tpu.memory_space<vmem>>, %arg5: memref<1x64x16xf32, #tpu.memory_space<vmem>>) attributes {dimension_semantics = [#tpu.dimension_semantics<parallel>, #tpu.dimension_semantics<parallel>], iteration_bounds = array<i64: 2, 2>, scalar_prefetch = 0 : i64, scratch_operands = 0 : i64, tpu.core_type = #tpu.core_type<tc>, window_params = [{transform_indices = @transform_0, window_bounds = array<i64: 1, 64, 64>}, {transform_indices = @transform_1, window_bounds = array<i64: 1, 64, 16>}, {pipeline_mode = #tpu.pipeline_mode<synchronous>, transform_indices = @transform_2, window_bounds = array<i64: 32, 16>}, {transform_indices = @transform_3, window_bounds = array<i64: 1, 64, 16>}]} {
    %c0 = arith.constant 0 : index
    %c0_0 = arith.constant 0 : index
    %c0_1 = arith.constant 0 : index
    %0 = vector.load %arg2[%c0, %c0_0, %c0_1] : memref<1x64x64xf32, #tpu.memory_space<vmem>>, vector<1x64x64xf32>
    %1 = vector.shape_cast %0 : vector<1x64x64xf32> to vector<64x64xf32>
    %2 = vector.extract_strided_slice %1 {offsets = [0, 0], sizes = [64, 32], strides = [1, 1]} : vector<64x64xf32> to vector<64x32xf32>
    %3 = vector.extract_strided_slice %1 {offsets = [0, 32], sizes = [64, 32], strides = [1, 1]} : vector<64x64xf32> to vector<64x32xf32>
    %4 = arith.maximumf %2, %3 : vector<64x32xf32>
    %5 = vector.extract_strided_slice %4 {offsets = [0, 1], sizes = [64, 31], strides = [1, 1]} : vector<64x32xf32> to vector<64x31xf32>
    %6 = vector.extract_strided_slice %4 {offsets = [0, 0], sizes = [64, 1], strides = [1, 1]} : vector<64x32xf32> to vector<64x1xf32>
    %7 = tpu.concatenate %5, %6 in 1 : vector<64x31xf32>, vector<64x1xf32> -> vector<64x32xf32>
    %8 = arith.maximumf %4, %7 : vector<64x32xf32>
    %c0_2 = arith.constant 0 : index
    %c0_3 = arith.constant 0 : index
    %9 = vector.load %arg4[%c0_2, %c0_3] : memref<32x16xf32, #tpu.memory_space<vmem>>, vector<32x16xf32>
    %cst = arith.constant dense<0.000000e+00> : vector<64x16xf32>
    %10 = tpu.matmul %8, %9, %cst {dimension_numbers = #tpu.dot_dimension_numbers<[1], [0], [0], [1], [0, 0, 1, 1], [], []>} : vector<64x32xf32>, vector<32x16xf32>, vector<64x16xf32> -> vector<64x16xf32>
    %c0_4 = arith.constant 0 : index
    %c0_5 = arith.constant 0 : index
    %c0_6 = arith.constant 0 : index
    %11 = vector.load %arg3[%c0_4, %c0_5, %c0_6] : memref<1x64x16xf32, #tpu.memory_space<vmem>>, vector<1x64x16xf32>
    %12 = vector.shape_cast %11 : vector<1x64x16xf32> to vector<64x16xf32>
    %13 = arith.addf %10, %12 : vector<64x16xf32>
    %c0_7 = arith.constant 0 : index
    %c0_8 = arith.constant 0 : index
    %c0_9 = arith.constant 0 : index
    %14 = vector.load %arg5[%c0_7, %c0_8, %c0_9] : memref<1x64x16xf32, #tpu.memory_space<vmem>>, vector<1x64x16xf32>
    %15 = vector.shape_cast %14 : vector<1x64x16xf32> to vector<64x16xf32>
    %16 = vector.shape_cast %13 : vector<64x16xf32> to vector<1x64x16xf32>
    tpu.vector_store %arg5[%c0_7, %c0_8, %c0_9], %16 {strides = array<i32>} : memref<1x64x16xf32, #tpu.memory_space<vmem>>, vector<1x64x16xf32>,
    return
  }
  func.func @transform_0(%arg0: i32, %arg1: i32) -> (i32, i32, i32) {
    %c0_i32 = arith.constant 0 : i32
    %c0_i32_0 = arith.constant 0 : i32
    return %arg0, %arg1, %c0_i32 : i32, i32, i32
  }
  func.func @transform_1(%arg0: i32, %arg1: i32) -> (i32, i32, i32) {
    %c0_i32 = arith.constant 0 : i32
    %c0_i32_0 = arith.constant 0 : i32
    return %arg0, %arg1, %c0_i32 : i32, i32, i32
  }
  func.func @transform_2(%arg0: i32, %arg1: i32) -> (i32, i32) {
    %c0_i32 = arith.constant 0 : i32
    %c0_i32_0 = arith.constant 0 : i32
    %c0_i32_1 = arith.constant 0 : i32
    return %c0_i32, %c0_i32_0 : i32, i32
  }
  func.func @transform_3(%arg0: i32, %arg1: i32) -> (i32, i32, i32) {
    %c0_i32 = arith.constant 0 : i32
    %c0_i32_0 = arith.constant 0 : i32
    return %arg0, %arg1, %c0_i32 : i32, i32, i32
  }
}

module attributes {stable_mosaic.version = 11 : i64} {
  func.func @_sa_residual_kernel(%arg0: i32, %arg1: memref<1x8x256xf32, #tpu.memory_space<vmem>>, %arg2: memref<1x8x256xf32, #tpu.memory_space<vmem>>, %arg3: memref<5x256xf32, #tpu.memory_space<vmem>>, %arg4: memref<50xf32, #tpu.memory_space<smem>>, %arg5: memref<1x8x256xf32, #tpu.memory_space<vmem>>, %arg6: memref<2x512xf32, #tpu.memory_space<vmem>>) attributes {dimension_semantics = [#tpu.dimension_semantics<parallel>], iteration_bounds = array<i64: 2>, scalar_prefetch = 0 : i64, scratch_operands = 1 : i64, tpu.core_type = #tpu.core_type<tc>, window_params = [{transform_indices = @transform_0, window_bounds = array<i64: 1, 8, 256>}, {transform_indices = @transform_1, window_bounds = array<i64: 1, 8, 256>}, {pipeline_mode = #tpu.pipeline_mode<synchronous>, transform_indices = @transform_2, window_bounds = array<i64: 5, 256>}, {transform_indices = @transform_3, window_bounds = array<i64: 50>}, {transform_indices = @transform_4, window_bounds = array<i64: 1, 8, 256>}]} {
    %c0 = arith.constant 0 : index
    %0 = memref.load %arg4[%c0] : memref<50xf32, #tpu.memory_space<smem>>
    %c1 = arith.constant 1 : index
    %1 = memref.load %arg4[%c1] : memref<50xf32, #tpu.memory_space<smem>>
    %c2 = arith.constant 2 : index
    %2 = memref.load %arg4[%c2] : memref<50xf32, #tpu.memory_space<smem>>
    %c3 = arith.constant 3 : index
    %3 = memref.load %arg4[%c3] : memref<50xf32, #tpu.memory_space<smem>>
    %c4 = arith.constant 4 : index
    %4 = memref.load %arg4[%c4] : memref<50xf32, #tpu.memory_space<smem>>
    %c5 = arith.constant 5 : index
    %5 = memref.load %arg4[%c5] : memref<50xf32, #tpu.memory_space<smem>>
    %c6 = arith.constant 6 : index
    %6 = memref.load %arg4[%c6] : memref<50xf32, #tpu.memory_space<smem>>
    %c7 = arith.constant 7 : index
    %7 = memref.load %arg4[%c7] : memref<50xf32, #tpu.memory_space<smem>>
    %c8 = arith.constant 8 : index
    %8 = memref.load %arg4[%c8] : memref<50xf32, #tpu.memory_space<smem>>
    %c9 = arith.constant 9 : index
    %9 = memref.load %arg4[%c9] : memref<50xf32, #tpu.memory_space<smem>>
    %c10 = arith.constant 10 : index
    %10 = memref.load %arg4[%c10] : memref<50xf32, #tpu.memory_space<smem>>
    %c11 = arith.constant 11 : index
    %11 = memref.load %arg4[%c11] : memref<50xf32, #tpu.memory_space<smem>>
    %c12 = arith.constant 12 : index
    %12 = memref.load %arg4[%c12] : memref<50xf32, #tpu.memory_space<smem>>
    %c13 = arith.constant 13 : index
    %13 = memref.load %arg4[%c13] : memref<50xf32, #tpu.memory_space<smem>>
    %c14 = arith.constant 14 : index
    %14 = memref.load %arg4[%c14] : memref<50xf32, #tpu.memory_space<smem>>
    %c15 = arith.constant 15 : index
    %15 = memref.load %arg4[%c15] : memref<50xf32, #tpu.memory_space<smem>>
    %c16 = arith.constant 16 : index
    %16 = memref.load %arg4[%c16] : memref<50xf32, #tpu.memory_space<smem>>
    %c17 = arith.constant 17 : index
    %17 = memref.load %arg4[%c17] : memref<50xf32, #tpu.memory_space<smem>>
    %c18 = arith.constant 18 : index
    %18 = memref.load %arg4[%c18] : memref<50xf32, #tpu.memory_space<smem>>
    %c19 = arith.constant 19 : index
    %19 = memref.load %arg4[%c19] : memref<50xf32, #tpu.memory_space<smem>>
    %c20 = arith.constant 20 : index
    %20 = memref.load %arg4[%c20] : memref<50xf32, #tpu.memory_space<smem>>
    %c21 = arith.constant 21 : index
    %21 = memref.load %arg4[%c21] : memref<50xf32, #tpu.memory_space<smem>>
    %c22 = arith.constant 22 : index
    %22 = memref.load %arg4[%c22] : memref<50xf32, #tpu.memory_space<smem>>
    %c23 = arith.constant 23 : index
    %23 = memref.load %arg4[%c23] : memref<50xf32, #tpu.memory_space<smem>>
    %c24 = arith.constant 24 : index
    %24 = memref.load %arg4[%c24] : memref<50xf32, #tpu.memory_space<smem>>
    %c25 = arith.constant 25 : index
    %25 = memref.load %arg4[%c25] : memref<50xf32, #tpu.memory_space<smem>>
    %c26 = arith.constant 26 : index
    %26 = memref.load %arg4[%c26] : memref<50xf32, #tpu.memory_space<smem>>
    %c27 = arith.constant 27 : index
    %27 = memref.load %arg4[%c27] : memref<50xf32, #tpu.memory_space<smem>>
    %c28 = arith.constant 28 : index
    %28 = memref.load %arg4[%c28] : memref<50xf32, #tpu.memory_space<smem>>
    %c29 = arith.constant 29 : index
    %29 = memref.load %arg4[%c29] : memref<50xf32, #tpu.memory_space<smem>>
    %c30 = arith.constant 30 : index
    %30 = memref.load %arg4[%c30] : memref<50xf32, #tpu.memory_space<smem>>
    %c31 = arith.constant 31 : index
    %31 = memref.load %arg4[%c31] : memref<50xf32, #tpu.memory_space<smem>>
    %c32 = arith.constant 32 : index
    %32 = memref.load %arg4[%c32] : memref<50xf32, #tpu.memory_space<smem>>
    %c33 = arith.constant 33 : index
    %33 = memref.load %arg4[%c33] : memref<50xf32, #tpu.memory_space<smem>>
    %c34 = arith.constant 34 : index
    %34 = memref.load %arg4[%c34] : memref<50xf32, #tpu.memory_space<smem>>
    %c35 = arith.constant 35 : index
    %35 = memref.load %arg4[%c35] : memref<50xf32, #tpu.memory_space<smem>>
    %c36 = arith.constant 36 : index
    %36 = memref.load %arg4[%c36] : memref<50xf32, #tpu.memory_space<smem>>
    %c37 = arith.constant 37 : index
    %37 = memref.load %arg4[%c37] : memref<50xf32, #tpu.memory_space<smem>>
    %c38 = arith.constant 38 : index
    %38 = memref.load %arg4[%c38] : memref<50xf32, #tpu.memory_space<smem>>
    %c39 = arith.constant 39 : index
    %39 = memref.load %arg4[%c39] : memref<50xf32, #tpu.memory_space<smem>>
    %c40 = arith.constant 40 : index
    %40 = memref.load %arg4[%c40] : memref<50xf32, #tpu.memory_space<smem>>
    %c41 = arith.constant 41 : index
    %41 = memref.load %arg4[%c41] : memref<50xf32, #tpu.memory_space<smem>>
    %c42 = arith.constant 42 : index
    %42 = memref.load %arg4[%c42] : memref<50xf32, #tpu.memory_space<smem>>
    %c43 = arith.constant 43 : index
    %43 = memref.load %arg4[%c43] : memref<50xf32, #tpu.memory_space<smem>>
    %c44 = arith.constant 44 : index
    %44 = memref.load %arg4[%c44] : memref<50xf32, #tpu.memory_space<smem>>
    %c45 = arith.constant 45 : index
    %45 = memref.load %arg4[%c45] : memref<50xf32, #tpu.memory_space<smem>>
    %c46 = arith.constant 46 : index
    %46 = memref.load %arg4[%c46] : memref<50xf32, #tpu.memory_space<smem>>
    %c47 = arith.constant 47 : index
    %47 = memref.load %arg4[%c47] : memref<50xf32, #tpu.memory_space<smem>>
    %c48 = arith.constant 48 : index
    %48 = memref.load %arg4[%c48] : memref<50xf32, #tpu.memory_space<smem>>
    %c49 = arith.constant 49 : index
    %49 = memref.load %arg4[%c49] : memref<50xf32, #tpu.memory_space<smem>>
    %c0_0 = arith.constant 0 : index
    %c0_1 = arith.constant 0 : index
    %50 = vector.load %arg3[%c0_0, %c0_1] : memref<5x256xf32, #tpu.memory_space<vmem>>, vector<5x256xf32>
    %c0_i32 = arith.constant 0 : i32
    %51 = arith.cmpi eq, %arg0, %c0_i32 : i32
    %52 = arith.extui %51 : i1 to i32
    %c0_i32_2 = arith.constant 0 : i32
    %53 = arith.cmpi ne, %52, %c0_i32_2 : i32
    scf.if %53 {
      %cst_31 = arith.constant 0.000000e+00 : f32
      %313 = vector.broadcast %cst_31 : f32 to vector<2x512xf32>
      %c0_32 = arith.constant 0 : index
      %c0_33 = arith.constant 0 : index
      %314 = vector.load %arg6[%c0_32, %c0_33] : memref<2x512xf32, #tpu.memory_space<vmem>>, vector<2x512xf32>
      tpu.vector_store %arg6[%c0_32, %c0_33], %313 {strides = array<i32>} : memref<2x512xf32, #tpu.memory_space<vmem>>, vector<2x512xf32>,
    } else {
    }
    %cst = arith.constant 0.000000e+00 : f32
    %54 = vector.broadcast %cst : f32 to vector<1x256xf32>
    %cst_3 = arith.constant 0xFF800000 : f32
    %55 = vector.broadcast %cst_3 : f32 to vector<1x256xf32>
    %c0_i32_4 = arith.constant 0 : i32
    %56 = tpu.assume_multiple %c0_i32_4, 8 : i32
    %c0_5 = arith.constant 0 : index
    %57 = arith.index_cast %56 : i32 to index
    %c0_6 = arith.constant 0 : index
    %58 = vector.load %arg1[%c0_5, %57, %c0_6] : memref<1x8x256xf32, #tpu.memory_space<vmem>>, vector<1x8x256xf32>
    %59 = vector.shape_cast %58 : vector<1x8x256xf32> to vector<8x256xf32>
    %cst_7 = arith.constant dense<0.000000e+00> : vector<256xf32>
    %60 = vector.multi_reduction <add>, %59, %cst_7 [0] : vector<8x256xf32> to vector<256xf32>
    %61 = vector.shape_cast %60 : vector<256xf32> to vector<1x256xf32>
    %62 = arith.addf %54, %61 : vector<1x256xf32>
    %cst_8 = arith.constant dense<0xFF800000> : vector<256xf32>
    %63 = vector.multi_reduction <maximumf>, %59, %cst_8 [0] : vector<8x256xf32> to vector<256xf32>
    %64 = vector.shape_cast %63 : vector<256xf32> to vector<1x256xf32>
    %65 = arith.maximumf %55, %64 : vector<1x256xf32>
    %cst_9 = arith.constant 1.250000e-01 : f32
    %66 = vector.broadcast %cst_9 : f32 to vector<1x256xf32>
    %67 = arith.mulf %62, %66 : vector<1x256xf32>
    %c0_10 = arith.constant 0 : index
    %c128 = arith.constant 128 : index
    %68 = vector.load %arg6[%c0_10, %c128] : memref<2x512xf32, #tpu.memory_space<vmem>>, vector<1x256xf32>
    tpu.vector_store %arg6[%c0_10, %c128], %67 {strides = array<i32>} : memref<2x512xf32, #tpu.memory_space<vmem>>, vector<1x256xf32>,
    %c1_11 = arith.constant 1 : index
    %c128_12 = arith.constant 128 : index
    %69 = vector.load %arg6[%c1_11, %c128_12] : memref<2x512xf32, #tpu.memory_space<vmem>>, vector<1x256xf32>
    tpu.vector_store %arg6[%c1_11, %c128_12], %65 {strides = array<i32>} : memref<2x512xf32, #tpu.memory_space<vmem>>, vector<1x256xf32>,
    %c0_13 = arith.constant 0 : index
    %c0_14 = arith.constant 0 : index
    %70 = vector.load %arg6[%c0_13, %c0_14] : memref<2x512xf32, #tpu.memory_space<vmem>>, vector<1x512xf32>
    %c1_15 = arith.constant 1 : index
    %c0_16 = arith.constant 0 : index
    %71 = vector.load %arg6[%c1_15, %c0_16] : memref<2x512xf32, #tpu.memory_space<vmem>>, vector<1x512xf32>
    %cst_17 = arith.constant 0.000000e+00 : f32
    %72 = vector.broadcast %cst_17 : f32 to vector<1x256xf32>
    %cst_18 = arith.constant 0.000000e+00 : f32
    %73 = vector.broadcast %cst_18 : f32 to vector<1x256xf32>
    %74 = vector.extract_strided_slice %70 {offsets = [0, 94], sizes = [1, 256], strides = [1, 1]} : vector<1x512xf32> to vector<1x256xf32>
    %75 = vector.broadcast %0 : f32 to vector<1x256xf32>
    %76 = arith.mulf %75, %74 : vector<1x256xf32>
    %77 = arith.addf %73, %76 : vector<1x256xf32>
    %78 = vector.extract_strided_slice %71 {offsets = [0, 94], sizes = [1, 256], strides = [1, 1]} : vector<1x512xf32> to vector<1x256xf32>
    %79 = vector.broadcast %25 : f32 to vector<1x256xf32>
    %80 = arith.mulf %79, %78 : vector<1x256xf32>
    %81 = arith.addf %77, %80 : vector<1x256xf32>
    %82 = vector.extract_strided_slice %70 {offsets = [0, 110], sizes = [1, 256], strides = [1, 1]} : vector<1x512xf32> to vector<1x256xf32>
    %83 = vector.broadcast %5 : f32 to vector<1x256xf32>
    %84 = arith.mulf %83, %82 : vector<1x256xf32>
    %85 = arith.addf %81, %84 : vector<1x256xf32>
    %86 = vector.extract_strided_slice %71 {offsets = [0, 110], sizes = [1, 256], strides = [1, 1]} : vector<1x512xf32> to vector<1x256xf32>
    %87 = vector.broadcast %30 : f32 to vector<1x256xf32>
    %88 = arith.mulf %87, %86 : vector<1x256xf32>
    %89 = arith.addf %85, %88 : vector<1x256xf32>
    %90 = vector.extract_strided_slice %70 {offsets = [0, 126], sizes = [1, 256], strides = [1, 1]} : vector<1x512xf32> to vector<1x256xf32>
    %91 = vector.broadcast %10 : f32 to vector<1x256xf32>
    %92 = arith.mulf %91, %90 : vector<1x256xf32>
    %93 = arith.addf %89, %92 : vector<1x256xf32>
    %94 = vector.extract_strided_slice %71 {offsets = [0, 126], sizes = [1, 256], strides = [1, 1]} : vector<1x512xf32> to vector<1x256xf32>
    %95 = vector.broadcast %35 : f32 to vector<1x256xf32>
    %96 = arith.mulf %95, %94 : vector<1x256xf32>
    %97 = arith.addf %93, %96 : vector<1x256xf32>
    %98 = vector.extract_strided_slice %70 {offsets = [0, 142], sizes = [1, 256], strides = [1, 1]} : vector<1x512xf32> to vector<1x256xf32>
    %99 = vector.broadcast %15 : f32 to vector<1x256xf32>
    %100 = arith.mulf %99, %98 : vector<1x256xf32>
    %101 = arith.addf %97, %100 : vector<1x256xf32>
    %102 = vector.extract_strided_slice %71 {offsets = [0, 142], sizes = [1, 256], strides = [1, 1]} : vector<1x512xf32> to vector<1x256xf32>
    %103 = vector.broadcast %40 : f32 to vector<1x256xf32>
    %104 = arith.mulf %103, %102 : vector<1x256xf32>
    %105 = arith.addf %101, %104 : vector<1x256xf32>
    %106 = vector.extract_strided_slice %70 {offsets = [0, 158], sizes = [1, 256], strides = [1, 1]} : vector<1x512xf32> to vector<1x256xf32>
    %107 = vector.broadcast %20 : f32 to vector<1x256xf32>
    %108 = arith.mulf %107, %106 : vector<1x256xf32>
    %109 = arith.addf %105, %108 : vector<1x256xf32>
    %110 = vector.extract_strided_slice %71 {offsets = [0, 158], sizes = [1, 256], strides = [1, 1]} : vector<1x512xf32> to vector<1x256xf32>
    %111 = vector.broadcast %45 : f32 to vector<1x256xf32>
    %112 = arith.mulf %111, %110 : vector<1x256xf32>
    %113 = arith.addf %109, %112 : vector<1x256xf32>
    %114 = vector.extract_strided_slice %50 {offsets = [0, 0], sizes = [1, 256], strides = [1, 1]} : vector<5x256xf32> to vector<1x256xf32>
    %115 = arith.mulf %114, %113 : vector<1x256xf32>
    %116 = arith.addf %72, %115 : vector<1x256xf32>
    %cst_19 = arith.constant 0.000000e+00 : f32
    %117 = vector.broadcast %cst_19 : f32 to vector<1x256xf32>
    %118 = vector.extract_strided_slice %70 {offsets = [0, 95], sizes = [1, 256], strides = [1, 1]} : vector<1x512xf32> to vector<1x256xf32>
    %119 = vector.broadcast %1 : f32 to vector<1x256xf32>
    %120 = arith.mulf %119, %118 : vector<1x256xf32>
    %121 = arith.addf %117, %120 : vector<1x256xf32>
    %122 = vector.extract_strided_slice %71 {offsets = [0, 95], sizes = [1, 256], strides = [1, 1]} : vector<1x512xf32> to vector<1x256xf32>
    %123 = vector.broadcast %26 : f32 to vector<1x256xf32>
    %124 = arith.mulf %123, %122 : vector<1x256xf32>
    %125 = arith.addf %121, %124 : vector<1x256xf32>
    %126 = vector.extract_strided_slice %70 {offsets = [0, 111], sizes = [1, 256], strides = [1, 1]} : vector<1x512xf32> to vector<1x256xf32>
    %127 = vector.broadcast %6 : f32 to vector<1x256xf32>
    %128 = arith.mulf %127, %126 : vector<1x256xf32>
    %129 = arith.addf %125, %128 : vector<1x256xf32>
    %130 = vector.extract_strided_slice %71 {offsets = [0, 111], sizes = [1, 256], strides = [1, 1]} : vector<1x512xf32> to vector<1x256xf32>
    %131 = vector.broadcast %31 : f32 to vector<1x256xf32>
    %132 = arith.mulf %131, %130 : vector<1x256xf32>
    %133 = arith.addf %129, %132 : vector<1x256xf32>
    %134 = vector.extract_strided_slice %70 {offsets = [0, 127], sizes = [1, 256], strides = [1, 1]} : vector<1x512xf32> to vector<1x256xf32>
    %135 = vector.broadcast %11 : f32 to vector<1x256xf32>
    %136 = arith.mulf %135, %134 : vector<1x256xf32>
    %137 = arith.addf %133, %136 : vector<1x256xf32>
    %138 = vector.extract_strided_slice %71 {offsets = [0, 127], sizes = [1, 256], strides = [1, 1]} : vector<1x512xf32> to vector<1x256xf32>
    %139 = vector.broadcast %36 : f32 to vector<1x256xf32>
    %140 = arith.mulf %139, %138 : vector<1x256xf32>
    %141 = arith.addf %137, %140 : vector<1x256xf32>
    %142 = vector.extract_strided_slice %70 {offsets = [0, 143], sizes = [1, 256], strides = [1, 1]} : vector<1x512xf32> to vector<1x256xf32>
    %143 = vector.broadcast %16 : f32 to vector<1x256xf32>
    %144 = arith.mulf %143, %142 : vector<1x256xf32>
    %145 = arith.addf %141, %144 : vector<1x256xf32>
    %146 = vector.extract_strided_slice %71 {offsets = [0, 143], sizes = [1, 256], strides = [1, 1]} : vector<1x512xf32> to vector<1x256xf32>
    %147 = vector.broadcast %41 : f32 to vector<1x256xf32>
    %148 = arith.mulf %147, %146 : vector<1x256xf32>
    %149 = arith.addf %145, %148 : vector<1x256xf32>
    %150 = vector.extract_strided_slice %70 {offsets = [0, 159], sizes = [1, 256], strides = [1, 1]} : vector<1x512xf32> to vector<1x256xf32>
    %151 = vector.broadcast %21 : f32 to vector<1x256xf32>
    %152 = arith.mulf %151, %150 : vector<1x256xf32>
    %153 = arith.addf %149, %152 : vector<1x256xf32>
    %154 = vector.extract_strided_slice %71 {offsets = [0, 159], sizes = [1, 256], strides = [1, 1]} : vector<1x512xf32> to vector<1x256xf32>
    %155 = vector.broadcast %46 : f32 to vector<1x256xf32>
    %156 = arith.mulf %155, %154 : vector<1x256xf32>
    %157 = arith.addf %153, %156 : vector<1x256xf32>
    %158 = vector.extract_strided_slice %50 {offsets = [1, 0], sizes = [1, 256], strides = [1, 1]} : vector<5x256xf32> to vector<1x256xf32>
    %159 = arith.mulf %158, %157 : vector<1x256xf32>
    %160 = arith.addf %116, %159 : vector<1x256xf32>
    %cst_20 = arith.constant 0.000000e+00 : f32
    %161 = vector.broadcast %cst_20 : f32 to vector<1x256xf32>
    %162 = vector.extract_strided_slice %70 {offsets = [0, 96], sizes = [1, 256], strides = [1, 1]} : vector<1x512xf32> to vector<1x256xf32>
    %163 = vector.broadcast %2 : f32 to vector<1x256xf32>
    %164 = arith.mulf %163, %162 : vector<1x256xf32>
    %165 = arith.addf %161, %164 : vector<1x256xf32>
    %166 = vector.extract_strided_slice %71 {offsets = [0, 96], sizes = [1, 256], strides = [1, 1]} : vector<1x512xf32> to vector<1x256xf32>
    %167 = vector.broadcast %27 : f32 to vector<1x256xf32>
    %168 = arith.mulf %167, %166 : vector<1x256xf32>
    %169 = arith.addf %165, %168 : vector<1x256xf32>
    %170 = vector.extract_strided_slice %70 {offsets = [0, 112], sizes = [1, 256], strides = [1, 1]} : vector<1x512xf32> to vector<1x256xf32>
    %171 = vector.broadcast %7 : f32 to vector<1x256xf32>
    %172 = arith.mulf %171, %170 : vector<1x256xf32>
    %173 = arith.addf %169, %172 : vector<1x256xf32>
    %174 = vector.extract_strided_slice %71 {offsets = [0, 112], sizes = [1, 256], strides = [1, 1]} : vector<1x512xf32> to vector<1x256xf32>
    %175 = vector.broadcast %32 : f32 to vector<1x256xf32>
    %176 = arith.mulf %175, %174 : vector<1x256xf32>
    %177 = arith.addf %173, %176 : vector<1x256xf32>
    %178 = vector.extract_strided_slice %70 {offsets = [0, 128], sizes = [1, 256], strides = [1, 1]} : vector<1x512xf32> to vector<1x256xf32>
    %179 = vector.broadcast %12 : f32 to vector<1x256xf32>
    %180 = arith.mulf %179, %178 : vector<1x256xf32>
    %181 = arith.addf %177, %180 : vector<1x256xf32>
    %182 = vector.extract_strided_slice %71 {offsets = [0, 128], sizes = [1, 256], strides = [1, 1]} : vector<1x512xf32> to vector<1x256xf32>
    %183 = vector.broadcast %37 : f32 to vector<1x256xf32>
    %184 = arith.mulf %183, %182 : vector<1x256xf32>
    %185 = arith.addf %181, %184 : vector<1x256xf32>
    %186 = vector.extract_strided_slice %70 {offsets = [0, 144], sizes = [1, 256], strides = [1, 1]} : vector<1x512xf32> to vector<1x256xf32>
    %187 = vector.broadcast %17 : f32 to vector<1x256xf32>
    %188 = arith.mulf %187, %186 : vector<1x256xf32>
    %189 = arith.addf %185, %188 : vector<1x256xf32>
    %190 = vector.extract_strided_slice %71 {offsets = [0, 144], sizes = [1, 256], strides = [1, 1]} : vector<1x512xf32> to vector<1x256xf32>
    %191 = vector.broadcast %42 : f32 to vector<1x256xf32>
    %192 = arith.mulf %191, %190 : vector<1x256xf32>
    %193 = arith.addf %189, %192 : vector<1x256xf32>
    %194 = vector.extract_strided_slice %70 {offsets = [0, 160], sizes = [1, 256], strides = [1, 1]} : vector<1x512xf32> to vector<1x256xf32>
    %195 = vector.broadcast %22 : f32 to vector<1x256xf32>
    %196 = arith.mulf %195, %194 : vector<1x256xf32>
    %197 = arith.addf %193, %196 : vector<1x256xf32>
    %198 = vector.extract_strided_slice %71 {offsets = [0, 160], sizes = [1, 256], strides = [1, 1]} : vector<1x512xf32> to vector<1x256xf32>
    %199 = vector.broadcast %47 : f32 to vector<1x256xf32>
    %200 = arith.mulf %199, %198 : vector<1x256xf32>
    %201 = arith.addf %197, %200 : vector<1x256xf32>
    %202 = vector.extract_strided_slice %50 {offsets = [2, 0], sizes = [1, 256], strides = [1, 1]} : vector<5x256xf32> to vector<1x256xf32>
    %203 = arith.mulf %202, %201 : vector<1x256xf32>
    %204 = arith.addf %160, %203 : vector<1x256xf32>
    %cst_21 = arith.constant 0.000000e+00 : f32
    %205 = vector.broadcast %cst_21 : f32 to vector<1x256xf32>
    %206 = vector.extract_strided_slice %70 {offsets = [0, 97], sizes = [1, 256], strides = [1, 1]} : vector<1x512xf32> to vector<1x256xf32>
    %207 = vector.broadcast %3 : f32 to vector<1x256xf32>
    %208 = arith.mulf %207, %206 : vector<1x256xf32>
    %209 = arith.addf %205, %208 : vector<1x256xf32>
    %210 = vector.extract_strided_slice %71 {offsets = [0, 97], sizes = [1, 256], strides = [1, 1]} : vector<1x512xf32> to vector<1x256xf32>
    %211 = vector.broadcast %28 : f32 to vector<1x256xf32>
    %212 = arith.mulf %211, %210 : vector<1x256xf32>
    %213 = arith.addf %209, %212 : vector<1x256xf32>
    %214 = vector.extract_strided_slice %70 {offsets = [0, 113], sizes = [1, 256], strides = [1, 1]} : vector<1x512xf32> to vector<1x256xf32>
    %215 = vector.broadcast %8 : f32 to vector<1x256xf32>
    %216 = arith.mulf %215, %214 : vector<1x256xf32>
    %217 = arith.addf %213, %216 : vector<1x256xf32>
    %218 = vector.extract_strided_slice %71 {offsets = [0, 113], sizes = [1, 256], strides = [1, 1]} : vector<1x512xf32> to vector<1x256xf32>
    %219 = vector.broadcast %33 : f32 to vector<1x256xf32>
    %220 = arith.mulf %219, %218 : vector<1x256xf32>
    %221 = arith.addf %217, %220 : vector<1x256xf32>
    %222 = vector.extract_strided_slice %70 {offsets = [0, 129], sizes = [1, 256], strides = [1, 1]} : vector<1x512xf32> to vector<1x256xf32>
    %223 = vector.broadcast %13 : f32 to vector<1x256xf32>
    %224 = arith.mulf %223, %222 : vector<1x256xf32>
    %225 = arith.addf %221, %224 : vector<1x256xf32>
    %226 = vector.extract_strided_slice %71 {offsets = [0, 129], sizes = [1, 256], strides = [1, 1]} : vector<1x512xf32> to vector<1x256xf32>
    %227 = vector.broadcast %38 : f32 to vector<1x256xf32>
    %228 = arith.mulf %227, %226 : vector<1x256xf32>
    %229 = arith.addf %225, %228 : vector<1x256xf32>
    %230 = vector.extract_strided_slice %70 {offsets = [0, 145], sizes = [1, 256], strides = [1, 1]} : vector<1x512xf32> to vector<1x256xf32>
    %231 = vector.broadcast %18 : f32 to vector<1x256xf32>
    %232 = arith.mulf %231, %230 : vector<1x256xf32>
    %233 = arith.addf %229, %232 : vector<1x256xf32>
    %234 = vector.extract_strided_slice %71 {offsets = [0, 145], sizes = [1, 256], strides = [1, 1]} : vector<1x512xf32> to vector<1x256xf32>
    %235 = vector.broadcast %43 : f32 to vector<1x256xf32>
    %236 = arith.mulf %235, %234 : vector<1x256xf32>
    %237 = arith.addf %233, %236 : vector<1x256xf32>
    %238 = vector.extract_strided_slice %70 {offsets = [0, 161], sizes = [1, 256], strides = [1, 1]} : vector<1x512xf32> to vector<1x256xf32>
    %239 = vector.broadcast %23 : f32 to vector<1x256xf32>
    %240 = arith.mulf %239, %238 : vector<1x256xf32>
    %241 = arith.addf %237, %240 : vector<1x256xf32>
    %242 = vector.extract_strided_slice %71 {offsets = [0, 161], sizes = [1, 256], strides = [1, 1]} : vector<1x512xf32> to vector<1x256xf32>
    %243 = vector.broadcast %48 : f32 to vector<1x256xf32>
    %244 = arith.mulf %243, %242 : vector<1x256xf32>
    %245 = arith.addf %241, %244 : vector<1x256xf32>
    %246 = vector.extract_strided_slice %50 {offsets = [3, 0], sizes = [1, 256], strides = [1, 1]} : vector<5x256xf32> to vector<1x256xf32>
    %247 = arith.mulf %246, %245 : vector<1x256xf32>
    %248 = arith.addf %204, %247 : vector<1x256xf32>
    %cst_22 = arith.constant 0.000000e+00 : f32
    %249 = vector.broadcast %cst_22 : f32 to vector<1x256xf32>
    %250 = vector.extract_strided_slice %70 {offsets = [0, 98], sizes = [1, 256], strides = [1, 1]} : vector<1x512xf32> to vector<1x256xf32>
    %251 = vector.broadcast %4 : f32 to vector<1x256xf32>
    %252 = arith.mulf %251, %250 : vector<1x256xf32>
    %253 = arith.addf %249, %252 : vector<1x256xf32>
    %254 = vector.extract_strided_slice %71 {offsets = [0, 98], sizes = [1, 256], strides = [1, 1]} : vector<1x512xf32> to vector<1x256xf32>
    %255 = vector.broadcast %29 : f32 to vector<1x256xf32>
    %256 = arith.mulf %255, %254 : vector<1x256xf32>
    %257 = arith.addf %253, %256 : vector<1x256xf32>
    %258 = vector.extract_strided_slice %70 {offsets = [0, 114], sizes = [1, 256], strides = [1, 1]} : vector<1x512xf32> to vector<1x256xf32>
    %259 = vector.broadcast %9 : f32 to vector<1x256xf32>
    %260 = arith.mulf %259, %258 : vector<1x256xf32>
    %261 = arith.addf %257, %260 : vector<1x256xf32>
    %262 = vector.extract_strided_slice %71 {offsets = [0, 114], sizes = [1, 256], strides = [1, 1]} : vector<1x512xf32> to vector<1x256xf32>
    %263 = vector.broadcast %34 : f32 to vector<1x256xf32>
    %264 = arith.mulf %263, %262 : vector<1x256xf32>
    %265 = arith.addf %261, %264 : vector<1x256xf32>
    %266 = vector.extract_strided_slice %70 {offsets = [0, 130], sizes = [1, 256], strides = [1, 1]} : vector<1x512xf32> to vector<1x256xf32>
    %267 = vector.broadcast %14 : f32 to vector<1x256xf32>
    %268 = arith.mulf %267, %266 : vector<1x256xf32>
    %269 = arith.addf %265, %268 : vector<1x256xf32>
    %270 = vector.extract_strided_slice %71 {offsets = [0, 130], sizes = [1, 256], strides = [1, 1]} : vector<1x512xf32> to vector<1x256xf32>
    %271 = vector.broadcast %39 : f32 to vector<1x256xf32>
    %272 = arith.mulf %271, %270 : vector<1x256xf32>
    %273 = arith.addf %269, %272 : vector<1x256xf32>
    %274 = vector.extract_strided_slice %70 {offsets = [0, 146], sizes = [1, 256], strides = [1, 1]} : vector<1x512xf32> to vector<1x256xf32>
    %275 = vector.broadcast %19 : f32 to vector<1x256xf32>
    %276 = arith.mulf %275, %274 : vector<1x256xf32>
    %277 = arith.addf %273, %276 : vector<1x256xf32>
    %278 = vector.extract_strided_slice %71 {offsets = [0, 146], sizes = [1, 256], strides = [1, 1]} : vector<1x512xf32> to vector<1x256xf32>
    %279 = vector.broadcast %44 : f32 to vector<1x256xf32>
    %280 = arith.mulf %279, %278 : vector<1x256xf32>
    %281 = arith.addf %277, %280 : vector<1x256xf32>
    %282 = vector.extract_strided_slice %70 {offsets = [0, 162], sizes = [1, 256], strides = [1, 1]} : vector<1x512xf32> to vector<1x256xf32>
    %283 = vector.broadcast %24 : f32 to vector<1x256xf32>
    %284 = arith.mulf %283, %282 : vector<1x256xf32>
    %285 = arith.addf %281, %284 : vector<1x256xf32>
    %286 = vector.extract_strided_slice %71 {offsets = [0, 162], sizes = [1, 256], strides = [1, 1]} : vector<1x512xf32> to vector<1x256xf32>
    %287 = vector.broadcast %49 : f32 to vector<1x256xf32>
    %288 = arith.mulf %287, %286 : vector<1x256xf32>
    %289 = arith.addf %285, %288 : vector<1x256xf32>
    %290 = vector.extract_strided_slice %50 {offsets = [4, 0], sizes = [1, 256], strides = [1, 1]} : vector<5x256xf32> to vector<1x256xf32>
    %291 = arith.mulf %290, %289 : vector<1x256xf32>
    %292 = arith.addf %248, %291 : vector<1x256xf32>
    %293 = arith.negf %292 : vector<1x256xf32>
    %294 = math.exp %293 : vector<1x256xf32>
    %cst_23 = arith.constant 1.000000e+00 : f32
    %295 = vector.broadcast %cst_23 : f32 to vector<1x256xf32>
    %296 = arith.addf %295, %294 : vector<1x256xf32>
    %297 = arith.divf %295, %296 : vector<1x256xf32>
    %298 = vector.shape_cast %297 : vector<1x256xf32> to vector<1x256xf32>
    %299 = vector.broadcast %298 : vector<1x256xf32> to vector<8x256xf32>
    %c0_i32_24 = arith.constant 0 : i32
    %300 = tpu.assume_multiple %c0_i32_24, 8 : i32
    %c0_25 = arith.constant 0 : index
    %301 = arith.index_cast %300 : i32 to index
    %c0_26 = arith.constant 0 : index
    %302 = vector.load %arg1[%c0_25, %301, %c0_26] : memref<1x8x256xf32, #tpu.memory_space<vmem>>, vector<1x8x256xf32>
    %303 = vector.shape_cast %302 : vector<1x8x256xf32> to vector<8x256xf32>
    %c0_27 = arith.constant 0 : index
    %304 = arith.index_cast %300 : i32 to index
    %c0_28 = arith.constant 0 : index
    %305 = vector.load %arg2[%c0_27, %304, %c0_28] : memref<1x8x256xf32, #tpu.memory_space<vmem>>, vector<1x8x256xf32>
    %306 = vector.shape_cast %305 : vector<1x8x256xf32> to vector<8x256xf32>
    %307 = arith.mulf %299, %303 : vector<8x256xf32>
    %308 = arith.addf %306, %307 : vector<8x256xf32>
    %c0_29 = arith.constant 0 : index
    %309 = arith.index_cast %300 : i32 to index
    %c0_30 = arith.constant 0 : index
    %310 = vector.load %arg5[%c0_29, %309, %c0_30] : memref<1x8x256xf32, #tpu.memory_space<vmem>>, vector<1x8x256xf32>
    %311 = vector.shape_cast %310 : vector<1x8x256xf32> to vector<8x256xf32>
    %312 = vector.shape_cast %308 : vector<8x256xf32> to vector<1x8x256xf32>
    tpu.vector_store %arg5[%c0_29, %309, %c0_30], %312 {strides = array<i32>} : memref<1x8x256xf32, #tpu.memory_space<vmem>>, vector<1x8x256xf32>,
    return
  }
  func.func @transform_0(%arg0: i32) -> (i32, i32, i32) {
    %c0_i32 = arith.constant 0 : i32
    %c0_i32_0 = arith.constant 0 : i32
    %c0_i32_1 = arith.constant 0 : i32
    return %arg0, %c0_i32, %c0_i32_0 : i32, i32, i32
  }
  func.func @transform_1(%arg0: i32) -> (i32, i32, i32) {
    %c0_i32 = arith.constant 0 : i32
    %c0_i32_0 = arith.constant 0 : i32
    %c0_i32_1 = arith.constant 0 : i32
    return %arg0, %c0_i32, %c0_i32_0 : i32, i32, i32
  }
  func.func @transform_2(%arg0: i32) -> (i32, i32) {
    %c0_i32 = arith.constant 0 : i32
    %c0_i32_0 = arith.constant 0 : i32
    %c0_i32_1 = arith.constant 0 : i32
    return %c0_i32, %c0_i32_0 : i32, i32
  }
  func.func @transform_3(%arg0: i32) -> i32 {
    %c0_i32 = arith.constant 0 : i32
    %c0_i32_0 = arith.constant 0 : i32
    return %c0_i32 : i32
  }
  func.func @transform_4(%arg0: i32) -> (i32, i32, i32) {
    %c0_i32 = arith.constant 0 : i32
    %c0_i32_0 = arith.constant 0 : i32
    %c0_i32_1 = arith.constant 0 : i32
    return %arg0, %c0_i32, %c0_i32_0 : i32, i32, i32
  }
}

</mosaic_0001>

<llo_original>
// kernel: panet_forward.15
$region0: #{panet_forward.15}
  #allocation0 [shape = 'u32[]', space=smem, size = 0x4, offset = 0x4, fixed_abs, tag = 'smem constant byte address 0x4 - core index']
  #allocation1 [shape = 'u32[144,128]{1,0:T(1,128)}', space=vmem, size = 0x12000, scoped, tag = 'internal scratch']
  %s0 = inlined_call_operand.vmem [shape: f32[2,8,16384], index: 0, kind: input, shape index: {}]
  %s1 = inlined_call_operand.vmem [shape: f32[8,8], index: 1, kind: input, shape index: {}]
  %s2 = inlined_call_operand.vmem [shape: f32[8,1], index: 2, kind: input, shape index: {}]
  %s3 = inlined_call_operand.vmem [shape: f32[2,8,16384], index: 3, kind: output, shape index: {}]
  %s4 = sld [smem:[#allocation0]]
  $region45: #{panet_forward.15} parent=0
    _
  %s6 = ssub.s32 1, %s4
  %s7 = scalar_select 0, %s6, %s4
  loop: start=0, step=1, limit=18
  $region2: #{panet_forward.15} parent=0 // loop_pre_header
    _
  $region3: #{panet_forward.15} parent=0 // loop_header
    %s9 = sphi 0, %s13
    %p10 = scmp.ge.s32.totalorder %s9, 18
    %s16 = sphi 0, %s28
    %s17 = sphi 0, %s24
    %s18 = sphi 0, %s16
    %s19 = sphi 0, %s17
    %s20 = sphi 0, %s18
    %s21 = sphi 0, %s19
    %s33 = sphi 0, %s35
    %s36 = sphi 0, %s33
    %s37 = sphi 0, %s36
    %s53 = sphi 0, %s37
    %s57 = sphi 0, %s57
    %s59 = sphi 0, %s57
    %s60 = sphi 0, %s59
    %s74 = sphi 0, %s60
    %s78 = sphi 0, %s78
    %s80 = sphi 0, %s78
    %s81 = sphi 0, %s80
    %s95 = sphi 0, %s81
    %s103 = sphi 0, %s105
    %s106 = sphi 0, %s103
    %s107 = sphi 0, %s106
    %s123 = sphi 0, %s107
  $region4: #{panet_forward.15} parent=0 // loop_header_branch
    %12 = sbr.rel (%p10) target = $region8
  $region5: #{panet_forward.15} parent=0 // loop_body
    %s14 = ssub.s32 %s9, 1
    %s15 = ssub.s32 %s9, 2
    %s22 = sadd.s32 1, %s17
    %p23 = scmp.ge.s32.totalorder %s22, 8
    %s24 = scalar_select %p23, 0, %s22
    %s25 = sadd.s32 1, %s16
    %s26 = scalar_select %p23, %s25, %s16
    %p27 = scmp.ge.s32.totalorder %s26, 2
    %s28 = scalar_select %p27, 0, %s26
    %s29 = ssub.s32 %s16, %s28
    %s30 = ssub.s32 %s17, %s24
    %s31 = sor.u32 %s29, %s30
    %p32 = scmp.eq.s32.totalorder %s31, 0
    %s34 = sadd.s32 %s33, 1
    %s35 = scalar_select %p32, %s33, %s34
    %p38 = pneg %p32
    %p39 = scmp.eq.s32.totalorder %s9, 15
    %p40 = por %p38, %p39
    %p41 = scmp.ne.s32.totalorder %s33, %s36
    %p42 = scmp.eq.s32.totalorder %s9, 0
    %p43 = por %p41, %p42
    %p44 = scmp.ne.s32.totalorder %s33, %s36
    %p45 = scmp.eq.s32.totalorder %s14, 15
    %p46 = por %p44, %p45
    %p47 = scmp.ne.s32.totalorder %s36, %s37
    %p48 = scmp.eq.s32.totalorder %s14, 0
    %p49 = por %p47, %p48
    %p50 = scmp.ne.s32.totalorder %s36, %s37
    %p51 = scmp.eq.s32.totalorder %s15, 15
    %p52 = por %p50, %p51
    %p54 = scmp.ne.s32.totalorder %s37, %s53
    %p55 = scmp.eq.s32.totalorder %s15, 0
    %p56 = por %p54, %p55
    %s58 = sadd.s32 %s57, 1
    %p61 = scmp.eq.s32.totalorder %s9, 15
    %p62 = scmp.ne.s32.totalorder %s57, %s59
    %p63 = scmp.eq.s32.totalorder %s9, 0
    %p64 = por %p62, %p63
    %p65 = scmp.ne.s32.totalorder %s57, %s59
    %p66 = scmp.eq.s32.totalorder %s14, 15
    %p67 = por %p65, %p66
    %p68 = scmp.ne.s32.totalorder %s59, %s60
    %p69 = scmp.eq.s32.totalorder %s14, 0
    %p70 = por %p68, %p69
    %p71 = scmp.ne.s32.totalorder %s59, %s60
    %p72 = scmp.eq.s32.totalorder %s15, 15
    %p73 = por %p71, %p72
    %p75 = scmp.ne.s32.totalorder %s60, %s74
    %p76 = scmp.eq.s32.totalorder %s15, 0
    %p77 = por %p75, %p76
    %s79 = sadd.s32 %s78, 1
    %p82 = scmp.eq.s32.totalorder %s9, 15
    %p83 = scmp.ne.s32.totalorder %s78, %s80
    %p84 = scmp.eq.s32.totalorder %s9, 0
    %p85 = por %p83, %p84
    %p86 = scmp.ne.s32.totalorder %s78, %s80
    %p87 = scmp.eq.s32.totalorder %s14, 15
    %p88 = por %p86, %p87
    %p89 = scmp.ne.s32.totalorder %s80, %s81
    %p90 = scmp.eq.s32.totalorder %s14, 0
    %p91 = por %p89, %p90
    %p92 = scmp.ne.s32.totalorder %s80, %s81
    %p93 = scmp.eq.s32.totalorder %s15, 15
    %p94 = por %p92, %p93
    %p96 = scmp.ne.s32.totalorder %s81, %s95
    %p97 = scmp.eq.s32.totalorder %s15, 0
    %p98 = por %p96, %p97
    %s99 = ssub.s32 %s16, %s28
    %s100 = ssub.s32 %s17, %s24
    %s101 = sor.u32 %s99, %s100
    %p102 = scmp.eq.s32.totalorder %s101, 0
    %s104 = sadd.s32 %s103, 1
    %s105 = scalar_select %p102, %s103, %s104
    %p108 = pneg %p102
    %p109 = scmp.eq.s32.totalorder %s9, 15
    %p110 = por %p108, %p109
    %p111 = scmp.ne.s32.totalorder %s103, %s106
    %p112 = scmp.eq.s32.totalorder %s9, 0
    %p113 = por %p111, %p112
    %p114 = scmp.ne.s32.totalorder %s103, %s106
    %p115 = scmp.eq.s32.totalorder %s14, 15
    %p116 = por %p114, %p115
    %p117 = scmp.ne.s32.totalorder %s106, %s107
    %p118 = scmp.eq.s32.totalorder %s14, 0
    %p119 = por %p117, %p118
    %p120 = scmp.ne.s32.totalorder %s106, %s107
    %p121 = scmp.eq.s32.totalorder %s15, 15
    %p122 = por %p120, %p121
    %p124 = scmp.ne.s32.totalorder %s107, %s123
    %p125 = scmp.eq.s32.totalorder %s15, 0
    %p126 = por %p124, %p125
    %p127 = scmp.le.s32.totalorder 1, %s9
    %p128 = scmp.lt.s32.totalorder %s9, 17
    %p129 = pnand %p127, %p128
    %p130 = pneg %p129
    // Predicated region
    $region9: #{panet_forward.15} parent=5 // pred_check
      _
    $region10: #{panet_forward.15} parent=5 // pred_check_branch
      %132 = sbr.rel (%p129) target = $region12
    $region11: #{panet_forward.15} parent=5 // pred_region
      %s133 = ssub.s32 %s9, 1
      // Predicated region
      $region13: #{panet_forward.15} parent=11 // pred_check
        %p134 = pneg %p70
      $region14: #{panet_forward.15} parent=11 // pred_check_branch
        %136 = sbr.rel (%p134) target = $region16
      $region15: #{panet_forward.15} parent=11 // pred_region
        _
      $region16: #{panet_forward.15} parent=11 // pred_fallthru
        _
      // Predicated region
      $region17: #{panet_forward.15} parent=11 // pred_check
        %p137 = pneg %p91
      $region18: #{panet_forward.15} parent=11 // pred_check_branch
        %139 = sbr.rel (%p137) target = $region20
      $region19: #{panet_forward.15} parent=11 // pred_region
        _
      $region20: #{panet_forward.15} parent=11 // pred_fallthru
        _
    $region12: #{panet_forward.15} parent=5 // pred_fallthru
      _
    %p140 = scmp.lt.s32.totalorder %s9, 16
    // Predicated region
    $region21: #{panet_forward.15} parent=5 // pred_check
      %p141 = pneg %p140
    $region22: #{panet_forward.15} parent=5 // pred_check_branch
      %143 = sbr.rel (%p141) target = $region24
    $region23: #{panet_forward.15} parent=5 // pred_region
      // Predicated region
      $region25: #{panet_forward.15} parent=23 // pred_check
        %p144 = pneg %p43
      $region26: #{panet_forward.15} parent=23 // pred_check_branch
        %146 = sbr.rel (%p144) target = $region28
      $region27: #{panet_forward.15} parent=23 // pred_region
        %s147 = smul.u32 16, %s17
        %p148 = scmp.lt.s32.totalorder %s16, 1
        %s149 = scalar_select %p148, %s16, 1
        %p150 = scmp.lt.s32.totalorder %s147, 127
        %s151 = scalar_select %p150, %s147, 127
        %s152 = smul.addr %s149, 128
        %s153 = sadd.s32 %s151, %s152
        %s154 = smul.addr %s153, 8
        %s155 = scalar_lea.vmem %s0, %s154
        %s156 = smul.u32 16, %s17
      $region28: #{panet_forward.15} parent=23 // pred_fallthru
        _
    $region24: #{panet_forward.15} parent=5 // pred_fallthru
      _
    %p157 = scmp.le.s32.totalorder 1, %s9
    %p158 = scmp.lt.s32.totalorder %s9, 17
    %p159 = pnand %p157, %p158
    %p160 = pneg %p159
    // Predicated region
    $region29: #{panet_forward.15} parent=5 // pred_check
      _
    $region30: #{panet_forward.15} parent=5 // pred_check_branch
      %162 = sbr.rel (%p159) target = $region32
    $region31: #{panet_forward.15} parent=5 // pred_region
      %s163 = ssub.s32 %s9, 1
      %s164 = smul.u32 16, %s19
      %p165 = scmp.lt.s32.totalorder %s18, 1
      %s166 = scalar_select %p165, %s18, 1
      %p167 = scmp.lt.s32.totalorder %s164, 127
      %s168 = scalar_select %p167, %s164, 127
      %s169 = smul.addr %s166, 128
      %s170 = sadd.s32 %s168, %s169
      %s171 = smul.addr %s170, 8
      %s172 = scalar_lea.vmem %s0, %s171
      %p173 = pneg %p49
      %p174 = pneg %p46
      %p175 = pneg %p70
      %p176 = pneg %p67
      %p177 = pneg %p91
      %p178 = pneg %p88
      %p179 = pneg %p119
      %p180 = pneg %p116
      %s181 = smul.u32 16, %s19
      %p182 = scmp.lt.s32.totalorder %s18, 1
      %s183 = scalar_select %p182, %s18, 1
      %p184 = scmp.lt.s32.totalorder %s181, 127
      %s185 = scalar_select %p184, %s181, 127
      %s186 = smul.addr %s183, 128
      %s187 = sadd.s32 %s185, %s186
      %s188 = smul.addr %s187, 8
      %s189 = scalar_lea.vmem %s3, %s188
      %s190 = smul.u32 16, %s19
      %p191 = scmp.lt.s32.totalorder %s18, 1
      %s192 = scalar_select %p191, %s18, 1
      %p193 = scmp.lt.s32.totalorder %s190, 127
      %s194 = scalar_select %p193, %s190, 127
      %s195 = smul.addr %s192, 128
      %s196 = sadd.s32 %s194, %s195
      %s197 = smul.addr %s196, 8
      %s198 = scalar_lea.vmem %s0, %s197
      %s199 = smul.u32 16, %s19
      %s200 = smul.u32 16, %s19
      %p201 = scmp.lt.s32.totalorder %s18, 1
      %s202 = scalar_select %p201, %s18, 1
      %p203 = scmp.lt.s32.totalorder %s200, 127
      %s204 = scalar_select %p203, %s200, 127
      %s205 = smul.addr %s202, 128
      %s206 = sadd.s32 %s204, %s205
      %s207 = smul.addr %s206, 8
      %s208 = scalar_lea.vmem %s3, %s207
      %s209 = smul.u32 16, %s19
      %v210 = vld [vmem:[%s198] sm:$0xff]
      %v211 = vld [vmem:[%s198 + $0x8] sm:$0xff]
      %v212 = vld [vmem:[%s198 + $0x10] sm:$0xff]
      %v213 = vld [vmem:[%s198 + $0x18] sm:$0xff]
      %v214 = vld [vmem:[%s198 + $0x20] sm:$0xff]
      %v215 = vld [vmem:[%s198 + $0x28] sm:$0xff]
      %v216 = vld [vmem:[%s198 + $0x30] sm:$0xff]
      %v217 = vld [vmem:[%s198 + $0x38] sm:$0xff]
      %v218 = vld [vmem:[%s198 + $0x40] sm:$0xff]
      %v219 = vld [vmem:[%s198 + $0x48] sm:$0xff]
      %v220 = vld [vmem:[%s198 + $0x50] sm:$0xff]
      %v221 = vld [vmem:[%s198 + $0x58] sm:$0xff]
      %v222 = vld [vmem:[%s198 + $0x60] sm:$0xff]
      %v223 = vld [vmem:[%s198 + $0x68] sm:$0xff]
      %v224 = vld [vmem:[%s198 + $0x70] sm:$0xff]
      %v225 = vld [vmem:[%s198 + $0x78] sm:$0xff]
      %v226 = vld [vmem:[%s1] sm:$0xff]
      %v227 = vld [vmem:[%s2] sm:$0xff]
      %229 = vset.pattern.permute.xlu0 0
      %230 = vperm.xlu0 %229, %v227
      %v231 = vpop.permute.xlu0 %230
      %vm233 = vcmask 64512
      %v235 = vsel %vm233, %v226, 0
      %237 = vmatprep.subr.mxu0 %v211
      %238 = vmatpush1.msra.mxu0 %v210
      %239 = vmatprep.subr.mxu0 0.0
      %240 = vmatpush1.msra.mxu0 0.0
      %241 = vmatprep.subr.mxu0 0.0
      %242 = vmatpush1.msra.mxu0 0.0
      %243 = vmatprep.subr.mxu0 0.0
      %244 = vmatpush1.msra.mxu0 0.0
      %245 = vmatprep.subr.mxu0 0.0
      %246 = vmatpush1.msra.mxu0 0.0
      %247 = vmatprep.subr.mxu0 0.0
      %248 = vmatpush1.msra.mxu0 0.0
      %249 = vmatprep.subr.mxu0 0.0
      %250 = vmatpush1.msra.mxu0 0.0
      %251 = vmatprep.subr.mxu0 0.0
      %252 = vmatpush1.msra.mxu0 0.0
      %253 = vmatprep.subr.mxu0 0.0
      %254 = vmatpush1.msra.mxu0 0.0
      %255 = vmatprep.subr.mxu0 0.0
      %256 = vmatpush1.msra.mxu0 0.0
      %257 = vmatprep.subr.mxu0 0.0
      %258 = vmatpush1.msra.mxu0 0.0
      %259 = vmatprep.subr.mxu0 0.0
      %260 = vmatpush1.msra.mxu0 0.0
      %261 = vmatprep.subr.mxu0 0.0
      %262 = vmatpush1.msra.mxu0 0.0
      %263 = vmatprep.subr.mxu0 0.0
      %264 = vmatpush1.msra.mxu0 0.0
      %265 = vmatprep.subr.mxu0 0.0
      %266 = vmatpush1.msra.mxu0 0.0
      %267 = vmatprep.subr.mxu0 0.0
      %268 = vmatpush1.msra.mxu0 0.0
      %269 = vmatprep.subr.mxu0 0.0
      %270 = vmatpush1.msra.mxu0 0.0
      %271 = vmatprep.subr.mxu0 0.0
      %272 = vmatpush1.msra.mxu0 0.0
      %273 = vmatprep.subr.mxu0 0.0
      %274 = vmatpush1.msra.mxu0 0.0
      %275 = vmatprep.subr.mxu0 0.0
      %276 = vmatpush1.msra.mxu0 0.0
      %277 = vmatprep.subr.mxu0 0.0
      %278 = vmatpush1.msra.mxu0 0.0
      %279 = vmatprep.subr.mxu0 0.0
      %280 = vmatpush1.msra.mxu0 0.0
      %281 = vmatprep.subr.mxu0 0.0
      %282 = vmatpush1.msra.mxu0 0.0
      %283 = vmatprep.subr.mxu0 0.0
      %284 = vmatpush1.msra.mxu0 0.0
      %285 = vmatprep.subr.mxu0 0.0
      %286 = vmatpush1.msra.mxu0 0.0
      %287 = vmatprep.subr.mxu0 0.0
      %288 = vmatpush1.msra.mxu0 0.0
      %289 = vmatprep.subr.mxu0 0.0
      %290 = vmatpush1.msra.mxu0 0.0
      %291 = vmatprep.subr.mxu0 0.0
      %292 = vmatpush1.msra.mxu0 0.0
      %293 = vmatprep.subr.mxu0 0.0
      %294 = vmatpush1.msra.mxu0 0.0
      %295 = vmatprep.subr.mxu0 0.0
      %296 = vmatpush1.msra.mxu0 0.0
      %297 = vmatprep.subr.mxu0 0.0
      %298 = vmatpush1.msra.mxu0 0.0
      %299 = vmatprep.subr.mxu0 0.0
      %300 = vmatpush1.msra.mxu0 0.0
      %301 = vmatprep.mubr.f32.mxu0 0.0
      %302 = vmatmul.mubr.f32.gmra.mrb[0].mxu0 %v235
      %v303 = vpop.f32.mrb[0].mxu0
      %v304 = vadd.f32 %v231, %v303
      %v305 = vpop.f32.mrb[0].mxu0
      %v306 = vadd.f32 %v231, %v305
      %307 = vdwg.mxu0
      %308 = vmatprep.subr.mxu0 %v213
      %309 = vmatpush1.msra.mxu0 %v212
      %310 = vmatprep.subr.mxu0 0.0
      %311 = vmatpush1.msra.mxu0 0.0
      %312 = vmatprep.subr.mxu0 0.0
      %313 = vmatpush1.msra.mxu0 0.0
      %314 = vmatprep.subr.mxu0 0.0
      %315 = vmatpush1.msra.mxu0 0.0
      %316 = vmatprep.subr.mxu0 0.0
      %317 = vmatpush1.msra.mxu0 0.0
      %318 = vmatprep.subr.mxu0 0.0
      %319 = vmatpush1.msra.mxu0 0.0
      %320 = vmatprep.subr.mxu0 0.0
      %321 = vmatpush1.msra.mxu0 0.0
      %322 = vmatprep.subr.mxu0 0.0
      %323 = vmatpush1.msra.mxu0 0.0
      %324 = vmatprep.subr.mxu0 0.0
      %325 = vmatpush1.msra.mxu0 0.0
      %326 = vmatprep.subr.mxu0 0.0
      %327 = vmatpush1.msra.mxu0 0.0
      %328 = vmatprep.subr.mxu0 0.0
      %329 = vmatpush1.msra.mxu0 0.0
      %330 = vmatprep.subr.mxu0 0.0
      %331 = vmatpush1.msra.mxu0 0.0
      %332 = vmatprep.subr.mxu0 0.0
      %333 = vmatpush1.msra.mxu0 0.0
      %334 = vmatprep.subr.mxu0 0.0
      %335 = vmatpush1.msra.mxu0 0.0
      %336 = vmatprep.subr.mxu0 0.0
      %337 = vmatpush1.msra.mxu0 0.0
      %338 = vmatprep.subr.mxu0 0.0
      %339 = vmatpush1.msra.mxu0 0.0
      %340 = vmatprep.subr.mxu0 0.0
      %341 = vmatpush1.msra.mxu0 0.0
      %342 = vmatprep.subr.mxu0 0.0
      %343 = vmatpush1.msra.mxu0 0.0
      %344 = vmatprep.subr.mxu0 0.0
      %345 = vmatpush1.msra.mxu0 0.0
      %346 = vmatprep.subr.mxu0 0.0
      %347 = vmatpush1.msra.mxu0 0.0
      %348 = vmatprep.subr.mxu0 0.0
      %349 = vmatpush1.msra.mxu0 0.0
      %350 = vmatprep.subr.mxu0 0.0
      %351 = vmatpush1.msra.mxu0 0.0
      %352 = vmatprep.subr.mxu0 0.0
      %353 = vmatpush1.msra.mxu0 0.0
      %354 = vmatprep.subr.mxu0 0.0
      %355 = vmatpush1.msra.mxu0 0.0
      %356 = vmatprep.subr.mxu0 0.0
      %357 = vmatpush1.msra.mxu0 0.0
      %358 = vmatprep.subr.mxu0 0.0
      %359 = vmatpush1.msra.mxu0 0.0
      %360 = vmatprep.subr.mxu0 0.0
      %361 = vmatpush1.msra.mxu0 0.0
      %362 = vmatprep.subr.mxu0 0.0
      %363 = vmatpush1.msra.mxu0 0.0
      %364 = vmatprep.subr.mxu0 0.0
      %365 = vmatpush1.msra.mxu0 0.0
      %366 = vmatprep.subr.mxu0 0.0
      %367 = vmatpush1.msra.mxu0 0.0
      %368 = vmatprep.subr.mxu0 0.0
      %369 = vmatpush1.msra.mxu0 0.0
      %370 = vmatprep.subr.mxu0 0.0
      %371 = vmatpush1.msra.mxu0 0.0
      %372 = vmatprep.mubr.f32.mxu0 0.0
      %373 = vmatmul.mubr.f32.gmra.mrb[0].mxu0 %v235
      %v374 = vpop.f32.mrb[0].mxu0
      %v375 = vadd.f32 %v231, %v374
      %v376 = vpop.f32.mrb[0].mxu0
      %v377 = vadd.f32 %v231, %v376
      %378 = vdwg.mxu0
      %379 = vmatprep.subr.mxu0 %v215
      %380 = vmatpush1.msra.mxu0 %v214
      %381 = vmatprep.subr.mxu0 0.0
      %382 = vmatpush1.msra.mxu0 0.0
      %383 = vmatprep.subr.mxu0 0.0
      %384 = vmatpush1.msra.mxu0 0.0
      %385 = vmatprep.subr.mxu0 0.0
      %386 = vmatpush1.msra.mxu0 0.0
      %387 = vmatprep.subr.mxu0 0.0
      %388 = vmatpush1.msra.mxu0 0.0
      %389 = vmatprep.subr.mxu0 0.0
      %390 = vmatpush1.msra.mxu0 0.0
      %391 = vmatprep.subr.mxu0 0.0
      %392 = vmatpush1.msra.mxu0 0.0
      %393 = vmatprep.subr.mxu0 0.0
      %394 = vmatpush1.msra.mxu0 0.0
      %395 = vmatprep.subr.mxu0 0.0
      %396 = vmatpush1.msra.mxu0 0.0
      %397 = vmatprep.subr.mxu0 0.0
      %398 = vmatpush1.msra.mxu0 0.0
      %399 = vmatprep.subr.mxu0 0.0
      %400 = vmatpush1.msra.mxu0 0.0
      %401 = vmatprep.subr.mxu0 0.0
      %402 = vmatpush1.msra.mxu0 0.0
      %403 = vmatprep.subr.mxu0 0.0
      %404 = vmatpush1.msra.mxu0 0.0
      %405 = vmatprep.subr.mxu0 0.0
      %406 = vmatpush1.msra.mxu0 0.0
      %407 = vmatprep.subr.mxu0 0.0
      %408 = vmatpush1.msra.mxu0 0.0
      %409 = vmatprep.subr.mxu0 0.0
      %410 = vmatpush1.msra.mxu0 0.0
      %411 = vmatprep.subr.mxu0 0.0
      %412 = vmatpush1.msra.mxu0 0.0
      %413 = vmatprep.subr.mxu0 0.0
      %414 = vmatpush1.msra.mxu0 0.0
      %415 = vmatprep.subr.mxu0 0.0
      %416 = vmatpush1.msra.mxu0 0.0
      %417 = vmatprep.subr.mxu0 0.0
      %418 = vmatpush1.msra.mxu0 0.0
      %419 = vmatprep.subr.mxu0 0.0
      %420 = vmatpush1.msra.mxu0 0.0
      %421 = vmatprep.subr.mxu0 0.0
      %422 = vmatpush1.msra.mxu0 0.0
      %423 = vmatprep.subr.mxu0 0.0
      %424 = vmatpush1.msra.mxu0 0.0
      %425 = vmatprep.subr.mxu0 0.0
      %426 = vmatpush1.msra.mxu0 0.0
      %427 = vmatprep.subr.mxu0 0.0
      %428 = vmatpush1.msra.mxu0 0.0
      %429 = vmatprep.subr.mxu0 0.0
      %430 = vmatpush1.msra.mxu0 0.0
      %431 = vmatprep.subr.mxu0 0.0
      %432 = vmatpush1.msra.mxu0 0.0
      %433 = vmatprep.subr.mxu0 0.0
      %434 = vmatpush1.msra.mxu0 0.0
      %435 = vmatprep.subr.mxu0 0.0
      %436 = vmatpush1.msra.mxu0 0.0
      %437 = vmatprep.subr.mxu0 0.0
      %438 = vmatpush1.msra.mxu0 0.0
      %439 = vmatprep.subr.mxu0 0.0
      %440 = vmatpush1.msra.mxu0 0.0
      %441 = vmatprep.subr.mxu0 0.0
      %442 = vmatpush1.msra.mxu0 0.0
      %443 = vmatprep.mubr.f32.mxu0 0.0
      %444 = vmatmul.mubr.f32.gmra.mrb[0].mxu0 %v235
      %v445 = vpop.f32.mrb[0].mxu0
      %v446 = vadd.f32 %v231, %v445
      %v447 = vpop.f32.mrb[0].mxu0
      %v448 = vadd.f32 %v231, %v447
      %449 = vdwg.mxu0
      %450 = vmatprep.subr.mxu0 %v217
      %451 = vmatpush1.msra.mxu0 %v216
      %452 = vmatprep.subr.mxu0 0.0
      %453 = vmatpush1.msra.mxu0 0.0
      %454 = vmatprep.subr.mxu0 0.0
      %455 = vmatpush1.msra.mxu0 0.0
      %456 = vmatprep.subr.mxu0 0.0
      %457 = vmatpush1.msra.mxu0 0.0
      %458 = vmatprep.subr.mxu0 0.0
      %459 = vmatpush1.msra.mxu0 0.0
      %460 = vmatprep.subr.mxu0 0.0
      %461 = vmatpush1.msra.mxu0 0.0
      %462 = vmatprep.subr.mxu0 0.0
      %463 = vmatpush1.msra.mxu0 0.0
      %464 = vmatprep.subr.mxu0 0.0
      %465 = vmatpush1.msra.mxu0 0.0
      %466 = vmatprep.subr.mxu0 0.0
      %467 = vmatpush1.msra.mxu0 0.0
      %468 = vmatprep.subr.mxu0 0.0
      %469 = vmatpush1.msra.mxu0 0.0
      %470 = vmatprep.subr.mxu0 0.0
      %471 = vmatpush1.msra.mxu0 0.0
      %472 = vmatprep.subr.mxu0 0.0
      %473 = vmatpush1.msra.mxu0 0.0
      %474 = vmatprep.subr.mxu0 0.0
      %475 = vmatpush1.msra.mxu0 0.0
      %476 = vmatprep.subr.mxu0 0.0
      %477 = vmatpush1.msra.mxu0 0.0
      %478 = vmatprep.subr.mxu0 0.0
      %479 = vmatpush1.msra.mxu0 0.0
      %480 = vmatprep.subr.mxu0 0.0
      %481 = vmatpush1.msra.mxu0 0.0
      %482 = vmatprep.subr.mxu0 0.0
      %483 = vmatpush1.msra.mxu0 0.0
      %484 = vmatprep.subr.mxu0 0.0
      %485 = vmatpush1.msra.mxu0 0.0
      %486 = vmatprep.subr.mxu0 0.0
      %487 = vmatpush1.msra.mxu0 0.0
      %488 = vmatprep.subr.mxu0 0.0
      %489 = vmatpush1.msra.mxu0 0.0
      %490 = vmatprep.subr.mxu0 0.0
      %491 = vmatpush1.msra.mxu0 0.0
      %492 = vmatprep.subr.mxu0 0.0
      %493 = vmatpush1.msra.mxu0 0.0
      %494 = vmatprep.subr.mxu0 0.0
      %495 = vmatpush1.msra.mxu0 0.0
      %496 = vmatprep.subr.mxu0 0.0
      %497 = vmatpush1.msra.mxu0 0.0
      %498 = vmatprep.subr.mxu0 0.0
      %499 = vmatpush1.msra.mxu0 0.0
      %500 = vmatprep.subr.mxu0 0.0
      %501 = vmatpush1.msra.mxu0 0.0
      %502 = vmatprep.subr.mxu0 0.0
      %503 = vmatpush1.msra.mxu0 0.0
      %504 = vmatprep.subr.mxu0 0.0
      %505 = vmatpush1.msra.mxu0 0.0
      %506 = vmatprep.subr.mxu0 0.0
      %507 = vmatpush1.msra.mxu0 0.0
      %508 = vmatprep.subr.mxu0 0.0
      %509 = vmatpush1.msra.mxu0 0.0
      %510 = vmatprep.subr.mxu0 0.0
      %511 = vmatpush1.msra.mxu0 0.0
      %512 = vmatprep.subr.mxu0 0.0
      %513 = vmatpush1.msra.mxu0 0.0
      %514 = vmatprep.mubr.f32.mxu0 0.0
      %515 = vmatmul.mubr.f32.gmra.mrb[0].mxu0 %v235
      %v516 = vpop.f32.mrb[0].mxu0
      %v517 = vadd.f32 %v231, %v516
      %v518 = vpop.f32.mrb[0].mxu0
      %v519 = vadd.f32 %v231, %v518
      %520 = vdwg.mxu0
      %521 = vmatprep.subr.mxu0 %v219
      %522 = vmatpush1.msra.mxu0 %v218
      %523 = vmatprep.subr.mxu0 0.0
      %524 = vmatpush1.msra.mxu0 0.0
      %525 = vmatprep.subr.mxu0 0.0
      %526 = vmatpush1.msra.mxu0 0.0
      %527 = vmatprep.subr.mxu0 0.0
      %528 = vmatpush1.msra.mxu0 0.0
      %529 = vmatprep.subr.mxu0 0.0
      %530 = vmatpush1.msra.mxu0 0.0
      %531 = vmatprep.subr.mxu0 0.0
      %532 = vmatpush1.msra.mxu0 0.0
      %533 = vmatprep.subr.mxu0 0.0
      %534 = vmatpush1.msra.mxu0 0.0
      %535 = vmatprep.subr.mxu0 0.0
      %536 = vmatpush1.msra.mxu0 0.0
      %537 = vmatprep.subr.mxu0 0.0
      %538 = vmatpush1.msra.mxu0 0.0
      %539 = vmatprep.subr.mxu0 0.0
      %540 = vmatpush1.msra.mxu0 0.0
      %541 = vmatprep.subr.mxu0 0.0
      %542 = vmatpush1.msra.mxu0 0.0
      %543 = vmatprep.subr.mxu0 0.0
      %544 = vmatpush1.msra.mxu0 0.0
      %545 = vmatprep.subr.mxu0 0.0
      %546 = vmatpush1.msra.mxu0 0.0
      %547 = vmatprep.subr.mxu0 0.0
      %548 = vmatpush1.msra.mxu0 0.0
      %549 = vmatprep.subr.mxu0 0.0
      %550 = vmatpush1.msra.mxu0 0.0
      %551 = vmatprep.subr.mxu0 0.0
      %552 = vmatpush1.msra.mxu0 0.0
      %553 = vmatprep.subr.mxu0 0.0
      %554 = vmatpush1.msra.mxu0 0.0
      %555 = vmatprep.subr.mxu0 0.0
      %556 = vmatpush1.msra.mxu0 0.0
      %557 = vmatprep.subr.mxu0 0.0
      %558 = vmatpush1.msra.mxu0 0.0
      %559 = vmatprep.subr.mxu0 0.0
      %560 = vmatpush1.msra.mxu0 0.0
      %561 = vmatprep.subr.mxu0 0.0
      %562 = vmatpush1.msra.mxu0 0.0
      %563 = vmatprep.subr.mxu0 0.0
      %564 = vmatpush1.msra.mxu0 0.0
      %565 = vmatprep.subr.mxu0 0.0
      %566 = vmatpush1.msra.mxu0 0.0
      %567 = vmatprep.subr.mxu0 0.0
      %568 = vmatpush1.msra.mxu0 0.0
      %569 = vmatprep.subr.mxu0 0.0
      %570 = vmatpush1.msra.mxu0 0.0
      %571 = vmatprep.subr.mxu0 0.0
      %572 = vmatpush1.msra.mxu0 0.0
      %573 = vmatprep.subr.mxu0 0.0
      %574 = vmatpush1.msra.mxu0 0.0
      %575 = vmatprep.subr.mxu0 0.0
      %576 = vmatpush1.msra.mxu0 0.0
      %577 = vmatprep.subr.mxu0 0.0
      %578 = vmatpush1.msra.mxu0 0.0
      %579 = vmatprep.subr.mxu0 0.0
      %580 = vmatpush1.msra.mxu0 0.0
      %581 = vmatprep.subr.mxu0 0.0
      %582 = vmatpush1.msra.mxu0 0.0
      %583 = vmatprep.subr.mxu0 0.0
      %584 = vmatpush1.msra.mxu0 0.0
      %585 = vmatprep.mubr.f32.mxu0 0.0
      %586 = vmatmul.mubr.f32.gmra.mrb[0].mxu0 %v235
      %v587 = vpop.f32.mrb[0].mxu0
      %v588 = vadd.f32 %v231, %v587
      %v589 = vpop.f32.mrb[0].mxu0
      %v590 = vadd.f32 %v231, %v589
      %591 = vdwg.mxu0
      %592 = vmatprep.subr.mxu0 %v221
      %593 = vmatpush1.msra.mxu0 %v220
      %594 = vmatprep.subr.mxu0 0.0
      %595 = vmatpush1.msra.mxu0 0.0
      %596 = vmatprep.subr.mxu0 0.0
      %597 = vmatpush1.msra.mxu0 0.0
      %598 = vmatprep.subr.mxu0 0.0
      %599 = vmatpush1.msra.mxu0 0.0
      %600 = vmatprep.subr.mxu0 0.0
      %601 = vmatpush1.msra.mxu0 0.0
      %602 = vmatprep.subr.mxu0 0.0
      %603 = vmatpush1.msra.mxu0 0.0
      %604 = vmatprep.subr.mxu0 0.0
      %605 = vmatpush1.msra.mxu0 0.0
      %606 = vmatprep.subr.mxu0 0.0
      %607 = vmatpush1.msra.mxu0 0.0
      %608 = vmatprep.subr.mxu0 0.0
      %609 = vmatpush1.msra.mxu0 0.0
      %610 = vmatprep.subr.mxu0 0.0
      %611 = vmatpush1.msra.mxu0 0.0
      %612 = vmatprep.subr.mxu0 0.0
      %613 = vmatpush1.msra.mxu0 0.0
      %614 = vmatprep.subr.mxu0 0.0
      %615 = vmatpush1.msra.mxu0 0.0
      %616 = vmatprep.subr.mxu0 0.0
      %617 = vmatpush1.msra.mxu0 0.0
      %618 = vmatprep.subr.mxu0 0.0
      %619 = vmatpush1.msra.mxu0 0.0
      %620 = vmatprep.subr.mxu0 0.0
      %621 = vmatpush1.msra.mxu0 0.0
      %622 = vmatprep.subr.mxu0 0.0
      %623 = vmatpush1.msra.mxu0 0.0
      %624 = vmatprep.subr.mxu0 0.0
      %625 = vmatpush1.msra.mxu0 0.0
      %626 = vmatprep.subr.mxu0 0.0
      %627 = vmatpush1.msra.mxu0 0.0
      %628 = vmatprep.subr.mxu0 0.0
      %629 = vmatpush1.msra.mxu0 0.0
      %630 = vmatprep.subr.mxu0 0.0
      %631 = vmatpush1.msra.mxu0 0.0
      %632 = vmatprep.subr.mxu0 0.0
      %633 = vmatpush1.msra.mxu0 0.0
      %634 = vmatprep.subr.mxu0 0.0
      %635 = vmatpush1.msra.mxu0 0.0
      %636 = vmatprep.subr.mxu0 0.0
      %637 = vmatpush1.msra.mxu0 0.0
      %638 = vmatprep.subr.mxu0 0.0
      %639 = vmatpush1.msra.mxu0 0.0
      %640 = vmatprep.subr.mxu0 0.0
      %641 = vmatpush1.msra.mxu0 0.0
      %642 = vmatprep.subr.mxu0 0.0
      %643 = vmatpush1.msra.mxu0 0.0
      %644 = vmatprep.subr.mxu0 0.0
      %645 = vmatpush1.msra.mxu0 0.0
      %646 = vmatprep.subr.mxu0 0.0
      %647 = vmatpush1.msra.mxu0 0.0
      %648 = vmatprep.subr.mxu0 0.0
      %649 = vmatpush1.msra.mxu0 0.0
      %650 = vmatprep.subr.mxu0 0.0
      %651 = vmatpush1.msra.mxu0 0.0
      %652 = vmatprep.subr.mxu0 0.0
      %653 = vmatpush1.msra.mxu0 0.0
      %654 = vmatprep.subr.mxu0 0.0
      %655 = vmatpush1.msra.mxu0 0.0
      %656 = vmatprep.mubr.f32.mxu0 0.0
      %657 = vmatmul.mubr.f32.gmra.mrb[0].mxu0 %v235
      %v658 = vpop.f32.mrb[0].mxu0
      %v659 = vadd.f32 %v231, %v658
      %v660 = vpop.f32.mrb[0].mxu0
      %v661 = vadd.f32 %v231, %v660
      %662 = vdwg.mxu0
      %663 = vmatprep.subr.mxu0 %v223
      %664 = vmatpush1.msra.mxu0 %v222
      %665 = vmatprep.subr.mxu0 0.0
      %666 = vmatpush1.msra.mxu0 0.0
      %667 = vmatprep.subr.mxu0 0.0
      %668 = vmatpush1.msra.mxu0 0.0
      %669 = vmatprep.subr.mxu0 0.0
      %670 = vmatpush1.msra.mxu0 0.0
      %671 = vmatprep.subr.mxu0 0.0
      %672 = vmatpush1.msra.mxu0 0.0
      %673 = vmatprep.subr.mxu0 0.0
      %674 = vmatpush1.msra.mxu0 0.0
      %675 = vmatprep.subr.mxu0 0.0
      %676 = vmatpush1.msra.mxu0 0.0
      %677 = vmatprep.subr.mxu0 0.0
      %678 = vmatpush1.msra.mxu0 0.0
      %679 = vmatprep.subr.mxu0 0.0
      %680 = vmatpush1.msra.mxu0 0.0
      %681 = vmatprep.subr.mxu0 0.0
      %682 = vmatpush1.msra.mxu0 0.0
      %683 = vmatprep.subr.mxu0 0.0
      %684 = vmatpush1.msra.mxu0 0.0
      %685 = vmatprep.subr.mxu0 0.0
      %686 = vmatpush1.msra.mxu0 0.0
      %687 = vmatprep.subr.mxu0 0.0
      %688 = vmatpush1.msra.mxu0 0.0
      %689 = vmatprep.subr.mxu0 0.0
      %690 = vmatpush1.msra.mxu0 0.0
      %691 = vmatprep.subr.mxu0 0.0
      %692 = vmatpush1.msra.mxu0 0.0
      %693 = vmatprep.subr.mxu0 0.0
      %694 = vmatpush1.msra.mxu0 0.0
      %695 = vmatprep.subr.mxu0 0.0
      %696 = vmatpush1.msra.mxu0 0.0
      %697 = vmatprep.subr.mxu0 0.0
      %698 = vmatpush1.msra.mxu0 0.0
      %699 = vmatprep.subr.mxu0 0.0
      %700 = vmatpush1.msra.mxu0 0.0
      %701 = vmatprep.subr.mxu0 0.0
      %702 = vmatpush1.msra.mxu0 0.0
      %703 = vmatprep.subr.mxu0 0.0
      %704 = vmatpush1.msra.mxu0 0.0
      %705 = vmatprep.subr.mxu0 0.0
      %706 = vmatpush1.msra.mxu0 0.0
      %707 = vmatprep.subr.mxu0 0.0
      %708 = vmatpush1.msra.mxu0 0.0
      %709 = vmatprep.subr.mxu0 0.0
      %710 = vmatpush1.msra.mxu0 0.0
      %711 = vmatprep.subr.mxu0 0.0
      %712 = vmatpush1.msra.mxu0 0.0
      %713 = vmatprep.subr.mxu0 0.0
      %714 = vmatpush1.msra.mxu0 0.0
      %715 = vmatprep.subr.mxu0 0.0
      %716 = vmatpush1.msra.mxu0 0.0
      %717 = vmatprep.subr.mxu0 0.0
      %718 = vmatpush1.msra.mxu0 0.0
      %719 = vmatprep.subr.mxu0 0.0
      %720 = vmatpush1.msra.mxu0 0.0
      %721 = vmatprep.subr.mxu0 0.0
      %722 = vmatpush1.msra.mxu0 0.0
      %723 = vmatprep.subr.mxu0 0.0
      %724 = vmatpush1.msra.mxu0 0.0
      %725 = vmatprep.subr.mxu0 0.0
      %726 = vmatpush1.msra.mxu0 0.0
      %727 = vmatprep.mubr.f32.mxu0 0.0
      %728 = vmatmul.mubr.f32.gmra.mrb[0].mxu0 %v235
      %v729 = vpop.f32.mrb[0].mxu0
      %v730 = vadd.f32 %v231, %v729
      %v731 = vpop.f32.mrb[0].mxu0
      %v732 = vadd.f32 %v231, %v731
      %733 = vdwg.mxu0
      %734 = vmatprep.subr.mxu0 %v225
      %735 = vmatpush1.msra.mxu0 %v224
      %736 = vmatprep.subr.mxu0 0.0
      %737 = vmatpush1.msra.mxu0 0.0
      %738 = vmatprep.subr.mxu0 0.0
      %739 = vmatpush1.msra.mxu0 0.0
      %740 = vmatprep.subr.mxu0 0.0
      %741 = vmatpush1.msra.mxu0 0.0
      %742 = vmatprep.subr.mxu0 0.0
      %743 = vmatpush1.msra.mxu0 0.0
      %744 = vmatprep.subr.mxu0 0.0
      %745 = vmatpush1.msra.mxu0 0.0
      %746 = vmatprep.subr.mxu0 0.0
      %747 = vmatpush1.msra.mxu0 0.0
      %748 = vmatprep.subr.mxu0 0.0
      %749 = vmatpush1.msra.mxu0 0.0
      %750 = vmatprep.subr.mxu0 0.0
      %751 = vmatpush1.msra.mxu0 0.0
      %752 = vmatprep.subr.mxu0 0.0
      %753 = vmatpush1.msra.mxu0 0.0
      %754 = vmatprep.subr.mxu0 0.0
      %755 = vmatpush1.msra.mxu0 0.0
      %756 = vmatprep.subr.mxu0 0.0
      %757 = vmatpush1.msra.mxu0 0.0
      %758 = vmatprep.subr.mxu0 0.0
      %759 = vmatpush1.msra.mxu0 0.0
      %760 = vmatprep.subr.mxu0 0.0
      %761 = vmatpush1.msra.mxu0 0.0
      %762 = vmatprep.subr.mxu0 0.0
      %763 = vmatpush1.msra.mxu0 0.0
      %764 = vmatprep.subr.mxu0 0.0
      %765 = vmatpush1.msra.mxu0 0.0
      %766 = vmatprep.subr.mxu0 0.0
      %767 = vmatpush1.msra.mxu0 0.0
      %768 = vmatprep.subr.mxu0 0.0
      %769 = vmatpush1.msra.mxu0 0.0
      %770 = vmatprep.subr.mxu0 0.0
      %771 = vmatpush1.msra.mxu0 0.0
      %772 = vmatprep.subr.mxu0 0.0
      %773 = vmatpush1.msra.mxu0 0.0
      %774 = vmatprep.subr.mxu0 0.0
      %775 = vmatpush1.msra.mxu0 0.0
      %776 = vmatprep.subr.mxu0 0.0
      %777 = vmatpush1.msra.mxu0 0.0
      %778 = vmatprep.subr.mxu0 0.0
      %779 = vmatpush1.msra.mxu0 0.0
      %780 = vmatprep.subr.mxu0 0.0
      %781 = vmatpush1.msra.mxu0 0.0
      %782 = vmatprep.subr.mxu0 0.0
      %783 = vmatpush1.msra.mxu0 0.0
      %784 = vmatprep.subr.mxu0 0.0
      %785 = vmatpush1.msra.mxu0 0.0
      %786 = vmatprep.subr.mxu0 0.0
      %787 = vmatpush1.msra.mxu0 0.0
      %788 = vmatprep.subr.mxu0 0.0
      %789 = vmatpush1.msra.mxu0 0.0
      %790 = vmatprep.subr.mxu0 0.0
      %791 = vmatpush1.msra.mxu0 0.0
      %792 = vmatprep.subr.mxu0 0.0
      %793 = vmatpush1.msra.mxu0 0.0
      %794 = vmatprep.subr.mxu0 0.0
      %795 = vmatpush1.msra.mxu0 0.0
      %796 = vmatprep.subr.mxu0 0.0
      %797 = vmatpush1.msra.mxu0 0.0
      %798 = vmatprep.mubr.f32.mxu0 0.0
      %799 = vmatmul.mubr.f32.gmra.mrb[0].mxu0 %v235
      %v800 = vpop.f32.mrb[0].mxu0
      %v801 = vadd.f32 %v231, %v800
      %v802 = vpop.f32.mrb[0].mxu0
      %v803 = vadd.f32 %v231, %v802
      %804 = vdwg.mxu0
      %v805 = vmax.f32 %v304, 0.0
      %v806 = vmax.f32 %v306, 0.0
      %v807 = vmax.f32 %v375, 0.0
      %v808 = vmax.f32 %v377, 0.0
      %v809 = vmax.f32 %v446, 0.0
      %v810 = vmax.f32 %v448, 0.0
      %v811 = vmax.f32 %v517, 0.0
      %v812 = vmax.f32 %v519, 0.0
      %v813 = vmax.f32 %v588, 0.0
      %v814 = vmax.f32 %v590, 0.0
      %v815 = vmax.f32 %v659, 0.0
      %v816 = vmax.f32 %v661, 0.0
      %v817 = vmax.f32 %v730, 0.0
      %v818 = vmax.f32 %v732, 0.0
      %v819 = vmax.f32 %v801, 0.0
      %v820 = vmax.f32 %v803, 0.0
      %821 = vst [vmem:[%s208] sm:$0xff] %v805
      %822 = vst [vmem:[%s208 + $0x8] sm:$0xff] %v806
      %823 = vst [vmem:[%s208 + $0x10] sm:$0xff] %v807
      %824 = vst [vmem:[%s208 + $0x18] sm:$0xff] %v808
      %825 = vst [vmem:[%s208 + $0x20] sm:$0xff] %v809
      %826 = vst [vmem:[%s208 + $0x28] sm:$0xff] %v810
      %827 = vst [vmem:[%s208 + $0x30] sm:$0xff] %v811
      %828 = vst [vmem:[%s208 + $0x38] sm:$0xff] %v812
      %829 = vst [vmem:[%s208 + $0x40] sm:$0xff] %v813
      %830 = vst [vmem:[%s208 + $0x48] sm:$0xff] %v814
      %831 = vst [vmem:[%s208 + $0x50] sm:$0xff] %v815
      %832 = vst [vmem:[%s208 + $0x58] sm:$0xff] %v816
      %833 = vst [vmem:[%s208 + $0x60] sm:$0xff] %v817
      %834 = vst [vmem:[%s208 + $0x68] sm:$0xff] %v818
      %835 = vst [vmem:[%s208 + $0x70] sm:$0xff] %v819
      %836 = vst [vmem:[%s208 + $0x78] sm:$0xff] %v820
      %s837 = smul.u32 16, %s19
      %p838 = scmp.lt.s32.totalorder %s18, 1
      %s839 = scalar_select %p838, %s18, 1
      %p840 = scmp.lt.s32.totalorder %s837, 127
      %s841 = scalar_select %p840, %s837, 127
      %s842 = smul.addr %s839, 128
      %s843 = sadd.s32 %s841, %s842
      %s844 = smul.addr %s843, 8
      %s845 = scalar_lea.vmem %s3, %s844
      // Predicated region
      $region33: #{panet_forward.15} parent=31 // pred_check
        %p846 = pneg %p116
      $region34: #{panet_forward.15} parent=31 // pred_check_branch
        %848 = sbr.rel (%p846) target = $region36
      $region35: #{panet_forward.15} parent=31 // pred_region
        %s849 = smul.u32 16, %s19
      $region36: #{panet_forward.15} parent=31 // pred_fallthru
        _
    $region32: #{panet_forward.15} parent=5 // pred_fallthru
      _
    %p850 = scmp.le.s32.totalorder 2, %s9
    // Predicated region
    $region37: #{panet_forward.15} parent=5 // pred_check
      %p851 = pneg %p850
    $region38: #{panet_forward.15} parent=5 // pred_check_branch
      %853 = sbr.rel (%p851) target = $region40
    $region39: #{panet_forward.15} parent=5 // pred_region
      %s854 = ssub.s32 %s9, 2
      // Predicated region
      $region41: #{panet_forward.15} parent=39 // pred_check
        %p855 = pneg %p122
      $region42: #{panet_forward.15} parent=39 // pred_check_branch
        %857 = sbr.rel (%p855) target = $region44
      $region43: #{panet_forward.15} parent=39 // pred_region
        %s858 = smul.u32 16, %s21
        %p859 = scmp.lt.s32.totalorder %s20, 1
        %s860 = scalar_select %p859, %s20, 1
        %p861 = scmp.lt.s32.totalorder %s858, 127
        %s862 = scalar_select %p861, %s858, 127
        %s863 = smul.addr %s860, 128
        %s864 = sadd.s32 %s862, %s863
        %s865 = smul.addr %s864, 8
        %s866 = scalar_lea.vmem %s3, %s865
      $region44: #{panet_forward.15} parent=39 // pred_fallthru
        _
    $region40: #{panet_forward.15} parent=5 // pred_fallthru
      _
  $region6: #{panet_forward.15} parent=0 // loop_footer
    %s13 = sadd.s32 1, %s9
  $region7: #{panet_forward.15} parent=0 // loop_footer_branch
    %8 = sbr.rel target = $region3
  $region8: #{panet_forward.15} parent=0 // loop_exit
    _

// kernel: panet_forward.14
$region0: #{panet_forward.14}
  #allocation0 [shape = 'u32[]', space=smem, size = 0x4, offset = 0x4, fixed_abs, tag = 'smem constant byte address 0x4 - core index']
  #allocation1 [shape = 'u32[144,128]{1,0:T(1,128)}', space=vmem, size = 0x12000, scoped, tag = 'internal scratch']
  %s0 = inlined_call_operand.vmem [shape: f32[2,4,16384], index: 0, kind: input, shape index: {}]
  %s1 = inlined_call_operand.vmem [shape: f32[8,4], index: 1, kind: input, shape index: {}]
  %s2 = inlined_call_operand.vmem [shape: f32[8,1], index: 2, kind: input, shape index: {}]
  %s3 = inlined_call_operand.vmem [shape: f32[2,8,16384], index: 3, kind: output, shape index: {}]
  %s4 = sld [smem:[#allocation0]]
  $region45: #{panet_forward.14} parent=0
    _
  %s6 = ssub.s32 1, %s4
  %s7 = scalar_select 0, %s6, %s4
  loop: start=0, step=1, limit=18
  $region2: #{panet_forward.14} parent=0 // loop_pre_header
    _
  $region3: #{panet_forward.14} parent=0 // loop_header
    %s9 = sphi 0, %s13
    %p10 = scmp.ge.s32.totalorder %s9, 18
    %s16 = sphi 0, %s28
    %s17 = sphi 0, %s24
    %s18 = sphi 0, %s16
    %s19 = sphi 0, %s17
    %s20 = sphi 0, %s18
    %s21 = sphi 0, %s19
    %s33 = sphi 0, %s35
    %s36 = sphi 0, %s33
    %s37 = sphi 0, %s36
    %s53 = sphi 0, %s37
    %s57 = sphi 0, %s57
    %s59 = sphi 0, %s57
    %s60 = sphi 0, %s59
    %s74 = sphi 0, %s60
    %s78 = sphi 0, %s78
    %s80 = sphi 0, %s78
    %s81 = sphi 0, %s80
    %s95 = sphi 0, %s81
    %s103 = sphi 0, %s105
    %s106 = sphi 0, %s103
    %s107 = sphi 0, %s106
    %s123 = sphi 0, %s107
  $region4: #{panet_forward.14} parent=0 // loop_header_branch
    %12 = sbr.rel (%p10) target = $region8
  $region5: #{panet_forward.14} parent=0 // loop_body
    %s14 = ssub.s32 %s9, 1
    %s15 = ssub.s32 %s9, 2
    %s22 = sadd.s32 1, %s17
    %p23 = scmp.ge.s32.totalorder %s22, 8
    %s24 = scalar_select %p23, 0, %s22
    %s25 = sadd.s32 1, %s16
    %s26 = scalar_select %p23, %s25, %s16
    %p27 = scmp.ge.s32.totalorder %s26, 2
    %s28 = scalar_select %p27, 0, %s26
    %s29 = ssub.s32 %s16, %s28
    %s30 = ssub.s32 %s17, %s24
    %s31 = sor.u32 %s29, %s30
    %p32 = scmp.eq.s32.totalorder %s31, 0
    %s34 = sadd.s32 %s33, 1
    %s35 = scalar_select %p32, %s33, %s34
    %p38 = pneg %p32
    %p39 = scmp.eq.s32.totalorder %s9, 15
    %p40 = por %p38, %p39
    %p41 = scmp.ne.s32.totalorder %s33, %s36
    %p42 = scmp.eq.s32.totalorder %s9, 0
    %p43 = por %p41, %p42
    %p44 = scmp.ne.s32.totalorder %s33, %s36
    %p45 = scmp.eq.s32.totalorder %s14, 15
    %p46 = por %p44, %p45
    %p47 = scmp.ne.s32.totalorder %s36, %s37
    %p48 = scmp.eq.s32.totalorder %s14, 0
    %p49 = por %p47, %p48
    %p50 = scmp.ne.s32.totalorder %s36, %s37
    %p51 = scmp.eq.s32.totalorder %s15, 15
    %p52 = por %p50, %p51
    %p54 = scmp.ne.s32.totalorder %s37, %s53
    %p55 = scmp.eq.s32.totalorder %s15, 0
    %p56 = por %p54, %p55
    %s58 = sadd.s32 %s57, 1
    %p61 = scmp.eq.s32.totalorder %s9, 15
    %p62 = scmp.ne.s32.totalorder %s57, %s59
    %p63 = scmp.eq.s32.totalorder %s9, 0
    %p64 = por %p62, %p63
    %p65 = scmp.ne.s32.totalorder %s57, %s59
    %p66 = scmp.eq.s32.totalorder %s14, 15
    %p67 = por %p65, %p66
    %p68 = scmp.ne.s32.totalorder %s59, %s60
    %p69 = scmp.eq.s32.totalorder %s14, 0
    %p70 = por %p68, %p69
    %p71 = scmp.ne.s32.totalorder %s59, %s60
    %p72 = scmp.eq.s32.totalorder %s15, 15
    %p73 = por %p71, %p72
    %p75 = scmp.ne.s32.totalorder %s60, %s74
    %p76 = scmp.eq.s32.totalorder %s15, 0
    %p77 = por %p75, %p76
    %s79 = sadd.s32 %s78, 1
    %p82 = scmp.eq.s32.totalorder %s9, 15
    %p83 = scmp.ne.s32.totalorder %s78, %s80
    %p84 = scmp.eq.s32.totalorder %s9, 0
    %p85 = por %p83, %p84
    %p86 = scmp.ne.s32.totalorder %s78, %s80
    %p87 = scmp.eq.s32.totalorder %s14, 15
    %p88 = por %p86, %p87
    %p89 = scmp.ne.s32.totalorder %s80, %s81
    %p90 = scmp.eq.s32.totalorder %s14, 0
    %p91 = por %p89, %p90
    %p92 = scmp.ne.s32.totalorder %s80, %s81
    %p93 = scmp.eq.s32.totalorder %s15, 15
    %p94 = por %p92, %p93
    %p96 = scmp.ne.s32.totalorder %s81, %s95
    %p97 = scmp.eq.s32.totalorder %s15, 0
    %p98 = por %p96, %p97
    %s99 = ssub.s32 %s16, %s28
    %s100 = ssub.s32 %s17, %s24
    %s101 = sor.u32 %s99, %s100
    %p102 = scmp.eq.s32.totalorder %s101, 0
    %s104 = sadd.s32 %s103, 1
    %s105 = scalar_select %p102, %s103, %s104
    %p108 = pneg %p102
    %p109 = scmp.eq.s32.totalorder %s9, 15
    %p110 = por %p108, %p109
    %p111 = scmp.ne.s32.totalorder %s103, %s106
    %p112 = scmp.eq.s32.totalorder %s9, 0
    %p113 = por %p111, %p112
    %p114 = scmp.ne.s32.totalorder %s103, %s106
    %p115 = scmp.eq.s32.totalorder %s14, 15
    %p116 = por %p114, %p115
    %p117 = scmp.ne.s32.totalorder %s106, %s107
    %p118 = scmp.eq.s32.totalorder %s14, 0
    %p119 = por %p117, %p118
    %p120 = scmp.ne.s32.totalorder %s106, %s107
    %p121 = scmp.eq.s32.totalorder %s15, 15
    %p122 = por %p120, %p121
    %p124 = scmp.ne.s32.totalorder %s107, %s123
    %p125 = scmp.eq.s32.totalorder %s15, 0
    %p126 = por %p124, %p125
    %p127 = scmp.le.s32.totalorder 1, %s9
    %p128 = scmp.lt.s32.totalorder %s9, 17
    %p129 = pnand %p127, %p128
    %p130 = pneg %p129
    // Predicated region
    $region9: #{panet_forward.14} parent=5 // pred_check
      _
    $region10: #{panet_forward.14} parent=5 // pred_check_branch
      %132 = sbr.rel (%p129) target = $region12
    $region11: #{panet_forward.14} parent=5 // pred_region
      %s133 = ssub.s32 %s9, 1
      // Predicated region
      $region13: #{panet_forward.14} parent=11 // pred_check
        %p134 = pneg %p70
      $region14: #{panet_forward.14} parent=11 // pred_check_branch
        %136 = sbr.rel (%p134) target = $region16
      $region15: #{panet_forward.14} parent=11 // pred_region
        _
      $region16: #{panet_forward.14} parent=11 // pred_fallthru
        _
      // Predicated region
      $region17: #{panet_forward.14} parent=11 // pred_check
        %p137 = pneg %p91
      $region18: #{panet_forward.14} parent=11 // pred_check_branch
        %139 = sbr.rel (%p137) target = $region20
      $region19: #{panet_forward.14} parent=11 // pred_region
        _
      $region20: #{panet_forward.14} parent=11 // pred_fallthru
        _
    $region12: #{panet_forward.14} parent=5 // pred_fallthru
      _
    %p140 = scmp.lt.s32.totalorder %s9, 16
    // Predicated region
    $region21: #{panet_forward.14} parent=5 // pred_check
      %p141 = pneg %p140
    $region22: #{panet_forward.14} parent=5 // pred_check_branch
      %143 = sbr.rel (%p141) target = $region24
    $region23: #{panet_forward.14} parent=5 // pred_region
      // Predicated region
      $region25: #{panet_forward.14} parent=23 // pred_check
        %p144 = pneg %p43
      $region26: #{panet_forward.14} parent=23 // pred_check_branch
        %146 = sbr.rel (%p144) target = $region28
      $region27: #{panet_forward.14} parent=23 // pred_region
        %s147 = smul.u32 16, %s17
        %p148 = scmp.lt.s32.totalorder %s16, 1
        %s149 = scalar_select %p148, %s16, 1
        %p150 = scmp.lt.s32.totalorder %s147, 127
        %s151 = scalar_select %p150, %s147, 127
        %s152 = smul.addr %s149, 128
        %s153 = sadd.s32 %s151, %s152
        %s154 = smul.addr %s153, 4
        %s155 = scalar_lea.vmem %s0, %s154
        %s156 = smul.u32 16, %s17
      $region28: #{panet_forward.14} parent=23 // pred_fallthru
        _
    $region24: #{panet_forward.14} parent=5 // pred_fallthru
      _
    %p157 = scmp.le.s32.totalorder 1, %s9
    %p158 = scmp.lt.s32.totalorder %s9, 17
    %p159 = pnand %p157, %p158
    %p160 = pneg %p159
    // Predicated region
    $region29: #{panet_forward.14} parent=5 // pred_check
      _
    $region30: #{panet_forward.14} parent=5 // pred_check_branch
      %162 = sbr.rel (%p159) target = $region32
    $region31: #{panet_forward.14} parent=5 // pred_region
      %s163 = ssub.s32 %s9, 1
      %s164 = smul.u32 16, %s19
      %p165 = scmp.lt.s32.totalorder %s18, 1
      %s166 = scalar_select %p165, %s18, 1
      %p167 = scmp.lt.s32.totalorder %s164, 127
      %s168 = scalar_select %p167, %s164, 127
      %s169 = smul.addr %s166, 128
      %s170 = sadd.s32 %s168, %s169
      %s171 = smul.addr %s170, 4
      %s172 = scalar_lea.vmem %s0, %s171
      %p173 = pneg %p49
      %p174 = pneg %p46
      %p175 = pneg %p70
      %p176 = pneg %p67
      %p177 = pneg %p91
      %p178 = pneg %p88
      %p179 = pneg %p119
      %p180 = pneg %p116
      %s181 = smul.u32 16, %s19
      %p182 = scmp.lt.s32.totalorder %s18, 1
      %s183 = scalar_select %p182, %s18, 1
      %p184 = scmp.lt.s32.totalorder %s181, 127
      %s185 = scalar_select %p184, %s181, 127
      %s186 = smul.addr %s183, 128
      %s187 = sadd.s32 %s185, %s186
      %s188 = smul.addr %s187, 8
      %s189 = scalar_lea.vmem %s3, %s188
      %s190 = smul.u32 16, %s19
      %p191 = scmp.lt.s32.totalorder %s18, 1
      %s192 = scalar_select %p191, %s18, 1
      %p193 = scmp.lt.s32.totalorder %s190, 127
      %s194 = scalar_select %p193, %s190, 127
      %s195 = smul.addr %s192, 128
      %s196 = sadd.s32 %s194, %s195
      %s197 = smul.addr %s196, 4
      %s198 = scalar_lea.vmem %s0, %s197
      %s199 = smul.u32 16, %s19
      %s200 = smul.u32 16, %s19
      %p201 = scmp.lt.s32.totalorder %s18, 1
      %s202 = scalar_select %p201, %s18, 1
      %p203 = scmp.lt.s32.totalorder %s200, 127
      %s204 = scalar_select %p203, %s200, 127
      %s205 = smul.addr %s202, 128
      %s206 = sadd.s32 %s204, %s205
      %s207 = smul.addr %s206, 8
      %s208 = scalar_lea.vmem %s3, %s207
      %s209 = smul.u32 16, %s19
      %v210 = vld [vmem:[%s198] sm:$0xff]
      %v211 = vld [vmem:[%s198 + $0x8] sm:$0xff]
      %v212 = vld [vmem:[%s198 + $0x10] sm:$0xff]
      %v213 = vld [vmem:[%s198 + $0x18] sm:$0xff]
      %v214 = vld [vmem:[%s198 + $0x20] sm:$0xff]
      %v215 = vld [vmem:[%s198 + $0x28] sm:$0xff]
      %v216 = vld [vmem:[%s198 + $0x30] sm:$0xff]
      %v217 = vld [vmem:[%s198 + $0x38] sm:$0xff]
      %v218 = vld [vmem:[%s1] sm:$0xff]
      %v219 = vld [vmem:[%s2] sm:$0xff]
      %221 = vset.pattern.permute.xlu0 0
      %222 = vperm.xlu0 %221, %v219
      %v223 = vpop.permute.xlu0 %222
      %v233 = vcombine.high %v210, %v210
      %v234 = vcombine.high %v211, %v211
      %v235 = vcombine.high %v212, %v212
      %v236 = vcombine.high %v213, %v213
      %v237 = vcombine.high %v214, %v214
      %v238 = vcombine.high %v215, %v215
      %v239 = vcombine.high %v216, %v216
      %v240 = vcombine.high %v217, %v217
      %vm241 = vcmask 31744
      %v243 = vsel %vm241, %v218, 0
      %vm245 = vcmask 1043456
      %v246 = vsel %vm245, %v210, 0
      %v248 = vsel %vm245, %v233, 0
      %v250 = vsel %vm245, %v211, 0
      %v252 = vsel %vm245, %v234, 0
      %v254 = vsel %vm245, %v212, 0
      %v256 = vsel %vm245, %v235, 0
      %v258 = vsel %vm245, %v213, 0
      %v260 = vsel %vm245, %v236, 0
      %v262 = vsel %vm245, %v214, 0
      %v264 = vsel %vm245, %v237, 0
      %v266 = vsel %vm245, %v215, 0
      %v268 = vsel %vm245, %v238, 0
      %v270 = vsel %vm245, %v216, 0
      %v272 = vsel %vm245, %v239, 0
      %v274 = vsel %vm245, %v217, 0
      %v276 = vsel %vm245, %v240, 0
      %278 = vmatprep.subr.mxu0 %v248
      %279 = vmatpush1.msra.mxu0 %v246
      %280 = vmatprep.subr.mxu0 0.0
      %281 = vmatpush1.msra.mxu0 0.0
      %282 = vmatprep.subr.mxu0 0.0
      %283 = vmatpush1.msra.mxu0 0.0
      %284 = vmatprep.subr.mxu0 0.0
      %285 = vmatpush1.msra.mxu0 0.0
      %286 = vmatprep.subr.mxu0 0.0
      %287 = vmatpush1.msra.mxu0 0.0
      %288 = vmatprep.subr.mxu0 0.0
      %289 = vmatpush1.msra.mxu0 0.0
      %290 = vmatprep.subr.mxu0 0.0
      %291 = vmatpush1.msra.mxu0 0.0
      %292 = vmatprep.subr.mxu0 0.0
      %293 = vmatpush1.msra.mxu0 0.0
      %294 = vmatprep.subr.mxu0 0.0
      %295 = vmatpush1.msra.mxu0 0.0
      %296 = vmatprep.subr.mxu0 0.0
      %297 = vmatpush1.msra.mxu0 0.0
      %298 = vmatprep.subr.mxu0 0.0
      %299 = vmatpush1.msra.mxu0 0.0
      %300 = vmatprep.subr.mxu0 0.0
      %301 = vmatpush1.msra.mxu0 0.0
      %302 = vmatprep.subr.mxu0 0.0
      %303 = vmatpush1.msra.mxu0 0.0
      %304 = vmatprep.subr.mxu0 0.0
      %305 = vmatpush1.msra.mxu0 0.0
      %306 = vmatprep.subr.mxu0 0.0
      %307 = vmatpush1.msra.mxu0 0.0
      %308 = vmatprep.subr.mxu0 0.0
      %309 = vmatpush1.msra.mxu0 0.0
      %310 = vmatprep.subr.mxu0 0.0
      %311 = vmatpush1.msra.mxu0 0.0
      %312 = vmatprep.subr.mxu0 0.0
      %313 = vmatpush1.msra.mxu0 0.0
      %314 = vmatprep.subr.mxu0 0.0
      %315 = vmatpush1.msra.mxu0 0.0
      %316 = vmatprep.subr.mxu0 0.0
      %317 = vmatpush1.msra.mxu0 0.0
      %318 = vmatprep.subr.mxu0 0.0
      %319 = vmatpush1.msra.mxu0 0.0
      %320 = vmatprep.subr.mxu0 0.0
      %321 = vmatpush1.msra.mxu0 0.0
      %322 = vmatprep.subr.mxu0 0.0
      %323 = vmatpush1.msra.mxu0 0.0
      %324 = vmatprep.subr.mxu0 0.0
      %325 = vmatpush1.msra.mxu0 0.0
      %326 = vmatprep.subr.mxu0 0.0
      %327 = vmatpush1.msra.mxu0 0.0
      %328 = vmatprep.subr.mxu0 0.0
      %329 = vmatpush1.msra.mxu0 0.0
      %330 = vmatprep.subr.mxu0 0.0
      %331 = vmatpush1.msra.mxu0 0.0
      %332 = vmatprep.subr.mxu0 0.0
      %333 = vmatpush1.msra.mxu0 0.0
      %334 = vmatprep.subr.mxu0 0.0
      %335 = vmatpush1.msra.mxu0 0.0
      %336 = vmatprep.subr.mxu0 0.0
      %337 = vmatpush1.msra.mxu0 0.0
      %338 = vmatprep.subr.mxu0 0.0
      %339 = vmatpush1.msra.mxu0 0.0
      %340 = vmatprep.subr.mxu0 0.0
      %341 = vmatpush1.msra.mxu0 0.0
      %342 = vmatprep.mubr.f32.mxu0 0.0
      %343 = vmatmul.mubr.f32.gmra.mrb[0].mxu0 %v243
      %v344 = vpop.f32.mrb[0].mxu0
      %v345 = vadd.f32 %v223, %v344
      %v346 = vpop.f32.mrb[0].mxu0
      %v347 = vadd.f32 %v223, %v346
      %348 = vdwg.mxu0
      %349 = vmatprep.subr.mxu0 %v252
      %350 = vmatpush1.msra.mxu0 %v250
      %351 = vmatprep.subr.mxu0 0.0
      %352 = vmatpush1.msra.mxu0 0.0
      %353 = vmatprep.subr.mxu0 0.0
      %354 = vmatpush1.msra.mxu0 0.0
      %355 = vmatprep.subr.mxu0 0.0
      %356 = vmatpush1.msra.mxu0 0.0
      %357 = vmatprep.subr.mxu0 0.0
      %358 = vmatpush1.msra.mxu0 0.0
      %359 = vmatprep.subr.mxu0 0.0
      %360 = vmatpush1.msra.mxu0 0.0
      %361 = vmatprep.subr.mxu0 0.0
      %362 = vmatpush1.msra.mxu0 0.0
      %363 = vmatprep.subr.mxu0 0.0
      %364 = vmatpush1.msra.mxu0 0.0
      %365 = vmatprep.subr.mxu0 0.0
      %366 = vmatpush1.msra.mxu0 0.0
      %367 = vmatprep.subr.mxu0 0.0
      %368 = vmatpush1.msra.mxu0 0.0
      %369 = vmatprep.subr.mxu0 0.0
      %370 = vmatpush1.msra.mxu0 0.0
      %371 = vmatprep.subr.mxu0 0.0
      %372 = vmatpush1.msra.mxu0 0.0
      %373 = vmatprep.subr.mxu0 0.0
      %374 = vmatpush1.msra.mxu0 0.0
      %375 = vmatprep.subr.mxu0 0.0
      %376 = vmatpush1.msra.mxu0 0.0
      %377 = vmatprep.subr.mxu0 0.0
      %378 = vmatpush1.msra.mxu0 0.0
      %379 = vmatprep.subr.mxu0 0.0
      %380 = vmatpush1.msra.mxu0 0.0
      %381 = vmatprep.subr.mxu0 0.0
      %382 = vmatpush1.msra.mxu0 0.0
      %383 = vmatprep.subr.mxu0 0.0
      %384 = vmatpush1.msra.mxu0 0.0
      %385 = vmatprep.subr.mxu0 0.0
      %386 = vmatpush1.msra.mxu0 0.0
      %387 = vmatprep.subr.mxu0 0.0
      %388 = vmatpush1.msra.mxu0 0.0
      %389 = vmatprep.subr.mxu0 0.0
      %390 = vmatpush1.msra.mxu0 0.0
      %391 = vmatprep.subr.mxu0 0.0
      %392 = vmatpush1.msra.mxu0 0.0
      %393 = vmatprep.subr.mxu0 0.0
      %394 = vmatpush1.msra.mxu0 0.0
      %395 = vmatprep.subr.mxu0 0.0
      %396 = vmatpush1.msra.mxu0 0.0
      %397 = vmatprep.subr.mxu0 0.0
      %398 = vmatpush1.msra.mxu0 0.0
      %399 = vmatprep.subr.mxu0 0.0
      %400 = vmatpush1.msra.mxu0 0.0
      %401 = vmatprep.subr.mxu0 0.0
      %402 = vmatpush1.msra.mxu0 0.0
      %403 = vmatprep.subr.mxu0 0.0
      %404 = vmatpush1.msra.mxu0 0.0
      %405 = vmatprep.subr.mxu0 0.0
      %406 = vmatpush1.msra.mxu0 0.0
      %407 = vmatprep.subr.mxu0 0.0
      %408 = vmatpush1.msra.mxu0 0.0
      %409 = vmatprep.subr.mxu0 0.0
      %410 = vmatpush1.msra.mxu0 0.0
      %411 = vmatprep.subr.mxu0 0.0
      %412 = vmatpush1.msra.mxu0 0.0
      %413 = vmatprep.mubr.f32.mxu0 0.0
      %414 = vmatmul.mubr.f32.gmra.mrb[0].mxu0 %v243
      %v415 = vpop.f32.mrb[0].mxu0
      %v416 = vadd.f32 %v223, %v415
      %v417 = vpop.f32.mrb[0].mxu0
      %v418 = vadd.f32 %v223, %v417
      %419 = vdwg.mxu0
      %420 = vmatprep.subr.mxu0 %v256
      %421 = vmatpush1.msra.mxu0 %v254
      %422 = vmatprep.subr.mxu0 0.0
      %423 = vmatpush1.msra.mxu0 0.0
      %424 = vmatprep.subr.mxu0 0.0
      %425 = vmatpush1.msra.mxu0 0.0
      %426 = vmatprep.subr.mxu0 0.0
      %427 = vmatpush1.msra.mxu0 0.0
      %428 = vmatprep.subr.mxu0 0.0
      %429 = vmatpush1.msra.mxu0 0.0
      %430 = vmatprep.subr.mxu0 0.0
      %431 = vmatpush1.msra.mxu0 0.0
      %432 = vmatprep.subr.mxu0 0.0
      %433 = vmatpush1.msra.mxu0 0.0
      %434 = vmatprep.subr.mxu0 0.0
      %435 = vmatpush1.msra.mxu0 0.0
      %436 = vmatprep.subr.mxu0 0.0
      %437 = vmatpush1.msra.mxu0 0.0
      %438 = vmatprep.subr.mxu0 0.0
      %439 = vmatpush1.msra.mxu0 0.0
      %440 = vmatprep.subr.mxu0 0.0
      %441 = vmatpush1.msra.mxu0 0.0
      %442 = vmatprep.subr.mxu0 0.0
      %443 = vmatpush1.msra.mxu0 0.0
      %444 = vmatprep.subr.mxu0 0.0
      %445 = vmatpush1.msra.mxu0 0.0
      %446 = vmatprep.subr.mxu0 0.0
      %447 = vmatpush1.msra.mxu0 0.0
      %448 = vmatprep.subr.mxu0 0.0
      %449 = vmatpush1.msra.mxu0 0.0
      %450 = vmatprep.subr.mxu0 0.0
      %451 = vmatpush1.msra.mxu0 0.0
      %452 = vmatprep.subr.mxu0 0.0
      %453 = vmatpush1.msra.mxu0 0.0
      %454 = vmatprep.subr.mxu0 0.0
      %455 = vmatpush1.msra.mxu0 0.0
      %456 = vmatprep.subr.mxu0 0.0
      %457 = vmatpush1.msra.mxu0 0.0
      %458 = vmatprep.subr.mxu0 0.0
      %459 = vmatpush1.msra.mxu0 0.0
      %460 = vmatprep.subr.mxu0 0.0
      %461 = vmatpush1.msra.mxu0 0.0
      %462 = vmatprep.subr.mxu0 0.0
      %463 = vmatpush1.msra.mxu0 0.0
      %464 = vmatprep.subr.mxu0 0.0
      %465 = vmatpush1.msra.mxu0 0.0
      %466 = vmatprep.subr.mxu0 0.0
      %467 = vmatpush1.msra.mxu0 0.0
      %468 = vmatprep.subr.mxu0 0.0
      %469 = vmatpush1.msra.mxu0 0.0
      %470 = vmatprep.subr.mxu0 0.0
      %471 = vmatpush1.msra.mxu0 0.0
      %472 = vmatprep.subr.mxu0 0.0
      %473 = vmatpush1.msra.mxu0 0.0
      %474 = vmatprep.subr.mxu0 0.0
      %475 = vmatpush1.msra.mxu0 0.0
      %476 = vmatprep.subr.mxu0 0.0
      %477 = vmatpush1.msra.mxu0 0.0
      %478 = vmatprep.subr.mxu0 0.0
      %479 = vmatpush1.msra.mxu0 0.0
      %480 = vmatprep.subr.mxu0 0.0
      %481 = vmatpush1.msra.mxu0 0.0
      %482 = vmatprep.subr.mxu0 0.0
      %483 = vmatpush1.msra.mxu0 0.0
      %484 = vmatprep.mubr.f32.mxu0 0.0
      %485 = vmatmul.mubr.f32.gmra.mrb[0].mxu0 %v243
      %v486 = vpop.f32.mrb[0].mxu0
      %v487 = vadd.f32 %v223, %v486
      %v488 = vpop.f32.mrb[0].mxu0
      %v489 = vadd.f32 %v223, %v488
      %490 = vdwg.mxu0
      %491 = vmatprep.subr.mxu0 %v260
      %492 = vmatpush1.msra.mxu0 %v258
      %493 = vmatprep.subr.mxu0 0.0
      %494 = vmatpush1.msra.mxu0 0.0
      %495 = vmatprep.subr.mxu0 0.0
      %496 = vmatpush1.msra.mxu0 0.0
      %497 = vmatprep.subr.mxu0 0.0
      %498 = vmatpush1.msra.mxu0 0.0
      %499 = vmatprep.subr.mxu0 0.0
      %500 = vmatpush1.msra.mxu0 0.0
      %501 = vmatprep.subr.mxu0 0.0
      %502 = vmatpush1.msra.mxu0 0.0
      %503 = vmatprep.subr.mxu0 0.0
      %504 = vmatpush1.msra.mxu0 0.0
      %505 = vmatprep.subr.mxu0 0.0
      %506 = vmatpush1.msra.mxu0 0.0
      %507 = vmatprep.subr.mxu0 0.0
      %508 = vmatpush1.msra.mxu0 0.0
      %509 = vmatprep.subr.mxu0 0.0
      %510 = vmatpush1.msra.mxu0 0.0
      %511 = vmatprep.subr.mxu0 0.0
      %512 = vmatpush1.msra.mxu0 0.0
      %513 = vmatprep.subr.mxu0 0.0
      %514 = vmatpush1.msra.mxu0 0.0
      %515 = vmatprep.subr.mxu0 0.0
      %516 = vmatpush1.msra.mxu0 0.0
      %517 = vmatprep.subr.mxu0 0.0
      %518 = vmatpush1.msra.mxu0 0.0
      %519 = vmatprep.subr.mxu0 0.0
      %520 = vmatpush1.msra.mxu0 0.0
      %521 = vmatprep.subr.mxu0 0.0
      %522 = vmatpush1.msra.mxu0 0.0
      %523 = vmatprep.subr.mxu0 0.0
      %524 = vmatpush1.msra.mxu0 0.0
      %525 = vmatprep.subr.mxu0 0.0
      %526 = vmatpush1.msra.mxu0 0.0
      %527 = vmatprep.subr.mxu0 0.0
      %528 = vmatpush1.msra.mxu0 0.0
      %529 = vmatprep.subr.mxu0 0.0
      %530 = vmatpush1.msra.mxu0 0.0
      %531 = vmatprep.subr.mxu0 0.0
      %532 = vmatpush1.msra.mxu0 0.0
      %533 = vmatprep.subr.mxu0 0.0
      %534 = vmatpush1.msra.mxu0 0.0
      %535 = vmatprep.subr.mxu0 0.0
      %536 = vmatpush1.msra.mxu0 0.0
      %537 = vmatprep.subr.mxu0 0.0
      %538 = vmatpush1.msra.mxu0 0.0
      %539 = vmatprep.subr.mxu0 0.0
      %540 = vmatpush1.msra.mxu0 0.0
      %541 = vmatprep.subr.mxu0 0.0
      %542 = vmatpush1.msra.mxu0 0.0
      %543 = vmatprep.subr.mxu0 0.0
      %544 = vmatpush1.msra.mxu0 0.0
      %545 = vmatprep.subr.mxu0 0.0
      %546 = vmatpush1.msra.mxu0 0.0
      %547 = vmatprep.subr.mxu0 0.0
      %548 = vmatpush1.msra.mxu0 0.0
      %549 = vmatprep.subr.mxu0 0.0
      %550 = vmatpush1.msra.mxu0 0.0
      %551 = vmatprep.subr.mxu0 0.0
      %552 = vmatpush1.msra.mxu0 0.0
      %553 = vmatprep.subr.mxu0 0.0
      %554 = vmatpush1.msra.mxu0 0.0
      %555 = vmatprep.mubr.f32.mxu0 0.0
      %556 = vmatmul.mubr.f32.gmra.mrb[0].mxu0 %v243
      %v557 = vpop.f32.mrb[0].mxu0
      %v558 = vadd.f32 %v223, %v557
      %v559 = vpop.f32.mrb[0].mxu0
      %v560 = vadd.f32 %v223, %v559
      %561 = vdwg.mxu0
      %562 = vmatprep.subr.mxu0 %v264
      %563 = vmatpush1.msra.mxu0 %v262
      %564 = vmatprep.subr.mxu0 0.0
      %565 = vmatpush1.msra.mxu0 0.0
      %566 = vmatprep.subr.mxu0 0.0
      %567 = vmatpush1.msra.mxu0 0.0
      %568 = vmatprep.subr.mxu0 0.0
      %569 = vmatpush1.msra.mxu0 0.0
      %570 = vmatprep.subr.mxu0 0.0
      %571 = vmatpush1.msra.mxu0 0.0
      %572 = vmatprep.subr.mxu0 0.0
      %573 = vmatpush1.msra.mxu0 0.0
      %574 = vmatprep.subr.mxu0 0.0
      %575 = vmatpush1.msra.mxu0 0.0
      %576 = vmatprep.subr.mxu0 0.0
      %577 = vmatpush1.msra.mxu0 0.0
      %578 = vmatprep.subr.mxu0 0.0
      %579 = vmatpush1.msra.mxu0 0.0
      %580 = vmatprep.subr.mxu0 0.0
      %581 = vmatpush1.msra.mxu0 0.0
      %582 = vmatprep.subr.mxu0 0.0
      %583 = vmatpush1.msra.mxu0 0.0
      %584 = vmatprep.subr.mxu0 0.0
      %585 = vmatpush1.msra.mxu0 0.0
      %586 = vmatprep.subr.mxu0 0.0
      %587 = vmatpush1.msra.mxu0 0.0
      %588 = vmatprep.subr.mxu0 0.0
      %589 = vmatpush1.msra.mxu0 0.0
      %590 = vmatprep.subr.mxu0 0.0
      %591 = vmatpush1.msra.mxu0 0.0
      %592 = vmatprep.subr.mxu0 0.0
      %593 = vmatpush1.msra.mxu0 0.0
      %594 = vmatprep.subr.mxu0 0.0
      %595 = vmatpush1.msra.mxu0 0.0
      %596 = vmatprep.subr.mxu0 0.0
      %597 = vmatpush1.msra.mxu0 0.0
      %598 = vmatprep.subr.mxu0 0.0
      %599 = vmatpush1.msra.mxu0 0.0
      %600 = vmatprep.subr.mxu0 0.0
      %601 = vmatpush1.msra.mxu0 0.0
      %602 = vmatprep.subr.mxu0 0.0
      %603 = vmatpush1.msra.mxu0 0.0
      %604 = vmatprep.subr.mxu0 0.0
      %605 = vmatpush1.msra.mxu0 0.0
      %606 = vmatprep.subr.mxu0 0.0
      %607 = vmatpush1.msra.mxu0 0.0
      %608 = vmatprep.subr.mxu0 0.0
      %609 = vmatpush1.msra.mxu0 0.0
      %610 = vmatprep.subr.mxu0 0.0
      %611 = vmatpush1.msra.mxu0 0.0
      %612 = vmatprep.subr.mxu0 0.0
      %613 = vmatpush1.msra.mxu0 0.0
      %614 = vmatprep.subr.mxu0 0.0
      %615 = vmatpush1.msra.mxu0 0.0
      %616 = vmatprep.subr.mxu0 0.0
      %617 = vmatpush1.msra.mxu0 0.0
      %618 = vmatprep.subr.mxu0 0.0
      %619 = vmatpush1.msra.mxu0 0.0
      %620 = vmatprep.subr.mxu0 0.0
      %621 = vmatpush1.msra.mxu0 0.0
      %622 = vmatprep.subr.mxu0 0.0
      %623 = vmatpush1.msra.mxu0 0.0
      %624 = vmatprep.subr.mxu0 0.0
      %625 = vmatpush1.msra.mxu0 0.0
      %626 = vmatprep.mubr.f32.mxu0 0.0
      %627 = vmatmul.mubr.f32.gmra.mrb[0].mxu0 %v243
      %v628 = vpop.f32.mrb[0].mxu0
      %v629 = vadd.f32 %v223, %v628
      %v630 = vpop.f32.mrb[0].mxu0
      %v631 = vadd.f32 %v223, %v630
      %632 = vdwg.mxu0
      %633 = vmatprep.subr.mxu0 %v268
      %634 = vmatpush1.msra.mxu0 %v266
      %635 = vmatprep.subr.mxu0 0.0
      %636 = vmatpush1.msra.mxu0 0.0
      %637 = vmatprep.subr.mxu0 0.0
      %638 = vmatpush1.msra.mxu0 0.0
      %639 = vmatprep.subr.mxu0 0.0
      %640 = vmatpush1.msra.mxu0 0.0
      %641 = vmatprep.subr.mxu0 0.0
      %642 = vmatpush1.msra.mxu0 0.0
      %643 = vmatprep.subr.mxu0 0.0
      %644 = vmatpush1.msra.mxu0 0.0
      %645 = vmatprep.subr.mxu0 0.0
      %646 = vmatpush1.msra.mxu0 0.0
      %647 = vmatprep.subr.mxu0 0.0
      %648 = vmatpush1.msra.mxu0 0.0
      %649 = vmatprep.subr.mxu0 0.0
      %650 = vmatpush1.msra.mxu0 0.0
      %651 = vmatprep.subr.mxu0 0.0
      %652 = vmatpush1.msra.mxu0 0.0
      %653 = vmatprep.subr.mxu0 0.0
      %654 = vmatpush1.msra.mxu0 0.0
      %655 = vmatprep.subr.mxu0 0.0
      %656 = vmatpush1.msra.mxu0 0.0
      %657 = vmatprep.subr.mxu0 0.0
      %658 = vmatpush1.msra.mxu0 0.0
      %659 = vmatprep.subr.mxu0 0.0
      %660 = vmatpush1.msra.mxu0 0.0
      %661 = vmatprep.subr.mxu0 0.0
      %662 = vmatpush1.msra.mxu0 0.0
      %663 = vmatprep.subr.mxu0 0.0
      %664 = vmatpush1.msra.mxu0 0.0
      %665 = vmatprep.subr.mxu0 0.0
      %666 = vmatpush1.msra.mxu0 0.0
      %667 = vmatprep.subr.mxu0 0.0
      %668 = vmatpush1.msra.mxu0 0.0
      %669 = vmatprep.subr.mxu0 0.0
      %670 = vmatpush1.msra.mxu0 0.0
      %671 = vmatprep.subr.mxu0 0.0
      %672 = vmatpush1.msra.mxu0 0.0
      %673 = vmatprep.subr.mxu0 0.0
      %674 = vmatpush1.msra.mxu0 0.0
      %675 = vmatprep.subr.mxu0 0.0
      %676 = vmatpush1.msra.mxu0 0.0
      %677 = vmatprep.subr.mxu0 0.0
      %678 = vmatpush1.msra.mxu0 0.0
      %679 = vmatprep.subr.mxu0 0.0
      %680 = vmatpush1.msra.mxu0 0.0
      %681 = vmatprep.subr.mxu0 0.0
      %682 = vmatpush1.msra.mxu0 0.0
      %683 = vmatprep.subr.mxu0 0.0
      %684 = vmatpush1.msra.mxu0 0.0
      %685 = vmatprep.subr.mxu0 0.0
      %686 = vmatpush1.msra.mxu0 0.0
      %687 = vmatprep.subr.mxu0 0.0
      %688 = vmatpush1.msra.mxu0 0.0
      %689 = vmatprep.subr.mxu0 0.0
      %690 = vmatpush1.msra.mxu0 0.0
      %691 = vmatprep.subr.mxu0 0.0
      %692 = vmatpush1.msra.mxu0 0.0
      %693 = vmatprep.subr.mxu0 0.0
      %694 = vmatpush1.msra.mxu0 0.0
      %695 = vmatprep.subr.mxu0 0.0
      %696 = vmatpush1.msra.mxu0 0.0
      %697 = vmatprep.mubr.f32.mxu0 0.0
      %698 = vmatmul.mubr.f32.gmra.mrb[0].mxu0 %v243
      %v699 = vpop.f32.mrb[0].mxu0
      %v700 = vadd.f32 %v223, %v699
      %v701 = vpop.f32.mrb[0].mxu0
      %v702 = vadd.f32 %v223, %v701
      %703 = vdwg.mxu0
      %704 = vmatprep.subr.mxu0 %v272
      %705 = vmatpush1.msra.mxu0 %v270
      %706 = vmatprep.subr.mxu0 0.0
      %707 = vmatpush1.msra.mxu0 0.0
      %708 = vmatprep.subr.mxu0 0.0
      %709 = vmatpush1.msra.mxu0 0.0
      %710 = vmatprep.subr.mxu0 0.0
      %711 = vmatpush1.msra.mxu0 0.0
      %712 = vmatprep.subr.mxu0 0.0
      %713 = vmatpush1.msra.mxu0 0.0
      %714 = vmatprep.subr.mxu0 0.0
      %715 = vmatpush1.msra.mxu0 0.0
      %716 = vmatprep.subr.mxu0 0.0
      %717 = vmatpush1.msra.mxu0 0.0
      %718 = vmatprep.subr.mxu0 0.0
      %719 = vmatpush1.msra.mxu0 0.0
      %720 = vmatprep.subr.mxu0 0.0
      %721 = vmatpush1.msra.mxu0 0.0
      %722 = vmatprep.subr.mxu0 0.0
      %723 = vmatpush1.msra.mxu0 0.0
      %724 = vmatprep.subr.mxu0 0.0
      %725 = vmatpush1.msra.mxu0 0.0
      %726 = vmatprep.subr.mxu0 0.0
      %727 = vmatpush1.msra.mxu0 0.0
      %728 = vmatprep.subr.mxu0 0.0
      %729 = vmatpush1.msra.mxu0 0.0
      %730 = vmatprep.subr.mxu0 0.0
      %731 = vmatpush1.msra.mxu0 0.0
      %732 = vmatprep.subr.mxu0 0.0
      %733 = vmatpush1.msra.mxu0 0.0
      %734 = vmatprep.subr.mxu0 0.0
      %735 = vmatpush1.msra.mxu0 0.0
      %736 = vmatprep.subr.mxu0 0.0
      %737 = vmatpush1.msra.mxu0 0.0
      %738 = vmatprep.subr.mxu0 0.0
      %739 = vmatpush1.msra.mxu0 0.0
      %740 = vmatprep.subr.mxu0 0.0
      %741 = vmatpush1.msra.mxu0 0.0
      %742 = vmatprep.subr.mxu0 0.0
      %743 = vmatpush1.msra.mxu0 0.0
      %744 = vmatprep.subr.mxu0 0.0
      %745 = vmatpush1.msra.mxu0 0.0
      %746 = vmatprep.subr.mxu0 0.0
      %747 = vmatpush1.msra.mxu0 0.0
      %748 = vmatprep.subr.mxu0 0.0
      %749 = vmatpush1.msra.mxu0 0.0
      %750 = vmatprep.subr.mxu0 0.0
      %751 = vmatpush1.msra.mxu0 0.0
      %752 = vmatprep.subr.mxu0 0.0
      %753 = vmatpush1.msra.mxu0 0.0
      %754 = vmatprep.subr.mxu0 0.0
      %755 = vmatpush1.msra.mxu0 0.0
      %756 = vmatprep.subr.mxu0 0.0
      %757 = vmatpush1.msra.mxu0 0.0
      %758 = vmatprep.subr.mxu0 0.0
      %759 = vmatpush1.msra.mxu0 0.0
      %760 = vmatprep.subr.mxu0 0.0
      %761 = vmatpush1.msra.mxu0 0.0
      %762 = vmatprep.subr.mxu0 0.0
      %763 = vmatpush1.msra.mxu0 0.0
      %764 = vmatprep.subr.mxu0 0.0
      %765 = vmatpush1.msra.mxu0 0.0
      %766 = vmatprep.subr.mxu0 0.0
      %767 = vmatpush1.msra.mxu0 0.0
      %768 = vmatprep.mubr.f32.mxu0 0.0
      %769 = vmatmul.mubr.f32.gmra.mrb[0].mxu0 %v243
      %v770 = vpop.f32.mrb[0].mxu0
      %v771 = vadd.f32 %v223, %v770
      %v772 = vpop.f32.mrb[0].mxu0
      %v773 = vadd.f32 %v223, %v772
      %774 = vdwg.mxu0
      %775 = vmatprep.subr.mxu0 %v276
      %776 = vmatpush1.msra.mxu0 %v274
      %777 = vmatprep.subr.mxu0 0.0
      %778 = vmatpush1.msra.mxu0 0.0
      %779 = vmatprep.subr.mxu0 0.0
      %780 = vmatpush1.msra.mxu0 0.0
      %781 = vmatprep.subr.mxu0 0.0
      %782 = vmatpush1.msra.mxu0 0.0
      %783 = vmatprep.subr.mxu0 0.0
      %784 = vmatpush1.msra.mxu0 0.0
      %785 = vmatprep.subr.mxu0 0.0
      %786 = vmatpush1.msra.mxu0 0.0
      %787 = vmatprep.subr.mxu0 0.0
      %788 = vmatpush1.msra.mxu0 0.0
      %789 = vmatprep.subr.mxu0 0.0
      %790 = vmatpush1.msra.mxu0 0.0
      %791 = vmatprep.subr.mxu0 0.0
      %792 = vmatpush1.msra.mxu0 0.0
      %793 = vmatprep.subr.mxu0 0.0
      %794 = vmatpush1.msra.mxu0 0.0
      %795 = vmatprep.subr.mxu0 0.0
      %796 = vmatpush1.msra.mxu0 0.0
      %797 = vmatprep.subr.mxu0 0.0
      %798 = vmatpush1.msra.mxu0 0.0
      %799 = vmatprep.subr.mxu0 0.0
      %800 = vmatpush1.msra.mxu0 0.0
      %801 = vmatprep.subr.mxu0 0.0
      %802 = vmatpush1.msra.mxu0 0.0
      %803 = vmatprep.subr.mxu0 0.0
      %804 = vmatpush1.msra.mxu0 0.0
      %805 = vmatprep.subr.mxu0 0.0
      %806 = vmatpush1.msra.mxu0 0.0
      %807 = vmatprep.subr.mxu0 0.0
      %808 = vmatpush1.msra.mxu0 0.0
      %809 = vmatprep.subr.mxu0 0.0
      %810 = vmatpush1.msra.mxu0 0.0
      %811 = vmatprep.subr.mxu0 0.0
      %812 = vmatpush1.msra.mxu0 0.0
      %813 = vmatprep.subr.mxu0 0.0
      %814 = vmatpush1.msra.mxu0 0.0
      %815 = vmatprep.subr.mxu0 0.0
      %816 = vmatpush1.msra.mxu0 0.0
      %817 = vmatprep.subr.mxu0 0.0
      %818 = vmatpush1.msra.mxu0 0.0
      %819 = vmatprep.subr.mxu0 0.0
      %820 = vmatpush1.msra.mxu0 0.0
      %821 = vmatprep.subr.mxu0 0.0
      %822 = vmatpush1.msra.mxu0 0.0
      %823 = vmatprep.subr.mxu0 0.0
      %824 = vmatpush1.msra.mxu0 0.0
      %825 = vmatprep.subr.mxu0 0.0
      %826 = vmatpush1.msra.mxu0 0.0
      %827 = vmatprep.subr.mxu0 0.0
      %828 = vmatpush1.msra.mxu0 0.0
      %829 = vmatprep.subr.mxu0 0.0
      %830 = vmatpush1.msra.mxu0 0.0
      %831 = vmatprep.subr.mxu0 0.0
      %832 = vmatpush1.msra.mxu0 0.0
      %833 = vmatprep.subr.mxu0 0.0
      %834 = vmatpush1.msra.mxu0 0.0
      %835 = vmatprep.subr.mxu0 0.0
      %836 = vmatpush1.msra.mxu0 0.0
      %837 = vmatprep.subr.mxu0 0.0
      %838 = vmatpush1.msra.mxu0 0.0
      %839 = vmatprep.mubr.f32.mxu0 0.0
      %840 = vmatmul.mubr.f32.gmra.mrb[0].mxu0 %v243
      %v841 = vpop.f32.mrb[0].mxu0
      %v842 = vadd.f32 %v223, %v841
      %v843 = vpop.f32.mrb[0].mxu0
      %v844 = vadd.f32 %v223, %v843
      %845 = vdwg.mxu0
      %v846 = vmax.f32 %v345, 0.0
      %v847 = vmax.f32 %v347, 0.0
      %v848 = vmax.f32 %v416, 0.0
      %v849 = vmax.f32 %v418, 0.0
      %v850 = vmax.f32 %v487, 0.0
      %v851 = vmax.f32 %v489, 0.0
      %v852 = vmax.f32 %v558, 0.0
      %v853 = vmax.f32 %v560, 0.0
      %v854 = vmax.f32 %v629, 0.0
      %v855 = vmax.f32 %v631, 0.0
      %v856 = vmax.f32 %v700, 0.0
      %v857 = vmax.f32 %v702, 0.0
      %v858 = vmax.f32 %v771, 0.0
      %v859 = vmax.f32 %v773, 0.0
      %v860 = vmax.f32 %v842, 0.0
      %v861 = vmax.f32 %v844, 0.0
      %862 = vst [vmem:[%s208] sm:$0xff] %v846
      %863 = vst [vmem:[%s208 + $0x8] sm:$0xff] %v847
      %864 = vst [vmem:[%s208 + $0x10] sm:$0xff] %v848
      %865 = vst [vmem:[%s208 + $0x18] sm:$0xff] %v849
      %866 = vst [vmem:[%s208 + $0x20] sm:$0xff] %v850
      %867 = vst [vmem:[%s208 + $0x28] sm:$0xff] %v851
      %868 = vst [vmem:[%s208 + $0x30] sm:$0xff] %v852
      %869 = vst [vmem:[%s208 + $0x38] sm:$0xff] %v853
      %870 = vst [vmem:[%s208 + $0x40] sm:$0xff] %v854
      %871 = vst [vmem:[%s208 + $0x48] sm:$0xff] %v855
      %872 = vst [vmem:[%s208 + $0x50] sm:$0xff] %v856
      %873 = vst [vmem:[%s208 + $0x58] sm:$0xff] %v857
      %874 = vst [vmem:[%s208 + $0x60] sm:$0xff] %v858
      %875 = vst [vmem:[%s208 + $0x68] sm:$0xff] %v859
      %876 = vst [vmem:[%s208 + $0x70] sm:$0xff] %v860
      %877 = vst [vmem:[%s208 + $0x78] sm:$0xff] %v861
      %s878 = smul.u32 16, %s19
      %p879 = scmp.lt.s32.totalorder %s18, 1
      %s880 = scalar_select %p879, %s18, 1
      %p881 = scmp.lt.s32.totalorder %s878, 127
      %s882 = scalar_select %p881, %s878, 127
      %s883 = smul.addr %s880, 128
      %s884 = sadd.s32 %s882, %s883
      %s885 = smul.addr %s884, 8
      %s886 = scalar_lea.vmem %s3, %s885
      // Predicated region
      $region33: #{panet_forward.14} parent=31 // pred_check
        %p887 = pneg %p116
      $region34: #{panet_forward.14} parent=31 // pred_check_branch
        %889 = sbr.rel (%p887) target = $region36
      $region35: #{panet_forward.14} parent=31 // pred_region
        %s890 = smul.u32 16, %s19
      $region36: #{panet_forward.14} parent=31 // pred_fallthru
        _
    $region32: #{panet_forward.14} parent=5 // pred_fallthru
      _
    %p891 = scmp.le.s32.totalorder 2, %s9
    // Predicated region
    $region37: #{panet_forward.14} parent=5 // pred_check
      %p892 = pneg %p891
    $region38: #{panet_forward.14} parent=5 // pred_check_branch
      %894 = sbr.rel (%p892) target = $region40
    $region39: #{panet_forward.14} parent=5 // pred_region
      %s895 = ssub.s32 %s9, 2
      // Predicated region
      $region41: #{panet_forward.14} parent=39 // pred_check
        %p896 = pneg %p122
      $region42: #{panet_forward.14} parent=39 // pred_check_branch
        %898 = sbr.rel (%p896) target = $region44
      $region43: #{panet_forward.14} parent=39 // pred_region
        %s899 = smul.u32 16, %s21
        %p900 = scmp.lt.s32.totalorder %s20, 1
        %s901 = scalar_select %p900, %s20, 1
        %p902 = scmp.lt.s32.totalorder %s899, 127
        %s903 = scalar_select %p902, %s899, 127
        %s904 = smul.addr %s901, 128
        %s905 = sadd.s32 %s903, %s904
        %s906 = smul.addr %s905, 8
        %s907 = scalar_lea.vmem %s3, %s906
      $region44: #{panet_forward.14} parent=39 // pred_fallthru
        _
    $region40: #{panet_forward.14} parent=5 // pred_fallthru
      _
  $region6: #{panet_forward.14} parent=0 // loop_footer
    %s13 = sadd.s32 1, %s9
  $region7: #{panet_forward.14} parent=0 // loop_footer_branch
    %8 = sbr.rel target = $region3
  $region8: #{panet_forward.14} parent=0 // loop_exit
    _

// kernel: panet_forward.13
$region0: #{panet_forward.13}
  #allocation0 [shape = 'u32[]', space=smem, size = 0x4, offset = 0x4, fixed_abs, tag = 'smem constant byte address 0x4 - core index']
  #allocation1 [shape = 'u32[144,128]{1,0:T(1,128)}', space=vmem, size = 0x12000, scoped, tag = 'internal scratch']
  %s0 = inlined_call_operand.vmem [shape: f32[2,4,4096], index: 0, kind: input, shape index: {}]
  %s1 = inlined_call_operand.vmem [shape: f32[8,4], index: 1, kind: input, shape index: {}]
  %s2 = inlined_call_operand.vmem [shape: f32[8,1], index: 2, kind: input, shape index: {}]
  %s3 = inlined_call_operand.vmem [shape: f32[2,8,4096], index: 3, kind: output, shape index: {}]
  %s4 = sld [smem:[#allocation0]]
  $region45: #{panet_forward.13} parent=0
    _
  %s6 = ssub.s32 1, %s4
  %s7 = scalar_select 0, %s6, %s4
  loop: start=0, step=1, limit=6
  $region2: #{panet_forward.13} parent=0 // loop_pre_header
    _
  $region3: #{panet_forward.13} parent=0 // loop_header
    %s9 = sphi 0, %s13
    %p10 = scmp.ge.s32.totalorder %s9, 6
    %s16 = sphi 0, %s28
    %s17 = sphi 0, %s24
    %s18 = sphi 0, %s16
    %s19 = sphi 0, %s17
    %s20 = sphi 0, %s18
    %s21 = sphi 0, %s19
    %s33 = sphi 0, %s35
    %s36 = sphi 0, %s33
    %s37 = sphi 0, %s36
    %s53 = sphi 0, %s37
    %s57 = sphi 0, %s57
    %s59 = sphi 0, %s57
    %s60 = sphi 0, %s59
    %s74 = sphi 0, %s60
    %s78 = sphi 0, %s78
    %s80 = sphi 0, %s78
    %s81 = sphi 0, %s80
    %s95 = sphi 0, %s81
    %s103 = sphi 0, %s105
    %s106 = sphi 0, %s103
    %s107 = sphi 0, %s106
    %s123 = sphi 0, %s107
  $region4: #{panet_forward.13} parent=0 // loop_header_branch
    %12 = sbr.rel (%p10) target = $region8
  $region5: #{panet_forward.13} parent=0 // loop_body
    %s14 = ssub.s32 %s9, 1
    %s15 = ssub.s32 %s9, 2
    %s22 = sadd.s32 1, %s17
    %p23 = scmp.ge.s32.totalorder %s22, 2
    %s24 = scalar_select %p23, 0, %s22
    %s25 = sadd.s32 1, %s16
    %s26 = scalar_select %p23, %s25, %s16
    %p27 = scmp.ge.s32.totalorder %s26, 2
    %s28 = scalar_select %p27, 0, %s26
    %s29 = ssub.s32 %s16, %s28
    %s30 = ssub.s32 %s17, %s24
    %s31 = sor.u32 %s29, %s30
    %p32 = scmp.eq.s32.totalorder %s31, 0
    %s34 = sadd.s32 %s33, 1
    %s35 = scalar_select %p32, %s33, %s34
    %p38 = pneg %p32
    %p39 = scmp.eq.s32.totalorder %s9, 3
    %p40 = por %p38, %p39
    %p41 = scmp.ne.s32.totalorder %s33, %s36
    %p42 = scmp.eq.s32.totalorder %s9, 0
    %p43 = por %p41, %p42
    %p44 = scmp.ne.s32.totalorder %s33, %s36
    %p45 = scmp.eq.s32.totalorder %s14, 3
    %p46 = por %p44, %p45
    %p47 = scmp.ne.s32.totalorder %s36, %s37
    %p48 = scmp.eq.s32.totalorder %s14, 0
    %p49 = por %p47, %p48
    %p50 = scmp.ne.s32.totalorder %s36, %s37
    %p51 = scmp.eq.s32.totalorder %s15, 3
    %p52 = por %p50, %p51
    %p54 = scmp.ne.s32.totalorder %s37, %s53
    %p55 = scmp.eq.s32.totalorder %s15, 0
    %p56 = por %p54, %p55
    %s58 = sadd.s32 %s57, 1
    %p61 = scmp.eq.s32.totalorder %s9, 3
    %p62 = scmp.ne.s32.totalorder %s57, %s59
    %p63 = scmp.eq.s32.totalorder %s9, 0
    %p64 = por %p62, %p63
    %p65 = scmp.ne.s32.totalorder %s57, %s59
    %p66 = scmp.eq.s32.totalorder %s14, 3
    %p67 = por %p65, %p66
    %p68 = scmp.ne.s32.totalorder %s59, %s60
    %p69 = scmp.eq.s32.totalorder %s14, 0
    %p70 = por %p68, %p69
    %p71 = scmp.ne.s32.totalorder %s59, %s60
    %p72 = scmp.eq.s32.totalorder %s15, 3
    %p73 = por %p71, %p72
    %p75 = scmp.ne.s32.totalorder %s60, %s74
    %p76 = scmp.eq.s32.totalorder %s15, 0
    %p77 = por %p75, %p76
    %s79 = sadd.s32 %s78, 1
    %p82 = scmp.eq.s32.totalorder %s9, 3
    %p83 = scmp.ne.s32.totalorder %s78, %s80
    %p84 = scmp.eq.s32.totalorder %s9, 0
    %p85 = por %p83, %p84
    %p86 = scmp.ne.s32.totalorder %s78, %s80
    %p87 = scmp.eq.s32.totalorder %s14, 3
    %p88 = por %p86, %p87
    %p89 = scmp.ne.s32.totalorder %s80, %s81
    %p90 = scmp.eq.s32.totalorder %s14, 0
    %p91 = por %p89, %p90
    %p92 = scmp.ne.s32.totalorder %s80, %s81
    %p93 = scmp.eq.s32.totalorder %s15, 3
    %p94 = por %p92, %p93
    %p96 = scmp.ne.s32.totalorder %s81, %s95
    %p97 = scmp.eq.s32.totalorder %s15, 0
    %p98 = por %p96, %p97
    %s99 = ssub.s32 %s16, %s28
    %s100 = ssub.s32 %s17, %s24
    %s101 = sor.u32 %s99, %s100
    %p102 = scmp.eq.s32.totalorder %s101, 0
    %s104 = sadd.s32 %s103, 1
    %s105 = scalar_select %p102, %s103, %s104
    %p108 = pneg %p102
    %p109 = scmp.eq.s32.totalorder %s9, 3
    %p110 = por %p108, %p109
    %p111 = scmp.ne.s32.totalorder %s103, %s106
    %p112 = scmp.eq.s32.totalorder %s9, 0
    %p113 = por %p111, %p112
    %p114 = scmp.ne.s32.totalorder %s103, %s106
    %p115 = scmp.eq.s32.totalorder %s14, 3
    %p116 = por %p114, %p115
    %p117 = scmp.ne.s32.totalorder %s106, %s107
    %p118 = scmp.eq.s32.totalorder %s14, 0
    %p119 = por %p117, %p118
    %p120 = scmp.ne.s32.totalorder %s106, %s107
    %p121 = scmp.eq.s32.totalorder %s15, 3
    %p122 = por %p120, %p121
    %p124 = scmp.ne.s32.totalorder %s107, %s123
    %p125 = scmp.eq.s32.totalorder %s15, 0
    %p126 = por %p124, %p125
    %p127 = scmp.le.s32.totalorder 1, %s9
    %p128 = scmp.lt.s32.totalorder %s9, 5
    %p129 = pnand %p127, %p128
    %p130 = pneg %p129
    // Predicated region
    $region9: #{panet_forward.13} parent=5 // pred_check
      _
    $region10: #{panet_forward.13} parent=5 // pred_check_branch
      %132 = sbr.rel (%p129) target = $region12
    $region11: #{panet_forward.13} parent=5 // pred_region
      %s133 = ssub.s32 %s9, 1
      // Predicated region
      $region13: #{panet_forward.13} parent=11 // pred_check
        %p134 = pneg %p70
      $region14: #{panet_forward.13} parent=11 // pred_check_branch
        %136 = sbr.rel (%p134) target = $region16
      $region15: #{panet_forward.13} parent=11 // pred_region
        _
      $region16: #{panet_forward.13} parent=11 // pred_fallthru
        _
      // Predicated region
      $region17: #{panet_forward.13} parent=11 // pred_check
        %p137 = pneg %p91
      $region18: #{panet_forward.13} parent=11 // pred_check_branch
        %139 = sbr.rel (%p137) target = $region20
      $region19: #{panet_forward.13} parent=11 // pred_region
        _
      $region20: #{panet_forward.13} parent=11 // pred_fallthru
        _
    $region12: #{panet_forward.13} parent=5 // pred_fallthru
      _
    %p140 = scmp.lt.s32.totalorder %s9, 4
    // Predicated region
    $region21: #{panet_forward.13} parent=5 // pred_check
      %p141 = pneg %p140
    $region22: #{panet_forward.13} parent=5 // pred_check_branch
      %143 = sbr.rel (%p141) target = $region24
    $region23: #{panet_forward.13} parent=5 // pred_region
      // Predicated region
      $region25: #{panet_forward.13} parent=23 // pred_check
        %p144 = pneg %p43
      $region26: #{panet_forward.13} parent=23 // pred_check_branch
        %146 = sbr.rel (%p144) target = $region28
      $region27: #{panet_forward.13} parent=23 // pred_region
        %s147 = smul.u32 16, %s17
        %p148 = scmp.lt.s32.totalorder %s16, 1
        %s149 = scalar_select %p148, %s16, 1
        %p150 = scmp.lt.s32.totalorder %s147, 31
        %s151 = scalar_select %p150, %s147, 31
        %s152 = smul.addr %s149, 32
        %s153 = sadd.s32 %s151, %s152
        %s154 = smul.addr %s153, 4
        %s155 = scalar_lea.vmem %s0, %s154
        %s156 = smul.u32 16, %s17
      $region28: #{panet_forward.13} parent=23 // pred_fallthru
        _
    $region24: #{panet_forward.13} parent=5 // pred_fallthru
      _
    %p157 = scmp.le.s32.totalorder 1, %s9
    %p158 = scmp.lt.s32.totalorder %s9, 5
    %p159 = pnand %p157, %p158
    %p160 = pneg %p159
    // Predicated region
    $region29: #{panet_forward.13} parent=5 // pred_check
      _
    $region30: #{panet_forward.13} parent=5 // pred_check_branch
      %162 = sbr.rel (%p159) target = $region32
    $region31: #{panet_forward.13} parent=5 // pred_region
      %s163 = ssub.s32 %s9, 1
      %s164 = smul.u32 16, %s19
      %p165 = scmp.lt.s32.totalorder %s18, 1
      %s166 = scalar_select %p165, %s18, 1
      %p167 = scmp.lt.s32.totalorder %s164, 31
      %s168 = scalar_select %p167, %s164, 31
      %s169 = smul.addr %s166, 32
      %s170 = sadd.s32 %s168, %s169
      %s171 = smul.addr %s170, 4
      %s172 = scalar_lea.vmem %s0, %s171
      %p173 = pneg %p49
      %p174 = pneg %p46
      %p175 = pneg %p70
      %p176 = pneg %p67
      %p177 = pneg %p91
      %p178 = pneg %p88
      %p179 = pneg %p119
      %p180 = pneg %p116
      %s181 = smul.u32 16, %s19
      %p182 = scmp.lt.s32.totalorder %s18, 1
      %s183 = scalar_select %p182, %s18, 1
      %p184 = scmp.lt.s32.totalorder %s181, 31
      %s185 = scalar_select %p184, %s181, 31
      %s186 = smul.addr %s183, 32
      %s187 = sadd.s32 %s185, %s186
      %s188 = smul.addr %s187, 8
      %s189 = scalar_lea.vmem %s3, %s188
      %s190 = smul.u32 16, %s19
      %p191 = scmp.lt.s32.totalorder %s18, 1
      %s192 = scalar_select %p191, %s18, 1
      %p193 = scmp.lt.s32.totalorder %s190, 31
      %s194 = scalar_select %p193, %s190, 31
      %s195 = smul.addr %s192, 32
      %s196 = sadd.s32 %s194, %s195
      %s197 = smul.addr %s196, 4
      %s198 = scalar_lea.vmem %s0, %s197
      %s199 = smul.u32 16, %s19
      %s200 = smul.u32 16, %s19
      %p201 = scmp.lt.s32.totalorder %s18, 1
      %s202 = scalar_select %p201, %s18, 1
      %p203 = scmp.lt.s32.totalorder %s200, 31
      %s204 = scalar_select %p203, %s200, 31
      %s205 = smul.addr %s202, 32
      %s206 = sadd.s32 %s204, %s205
      %s207 = smul.addr %s206, 8
      %s208 = scalar_lea.vmem %s3, %s207
      %s209 = smul.u32 16, %s19
      %v210 = vld [vmem:[%s198] sm:$0xff]
      %v211 = vld [vmem:[%s198 + $0x8] sm:$0xff]
      %v212 = vld [vmem:[%s198 + $0x10] sm:$0xff]
      %v213 = vld [vmem:[%s198 + $0x18] sm:$0xff]
      %v214 = vld [vmem:[%s198 + $0x20] sm:$0xff]
      %v215 = vld [vmem:[%s198 + $0x28] sm:$0xff]
      %v216 = vld [vmem:[%s198 + $0x30] sm:$0xff]
      %v217 = vld [vmem:[%s198 + $0x38] sm:$0xff]
      %v218 = vld [vmem:[%s1] sm:$0xff]
      %v219 = vld [vmem:[%s2] sm:$0xff]
      %221 = vset.pattern.permute.xlu0 0
      %222 = vperm.xlu0 %221, %v219
      %v223 = vpop.permute.xlu0 %222
      %v233 = vcombine.high %v210, %v210
      %v234 = vcombine.high %v211, %v211
      %v235 = vcombine.high %v212, %v212
      %v236 = vcombine.high %v213, %v213
      %v237 = vcombine.high %v214, %v214
      %v238 = vcombine.high %v215, %v215
      %v239 = vcombine.high %v216, %v216
      %v240 = vcombine.high %v217, %v217
      %vm241 = vcmask 31744
      %v243 = vsel %vm241, %v218, 0
      %vm245 = vcmask 1043456
      %v246 = vsel %vm245, %v210, 0
      %v248 = vsel %vm245, %v233, 0
      %v250 = vsel %vm245, %v211, 0
      %v252 = vsel %vm245, %v234, 0
      %v254 = vsel %vm245, %v212, 0
      %v256 = vsel %vm245, %v235, 0
      %v258 = vsel %vm245, %v213, 0
      %v260 = vsel %vm245, %v236, 0
      %v262 = vsel %vm245, %v214, 0
      %v264 = vsel %vm245, %v237, 0
      %v266 = vsel %vm245, %v215, 0
      %v268 = vsel %vm245, %v238, 0
      %v270 = vsel %vm245, %v216, 0
      %v272 = vsel %vm245, %v239, 0
      %v274 = vsel %vm245, %v217, 0
      %v276 = vsel %vm245, %v240, 0
      %278 = vmatprep.subr.mxu0 %v248
      %279 = vmatpush1.msra.mxu0 %v246
      %280 = vmatprep.subr.mxu0 0.0
      %281 = vmatpush1.msra.mxu0 0.0
      %282 = vmatprep.subr.mxu0 0.0
      %283 = vmatpush1.msra.mxu0 0.0
      %284 = vmatprep.subr.mxu0 0.0
      %285 = vmatpush1.msra.mxu0 0.0
      %286 = vmatprep.subr.mxu0 0.0
      %287 = vmatpush1.msra.mxu0 0.0
      %288 = vmatprep.subr.mxu0 0.0
      %289 = vmatpush1.msra.mxu0 0.0
      %290 = vmatprep.subr.mxu0 0.0
      %291 = vmatpush1.msra.mxu0 0.0
      %292 = vmatprep.subr.mxu0 0.0
      %293 = vmatpush1.msra.mxu0 0.0
      %294 = vmatprep.subr.mxu0 0.0
      %295 = vmatpush1.msra.mxu0 0.0
      %296 = vmatprep.subr.mxu0 0.0
      %297 = vmatpush1.msra.mxu0 0.0
      %298 = vmatprep.subr.mxu0 0.0
      %299 = vmatpush1.msra.mxu0 0.0
      %300 = vmatprep.subr.mxu0 0.0
      %301 = vmatpush1.msra.mxu0 0.0
      %302 = vmatprep.subr.mxu0 0.0
      %303 = vmatpush1.msra.mxu0 0.0
      %304 = vmatprep.subr.mxu0 0.0
      %305 = vmatpush1.msra.mxu0 0.0
      %306 = vmatprep.subr.mxu0 0.0
      %307 = vmatpush1.msra.mxu0 0.0
      %308 = vmatprep.subr.mxu0 0.0
      %309 = vmatpush1.msra.mxu0 0.0
      %310 = vmatprep.subr.mxu0 0.0
      %311 = vmatpush1.msra.mxu0 0.0
      %312 = vmatprep.subr.mxu0 0.0
      %313 = vmatpush1.msra.mxu0 0.0
      %314 = vmatprep.subr.mxu0 0.0
      %315 = vmatpush1.msra.mxu0 0.0
      %316 = vmatprep.subr.mxu0 0.0
      %317 = vmatpush1.msra.mxu0 0.0
      %318 = vmatprep.subr.mxu0 0.0
      %319 = vmatpush1.msra.mxu0 0.0
      %320 = vmatprep.subr.mxu0 0.0
      %321 = vmatpush1.msra.mxu0 0.0
      %322 = vmatprep.subr.mxu0 0.0
      %323 = vmatpush1.msra.mxu0 0.0
      %324 = vmatprep.subr.mxu0 0.0
      %325 = vmatpush1.msra.mxu0 0.0
      %326 = vmatprep.subr.mxu0 0.0
      %327 = vmatpush1.msra.mxu0 0.0
      %328 = vmatprep.subr.mxu0 0.0
      %329 = vmatpush1.msra.mxu0 0.0
      %330 = vmatprep.subr.mxu0 0.0
      %331 = vmatpush1.msra.mxu0 0.0
      %332 = vmatprep.subr.mxu0 0.0
      %333 = vmatpush1.msra.mxu0 0.0
      %334 = vmatprep.subr.mxu0 0.0
      %335 = vmatpush1.msra.mxu0 0.0
      %336 = vmatprep.subr.mxu0 0.0
      %337 = vmatpush1.msra.mxu0 0.0
      %338 = vmatprep.subr.mxu0 0.0
      %339 = vmatpush1.msra.mxu0 0.0
      %340 = vmatprep.subr.mxu0 0.0
      %341 = vmatpush1.msra.mxu0 0.0
      %342 = vmatprep.mubr.f32.mxu0 0.0
      %343 = vmatmul.mubr.f32.gmra.mrb[0].mxu0 %v243
      %v344 = vpop.f32.mrb[0].mxu0
      %v345 = vadd.f32 %v223, %v344
      %v346 = vpop.f32.mrb[0].mxu0
      %v347 = vadd.f32 %v223, %v346
      %348 = vdwg.mxu0
      %349 = vmatprep.subr.mxu0 %v252
      %350 = vmatpush1.msra.mxu0 %v250
      %351 = vmatprep.subr.mxu0 0.0
      %352 = vmatpush1.msra.mxu0 0.0
      %353 = vmatprep.subr.mxu0 0.0
      %354 = vmatpush1.msra.mxu0 0.0
      %355 = vmatprep.subr.mxu0 0.0
      %356 = vmatpush1.msra.mxu0 0.0
      %357 = vmatprep.subr.mxu0 0.0
      %358 = vmatpush1.msra.mxu0 0.0
      %359 = vmatprep.subr.mxu0 0.0
      %360 = vmatpush1.msra.mxu0 0.0
      %361 = vmatprep.subr.mxu0 0.0
      %362 = vmatpush1.msra.mxu0 0.0
      %363 = vmatprep.subr.mxu0 0.0
      %364 = vmatpush1.msra.mxu0 0.0
      %365 = vmatprep.subr.mxu0 0.0
      %366 = vmatpush1.msra.mxu0 0.0
      %367 = vmatprep.subr.mxu0 0.0
      %368 = vmatpush1.msra.mxu0 0.0
      %369 = vmatprep.subr.mxu0 0.0
      %370 = vmatpush1.msra.mxu0 0.0
      %371 = vmatprep.subr.mxu0 0.0
      %372 = vmatpush1.msra.mxu0 0.0
      %373 = vmatprep.subr.mxu0 0.0
      %374 = vmatpush1.msra.mxu0 0.0
      %375 = vmatprep.subr.mxu0 0.0
      %376 = vmatpush1.msra.mxu0 0.0
      %377 = vmatprep.subr.mxu0 0.0
      %378 = vmatpush1.msra.mxu0 0.0
      %379 = vmatprep.subr.mxu0 0.0
      %380 = vmatpush1.msra.mxu0 0.0
      %381 = vmatprep.subr.mxu0 0.0
      %382 = vmatpush1.msra.mxu0 0.0
      %383 = vmatprep.subr.mxu0 0.0
      %384 = vmatpush1.msra.mxu0 0.0
      %385 = vmatprep.subr.mxu0 0.0
      %386 = vmatpush1.msra.mxu0 0.0
      %387 = vmatprep.subr.mxu0 0.0
      %388 = vmatpush1.msra.mxu0 0.0
      %389 = vmatprep.subr.mxu0 0.0
      %390 = vmatpush1.msra.mxu0 0.0
      %391 = vmatprep.subr.mxu0 0.0
      %392 = vmatpush1.msra.mxu0 0.0
      %393 = vmatprep.subr.mxu0 0.0
      %394 = vmatpush1.msra.mxu0 0.0
      %395 = vmatprep.subr.mxu0 0.0
      %396 = vmatpush1.msra.mxu0 0.0
      %397 = vmatprep.subr.mxu0 0.0
      %398 = vmatpush1.msra.mxu0 0.0
      %399 = vmatprep.subr.mxu0 0.0
      %400 = vmatpush1.msra.mxu0 0.0
      %401 = vmatprep.subr.mxu0 0.0
      %402 = vmatpush1.msra.mxu0 0.0
      %403 = vmatprep.subr.mxu0 0.0
      %404 = vmatpush1.msra.mxu0 0.0
      %405 = vmatprep.subr.mxu0 0.0
      %406 = vmatpush1.msra.mxu0 0.0
      %407 = vmatprep.subr.mxu0 0.0
      %408 = vmatpush1.msra.mxu0 0.0
      %409 = vmatprep.subr.mxu0 0.0
      %410 = vmatpush1.msra.mxu0 0.0
      %411 = vmatprep.subr.mxu0 0.0
      %412 = vmatpush1.msra.mxu0 0.0
      %413 = vmatprep.mubr.f32.mxu0 0.0
      %414 = vmatmul.mubr.f32.gmra.mrb[0].mxu0 %v243
      %v415 = vpop.f32.mrb[0].mxu0
      %v416 = vadd.f32 %v223, %v415
      %v417 = vpop.f32.mrb[0].mxu0
      %v418 = vadd.f32 %v223, %v417
      %419 = vdwg.mxu0
      %420 = vmatprep.subr.mxu0 %v256
      %421 = vmatpush1.msra.mxu0 %v254
      %422 = vmatprep.subr.mxu0 0.0
      %423 = vmatpush1.msra.mxu0 0.0
      %424 = vmatprep.subr.mxu0 0.0
      %425 = vmatpush1.msra.mxu0 0.0
      %426 = vmatprep.subr.mxu0 0.0
      %427 = vmatpush1.msra.mxu0 0.0
      %428 = vmatprep.subr.mxu0 0.0
      %429 = vmatpush1.msra.mxu0 0.0
      %430 = vmatprep.subr.mxu0 0.0
      %431 = vmatpush1.msra.mxu0 0.0
      %432 = vmatprep.subr.mxu0 0.0
      %433 = vmatpush1.msra.mxu0 0.0
      %434 = vmatprep.subr.mxu0 0.0
      %435 = vmatpush1.msra.mxu0 0.0
      %436 = vmatprep.subr.mxu0 0.0
      %437 = vmatpush1.msra.mxu0 0.0
      %438 = vmatprep.subr.mxu0 0.0
      %439 = vmatpush1.msra.mxu0 0.0
      %440 = vmatprep.subr.mxu0 0.0
      %441 = vmatpush1.msra.mxu0 0.0
      %442 = vmatprep.subr.mxu0 0.0
      %443 = vmatpush1.msra.mxu0 0.0
      %444 = vmatprep.subr.mxu0 0.0
      %445 = vmatpush1.msra.mxu0 0.0
      %446 = vmatprep.subr.mxu0 0.0
      %447 = vmatpush1.msra.mxu0 0.0
      %448 = vmatprep.subr.mxu0 0.0
      %449 = vmatpush1.msra.mxu0 0.0
      %450 = vmatprep.subr.mxu0 0.0
      %451 = vmatpush1.msra.mxu0 0.0
      %452 = vmatprep.subr.mxu0 0.0
      %453 = vmatpush1.msra.mxu0 0.0
      %454 = vmatprep.subr.mxu0 0.0
      %455 = vmatpush1.msra.mxu0 0.0
      %456 = vmatprep.subr.mxu0 0.0
      %457 = vmatpush1.msra.mxu0 0.0
      %458 = vmatprep.subr.mxu0 0.0
      %459 = vmatpush1.msra.mxu0 0.0
      %460 = vmatprep.subr.mxu0 0.0
      %461 = vmatpush1.msra.mxu0 0.0
      %462 = vmatprep.subr.mxu0 0.0
      %463 = vmatpush1.msra.mxu0 0.0
      %464 = vmatprep.subr.mxu0 0.0
      %465 = vmatpush1.msra.mxu0 0.0
      %466 = vmatprep.subr.mxu0 0.0
      %467 = vmatpush1.msra.mxu0 0.0
      %468 = vmatprep.subr.mxu0 0.0
      %469 = vmatpush1.msra.mxu0 0.0
      %470 = vmatprep.subr.mxu0 0.0
      %471 = vmatpush1.msra.mxu0 0.0
      %472 = vmatprep.subr.mxu0 0.0
      %473 = vmatpush1.msra.mxu0 0.0
      %474 = vmatprep.subr.mxu0 0.0
      %475 = vmatpush1.msra.mxu0 0.0
      %476 = vmatprep.subr.mxu0 0.0
      %477 = vmatpush1.msra.mxu0 0.0
      %478 = vmatprep.subr.mxu0 0.0
      %479 = vmatpush1.msra.mxu0 0.0
      %480 = vmatprep.subr.mxu0 0.0
      %481 = vmatpush1.msra.mxu0 0.0
      %482 = vmatprep.subr.mxu0 0.0
      %483 = vmatpush1.msra.mxu0 0.0
      %484 = vmatprep.mubr.f32.mxu0 0.0
      %485 = vmatmul.mubr.f32.gmra.mrb[0].mxu0 %v243
      %v486 = vpop.f32.mrb[0].mxu0
      %v487 = vadd.f32 %v223, %v486
      %v488 = vpop.f32.mrb[0].mxu0
      %v489 = vadd.f32 %v223, %v488
      %490 = vdwg.mxu0
      %491 = vmatprep.subr.mxu0 %v260
      %492 = vmatpush1.msra.mxu0 %v258
      %493 = vmatprep.subr.mxu0 0.0
      %494 = vmatpush1.msra.mxu0 0.0
      %495 = vmatprep.subr.mxu0 0.0
      %496 = vmatpush1.msra.mxu0 0.0
      %497 = vmatprep.subr.mxu0 0.0
      %498 = vmatpush1.msra.mxu0 0.0
      %499 = vmatprep.subr.mxu0 0.0
      %500 = vmatpush1.msra.mxu0 0.0
      %501 = vmatprep.subr.mxu0 0.0
      %502 = vmatpush1.msra.mxu0 0.0
      %503 = vmatprep.subr.mxu0 0.0
      %504 = vmatpush1.msra.mxu0 0.0
      %505 = vmatprep.subr.mxu0 0.0
      %506 = vmatpush1.msra.mxu0 0.0
      %507 = vmatprep.subr.mxu0 0.0
      %508 = vmatpush1.msra.mxu0 0.0
      %509 = vmatprep.subr.mxu0 0.0
      %510 = vmatpush1.msra.mxu0 0.0
      %511 = vmatprep.subr.mxu0 0.0
      %512 = vmatpush1.msra.mxu0 0.0
      %513 = vmatprep.subr.mxu0 0.0
      %514 = vmatpush1.msra.mxu0 0.0
      %515 = vmatprep.subr.mxu0 0.0
      %516 = vmatpush1.msra.mxu0 0.0
      %517 = vmatprep.subr.mxu0 0.0
      %518 = vmatpush1.msra.mxu0 0.0
      %519 = vmatprep.subr.mxu0 0.0
      %520 = vmatpush1.msra.mxu0 0.0
      %521 = vmatprep.subr.mxu0 0.0
      %522 = vmatpush1.msra.mxu0 0.0
      %523 = vmatprep.subr.mxu0 0.0
      %524 = vmatpush1.msra.mxu0 0.0
      %525 = vmatprep.subr.mxu0 0.0
      %526 = vmatpush1.msra.mxu0 0.0
      %527 = vmatprep.subr.mxu0 0.0
      %528 = vmatpush1.msra.mxu0 0.0
      %529 = vmatprep.subr.mxu0 0.0
      %530 = vmatpush1.msra.mxu0 0.0
      %531 = vmatprep.subr.mxu0 0.0
      %532 = vmatpush1.msra.mxu0 0.0
      %533 = vmatprep.subr.mxu0 0.0
      %534 = vmatpush1.msra.mxu0 0.0
      %535 = vmatprep.subr.mxu0 0.0
      %536 = vmatpush1.msra.mxu0 0.0
      %537 = vmatprep.subr.mxu0 0.0
      %538 = vmatpush1.msra.mxu0 0.0
      %539 = vmatprep.subr.mxu0 0.0
      %540 = vmatpush1.msra.mxu0 0.0
      %541 = vmatprep.subr.mxu0 0.0
      %542 = vmatpush1.msra.mxu0 0.0
      %543 = vmatprep.subr.mxu0 0.0
      %544 = vmatpush1.msra.mxu0 0.0
      %545 = vmatprep.subr.mxu0 0.0
      %546 = vmatpush1.msra.mxu0 0.0
      %547 = vmatprep.subr.mxu0 0.0
      %548 = vmatpush1.msra.mxu0 0.0
      %549 = vmatprep.subr.mxu0 0.0
      %550 = vmatpush1.msra.mxu0 0.0
      %551 = vmatprep.subr.mxu0 0.0
      %552 = vmatpush1.msra.mxu0 0.0
      %553 = vmatprep.subr.mxu0 0.0
      %554 = vmatpush1.msra.mxu0 0.0
      %555 = vmatprep.mubr.f32.mxu0 0.0
      %556 = vmatmul.mubr.f32.gmra.mrb[0].mxu0 %v243
      %v557 = vpop.f32.mrb[0].mxu0
      %v558 = vadd.f32 %v223, %v557
      %v559 = vpop.f32.mrb[0].mxu0
      %v560 = vadd.f32 %v223, %v559
      %561 = vdwg.mxu0
      %562 = vmatprep.subr.mxu0 %v264
      %563 = vmatpush1.msra.mxu0 %v262
      %564 = vmatprep.subr.mxu0 0.0
      %565 = vmatpush1.msra.mxu0 0.0
      %566 = vmatprep.subr.mxu0 0.0
      %567 = vmatpush1.msra.mxu0 0.0
      %568 = vmatprep.subr.mxu0 0.0
      %569 = vmatpush1.msra.mxu0 0.0
      %570 = vmatprep.subr.mxu0 0.0
      %571 = vmatpush1.msra.mxu0 0.0
      %572 = vmatprep.subr.mxu0 0.0
      %573 = vmatpush1.msra.mxu0 0.0
      %574 = vmatprep.subr.mxu0 0.0
      %575 = vmatpush1.msra.mxu0 0.0
      %576 = vmatprep.subr.mxu0 0.0
      %577 = vmatpush1.msra.mxu0 0.0
      %578 = vmatprep.subr.mxu0 0.0
      %579 = vmatpush1.msra.mxu0 0.0
      %580 = vmatprep.subr.mxu0 0.0
      %581 = vmatpush1.msra.mxu0 0.0
      %582 = vmatprep.subr.mxu0 0.0
      %583 = vmatpush1.msra.mxu0 0.0
      %584 = vmatprep.subr.mxu0 0.0
      %585 = vmatpush1.msra.mxu0 0.0
      %586 = vmatprep.subr.mxu0 0.0
      %587 = vmatpush1.msra.mxu0 0.0
      %588 = vmatprep.subr.mxu0 0.0
      %589 = vmatpush1.msra.mxu0 0.0
      %590 = vmatprep.subr.mxu0 0.0
      %591 = vmatpush1.msra.mxu0 0.0
      %592 = vmatprep.subr.mxu0 0.0
      %593 = vmatpush1.msra.mxu0 0.0
      %594 = vmatprep.subr.mxu0 0.0
      %595 = vmatpush1.msra.mxu0 0.0
      %596 = vmatprep.subr.mxu0 0.0
      %597 = vmatpush1.msra.mxu0 0.0
      %598 = vmatprep.subr.mxu0 0.0
      %599 = vmatpush1.msra.mxu0 0.0
      %600 = vmatprep.subr.mxu0 0.0
      %601 = vmatpush1.msra.mxu0 0.0
      %602 = vmatprep.subr.mxu0 0.0
      %603 = vmatpush1.msra.mxu0 0.0
      %604 = vmatprep.subr.mxu0 0.0
      %605 = vmatpush1.msra.mxu0 0.0
      %606 = vmatprep.subr.mxu0 0.0
      %607 = vmatpush1.msra.mxu0 0.0
      %608 = vmatprep.subr.mxu0 0.0
      %609 = vmatpush1.msra.mxu0 0.0
      %610 = vmatprep.subr.mxu0 0.0
      %611 = vmatpush1.msra.mxu0 0.0
      %612 = vmatprep.subr.mxu0 0.0
      %613 = vmatpush1.msra.mxu0 0.0
      %614 = vmatprep.subr.mxu0 0.0
      %615 = vmatpush1.msra.mxu0 0.0
      %616 = vmatprep.subr.mxu0 0.0
      %617 = vmatpush1.msra.mxu0 0.0
      %618 = vmatprep.subr.mxu0 0.0
      %619 = vmatpush1.msra.mxu0 0.0
      %620 = vmatprep.subr.mxu0 0.0
      %621 = vmatpush1.msra.mxu0 0.0
      %622 = vmatprep.subr.mxu0 0.0
      %623 = vmatpush1.msra.mxu0 0.0
      %624 = vmatprep.subr.mxu0 0.0
      %625 = vmatpush1.msra.mxu0 0.0
      %626 = vmatprep.mubr.f32.mxu0 0.0
      %627 = vmatmul.mubr.f32.gmra.mrb[0].mxu0 %v243
      %v628 = vpop.f32.mrb[0].mxu0
      %v629 = vadd.f32 %v223, %v628
      %v630 = vpop.f32.mrb[0].mxu0
      %v631 = vadd.f32 %v223, %v630
      %632 = vdwg.mxu0
      %633 = vmatprep.subr.mxu0 %v268
      %634 = vmatpush1.msra.mxu0 %v266
      %635 = vmatprep.subr.mxu0 0.0
      %636 = vmatpush1.msra.mxu0 0.0
      %637 = vmatprep.subr.mxu0 0.0
      %638 = vmatpush1.msra.mxu0 0.0
      %639 = vmatprep.subr.mxu0 0.0
      %640 = vmatpush1.msra.mxu0 0.0
      %641 = vmatprep.subr.mxu0 0.0
      %642 = vmatpush1.msra.mxu0 0.0
      %643 = vmatprep.subr.mxu0 0.0
      %644 = vmatpush1.msra.mxu0 0.0
      %645 = vmatprep.subr.mxu0 0.0
      %646 = vmatpush1.msra.mxu0 0.0
      %647 = vmatprep.subr.mxu0 0.0
      %648 = vmatpush1.msra.mxu0 0.0
      %649 = vmatprep.subr.mxu0 0.0
      %650 = vmatpush1.msra.mxu0 0.0
      %651 = vmatprep.subr.mxu0 0.0
      %652 = vmatpush1.msra.mxu0 0.0
      %653 = vmatprep.subr.mxu0 0.0
      %654 = vmatpush1.msra.mxu0 0.0
      %655 = vmatprep.subr.mxu0 0.0
      %656 = vmatpush1.msra.mxu0 0.0
      %657 = vmatprep.subr.mxu0 0.0
      %658 = vmatpush1.msra.mxu0 0.0
      %659 = vmatprep.subr.mxu0 0.0
      %660 = vmatpush1.msra.mxu0 0.0
      %661 = vmatprep.subr.mxu0 0.0
      %662 = vmatpush1.msra.mxu0 0.0
      %663 = vmatprep.subr.mxu0 0.0
      %664 = vmatpush1.msra.mxu0 0.0
      %665 = vmatprep.subr.mxu0 0.0
      %666 = vmatpush1.msra.mxu0 0.0
      %667 = vmatprep.subr.mxu0 0.0
      %668 = vmatpush1.msra.mxu0 0.0
      %669 = vmatprep.subr.mxu0 0.0
      %670 = vmatpush1.msra.mxu0 0.0
      %671 = vmatprep.subr.mxu0 0.0
      %672 = vmatpush1.msra.mxu0 0.0
      %673 = vmatprep.subr.mxu0 0.0
      %674 = vmatpush1.msra.mxu0 0.0
      %675 = vmatprep.subr.mxu0 0.0
      %676 = vmatpush1.msra.mxu0 0.0
      %677 = vmatprep.subr.mxu0 0.0
      %678 = vmatpush1.msra.mxu0 0.0
      %679 = vmatprep.subr.mxu0 0.0
      %680 = vmatpush1.msra.mxu0 0.0
      %681 = vmatprep.subr.mxu0 0.0
      %682 = vmatpush1.msra.mxu0 0.0
      %683 = vmatprep.subr.mxu0 0.0
      %684 = vmatpush1.msra.mxu0 0.0
      %685 = vmatprep.subr.mxu0 0.0
      %686 = vmatpush1.msra.mxu0 0.0
      %687 = vmatprep.subr.mxu0 0.0
      %688 = vmatpush1.msra.mxu0 0.0
      %689 = vmatprep.subr.mxu0 0.0
      %690 = vmatpush1.msra.mxu0 0.0
      %691 = vmatprep.subr.mxu0 0.0
      %692 = vmatpush1.msra.mxu0 0.0
      %693 = vmatprep.subr.mxu0 0.0
      %694 = vmatpush1.msra.mxu0 0.0
      %695 = vmatprep.subr.mxu0 0.0
      %696 = vmatpush1.msra.mxu0 0.0
      %697 = vmatprep.mubr.f32.mxu0 0.0
      %698 = vmatmul.mubr.f32.gmra.mrb[0].mxu0 %v243
      %v699 = vpop.f32.mrb[0].mxu0
      %v700 = vadd.f32 %v223, %v699
      %v701 = vpop.f32.mrb[0].mxu0
      %v702 = vadd.f32 %v223, %v701
      %703 = vdwg.mxu0
      %704 = vmatprep.subr.mxu0 %v272
      %705 = vmatpush1.msra.mxu0 %v270
      %706 = vmatprep.subr.mxu0 0.0
      %707 = vmatpush1.msra.mxu0 0.0
      %708 = vmatprep.subr.mxu0 0.0
      %709 = vmatpush1.msra.mxu0 0.0
      %710 = vmatprep.subr.mxu0 0.0
      %711 = vmatpush1.msra.mxu0 0.0
      %712 = vmatprep.subr.mxu0 0.0
      %713 = vmatpush1.msra.mxu0 0.0
      %714 = vmatprep.subr.mxu0 0.0
      %715 = vmatpush1.msra.mxu0 0.0
      %716 = vmatprep.subr.mxu0 0.0
      %717 = vmatpush1.msra.mxu0 0.0
      %718 = vmatprep.subr.mxu0 0.0
      %719 = vmatpush1.msra.mxu0 0.0
      %720 = vmatprep.subr.mxu0 0.0
      %721 = vmatpush1.msra.mxu0 0.0
      %722 = vmatprep.subr.mxu0 0.0
      %723 = vmatpush1.msra.mxu0 0.0
      %724 = vmatprep.subr.mxu0 0.0
      %725 = vmatpush1.msra.mxu0 0.0
      %726 = vmatprep.subr.mxu0 0.0
      %727 = vmatpush1.msra.mxu0 0.0
      %728 = vmatprep.subr.mxu0 0.0
      %729 = vmatpush1.msra.mxu0 0.0
      %730 = vmatprep.subr.mxu0 0.0
      %731 = vmatpush1.msra.mxu0 0.0
      %732 = vmatprep.subr.mxu0 0.0
      %733 = vmatpush1.msra.mxu0 0.0
      %734 = vmatprep.subr.mxu0 0.0
      %735 = vmatpush1.msra.mxu0 0.0
      %736 = vmatprep.subr.mxu0 0.0
      %737 = vmatpush1.msra.mxu0 0.0
      %738 = vmatprep.subr.mxu0 0.0
      %739 = vmatpush1.msra.mxu0 0.0
      %740 = vmatprep.subr.mxu0 0.0
      %741 = vmatpush1.msra.mxu0 0.0
      %742 = vmatprep.subr.mxu0 0.0
      %743 = vmatpush1.msra.mxu0 0.0
      %744 = vmatprep.subr.mxu0 0.0
      %745 = vmatpush1.msra.mxu0 0.0
      %746 = vmatprep.subr.mxu0 0.0
      %747 = vmatpush1.msra.mxu0 0.0
      %748 = vmatprep.subr.mxu0 0.0
      %749 = vmatpush1.msra.mxu0 0.0
      %750 = vmatprep.subr.mxu0 0.0
      %751 = vmatpush1.msra.mxu0 0.0
      %752 = vmatprep.subr.mxu0 0.0
      %753 = vmatpush1.msra.mxu0 0.0
      %754 = vmatprep.subr.mxu0 0.0
      %755 = vmatpush1.msra.mxu0 0.0
      %756 = vmatprep.subr.mxu0 0.0
      %757 = vmatpush1.msra.mxu0 0.0
      %758 = vmatprep.subr.mxu0 0.0
      %759 = vmatpush1.msra.mxu0 0.0
      %760 = vmatprep.subr.mxu0 0.0
      %761 = vmatpush1.msra.mxu0 0.0
      %762 = vmatprep.subr.mxu0 0.0
      %763 = vmatpush1.msra.mxu0 0.0
      %764 = vmatprep.subr.mxu0 0.0
      %765 = vmatpush1.msra.mxu0 0.0
      %766 = vmatprep.subr.mxu0 0.0
      %767 = vmatpush1.msra.mxu0 0.0
      %768 = vmatprep.mubr.f32.mxu0 0.0
      %769 = vmatmul.mubr.f32.gmra.mrb[0].mxu0 %v243
      %v770 = vpop.f32.mrb[0].mxu0
      %v771 = vadd.f32 %v223, %v770
      %v772 = vpop.f32.mrb[0].mxu0
      %v773 = vadd.f32 %v223, %v772
      %774 = vdwg.mxu0
      %775 = vmatprep.subr.mxu0 %v276
      %776 = vmatpush1.msra.mxu0 %v274
      %777 = vmatprep.subr.mxu0 0.0
      %778 = vmatpush1.msra.mxu0 0.0
      %779 = vmatprep.subr.mxu0 0.0
      %780 = vmatpush1.msra.mxu0 0.0
      %781 = vmatprep.subr.mxu0 0.0
      %782 = vmatpush1.msra.mxu0 0.0
      %783 = vmatprep.subr.mxu0 0.0
      %784 = vmatpush1.msra.mxu0 0.0
      %785 = vmatprep.subr.mxu0 0.0
      %786 = vmatpush1.msra.mxu0 0.0
      %787 = vmatprep.subr.mxu0 0.0
      %788 = vmatpush1.msra.mxu0 0.0
      %789 = vmatprep.subr.mxu0 0.0
      %790 = vmatpush1.msra.mxu0 0.0
      %791 = vmatprep.subr.mxu0 0.0
      %792 = vmatpush1.msra.mxu0 0.0
      %793 = vmatprep.subr.mxu0 0.0
      %794 = vmatpush1.msra.mxu0 0.0
      %795 = vmatprep.subr.mxu0 0.0
      %796 = vmatpush1.msra.mxu0 0.0
      %797 = vmatprep.subr.mxu0 0.0
      %798 = vmatpush1.msra.mxu0 0.0
      %799 = vmatprep.subr.mxu0 0.0
      %800 = vmatpush1.msra.mxu0 0.0
      %801 = vmatprep.subr.mxu0 0.0
      %802 = vmatpush1.msra.mxu0 0.0
      %803 = vmatprep.subr.mxu0 0.0
      %804 = vmatpush1.msra.mxu0 0.0
      %805 = vmatprep.subr.mxu0 0.0
      %806 = vmatpush1.msra.mxu0 0.0
      %807 = vmatprep.subr.mxu0 0.0
      %808 = vmatpush1.msra.mxu0 0.0
      %809 = vmatprep.subr.mxu0 0.0
      %810 = vmatpush1.msra.mxu0 0.0
      %811 = vmatprep.subr.mxu0 0.0
      %812 = vmatpush1.msra.mxu0 0.0
      %813 = vmatprep.subr.mxu0 0.0
      %814 = vmatpush1.msra.mxu0 0.0
      %815 = vmatprep.subr.mxu0 0.0
      %816 = vmatpush1.msra.mxu0 0.0
      %817 = vmatprep.subr.mxu0 0.0
      %818 = vmatpush1.msra.mxu0 0.0
      %819 = vmatprep.subr.mxu0 0.0
      %820 = vmatpush1.msra.mxu0 0.0
      %821 = vmatprep.subr.mxu0 0.0
      %822 = vmatpush1.msra.mxu0 0.0
      %823 = vmatprep.subr.mxu0 0.0
      %824 = vmatpush1.msra.mxu0 0.0
      %825 = vmatprep.subr.mxu0 0.0
      %826 = vmatpush1.msra.mxu0 0.0
      %827 = vmatprep.subr.mxu0 0.0
      %828 = vmatpush1.msra.mxu0 0.0
      %829 = vmatprep.subr.mxu0 0.0
      %830 = vmatpush1.msra.mxu0 0.0
      %831 = vmatprep.subr.mxu0 0.0
      %832 = vmatpush1.msra.mxu0 0.0
      %833 = vmatprep.subr.mxu0 0.0
      %834 = vmatpush1.msra.mxu0 0.0
      %835 = vmatprep.subr.mxu0 0.0
      %836 = vmatpush1.msra.mxu0 0.0
      %837 = vmatprep.subr.mxu0 0.0
      %838 = vmatpush1.msra.mxu0 0.0
      %839 = vmatprep.mubr.f32.mxu0 0.0
      %840 = vmatmul.mubr.f32.gmra.mrb[0].mxu0 %v243
      %v841 = vpop.f32.mrb[0].mxu0
      %v842 = vadd.f32 %v223, %v841
      %v843 = vpop.f32.mrb[0].mxu0
      %v844 = vadd.f32 %v223, %v843
      %845 = vdwg.mxu0
      %v846 = vmax.f32 %v345, 0.0
      %v847 = vmax.f32 %v347, 0.0
      %v848 = vmax.f32 %v416, 0.0
      %v849 = vmax.f32 %v418, 0.0
      %v850 = vmax.f32 %v487, 0.0
      %v851 = vmax.f32 %v489, 0.0
      %v852 = vmax.f32 %v558, 0.0
      %v853 = vmax.f32 %v560, 0.0
      %v854 = vmax.f32 %v629, 0.0
      %v855 = vmax.f32 %v631, 0.0
      %v856 = vmax.f32 %v700, 0.0
      %v857 = vmax.f32 %v702, 0.0
      %v858 = vmax.f32 %v771, 0.0
      %v859 = vmax.f32 %v773, 0.0
      %v860 = vmax.f32 %v842, 0.0
      %v861 = vmax.f32 %v844, 0.0
      %862 = vst [vmem:[%s208] sm:$0xff] %v846
      %863 = vst [vmem:[%s208 + $0x8] sm:$0xff] %v847
      %864 = vst [vmem:[%s208 + $0x10] sm:$0xff] %v848
      %865 = vst [vmem:[%s208 + $0x18] sm:$0xff] %v849
      %866 = vst [vmem:[%s208 + $0x20] sm:$0xff] %v850
      %867 = vst [vmem:[%s208 + $0x28] sm:$0xff] %v851
      %868 = vst [vmem:[%s208 + $0x30] sm:$0xff] %v852
      %869 = vst [vmem:[%s208 + $0x38] sm:$0xff] %v853
      %870 = vst [vmem:[%s208 + $0x40] sm:$0xff] %v854
      %871 = vst [vmem:[%s208 + $0x48] sm:$0xff] %v855
      %872 = vst [vmem:[%s208 + $0x50] sm:$0xff] %v856
      %873 = vst [vmem:[%s208 + $0x58] sm:$0xff] %v857
      %874 = vst [vmem:[%s208 + $0x60] sm:$0xff] %v858
      %875 = vst [vmem:[%s208 + $0x68] sm:$0xff] %v859
      %876 = vst [vmem:[%s208 + $0x70] sm:$0xff] %v860
      %877 = vst [vmem:[%s208 + $0x78] sm:$0xff] %v861
      %s878 = smul.u32 16, %s19
      %p879 = scmp.lt.s32.totalorder %s18, 1
      %s880 = scalar_select %p879, %s18, 1
      %p881 = scmp.lt.s32.totalorder %s878, 31
      %s882 = scalar_select %p881, %s878, 31
      %s883 = smul.addr %s880, 32
      %s884 = sadd.s32 %s882, %s883
      %s885 = smul.addr %s884, 8
      %s886 = scalar_lea.vmem %s3, %s885
      // Predicated region
      $region33: #{panet_forward.13} parent=31 // pred_check
        %p887 = pneg %p116
      $region34: #{panet_forward.13} parent=31 // pred_check_branch
        %889 = sbr.rel (%p887) target = $region36
      $region35: #{panet_forward.13} parent=31 // pred_region
        %s890 = smul.u32 16, %s19
      $region36: #{panet_forward.13} parent=31 // pred_fallthru
        _
    $region32: #{panet_forward.13} parent=5 // pred_fallthru
      _
    %p891 = scmp.le.s32.totalorder 2, %s9
    // Predicated region
    $region37: #{panet_forward.13} parent=5 // pred_check
      %p892 = pneg %p891
    $region38: #{panet_forward.13} parent=5 // pred_check_branch
      %894 = sbr.rel (%p892) target = $region40
    $region39: #{panet_forward.13} parent=5 // pred_region
      %s895 = ssub.s32 %s9, 2
      // Predicated region
      $region41: #{panet_forward.13} parent=39 // pred_check
        %p896 = pneg %p122
      $region42: #{panet_forward.13} parent=39 // pred_check_branch
        %898 = sbr.rel (%p896) target = $region44
      $region43: #{panet_forward.13} parent=39 // pred_region
        %s899 = smul.u32 16, %s21
        %p900 = scmp.lt.s32.totalorder %s20, 1
        %s901 = scalar_select %p900, %s20, 1
        %p902 = scmp.lt.s32.totalorder %s899, 31
        %s903 = scalar_select %p902, %s899, 31
        %s904 = smul.addr %s901, 32
        %s905 = sadd.s32 %s903, %s904
        %s906 = smul.addr %s905, 8
        %s907 = scalar_lea.vmem %s3, %s906
      $region44: #{panet_forward.13} parent=39 // pred_fallthru
        _
    $region40: #{panet_forward.13} parent=5 // pred_fallthru
      _
  $region6: #{panet_forward.13} parent=0 // loop_footer
    %s13 = sadd.s32 1, %s9
  $region7: #{panet_forward.13} parent=0 // loop_footer_branch
    %8 = sbr.rel target = $region3
  $region8: #{panet_forward.13} parent=0 // loop_exit
    _

// kernel: panet_forward.16
$region0: #{panet_forward.16}
  #allocation0 [shape = 'u32[]', space=smem, size = 0x4, offset = 0x4, fixed_abs, tag = 'smem constant byte address 0x4 - core index']
  #allocation1 [shape = 'u32[144,128]{1,0:T(1,128)}', space=vmem, size = 0x12000, scoped, tag = 'internal scratch']
  %s0 = inlined_call_operand.vmem [shape: f32[2,512,256], index: 0, kind: input, shape index: {}]
  %s1 = inlined_call_operand.vmem [shape: f32[2,512,64], index: 1, kind: input, shape index: {}]
  %s2 = inlined_call_operand.vmem [shape: f32[128,64], index: 2, kind: input, shape index: {}]
  %s3 = inlined_call_operand.vmem [shape: f32[2,512,64], index: 3, kind: output, shape index: {}]
  %s4 = sld [smem:[#allocation0]]
  $region45: #{panet_forward.16} parent=0
    _
  %s6 = ssub.s32 1, %s4
  %s7 = scalar_select 0, %s6, %s4
  loop: start=0, step=1, limit=18
  $region2: #{panet_forward.16} parent=0 // loop_pre_header
    _
  $region3: #{panet_forward.16} parent=0 // loop_header
    %s9 = sphi 0, %s13
    %p10 = scmp.ge.s32.totalorder %s9, 18
    %s16 = sphi 0, %s28
    %s17 = sphi 0, %s24
    %s18 = sphi 0, %s16
    %s19 = sphi 0, %s17
    %s20 = sphi 0, %s18
    %s21 = sphi 0, %s19
    %s33 = sphi 0, %s35
    %s36 = sphi 0, %s33
    %s37 = sphi 0, %s36
    %s53 = sphi 0, %s37
    %s61 = sphi 0, %s63
    %s64 = sphi 0, %s61
    %s65 = sphi 0, %s64
    %s81 = sphi 0, %s65
    %s85 = sphi 0, %s85
    %s87 = sphi 0, %s85
    %s88 = sphi 0, %s87
    %s102 = sphi 0, %s88
    %s110 = sphi 0, %s112
    %s113 = sphi 0, %s110
    %s114 = sphi 0, %s113
    %s130 = sphi 0, %s114
  $region4: #{panet_forward.16} parent=0 // loop_header_branch
    %12 = sbr.rel (%p10) target = $region8
  $region5: #{panet_forward.16} parent=0 // loop_body
    %s14 = ssub.s32 %s9, 1
    %s15 = ssub.s32 %s9, 2
    %s22 = sadd.s32 1, %s17
    %p23 = scmp.ge.s32.totalorder %s22, 8
    %s24 = scalar_select %p23, 0, %s22
    %s25 = sadd.s32 1, %s16
    %s26 = scalar_select %p23, %s25, %s16
    %p27 = scmp.ge.s32.totalorder %s26, 2
    %s28 = scalar_select %p27, 0, %s26
    %s29 = ssub.s32 %s16, %s28
    %s30 = ssub.s32 %s17, %s24
    %s31 = sor.u32 %s29, %s30
    %p32 = scmp.eq.s32.totalorder %s31, 0
    %s34 = sadd.s32 %s33, 1
    %s35 = scalar_select %p32, %s33, %s34
    %p38 = pneg %p32
    %p39 = scmp.eq.s32.totalorder %s9, 15
    %p40 = por %p38, %p39
    %p41 = scmp.ne.s32.totalorder %s33, %s36
    %p42 = scmp.eq.s32.totalorder %s9, 0
    %p43 = por %p41, %p42
    %p44 = scmp.ne.s32.totalorder %s33, %s36
    %p45 = scmp.eq.s32.totalorder %s14, 15
    %p46 = por %p44, %p45
    %p47 = scmp.ne.s32.totalorder %s36, %s37
    %p48 = scmp.eq.s32.totalorder %s14, 0
    %p49 = por %p47, %p48
    %p50 = scmp.ne.s32.totalorder %s36, %s37
    %p51 = scmp.eq.s32.totalorder %s15, 15
    %p52 = por %p50, %p51
    %p54 = scmp.ne.s32.totalorder %s37, %s53
    %p55 = scmp.eq.s32.totalorder %s15, 0
    %p56 = por %p54, %p55
    %s57 = ssub.s32 %s16, %s28
    %s58 = ssub.s32 %s17, %s24
    %s59 = sor.u32 %s57, %s58
    %p60 = scmp.eq.s32.totalorder %s59, 0
    %s62 = sadd.s32 %s61, 1
    %s63 = scalar_select %p60, %s61, %s62
    %p66 = pneg %p60
    %p67 = scmp.eq.s32.totalorder %s9, 15
    %p68 = por %p66, %p67
    %p69 = scmp.ne.s32.totalorder %s61, %s64
    %p70 = scmp.eq.s32.totalorder %s9, 0
    %p71 = por %p69, %p70
    %p72 = scmp.ne.s32.totalorder %s61, %s64
    %p73 = scmp.eq.s32.totalorder %s14, 15
    %p74 = por %p72, %p73
    %p75 = scmp.ne.s32.totalorder %s64, %s65
    %p76 = scmp.eq.s32.totalorder %s14, 0
    %p77 = por %p75, %p76
    %p78 = scmp.ne.s32.totalorder %s64, %s65
    %p79 = scmp.eq.s32.totalorder %s15, 15
    %p80 = por %p78, %p79
    %p82 = scmp.ne.s32.totalorder %s65, %s81
    %p83 = scmp.eq.s32.totalorder %s15, 0
    %p84 = por %p82, %p83
    %s86 = sadd.s32 %s85, 1
    %p89 = scmp.eq.s32.totalorder %s9, 15
    %p90 = scmp.ne.s32.totalorder %s85, %s87
    %p91 = scmp.eq.s32.totalorder %s9, 0
    %p92 = por %p90, %p91
    %p93 = scmp.ne.s32.totalorder %s85, %s87
    %p94 = scmp.eq.s32.totalorder %s14, 15
    %p95 = por %p93, %p94
    %p96 = scmp.ne.s32.totalorder %s87, %s88
    %p97 = scmp.eq.s32.totalorder %s14, 0
    %p98 = por %p96, %p97
    %p99 = scmp.ne.s32.totalorder %s87, %s88
    %p100 = scmp.eq.s32.totalorder %s15, 15
    %p101 = por %p99, %p100
    %p103 = scmp.ne.s32.totalorder %s88, %s102
    %p104 = scmp.eq.s32.totalorder %s15, 0
    %p105 = por %p103, %p104
    %s106 = ssub.s32 %s16, %s28
    %s107 = ssub.s32 %s17, %s24
    %s108 = sor.u32 %s106, %s107
    %p109 = scmp.eq.s32.totalorder %s108, 0
    %s111 = sadd.s32 %s110, 1
    %s112 = scalar_select %p109, %s110, %s111
    %p115 = pneg %p109
    %p116 = scmp.eq.s32.totalorder %s9, 15
    %p117 = por %p115, %p116
    %p118 = scmp.ne.s32.totalorder %s110, %s113
    %p119 = scmp.eq.s32.totalorder %s9, 0
    %p120 = por %p118, %p119
    %p121 = scmp.ne.s32.totalorder %s110, %s113
    %p122 = scmp.eq.s32.totalorder %s14, 15
    %p123 = por %p121, %p122
    %p124 = scmp.ne.s32.totalorder %s113, %s114
    %p125 = scmp.eq.s32.totalorder %s14, 0
    %p126 = por %p124, %p125
    %p127 = scmp.ne.s32.totalorder %s113, %s114
    %p128 = scmp.eq.s32.totalorder %s15, 15
    %p129 = por %p127, %p128
    %p131 = scmp.ne.s32.totalorder %s114, %s130
    %p132 = scmp.eq.s32.totalorder %s15, 0
    %p133 = por %p131, %p132
    %p134 = scmp.le.s32.totalorder 1, %s9
    %p135 = scmp.lt.s32.totalorder %s9, 17
    %p136 = pnand %p134, %p135
    %p137 = pneg %p136
    // Predicated region
    $region9: #{panet_forward.16} parent=5 // pred_check
      _
    $region10: #{panet_forward.16} parent=5 // pred_check_branch
      %139 = sbr.rel (%p136) target = $region12
    $region11: #{panet_forward.16} parent=5 // pred_region
      %s140 = ssub.s32 %s9, 1
      // Predicated region
      $region13: #{panet_forward.16} parent=11 // pred_check
        %p141 = pneg %p98
      $region14: #{panet_forward.16} parent=11 // pred_check_branch
        %143 = sbr.rel (%p141) target = $region16
      $region15: #{panet_forward.16} parent=11 // pred_region
        _
      $region16: #{panet_forward.16} parent=11 // pred_fallthru
        _
    $region12: #{panet_forward.16} parent=5 // pred_fallthru
      _
    %p144 = scmp.lt.s32.totalorder %s9, 16
    // Predicated region
    $region17: #{panet_forward.16} parent=5 // pred_check
      %p145 = pneg %p144
    $region18: #{panet_forward.16} parent=5 // pred_check_branch
      %147 = sbr.rel (%p145) target = $region20
    $region19: #{panet_forward.16} parent=5 // pred_region
      // Predicated region
      $region21: #{panet_forward.16} parent=19 // pred_check
        %p148 = pneg %p43
      $region22: #{panet_forward.16} parent=19 // pred_check_branch
        %150 = sbr.rel (%p148) target = $region24
      $region23: #{panet_forward.16} parent=19 // pred_region
        %s151 = smul.u32 8, %s17
        %p152 = scmp.lt.s32.totalorder %s16, 1
        %s153 = scalar_select %p152, %s16, 1
        %p154 = scmp.lt.s32.totalorder %s151, 63
        %s155 = scalar_select %p154, %s151, 63
        %s156 = smul.addr %s155, 2
        %s157 = smul.addr %s153, 128
        %s158 = sadd.s32 %s156, %s157
        %s159 = smul.addr %s158, 8
        %s160 = scalar_lea.vmem %s0, %s159
        %s161 = smul.u32 8, %s17
      $region24: #{panet_forward.16} parent=19 // pred_fallthru
        _
      // Predicated region
      $region25: #{panet_forward.16} parent=19 // pred_check
        %p162 = pneg %p71
      $region26: #{panet_forward.16} parent=19 // pred_check_branch
        %164 = sbr.rel (%p162) target = $region28
      $region27: #{panet_forward.16} parent=19 // pred_region
        %s165 = smul.u32 8, %s17
        %p166 = scmp.lt.s32.totalorder %s16, 1
        %s167 = scalar_select %p166, %s16, 1
        %p168 = scmp.lt.s32.totalorder %s165, 63
        %s169 = scalar_select %p168, %s165, 63
        %s170 = smul.addr %s167, 64
        %s171 = sadd.s32 %s169, %s170
        %s172 = smul.addr %s171, 8
        %s173 = scalar_lea.vmem %s1, %s172
        %s174 = smul.u32 8, %s17
      $region28: #{panet_forward.16} parent=19 // pred_fallthru
        _
    $region20: #{panet_forward.16} parent=5 // pred_fallthru
      _
    %p175 = scmp.le.s32.totalorder 1, %s9
    %p176 = scmp.lt.s32.totalorder %s9, 17
    %p177 = pnand %p175, %p176
    %p178 = pneg %p177
    // Predicated region
    $region29: #{panet_forward.16} parent=5 // pred_check
      _
    $region30: #{panet_forward.16} parent=5 // pred_check_branch
      %180 = sbr.rel (%p177) target = $region32
    $region31: #{panet_forward.16} parent=5 // pred_region
      %s181 = ssub.s32 %s9, 1
      %s182 = smul.u32 8, %s19
      %p183 = scmp.lt.s32.totalorder %s18, 1
      %s184 = scalar_select %p183, %s18, 1
      %p185 = scmp.lt.s32.totalorder %s182, 63
      %s186 = scalar_select %p185, %s182, 63
      %s187 = smul.addr %s186, 2
      %s188 = smul.addr %s184, 128
      %s189 = sadd.s32 %s187, %s188
      %s190 = smul.addr %s189, 8
      %s191 = scalar_lea.vmem %s0, %s190
      %p192 = pneg %p49
      %p193 = pneg %p46
      %s194 = smul.u32 8, %s19
      %p195 = scmp.lt.s32.totalorder %s18, 1
      %s196 = scalar_select %p195, %s18, 1
      %p197 = scmp.lt.s32.totalorder %s194, 63
      %s198 = scalar_select %p197, %s194, 63
      %s199 = smul.addr %s196, 64
      %s200 = sadd.s32 %s198, %s199
      %s201 = smul.addr %s200, 8
      %s202 = scalar_lea.vmem %s1, %s201
      %p203 = pneg %p77
      %p204 = pneg %p74
      %p205 = pneg %p98
      %p206 = pneg %p95
      %p207 = pneg %p126
      %p208 = pneg %p123
      %s209 = smul.u32 8, %s19
      %p210 = scmp.lt.s32.totalorder %s18, 1
      %s211 = scalar_select %p210, %s18, 1
      %p212 = scmp.lt.s32.totalorder %s209, 63
      %s213 = scalar_select %p212, %s209, 63
      %s214 = smul.addr %s211, 64
      %s215 = sadd.s32 %s213, %s214
      %s216 = smul.addr %s215, 8
      %s217 = scalar_lea.vmem %s3, %s216
      %s218 = smul.u32 8, %s19
      %p219 = scmp.lt.s32.totalorder %s18, 1
      %s220 = scalar_select %p219, %s18, 1
      %p221 = scmp.lt.s32.totalorder %s218, 63
      %s222 = scalar_select %p221, %s218, 63
      %s223 = smul.addr %s222, 2
      %s224 = smul.addr %s220, 128
      %s225 = sadd.s32 %s223, %s224
      %s226 = smul.addr %s225, 8
      %s227 = scalar_lea.vmem %s0, %s226
      %s228 = smul.u32 8, %s19
      %s229 = smul.u32 8, %s19
      %p230 = scmp.lt.s32.totalorder %s18, 1
      %s231 = scalar_select %p230, %s18, 1
      %p232 = scmp.lt.s32.totalorder %s229, 63
      %s233 = scalar_select %p232, %s229, 63
      %s234 = smul.addr %s231, 64
      %s235 = sadd.s32 %s233, %s234
      %s236 = smul.addr %s235, 8
      %s237 = scalar_lea.vmem %s1, %s236
      %s238 = smul.u32 8, %s19
      %s239 = smul.u32 8, %s19
      %p240 = scmp.lt.s32.totalorder %s18, 1
      %s241 = scalar_select %p240, %s18, 1
      %p242 = scmp.lt.s32.totalorder %s239, 63
      %s243 = scalar_select %p242, %s239, 63
      %s244 = smul.addr %s241, 64
      %s245 = sadd.s32 %s243, %s244
      %s246 = smul.addr %s245, 8
      %s247 = scalar_lea.vmem %s3, %s246
      %s248 = smul.u32 8, %s19
      %v249 = vld [vmem:[%s227] sm:$0xff]
      %v250 = vld [vmem:[%s227 + $0x8] sm:$0xff]
      %v251 = vld [vmem:[%s227 + $0x10] sm:$0xff]
      %v252 = vld [vmem:[%s227 + $0x18] sm:$0xff]
      %v253 = vld [vmem:[%s227 + $0x20] sm:$0xff]
      %v254 = vld [vmem:[%s227 + $0x28] sm:$0xff]
      %v255 = vld [vmem:[%s227 + $0x30] sm:$0xff]
      %v256 = vld [vmem:[%s227 + $0x38] sm:$0xff]
      %v257 = vld [vmem:[%s227 + $0x40] sm:$0xff]
      %v258 = vld [vmem:[%s227 + $0x48] sm:$0xff]
      %v259 = vld [vmem:[%s227 + $0x50] sm:$0xff]
      %v260 = vld [vmem:[%s227 + $0x58] sm:$0xff]
      %v261 = vld [vmem:[%s227 + $0x60] sm:$0xff]
      %v262 = vld [vmem:[%s227 + $0x68] sm:$0xff]
      %v263 = vld [vmem:[%s227 + $0x70] sm:$0xff]
      %v264 = vld [vmem:[%s227 + $0x78] sm:$0xff]
      %v265 = vmax.f32 %v249, %v250
      %v266 = vmax.f32 %v251, %v252
      %v267 = vmax.f32 %v253, %v254
      %v268 = vmax.f32 %v255, %v256
      %v269 = vmax.f32 %v257, %v258
      %v270 = vmax.f32 %v259, %v260
      %v271 = vmax.f32 %v261, %v262
      %v272 = vmax.f32 %v263, %v264
      %281 = vrot.lane.b32.xlu0 %v265, 127
      %v282 = vpop.permute.xlu0 %281
      %283 = vrot.lane.b32.xlu0 %v266, 127
      %v284 = vpop.permute.xlu0 %283
      %285 = vrot.lane.b32.xlu0 %v267, 127
      %v286 = vpop.permute.xlu0 %285
      %287 = vrot.lane.b32.xlu0 %v268, 127
      %v288 = vpop.permute.xlu0 %287
      %289 = vrot.lane.b32.xlu0 %v269, 127
      %v290 = vpop.permute.xlu0 %289
      %291 = vrot.lane.b32.xlu0 %v270, 127
      %v292 = vpop.permute.xlu0 %291
      %293 = vrot.lane.b32.xlu0 %v271, 127
      %v294 = vpop.permute.xlu0 %293
      %295 = vrot.lane.b32.xlu0 %v272, 127
      %v296 = vpop.permute.xlu0 %295
      %v305 = vmax.f32 %v265, %v282
      %v306 = vmax.f32 %v266, %v284
      %v307 = vmax.f32 %v267, %v286
      %v308 = vmax.f32 %v268, %v288
      %v309 = vmax.f32 %v269, %v290
      %v310 = vmax.f32 %v270, %v292
      %v311 = vmax.f32 %v271, %v294
      %v312 = vmax.f32 %v272, %v296
      %v313 = vld [vmem:[%s2] sm:$0xff]
      %v314 = vld [vmem:[%s2 + $0x8] sm:$0xff]
      %v315 = vld [vmem:[%s2 + $0x10] sm:$0xff]
      %v316 = vld [vmem:[%s2 + $0x18] sm:$0xff]
      %v317 = vld [vmem:[%s2 + $0x20] sm:$0xff]
      %v318 = vld [vmem:[%s2 + $0x28] sm:$0xff]
      %v319 = vld [vmem:[%s2 + $0x30] sm:$0xff]
      %v320 = vld [vmem:[%s2 + $0x38] sm:$0xff]
      %v321 = vld [vmem:[%s2 + $0x40] sm:$0xff]
      %v322 = vld [vmem:[%s2 + $0x48] sm:$0xff]
      %v323 = vld [vmem:[%s2 + $0x50] sm:$0xff]
      %v324 = vld [vmem:[%s2 + $0x58] sm:$0xff]
      %v325 = vld [vmem:[%s2 + $0x60] sm:$0xff]
      %v326 = vld [vmem:[%s2 + $0x68] sm:$0xff]
      %v327 = vld [vmem:[%s2 + $0x70] sm:$0xff]
      %v328 = vld [vmem:[%s2 + $0x78] sm:$0xff]
      %v329 = vld [vmem:[%s237] sm:$0xff]
      %v330 = vld [vmem:[%s237 + $0x8] sm:$0xff]
      %v331 = vld [vmem:[%s237 + $0x10] sm:$0xff]
      %v332 = vld [vmem:[%s237 + $0x18] sm:$0xff]
      %v333 = vld [vmem:[%s237 + $0x20] sm:$0xff]
      %v334 = vld [vmem:[%s237 + $0x28] sm:$0xff]
      %v335 = vld [vmem:[%s237 + $0x30] sm:$0xff]
      %v336 = vld [vmem:[%s237 + $0x38] sm:$0xff]
      %337 = vmatprep.subr.mxu0 0.0
      %338 = vmatpush1.msra.mxu0 %v313
      %339 = vmatprep.subr.mxu0 0.0
      %340 = vmatpush1.msra.mxu0 %v314
      %341 = vmatprep.subr.mxu0 0.0
      %342 = vmatpush1.msra.mxu0 %v315
      %343 = vmatprep.subr.mxu0 0.0
      %344 = vmatpush1.msra.mxu0 %v316
      %345 = vmatprep.subr.mxu0 0.0
      %346 = vmatpush1.msra.mxu0 %v317
      %347 = vmatprep.subr.mxu0 0.0
      %348 = vmatpush1.msra.mxu0 %v318
      %349 = vmatprep.subr.mxu0 0.0
      %350 = vmatpush1.msra.mxu0 %v319
      %351 = vmatprep.subr.mxu0 0.0
      %352 = vmatpush1.msra.mxu0 %v320
      %353 = vmatprep.subr.mxu0 0.0
      %354 = vmatpush1.msra.mxu0 %v321
      %355 = vmatprep.subr.mxu0 0.0
      %356 = vmatpush1.msra.mxu0 %v322
      %357 = vmatprep.subr.mxu0 0.0
      %358 = vmatpush1.msra.mxu0 %v323
      %359 = vmatprep.subr.mxu0 0.0
      %360 = vmatpush1.msra.mxu0 %v324
      %361 = vmatprep.subr.mxu0 0.0
      %362 = vmatpush1.msra.mxu0 %v325
      %363 = vmatprep.subr.mxu0 0.0
      %364 = vmatpush1.msra.mxu0 %v326
      %365 = vmatprep.subr.mxu0 0.0
      %366 = vmatpush1.msra.mxu0 %v327
      %367 = vmatprep.subr.mxu0 0.0
      %368 = vmatpush1.msra.mxu0 %v328
      %369 = vmatprep.subr.mxu0 0.0
      %370 = vmatpush1.msra.mxu0 0.0
      %371 = vmatprep.subr.mxu0 0.0
      %372 = vmatpush1.msra.mxu0 0.0
      %373 = vmatprep.subr.mxu0 0.0
      %374 = vmatpush1.msra.mxu0 0.0
      %375 = vmatprep.subr.mxu0 0.0
      %376 = vmatpush1.msra.mxu0 0.0
      %377 = vmatprep.subr.mxu0 0.0
      %378 = vmatpush1.msra.mxu0 0.0
      %379 = vmatprep.subr.mxu0 0.0
      %380 = vmatpush1.msra.mxu0 0.0
      %381 = vmatprep.subr.mxu0 0.0
      %382 = vmatpush1.msra.mxu0 0.0
      %383 = vmatprep.subr.mxu0 0.0
      %384 = vmatpush1.msra.mxu0 0.0
      %385 = vmatprep.subr.mxu0 0.0
      %386 = vmatpush1.msra.mxu0 0.0
      %387 = vmatprep.subr.mxu0 0.0
      %388 = vmatpush1.msra.mxu0 0.0
      %389 = vmatprep.subr.mxu0 0.0
      %390 = vmatpush1.msra.mxu0 0.0
      %391 = vmatprep.subr.mxu0 0.0
      %392 = vmatpush1.msra.mxu0 0.0
      %393 = vmatprep.subr.mxu0 0.0
      %394 = vmatpush1.msra.mxu0 0.0
      %395 = vmatprep.subr.mxu0 0.0
      %396 = vmatpush1.msra.mxu0 0.0
      %397 = vmatprep.subr.mxu0 0.0
      %398 = vmatpush1.msra.mxu0 0.0
      %399 = vmatprep.subr.mxu0 0.0
      %400 = vmatpush1.msra.mxu0 0.0
      %401 = vmatprep.mubr.f32.mxu0 0.0
      %402 = vmatmul.mubr.f32.gmra.mrb[0].mxu0 %v305
      %v403 = vpop.f32.mrb[0].mxu0
      %v404 = vadd.f32 %v329, %v403
      %v405 = vpop.f32.mrb[0].mxu0
      %406 = vmatprep.mubr.f32.mxu0 0.0
      %407 = vmatmul.mubr.f32.gmra.mrb[0].mxu0 %v306
      %v408 = vpop.f32.mrb[0].mxu0
      %v409 = vadd.f32 %v330, %v408
      %v410 = vpop.f32.mrb[0].mxu0
      %411 = vmatprep.mubr.f32.mxu0 0.0
      %412 = vmatmul.mubr.f32.gmra.mrb[0].mxu0 %v307
      %v413 = vpop.f32.mrb[0].mxu0
      %v414 = vadd.f32 %v331, %v413
      %v415 = vpop.f32.mrb[0].mxu0
      %416 = vmatprep.mubr.f32.mxu0 0.0
      %417 = vmatmul.mubr.f32.gmra.mrb[0].mxu0 %v308
      %v418 = vpop.f32.mrb[0].mxu0
      %v419 = vadd.f32 %v332, %v418
      %v420 = vpop.f32.mrb[0].mxu0
      %421 = vmatprep.mubr.f32.mxu0 0.0
      %422 = vmatmul.mubr.f32.gmra.mrb[0].mxu0 %v309
      %v423 = vpop.f32.mrb[0].mxu0
      %v424 = vadd.f32 %v333, %v423
      %v425 = vpop.f32.mrb[0].mxu0
      %426 = vmatprep.mubr.f32.mxu0 0.0
      %427 = vmatmul.mubr.f32.gmra.mrb[0].mxu0 %v310
      %v428 = vpop.f32.mrb[0].mxu0
      %v429 = vadd.f32 %v334, %v428
      %v430 = vpop.f32.mrb[0].mxu0
      %431 = vmatprep.mubr.f32.mxu0 0.0
      %432 = vmatmul.mubr.f32.gmra.mrb[0].mxu0 %v311
      %v433 = vpop.f32.mrb[0].mxu0
      %v434 = vadd.f32 %v335, %v433
      %v435 = vpop.f32.mrb[0].mxu0
      %436 = vmatprep.mubr.f32.mxu0 0.0
      %437 = vmatmul.mubr.f32.gmra.mrb[0].mxu0 %v312
      %v438 = vpop.f32.mrb[0].mxu0
      %v439 = vadd.f32 %v336, %v438
      %v440 = vpop.f32.mrb[0].mxu0
      %441 = vdwg.mxu0
      %vm442 = vcmask 523264
      %443 = vst.msk [vmem:[%s247] sm:$0xff] %vm442, %v404
      %444 = vst.msk [vmem:[%s247 + $0x8] sm:$0xff] %vm442, %v409
      %445 = vst.msk [vmem:[%s247 + $0x10] sm:$0xff] %vm442, %v414
      %446 = vst.msk [vmem:[%s247 + $0x18] sm:$0xff] %vm442, %v419
      %447 = vst.msk [vmem:[%s247 + $0x20] sm:$0xff] %vm442, %v424
      %448 = vst.msk [vmem:[%s247 + $0x28] sm:$0xff] %vm442, %v429
      %449 = vst.msk [vmem:[%s247 + $0x30] sm:$0xff] %vm442, %v434
      %450 = vst.msk [vmem:[%s247 + $0x38] sm:$0xff] %vm442, %v439
      %s451 = smul.u32 8, %s19
      %p452 = scmp.lt.s32.totalorder %s18, 1
      %s453 = scalar_select %p452, %s18, 1
      %p454 = scmp.lt.s32.totalorder %s451, 63
      %s455 = scalar_select %p454, %s451, 63
      %s456 = smul.addr %s453, 64
      %s457 = sadd.s32 %s455, %s456
      %s458 = smul.addr %s457, 8
      %s459 = scalar_lea.vmem %s3, %s458
      // Predicated region
      $region33: #{panet_forward.16} parent=31 // pred_check
        %p460 = pneg %p123
      $region34: #{panet_forward.16} parent=31 // pred_check_branch
        %462 = sbr.rel (%p460) target = $region36
      $region35: #{panet_forward.16} parent=31 // pred_region
        %s463 = smul.u32 8, %s19
      $region36: #{panet_forward.16} parent=31 // pred_fallthru
        _
    $region32: #{panet_forward.16} parent=5 // pred_fallthru
      _
    %p464 = scmp.le.s32.totalorder 2, %s9
    // Predicated region
    $region37: #{panet_forward.16} parent=5 // pred_check
      %p465 = pneg %p464
    $region38: #{panet_forward.16} parent=5 // pred_check_branch
      %467 = sbr.rel (%p465) target = $region40
    $region39: #{panet_forward.16} parent=5 // pred_region
      %s468 = ssub.s32 %s9, 2
      // Predicated region
      $region41: #{panet_forward.16} parent=39 // pred_check
        %p469 = pneg %p129
      $region42: #{panet_forward.16} parent=39 // pred_check_branch
        %471 = sbr.rel (%p469) target = $region44
      $region43: #{panet_forward.16} parent=39 // pred_region
        %s472 = smul.u32 8, %s21
        %p473 = scmp.lt.s32.totalorder %s20, 1
        %s474 = scalar_select %p473, %s20, 1
        %p475 = scmp.lt.s32.totalorder %s472, 63
        %s476 = scalar_select %p475, %s472, 63
        %s477 = smul.addr %s474, 64
        %s478 = sadd.s32 %s476, %s477
        %s479 = smul.addr %s478, 8
        %s480 = scalar_lea.vmem %s3, %s479
      $region44: #{panet_forward.16} parent=39 // pred_fallthru
        _
    $region40: #{panet_forward.16} parent=5 // pred_fallthru
      _
  $region6: #{panet_forward.16} parent=0 // loop_footer
    %s13 = sadd.s32 1, %s9
  $region7: #{panet_forward.16} parent=0 // loop_footer_branch
    %8 = sbr.rel target = $region3
  $region8: #{panet_forward.16} parent=0 // loop_exit
    _

// kernel: panet_forward.17
$region0: #{panet_forward.17}
  #allocation0 [shape = 'u32[]', space=smem, size = 0x4, offset = 0x4, fixed_abs, tag = 'smem constant byte address 0x4 - core index']
  #allocation1 [shape = 'u32[144,128]{1,0:T(1,128)}', space=vmem, size = 0x12000, scoped, tag = 'internal scratch']
  %s0 = inlined_call_operand.vmem [shape: f32[2,8,4096], index: 0, kind: input, shape index: {}]
  %s1 = inlined_call_operand.vmem [shape: f32[8,8], index: 1, kind: input, shape index: {}]
  %s2 = inlined_call_operand.vmem [shape: f32[8,1], index: 2, kind: input, shape index: {}]
  %s3 = inlined_call_operand.vmem [shape: f32[2,8,4096], index: 3, kind: output, shape index: {}]
  %s4 = sld [smem:[#allocation0]]
  $region45: #{panet_forward.17} parent=0
    _
  %s6 = ssub.s32 1, %s4
  %s7 = scalar_select 0, %s6, %s4
  loop: start=0, step=1, limit=6
  $region2: #{panet_forward.17} parent=0 // loop_pre_header
    _
  $region3: #{panet_forward.17} parent=0 // loop_header
    %s9 = sphi 0, %s13
    %p10 = scmp.ge.s32.totalorder %s9, 6
    %s16 = sphi 0, %s28
    %s17 = sphi 0, %s24
    %s18 = sphi 0, %s16
    %s19 = sphi 0, %s17
    %s20 = sphi 0, %s18
    %s21 = sphi 0, %s19
    %s33 = sphi 0, %s35
    %s36 = sphi 0, %s33
    %s37 = sphi 0, %s36
    %s53 = sphi 0, %s37
    %s57 = sphi 0, %s57
    %s59 = sphi 0, %s57
    %s60 = sphi 0, %s59
    %s74 = sphi 0, %s60
    %s78 = sphi 0, %s78
    %s80 = sphi 0, %s78
    %s81 = sphi 0, %s80
    %s95 = sphi 0, %s81
    %s103 = sphi 0, %s105
    %s106 = sphi 0, %s103
    %s107 = sphi 0, %s106
    %s123 = sphi 0, %s107
  $region4: #{panet_forward.17} parent=0 // loop_header_branch
    %12 = sbr.rel (%p10) target = $region8
  $region5: #{panet_forward.17} parent=0 // loop_body
    %s14 = ssub.s32 %s9, 1
    %s15 = ssub.s32 %s9, 2
    %s22 = sadd.s32 1, %s17
    %p23 = scmp.ge.s32.totalorder %s22, 2
    %s24 = scalar_select %p23, 0, %s22
    %s25 = sadd.s32 1, %s16
    %s26 = scalar_select %p23, %s25, %s16
    %p27 = scmp.ge.s32.totalorder %s26, 2
    %s28 = scalar_select %p27, 0, %s26
    %s29 = ssub.s32 %s16, %s28
    %s30 = ssub.s32 %s17, %s24
    %s31 = sor.u32 %s29, %s30
    %p32 = scmp.eq.s32.totalorder %s31, 0
    %s34 = sadd.s32 %s33, 1
    %s35 = scalar_select %p32, %s33, %s34
    %p38 = pneg %p32
    %p39 = scmp.eq.s32.totalorder %s9, 3
    %p40 = por %p38, %p39
    %p41 = scmp.ne.s32.totalorder %s33, %s36
    %p42 = scmp.eq.s32.totalorder %s9, 0
    %p43 = por %p41, %p42
    %p44 = scmp.ne.s32.totalorder %s33, %s36
    %p45 = scmp.eq.s32.totalorder %s14, 3
    %p46 = por %p44, %p45
    %p47 = scmp.ne.s32.totalorder %s36, %s37
    %p48 = scmp.eq.s32.totalorder %s14, 0
    %p49 = por %p47, %p48
    %p50 = scmp.ne.s32.totalorder %s36, %s37
    %p51 = scmp.eq.s32.totalorder %s15, 3
    %p52 = por %p50, %p51
    %p54 = scmp.ne.s32.totalorder %s37, %s53
    %p55 = scmp.eq.s32.totalorder %s15, 0
    %p56 = por %p54, %p55
    %s58 = sadd.s32 %s57, 1
    %p61 = scmp.eq.s32.totalorder %s9, 3
    %p62 = scmp.ne.s32.totalorder %s57, %s59
    %p63 = scmp.eq.s32.totalorder %s9, 0
    %p64 = por %p62, %p63
    %p65 = scmp.ne.s32.totalorder %s57, %s59
    %p66 = scmp.eq.s32.totalorder %s14, 3
    %p67 = por %p65, %p66
    %p68 = scmp.ne.s32.totalorder %s59, %s60
    %p69 = scmp.eq.s32.totalorder %s14, 0
    %p70 = por %p68, %p69
    %p71 = scmp.ne.s32.totalorder %s59, %s60
    %p72 = scmp.eq.s32.totalorder %s15, 3
    %p73 = por %p71, %p72
    %p75 = scmp.ne.s32.totalorder %s60, %s74
    %p76 = scmp.eq.s32.totalorder %s15, 0
    %p77 = por %p75, %p76
    %s79 = sadd.s32 %s78, 1
    %p82 = scmp.eq.s32.totalorder %s9, 3
    %p83 = scmp.ne.s32.totalorder %s78, %s80
    %p84 = scmp.eq.s32.totalorder %s9, 0
    %p85 = por %p83, %p84
    %p86 = scmp.ne.s32.totalorder %s78, %s80
    %p87 = scmp.eq.s32.totalorder %s14, 3
    %p88 = por %p86, %p87
    %p89 = scmp.ne.s32.totalorder %s80, %s81
    %p90 = scmp.eq.s32.totalorder %s14, 0
    %p91 = por %p89, %p90
    %p92 = scmp.ne.s32.totalorder %s80, %s81
    %p93 = scmp.eq.s32.totalorder %s15, 3
    %p94 = por %p92, %p93
    %p96 = scmp.ne.s32.totalorder %s81, %s95
    %p97 = scmp.eq.s32.totalorder %s15, 0
    %p98 = por %p96, %p97
    %s99 = ssub.s32 %s16, %s28
    %s100 = ssub.s32 %s17, %s24
    %s101 = sor.u32 %s99, %s100
    %p102 = scmp.eq.s32.totalorder %s101, 0
    %s104 = sadd.s32 %s103, 1
    %s105 = scalar_select %p102, %s103, %s104
    %p108 = pneg %p102
    %p109 = scmp.eq.s32.totalorder %s9, 3
    %p110 = por %p108, %p109
    %p111 = scmp.ne.s32.totalorder %s103, %s106
    %p112 = scmp.eq.s32.totalorder %s9, 0
    %p113 = por %p111, %p112
    %p114 = scmp.ne.s32.totalorder %s103, %s106
    %p115 = scmp.eq.s32.totalorder %s14, 3
    %p116 = por %p114, %p115
    %p117 = scmp.ne.s32.totalorder %s106, %s107
    %p118 = scmp.eq.s32.totalorder %s14, 0
    %p119 = por %p117, %p118
    %p120 = scmp.ne.s32.totalorder %s106, %s107
    %p121 = scmp.eq.s32.totalorder %s15, 3
    %p122 = por %p120, %p121
    %p124 = scmp.ne.s32.totalorder %s107, %s123
    %p125 = scmp.eq.s32.totalorder %s15, 0
    %p126 = por %p124, %p125
    %p127 = scmp.le.s32.totalorder 1, %s9
    %p128 = scmp.lt.s32.totalorder %s9, 5
    %p129 = pnand %p127, %p128
    %p130 = pneg %p129
    // Predicated region
    $region9: #{panet_forward.17} parent=5 // pred_check
      _
    $region10: #{panet_forward.17} parent=5 // pred_check_branch
      %132 = sbr.rel (%p129) target = $region12
    $region11: #{panet_forward.17} parent=5 // pred_region
      %s133 = ssub.s32 %s9, 1
      // Predicated region
      $region13: #{panet_forward.17} parent=11 // pred_check
        %p134 = pneg %p70
      $region14: #{panet_forward.17} parent=11 // pred_check_branch
        %136 = sbr.rel (%p134) target = $region16
      $region15: #{panet_forward.17} parent=11 // pred_region
        _
      $region16: #{panet_forward.17} parent=11 // pred_fallthru
        _
      // Predicated region
      $region17: #{panet_forward.17} parent=11 // pred_check
        %p137 = pneg %p91
      $region18: #{panet_forward.17} parent=11 // pred_check_branch
        %139 = sbr.rel (%p137) target = $region20
      $region19: #{panet_forward.17} parent=11 // pred_region
        _
      $region20: #{panet_forward.17} parent=11 // pred_fallthru
        _
    $region12: #{panet_forward.17} parent=5 // pred_fallthru
      _
    %p140 = scmp.lt.s32.totalorder %s9, 4
    // Predicated region
    $region21: #{panet_forward.17} parent=5 // pred_check
      %p141 = pneg %p140
    $region22: #{panet_forward.17} parent=5 // pred_check_branch
      %143 = sbr.rel (%p141) target = $region24
    $region23: #{panet_forward.17} parent=5 // pred_region
      // Predicated region
      $region25: #{panet_forward.17} parent=23 // pred_check
        %p144 = pneg %p43
      $region26: #{panet_forward.17} parent=23 // pred_check_branch
        %146 = sbr.rel (%p144) target = $region28
      $region27: #{panet_forward.17} parent=23 // pred_region
        %s147 = smul.u32 16, %s17
        %p148 = scmp.lt.s32.totalorder %s16, 1
        %s149 = scalar_select %p148, %s16, 1
        %p150 = scmp.lt.s32.totalorder %s147, 31
        %s151 = scalar_select %p150, %s147, 31
        %s152 = smul.addr %s149, 32
        %s153 = sadd.s32 %s151, %s152
        %s154 = smul.addr %s153, 8
        %s155 = scalar_lea.vmem %s0, %s154
        %s156 = smul.u32 16, %s17
      $region28: #{panet_forward.17} parent=23 // pred_fallthru
        _
    $region24: #{panet_forward.17} parent=5 // pred_fallthru
      _
    %p157 = scmp.le.s32.totalorder 1, %s9
    %p158 = scmp.lt.s32.totalorder %s9, 5
    %p159 = pnand %p157, %p158
    %p160 = pneg %p159
    // Predicated region
    $region29: #{panet_forward.17} parent=5 // pred_check
      _
    $region30: #{panet_forward.17} parent=5 // pred_check_branch
      %162 = sbr.rel (%p159) target = $region32
    $region31: #{panet_forward.17} parent=5 // pred_region
      %s163 = ssub.s32 %s9, 1
      %s164 = smul.u32 16, %s19
      %p165 = scmp.lt.s32.totalorder %s18, 1
      %s166 = scalar_select %p165, %s18, 1
      %p167 = scmp.lt.s32.totalorder %s164, 31
      %s168 = scalar_select %p167, %s164, 31
      %s169 = smul.addr %s166, 32
      %s170 = sadd.s32 %s168, %s169
      %s171 = smul.addr %s170, 8
      %s172 = scalar_lea.vmem %s0, %s171
      %p173 = pneg %p49
      %p174 = pneg %p46
      %p175 = pneg %p70
      %p176 = pneg %p67
      %p177 = pneg %p91
      %p178 = pneg %p88
      %p179 = pneg %p119
      %p180 = pneg %p116
      %s181 = smul.u32 16, %s19
      %p182 = scmp.lt.s32.totalorder %s18, 1
      %s183 = scalar_select %p182, %s18, 1
      %p184 = scmp.lt.s32.totalorder %s181, 31
      %s185 = scalar_select %p184, %s181, 31
      %s186 = smul.addr %s183, 32
      %s187 = sadd.s32 %s185, %s186
      %s188 = smul.addr %s187, 8
      %s189 = scalar_lea.vmem %s3, %s188
      %s190 = smul.u32 16, %s19
      %p191 = scmp.lt.s32.totalorder %s18, 1
      %s192 = scalar_select %p191, %s18, 1
      %p193 = scmp.lt.s32.totalorder %s190, 31
      %s194 = scalar_select %p193, %s190, 31
      %s195 = smul.addr %s192, 32
      %s196 = sadd.s32 %s194, %s195
      %s197 = smul.addr %s196, 8
      %s198 = scalar_lea.vmem %s0, %s197
      %s199 = smul.u32 16, %s19
      %s200 = smul.u32 16, %s19
      %p201 = scmp.lt.s32.totalorder %s18, 1
      %s202 = scalar_select %p201, %s18, 1
      %p203 = scmp.lt.s32.totalorder %s200, 31
      %s204 = scalar_select %p203, %s200, 31
      %s205 = smul.addr %s202, 32
      %s206 = sadd.s32 %s204, %s205
      %s207 = smul.addr %s206, 8
      %s208 = scalar_lea.vmem %s3, %s207
      %s209 = smul.u32 16, %s19
      %v210 = vld [vmem:[%s198] sm:$0xff]
      %v211 = vld [vmem:[%s198 + $0x8] sm:$0xff]
      %v212 = vld [vmem:[%s198 + $0x10] sm:$0xff]
      %v213 = vld [vmem:[%s198 + $0x18] sm:$0xff]
      %v214 = vld [vmem:[%s198 + $0x20] sm:$0xff]
      %v215 = vld [vmem:[%s198 + $0x28] sm:$0xff]
      %v216 = vld [vmem:[%s198 + $0x30] sm:$0xff]
      %v217 = vld [vmem:[%s198 + $0x38] sm:$0xff]
      %v218 = vld [vmem:[%s198 + $0x40] sm:$0xff]
      %v219 = vld [vmem:[%s198 + $0x48] sm:$0xff]
      %v220 = vld [vmem:[%s198 + $0x50] sm:$0xff]
      %v221 = vld [vmem:[%s198 + $0x58] sm:$0xff]
      %v222 = vld [vmem:[%s198 + $0x60] sm:$0xff]
      %v223 = vld [vmem:[%s198 + $0x68] sm:$0xff]
      %v224 = vld [vmem:[%s198 + $0x70] sm:$0xff]
      %v225 = vld [vmem:[%s198 + $0x78] sm:$0xff]
      %v226 = vld [vmem:[%s1] sm:$0xff]
      %v227 = vld [vmem:[%s2] sm:$0xff]
      %229 = vset.pattern.permute.xlu0 0
      %230 = vperm.xlu0 %229, %v227
      %v231 = vpop.permute.xlu0 %230
      %vm233 = vcmask 64512
      %v235 = vsel %vm233, %v226, 0
      %237 = vmatprep.subr.mxu0 %v211
      %238 = vmatpush1.msra.mxu0 %v210
      %239 = vmatprep.subr.mxu0 0.0
      %240 = vmatpush1.msra.mxu0 0.0
      %241 = vmatprep.subr.mxu0 0.0
      %242 = vmatpush1.msra.mxu0 0.0
      %243 = vmatprep.subr.mxu0 0.0
      %244 = vmatpush1.msra.mxu0 0.0
      %245 = vmatprep.subr.mxu0 0.0
      %246 = vmatpush1.msra.mxu0 0.0
      %247 = vmatprep.subr.mxu0 0.0
      %248 = vmatpush1.msra.mxu0 0.0
      %249 = vmatprep.subr.mxu0 0.0
      %250 = vmatpush1.msra.mxu0 0.0
      %251 = vmatprep.subr.mxu0 0.0
      %252 = vmatpush1.msra.mxu0 0.0
      %253 = vmatprep.subr.mxu0 0.0
      %254 = vmatpush1.msra.mxu0 0.0
      %255 = vmatprep.subr.mxu0 0.0
      %256 = vmatpush1.msra.mxu0 0.0
      %257 = vmatprep.subr.mxu0 0.0
      %258 = vmatpush1.msra.mxu0 0.0
      %259 = vmatprep.subr.mxu0 0.0
      %260 = vmatpush1.msra.mxu0 0.0
      %261 = vmatprep.subr.mxu0 0.0
      %262 = vmatpush1.msra.mxu0 0.0
      %263 = vmatprep.subr.mxu0 0.0
      %264 = vmatpush1.msra.mxu0 0.0
      %265 = vmatprep.subr.mxu0 0.0
      %266 = vmatpush1.msra.mxu0 0.0
      %267 = vmatprep.subr.mxu0 0.0
      %268 = vmatpush1.msra.mxu0 0.0
      %269 = vmatprep.subr.mxu0 0.0
      %270 = vmatpush1.msra.mxu0 0.0
      %271 = vmatprep.subr.mxu0 0.0
      %272 = vmatpush1.msra.mxu0 0.0
      %273 = vmatprep.subr.mxu0 0.0
      %274 = vmatpush1.msra.mxu0 0.0
      %275 = vmatprep.subr.mxu0 0.0
      %276 = vmatpush1.msra.mxu0 0.0
      %277 = vmatprep.subr.mxu0 0.0
      %278 = vmatpush1.msra.mxu0 0.0
      %279 = vmatprep.subr.mxu0 0.0
      %280 = vmatpush1.msra.mxu0 0.0
      %281 = vmatprep.subr.mxu0 0.0
      %282 = vmatpush1.msra.mxu0 0.0
      %283 = vmatprep.subr.mxu0 0.0
      %284 = vmatpush1.msra.mxu0 0.0
      %285 = vmatprep.subr.mxu0 0.0
      %286 = vmatpush1.msra.mxu0 0.0
      %287 = vmatprep.subr.mxu0 0.0
      %288 = vmatpush1.msra.mxu0 0.0
      %289 = vmatprep.subr.mxu0 0.0
      %290 = vmatpush1.msra.mxu0 0.0
      %291 = vmatprep.subr.mxu0 0.0
      %292 = vmatpush1.msra.mxu0 0.0
      %293 = vmatprep.subr.mxu0 0.0
      %294 = vmatpush1.msra.mxu0 0.0
      %295 = vmatprep.subr.mxu0 0.0
      %296 = vmatpush1.msra.mxu0 0.0
      %297 = vmatprep.subr.mxu0 0.0
      %298 = vmatpush1.msra.mxu0 0.0
      %299 = vmatprep.subr.mxu0 0.0
      %300 = vmatpush1.msra.mxu0 0.0
      %301 = vmatprep.mubr.f32.mxu0 0.0
      %302 = vmatmul.mubr.f32.gmra.mrb[0].mxu0 %v235
      %v303 = vpop.f32.mrb[0].mxu0
      %v304 = vadd.f32 %v231, %v303
      %v305 = vpop.f32.mrb[0].mxu0
      %v306 = vadd.f32 %v231, %v305
      %307 = vdwg.mxu0
      %308 = vmatprep.subr.mxu0 %v213
      %309 = vmatpush1.msra.mxu0 %v212
      %310 = vmatprep.subr.mxu0 0.0
      %311 = vmatpush1.msra.mxu0 0.0
      %312 = vmatprep.subr.mxu0 0.0
      %313 = vmatpush1.msra.mxu0 0.0
      %314 = vmatprep.subr.mxu0 0.0
      %315 = vmatpush1.msra.mxu0 0.0
      %316 = vmatprep.subr.mxu0 0.0
      %317 = vmatpush1.msra.mxu0 0.0
      %318 = vmatprep.subr.mxu0 0.0
      %319 = vmatpush1.msra.mxu0 0.0
      %320 = vmatprep.subr.mxu0 0.0
      %321 = vmatpush1.msra.mxu0 0.0
      %322 = vmatprep.subr.mxu0 0.0
      %323 = vmatpush1.msra.mxu0 0.0
      %324 = vmatprep.subr.mxu0 0.0
      %325 = vmatpush1.msra.mxu0 0.0
      %326 = vmatprep.subr.mxu0 0.0
      %327 = vmatpush1.msra.mxu0 0.0
      %328 = vmatprep.subr.mxu0 0.0
      %329 = vmatpush1.msra.mxu0 0.0
      %330 = vmatprep.subr.mxu0 0.0
      %331 = vmatpush1.msra.mxu0 0.0
      %332 = vmatprep.subr.mxu0 0.0
      %333 = vmatpush1.msra.mxu0 0.0
      %334 = vmatprep.subr.mxu0 0.0
      %335 = vmatpush1.msra.mxu0 0.0
      %336 = vmatprep.subr.mxu0 0.0
      %337 = vmatpush1.msra.mxu0 0.0
      %338 = vmatprep.subr.mxu0 0.0
      %339 = vmatpush1.msra.mxu0 0.0
      %340 = vmatprep.subr.mxu0 0.0
      %341 = vmatpush1.msra.mxu0 0.0
      %342 = vmatprep.subr.mxu0 0.0
      %343 = vmatpush1.msra.mxu0 0.0
      %344 = vmatprep.subr.mxu0 0.0
      %345 = vmatpush1.msra.mxu0 0.0
      %346 = vmatprep.subr.mxu0 0.0
      %347 = vmatpush1.msra.mxu0 0.0
      %348 = vmatprep.subr.mxu0 0.0
      %349 = vmatpush1.msra.mxu0 0.0
      %350 = vmatprep.subr.mxu0 0.0
      %351 = vmatpush1.msra.mxu0 0.0
      %352 = vmatprep.subr.mxu0 0.0
      %353 = vmatpush1.msra.mxu0 0.0
      %354 = vmatprep.subr.mxu0 0.0
      %355 = vmatpush1.msra.mxu0 0.0
      %356 = vmatprep.subr.mxu0 0.0
      %357 = vmatpush1.msra.mxu0 0.0
      %358 = vmatprep.subr.mxu0 0.0
      %359 = vmatpush1.msra.mxu0 0.0
      %360 = vmatprep.subr.mxu0 0.0
      %361 = vmatpush1.msra.mxu0 0.0
      %362 = vmatprep.subr.mxu0 0.0
      %363 = vmatpush1.msra.mxu0 0.0
      %364 = vmatprep.subr.mxu0 0.0
      %365 = vmatpush1.msra.mxu0 0.0
      %366 = vmatprep.subr.mxu0 0.0
      %367 = vmatpush1.msra.mxu0 0.0
      %368 = vmatprep.subr.mxu0 0.0
      %369 = vmatpush1.msra.mxu0 0.0
      %370 = vmatprep.subr.mxu0 0.0
      %371 = vmatpush1.msra.mxu0 0.0
      %372 = vmatprep.mubr.f32.mxu0 0.0
      %373 = vmatmul.mubr.f32.gmra.mrb[0].mxu0 %v235
      %v374 = vpop.f32.mrb[0].mxu0
      %v375 = vadd.f32 %v231, %v374
      %v376 = vpop.f32.mrb[0].mxu0
      %v377 = vadd.f32 %v231, %v376
      %378 = vdwg.mxu0
      %379 = vmatprep.subr.mxu0 %v215
      %380 = vmatpush1.msra.mxu0 %v214
      %381 = vmatprep.subr.mxu0 0.0
      %382 = vmatpush1.msra.mxu0 0.0
      %383 = vmatprep.subr.mxu0 0.0
      %384 = vmatpush1.msra.mxu0 0.0
      %385 = vmatprep.subr.mxu0 0.0
      %386 = vmatpush1.msra.mxu0 0.0
      %387 = vmatprep.subr.mxu0 0.0
      %388 = vmatpush1.msra.mxu0 0.0
      %389 = vmatprep.subr.mxu0 0.0
      %390 = vmatpush1.msra.mxu0 0.0
      %391 = vmatprep.subr.mxu0 0.0
      %392 = vmatpush1.msra.mxu0 0.0
      %393 = vmatprep.subr.mxu0 0.0
      %394 = vmatpush1.msra.mxu0 0.0
      %395 = vmatprep.subr.mxu0 0.0
      %396 = vmatpush1.msra.mxu0 0.0
      %397 = vmatprep.subr.mxu0 0.0
      %398 = vmatpush1.msra.mxu0 0.0
      %399 = vmatprep.subr.mxu0 0.0
      %400 = vmatpush1.msra.mxu0 0.0
      %401 = vmatprep.subr.mxu0 0.0
      %402 = vmatpush1.msra.mxu0 0.0
      %403 = vmatprep.subr.mxu0 0.0
      %404 = vmatpush1.msra.mxu0 0.0
      %405 = vmatprep.subr.mxu0 0.0
      %406 = vmatpush1.msra.mxu0 0.0
      %407 = vmatprep.subr.mxu0 0.0
      %408 = vmatpush1.msra.mxu0 0.0
      %409 = vmatprep.subr.mxu0 0.0
      %410 = vmatpush1.msra.mxu0 0.0
      %411 = vmatprep.subr.mxu0 0.0
      %412 = vmatpush1.msra.mxu0 0.0
      %413 = vmatprep.subr.mxu0 0.0
      %414 = vmatpush1.msra.mxu0 0.0
      %415 = vmatprep.subr.mxu0 0.0
      %416 = vmatpush1.msra.mxu0 0.0
      %417 = vmatprep.subr.mxu0 0.0
      %418 = vmatpush1.msra.mxu0 0.0
      %419 = vmatprep.subr.mxu0 0.0
      %420 = vmatpush1.msra.mxu0 0.0
      %421 = vmatprep.subr.mxu0 0.0
      %422 = vmatpush1.msra.mxu0 0.0
      %423 = vmatprep.subr.mxu0 0.0
      %424 = vmatpush1.msra.mxu0 0.0
      %425 = vmatprep.subr.mxu0 0.0
      %426 = vmatpush1.msra.mxu0 0.0
      %427 = vmatprep.subr.mxu0 0.0
      %428 = vmatpush1.msra.mxu0 0.0
      %429 = vmatprep.subr.mxu0 0.0
      %430 = vmatpush1.msra.mxu0 0.0
      %431 = vmatprep.subr.mxu0 0.0
      %432 = vmatpush1.msra.mxu0 0.0
      %433 = vmatprep.subr.mxu0 0.0
      %434 = vmatpush1.msra.mxu0 0.0
      %435 = vmatprep.subr.mxu0 0.0
      %436 = vmatpush1.msra.mxu0 0.0
      %437 = vmatprep.subr.mxu0 0.0
      %438 = vmatpush1.msra.mxu0 0.0
      %439 = vmatprep.subr.mxu0 0.0
      %440 = vmatpush1.msra.mxu0 0.0
      %441 = vmatprep.subr.mxu0 0.0
      %442 = vmatpush1.msra.mxu0 0.0
      %443 = vmatprep.mubr.f32.mxu0 0.0
      %444 = vmatmul.mubr.f32.gmra.mrb[0].mxu0 %v235
      %v445 = vpop.f32.mrb[0].mxu0
      %v446 = vadd.f32 %v231, %v445
      %v447 = vpop.f32.mrb[0].mxu0
      %v448 = vadd.f32 %v231, %v447
      %449 = vdwg.mxu0
      %450 = vmatprep.subr.mxu0 %v217
      %451 = vmatpush1.msra.mxu0 %v216
      %452 = vmatprep.subr.mxu0 0.0
      %453 = vmatpush1.msra.mxu0 0.0
      %454 = vmatprep.subr.mxu0 0.0
      %455 = vmatpush1.msra.mxu0 0.0
      %456 = vmatprep.subr.mxu0 0.0
      %457 = vmatpush1.msra.mxu0 0.0
      %458 = vmatprep.subr.mxu0 0.0
      %459 = vmatpush1.msra.mxu0 0.0
      %460 = vmatprep.subr.mxu0 0.0
      %461 = vmatpush1.msra.mxu0 0.0
      %462 = vmatprep.subr.mxu0 0.0
      %463 = vmatpush1.msra.mxu0 0.0
      %464 = vmatprep.subr.mxu0 0.0
      %465 = vmatpush1.msra.mxu0 0.0
      %466 = vmatprep.subr.mxu0 0.0
      %467 = vmatpush1.msra.mxu0 0.0
      %468 = vmatprep.subr.mxu0 0.0
      %469 = vmatpush1.msra.mxu0 0.0
      %470 = vmatprep.subr.mxu0 0.0
      %471 = vmatpush1.msra.mxu0 0.0
      %472 = vmatprep.subr.mxu0 0.0
      %473 = vmatpush1.msra.mxu0 0.0
      %474 = vmatprep.subr.mxu0 0.0
      %475 = vmatpush1.msra.mxu0 0.0
      %476 = vmatprep.subr.mxu0 0.0
      %477 = vmatpush1.msra.mxu0 0.0
      %478 = vmatprep.subr.mxu0 0.0
      %479 = vmatpush1.msra.mxu0 0.0
      %480 = vmatprep.subr.mxu0 0.0
      %481 = vmatpush1.msra.mxu0 0.0
      %482 = vmatprep.subr.mxu0 0.0
      %483 = vmatpush1.msra.mxu0 0.0
      %484 = vmatprep.subr.mxu0 0.0
      %485 = vmatpush1.msra.mxu0 0.0
      %486 = vmatprep.subr.mxu0 0.0
      %487 = vmatpush1.msra.mxu0 0.0
      %488 = vmatprep.subr.mxu0 0.0
      %489 = vmatpush1.msra.mxu0 0.0
      %490 = vmatprep.subr.mxu0 0.0
      %491 = vmatpush1.msra.mxu0 0.0
      %492 = vmatprep.subr.mxu0 0.0
      %493 = vmatpush1.msra.mxu0 0.0
      %494 = vmatprep.subr.mxu0 0.0
      %495 = vmatpush1.msra.mxu0 0.0
      %496 = vmatprep.subr.mxu0 0.0
      %497 = vmatpush1.msra.mxu0 0.0
      %498 = vmatprep.subr.mxu0 0.0
      %499 = vmatpush1.msra.mxu0 0.0
      %500 = vmatprep.subr.mxu0 0.0
      %501 = vmatpush1.msra.mxu0 0.0
      %502 = vmatprep.subr.mxu0 0.0
      %503 = vmatpush1.msra.mxu0 0.0
      %504 = vmatprep.subr.mxu0 0.0
      %505 = vmatpush1.msra.mxu0 0.0
      %506 = vmatprep.subr.mxu0 0.0
      %507 = vmatpush1.msra.mxu0 0.0
      %508 = vmatprep.subr.mxu0 0.0
      %509 = vmatpush1.msra.mxu0 0.0
      %510 = vmatprep.subr.mxu0 0.0
      %511 = vmatpush1.msra.mxu0 0.0
      %512 = vmatprep.subr.mxu0 0.0
      %513 = vmatpush1.msra.mxu0 0.0
      %514 = vmatprep.mubr.f32.mxu0 0.0
      %515 = vmatmul.mubr.f32.gmra.mrb[0].mxu0 %v235
      %v516 = vpop.f32.mrb[0].mxu0
      %v517 = vadd.f32 %v231, %v516
      %v518 = vpop.f32.mrb[0].mxu0
      %v519 = vadd.f32 %v231, %v518
      %520 = vdwg.mxu0
      %521 = vmatprep.subr.mxu0 %v219
      %522 = vmatpush1.msra.mxu0 %v218
      %523 = vmatprep.subr.mxu0 0.0
      %524 = vmatpush1.msra.mxu0 0.0
      %525 = vmatprep.subr.mxu0 0.0
      %526 = vmatpush1.msra.mxu0 0.0
      %527 = vmatprep.subr.mxu0 0.0
      %528 = vmatpush1.msra.mxu0 0.0
      %529 = vmatprep.subr.mxu0 0.0
      %530 = vmatpush1.msra.mxu0 0.0
      %531 = vmatprep.subr.mxu0 0.0
      %532 = vmatpush1.msra.mxu0 0.0
      %533 = vmatprep.subr.mxu0 0.0
      %534 = vmatpush1.msra.mxu0 0.0
      %535 = vmatprep.subr.mxu0 0.0
      %536 = vmatpush1.msra.mxu0 0.0
      %537 = vmatprep.subr.mxu0 0.0
      %538 = vmatpush1.msra.mxu0 0.0
      %539 = vmatprep.subr.mxu0 0.0
      %540 = vmatpush1.msra.mxu0 0.0
      %541 = vmatprep.subr.mxu0 0.0
      %542 = vmatpush1.msra.mxu0 0.0
      %543 = vmatprep.subr.mxu0 0.0
      %544 = vmatpush1.msra.mxu0 0.0
      %545 = vmatprep.subr.mxu0 0.0
      %546 = vmatpush1.msra.mxu0 0.0
      %547 = vmatprep.subr.mxu0 0.0
      %548 = vmatpush1.msra.mxu0 0.0
      %549 = vmatprep.subr.mxu0 0.0
      %550 = vmatpush1.msra.mxu0 0.0
      %551 = vmatprep.subr.mxu0 0.0
      %552 = vmatpush1.msra.mxu0 0.0
      %553 = vmatprep.subr.mxu0 0.0
      %554 = vmatpush1.msra.mxu0 0.0
      %555 = vmatprep.subr.mxu0 0.0
      %556 = vmatpush1.msra.mxu0 0.0
      %557 = vmatprep.subr.mxu0 0.0
      %558 = vmatpush1.msra.mxu0 0.0
      %559 = vmatprep.subr.mxu0 0.0
      %560 = vmatpush1.msra.mxu0 0.0
      %561 = vmatprep.subr.mxu0 0.0
      %562 = vmatpush1.msra.mxu0 0.0
      %563 = vmatprep.subr.mxu0 0.0
      %564 = vmatpush1.msra.mxu0 0.0
      %565 = vmatprep.subr.mxu0 0.0
      %566 = vmatpush1.msra.mxu0 0.0
      %567 = vmatprep.subr.mxu0 0.0
      %568 = vmatpush1.msra.mxu0 0.0
      %569 = vmatprep.subr.mxu0 0.0
      %570 = vmatpush1.msra.mxu0 0.0
      %571 = vmatprep.subr.mxu0 0.0
      %572 = vmatpush1.msra.mxu0 0.0
      %573 = vmatprep.subr.mxu0 0.0
      %574 = vmatpush1.msra.mxu0 0.0
      %575 = vmatprep.subr.mxu0 0.0
      %576 = vmatpush1.msra.mxu0 0.0
      %577 = vmatprep.subr.mxu0 0.0
      %578 = vmatpush1.msra.mxu0 0.0
      %579 = vmatprep.subr.mxu0 0.0
      %580 = vmatpush1.msra.mxu0 0.0
      %581 = vmatprep.subr.mxu0 0.0
      %582 = vmatpush1.msra.mxu0 0.0
      %583 = vmatprep.subr.mxu0 0.0
      %584 = vmatpush1.msra.mxu0 0.0
      %585 = vmatprep.mubr.f32.mxu0 0.0
      %586 = vmatmul.mubr.f32.gmra.mrb[0].mxu0 %v235
      %v587 = vpop.f32.mrb[0].mxu0
      %v588 = vadd.f32 %v231, %v587
      %v589 = vpop.f32.mrb[0].mxu0
      %v590 = vadd.f32 %v231, %v589
      %591 = vdwg.mxu0
      %592 = vmatprep.subr.mxu0 %v221
      %593 = vmatpush1.msra.mxu0 %v220
      %594 = vmatprep.subr.mxu0 0.0
      %595 = vmatpush1.msra.mxu0 0.0
      %596 = vmatprep.subr.mxu0 0.0
      %597 = vmatpush1.msra.mxu0 0.0
      %598 = vmatprep.subr.mxu0 0.0
      %599 = vmatpush1.msra.mxu0 0.0
      %600 = vmatprep.subr.mxu0 0.0
      %601 = vmatpush1.msra.mxu0 0.0
      %602 = vmatprep.subr.mxu0 0.0
      %603 = vmatpush1.msra.mxu0 0.0
      %604 = vmatprep.subr.mxu0 0.0
      %605 = vmatpush1.msra.mxu0 0.0
      %606 = vmatprep.subr.mxu0 0.0
      %607 = vmatpush1.msra.mxu0 0.0
      %608 = vmatprep.subr.mxu0 0.0
      %609 = vmatpush1.msra.mxu0 0.0
      %610 = vmatprep.subr.mxu0 0.0
      %611 = vmatpush1.msra.mxu0 0.0
      %612 = vmatprep.subr.mxu0 0.0
      %613 = vmatpush1.msra.mxu0 0.0
      %614 = vmatprep.subr.mxu0 0.0
      %615 = vmatpush1.msra.mxu0 0.0
      %616 = vmatprep.subr.mxu0 0.0
      %617 = vmatpush1.msra.mxu0 0.0
      %618 = vmatprep.subr.mxu0 0.0
      %619 = vmatpush1.msra.mxu0 0.0
      %620 = vmatprep.subr.mxu0 0.0
      %621 = vmatpush1.msra.mxu0 0.0
      %622 = vmatprep.subr.mxu0 0.0
      %623 = vmatpush1.msra.mxu0 0.0
      %624 = vmatprep.subr.mxu0 0.0
      %625 = vmatpush1.msra.mxu0 0.0
      %626 = vmatprep.subr.mxu0 0.0
      %627 = vmatpush1.msra.mxu0 0.0
      %628 = vmatprep.subr.mxu0 0.0
      %629 = vmatpush1.msra.mxu0 0.0
      %630 = vmatprep.subr.mxu0 0.0
      %631 = vmatpush1.msra.mxu0 0.0
      %632 = vmatprep.subr.mxu0 0.0
      %633 = vmatpush1.msra.mxu0 0.0
      %634 = vmatprep.subr.mxu0 0.0
      %635 = vmatpush1.msra.mxu0 0.0
      %636 = vmatprep.subr.mxu0 0.0
      %637 = vmatpush1.msra.mxu0 0.0
      %638 = vmatprep.subr.mxu0 0.0
      %639 = vmatpush1.msra.mxu0 0.0
      %640 = vmatprep.subr.mxu0 0.0
      %641 = vmatpush1.msra.mxu0 0.0
      %642 = vmatprep.subr.mxu0 0.0
      %643 = vmatpush1.msra.mxu0 0.0
      %644 = vmatprep.subr.mxu0 0.0
      %645 = vmatpush1.msra.mxu0 0.0
      %646 = vmatprep.subr.mxu0 0.0
      %647 = vmatpush1.msra.mxu0 0.0
      %648 = vmatprep.subr.mxu0 0.0
      %649 = vmatpush1.msra.mxu0 0.0
      %650 = vmatprep.subr.mxu0 0.0
      %651 = vmatpush1.msra.mxu0 0.0
      %652 = vmatprep.subr.mxu0 0.0
      %653 = vmatpush1.msra.mxu0 0.0
      %654 = vmatprep.subr.mxu0 0.0
      %655 = vmatpush1.msra.mxu0 0.0
      %656 = vmatprep.mubr.f32.mxu0 0.0
      %657 = vmatmul.mubr.f32.gmra.mrb[0].mxu0 %v235
      %v658 = vpop.f32.mrb[0].mxu0
      %v659 = vadd.f32 %v231, %v658
      %v660 = vpop.f32.mrb[0].mxu0
      %v661 = vadd.f32 %v231, %v660
      %662 = vdwg.mxu0
      %663 = vmatprep.subr.mxu0 %v223
      %664 = vmatpush1.msra.mxu0 %v222
      %665 = vmatprep.subr.mxu0 0.0
      %666 = vmatpush1.msra.mxu0 0.0
      %667 = vmatprep.subr.mxu0 0.0
      %668 = vmatpush1.msra.mxu0 0.0
      %669 = vmatprep.subr.mxu0 0.0
      %670 = vmatpush1.msra.mxu0 0.0
      %671 = vmatprep.subr.mxu0 0.0
      %672 = vmatpush1.msra.mxu0 0.0
      %673 = vmatprep.subr.mxu0 0.0
      %674 = vmatpush1.msra.mxu0 0.0
      %675 = vmatprep.subr.mxu0 0.0
      %676 = vmatpush1.msra.mxu0 0.0
      %677 = vmatprep.subr.mxu0 0.0
      %678 = vmatpush1.msra.mxu0 0.0
      %679 = vmatprep.subr.mxu0 0.0
      %680 = vmatpush1.msra.mxu0 0.0
      %681 = vmatprep.subr.mxu0 0.0
      %682 = vmatpush1.msra.mxu0 0.0
      %683 = vmatprep.subr.mxu0 0.0
      %684 = vmatpush1.msra.mxu0 0.0
      %685 = vmatprep.subr.mxu0 0.0
      %686 = vmatpush1.msra.mxu0 0.0
      %687 = vmatprep.subr.mxu0 0.0
      %688 = vmatpush1.msra.mxu0 0.0
      %689 = vmatprep.subr.mxu0 0.0
      %690 = vmatpush1.msra.mxu0 0.0
      %691 = vmatprep.subr.mxu0 0.0
      %692 = vmatpush1.msra.mxu0 0.0
      %693 = vmatprep.subr.mxu0 0.0
      %694 = vmatpush1.msra.mxu0 0.0
      %695 = vmatprep.subr.mxu0 0.0
      %696 = vmatpush1.msra.mxu0 0.0
      %697 = vmatprep.subr.mxu0 0.0
      %698 = vmatpush1.msra.mxu0 0.0
      %699 = vmatprep.subr.mxu0 0.0
      %700 = vmatpush1.msra.mxu0 0.0
      %701 = vmatprep.subr.mxu0 0.0
      %702 = vmatpush1.msra.mxu0 0.0
      %703 = vmatprep.subr.mxu0 0.0
      %704 = vmatpush1.msra.mxu0 0.0
      %705 = vmatprep.subr.mxu0 0.0
      %706 = vmatpush1.msra.mxu0 0.0
      %707 = vmatprep.subr.mxu0 0.0
      %708 = vmatpush1.msra.mxu0 0.0
      %709 = vmatprep.subr.mxu0 0.0
      %710 = vmatpush1.msra.mxu0 0.0
      %711 = vmatprep.subr.mxu0 0.0
      %712 = vmatpush1.msra.mxu0 0.0
      %713 = vmatprep.subr.mxu0 0.0
      %714 = vmatpush1.msra.mxu0 0.0
      %715 = vmatprep.subr.mxu0 0.0
      %716 = vmatpush1.msra.mxu0 0.0
      %717 = vmatprep.subr.mxu0 0.0
      %718 = vmatpush1.msra.mxu0 0.0
      %719 = vmatprep.subr.mxu0 0.0
      %720 = vmatpush1.msra.mxu0 0.0
      %721 = vmatprep.subr.mxu0 0.0
      %722 = vmatpush1.msra.mxu0 0.0
      %723 = vmatprep.subr.mxu0 0.0
      %724 = vmatpush1.msra.mxu0 0.0
      %725 = vmatprep.subr.mxu0 0.0
      %726 = vmatpush1.msra.mxu0 0.0
      %727 = vmatprep.mubr.f32.mxu0 0.0
      %728 = vmatmul.mubr.f32.gmra.mrb[0].mxu0 %v235
      %v729 = vpop.f32.mrb[0].mxu0
      %v730 = vadd.f32 %v231, %v729
      %v731 = vpop.f32.mrb[0].mxu0
      %v732 = vadd.f32 %v231, %v731
      %733 = vdwg.mxu0
      %734 = vmatprep.subr.mxu0 %v225
      %735 = vmatpush1.msra.mxu0 %v224
      %736 = vmatprep.subr.mxu0 0.0
      %737 = vmatpush1.msra.mxu0 0.0
      %738 = vmatprep.subr.mxu0 0.0
      %739 = vmatpush1.msra.mxu0 0.0
      %740 = vmatprep.subr.mxu0 0.0
      %741 = vmatpush1.msra.mxu0 0.0
      %742 = vmatprep.subr.mxu0 0.0
      %743 = vmatpush1.msra.mxu0 0.0
      %744 = vmatprep.subr.mxu0 0.0
      %745 = vmatpush1.msra.mxu0 0.0
      %746 = vmatprep.subr.mxu0 0.0
      %747 = vmatpush1.msra.mxu0 0.0
      %748 = vmatprep.subr.mxu0 0.0
      %749 = vmatpush1.msra.mxu0 0.0
      %750 = vmatprep.subr.mxu0 0.0
      %751 = vmatpush1.msra.mxu0 0.0
      %752 = vmatprep.subr.mxu0 0.0
      %753 = vmatpush1.msra.mxu0 0.0
      %754 = vmatprep.subr.mxu0 0.0
      %755 = vmatpush1.msra.mxu0 0.0
      %756 = vmatprep.subr.mxu0 0.0
      %757 = vmatpush1.msra.mxu0 0.0
      %758 = vmatprep.subr.mxu0 0.0
      %759 = vmatpush1.msra.mxu0 0.0
      %760 = vmatprep.subr.mxu0 0.0
      %761 = vmatpush1.msra.mxu0 0.0
      %762 = vmatprep.subr.mxu0 0.0
      %763 = vmatpush1.msra.mxu0 0.0
      %764 = vmatprep.subr.mxu0 0.0
      %765 = vmatpush1.msra.mxu0 0.0
      %766 = vmatprep.subr.mxu0 0.0
      %767 = vmatpush1.msra.mxu0 0.0
      %768 = vmatprep.subr.mxu0 0.0
      %769 = vmatpush1.msra.mxu0 0.0
      %770 = vmatprep.subr.mxu0 0.0
      %771 = vmatpush1.msra.mxu0 0.0
      %772 = vmatprep.subr.mxu0 0.0
      %773 = vmatpush1.msra.mxu0 0.0
      %774 = vmatprep.subr.mxu0 0.0
      %775 = vmatpush1.msra.mxu0 0.0
      %776 = vmatprep.subr.mxu0 0.0
      %777 = vmatpush1.msra.mxu0 0.0
      %778 = vmatprep.subr.mxu0 0.0
      %779 = vmatpush1.msra.mxu0 0.0
      %780 = vmatprep.subr.mxu0 0.0
      %781 = vmatpush1.msra.mxu0 0.0
      %782 = vmatprep.subr.mxu0 0.0
      %783 = vmatpush1.msra.mxu0 0.0
      %784 = vmatprep.subr.mxu0 0.0
      %785 = vmatpush1.msra.mxu0 0.0
      %786 = vmatprep.subr.mxu0 0.0
      %787 = vmatpush1.msra.mxu0 0.0
      %788 = vmatprep.subr.mxu0 0.0
      %789 = vmatpush1.msra.mxu0 0.0
      %790 = vmatprep.subr.mxu0 0.0
      %791 = vmatpush1.msra.mxu0 0.0
      %792 = vmatprep.subr.mxu0 0.0
      %793 = vmatpush1.msra.mxu0 0.0
      %794 = vmatprep.subr.mxu0 0.0
      %795 = vmatpush1.msra.mxu0 0.0
      %796 = vmatprep.subr.mxu0 0.0
      %797 = vmatpush1.msra.mxu0 0.0
      %798 = vmatprep.mubr.f32.mxu0 0.0
      %799 = vmatmul.mubr.f32.gmra.mrb[0].mxu0 %v235
      %v800 = vpop.f32.mrb[0].mxu0
      %v801 = vadd.f32 %v231, %v800
      %v802 = vpop.f32.mrb[0].mxu0
      %v803 = vadd.f32 %v231, %v802
      %804 = vdwg.mxu0
      %v805 = vmax.f32 %v304, 0.0
      %v806 = vmax.f32 %v306, 0.0
      %v807 = vmax.f32 %v375, 0.0
      %v808 = vmax.f32 %v377, 0.0
      %v809 = vmax.f32 %v446, 0.0
      %v810 = vmax.f32 %v448, 0.0
      %v811 = vmax.f32 %v517, 0.0
      %v812 = vmax.f32 %v519, 0.0
      %v813 = vmax.f32 %v588, 0.0
      %v814 = vmax.f32 %v590, 0.0
      %v815 = vmax.f32 %v659, 0.0
      %v816 = vmax.f32 %v661, 0.0
      %v817 = vmax.f32 %v730, 0.0
      %v818 = vmax.f32 %v732, 0.0
      %v819 = vmax.f32 %v801, 0.0
      %v820 = vmax.f32 %v803, 0.0
      %821 = vst [vmem:[%s208] sm:$0xff] %v805
      %822 = vst [vmem:[%s208 + $0x8] sm:$0xff] %v806
      %823 = vst [vmem:[%s208 + $0x10] sm:$0xff] %v807
      %824 = vst [vmem:[%s208 + $0x18] sm:$0xff] %v808
      %825 = vst [vmem:[%s208 + $0x20] sm:$0xff] %v809
      %826 = vst [vmem:[%s208 + $0x28] sm:$0xff] %v810
      %827 = vst [vmem:[%s208 + $0x30] sm:$0xff] %v811
      %828 = vst [vmem:[%s208 + $0x38] sm:$0xff] %v812
      %829 = vst [vmem:[%s208 + $0x40] sm:$0xff] %v813
      %830 = vst [vmem:[%s208 + $0x48] sm:$0xff] %v814
      %831 = vst [vmem:[%s208 + $0x50] sm:$0xff] %v815
      %832 = vst [vmem:[%s208 + $0x58] sm:$0xff] %v816
      %833 = vst [vmem:[%s208 + $0x60] sm:$0xff] %v817
      %834 = vst [vmem:[%s208 + $0x68] sm:$0xff] %v818
      %835 = vst [vmem:[%s208 + $0x70] sm:$0xff] %v819
      %836 = vst [vmem:[%s208 + $0x78] sm:$0xff] %v820
      %s837 = smul.u32 16, %s19
      %p838 = scmp.lt.s32.totalorder %s18, 1
      %s839 = scalar_select %p838, %s18, 1
      %p840 = scmp.lt.s32.totalorder %s837, 31
      %s841 = scalar_select %p840, %s837, 31
      %s842 = smul.addr %s839, 32
      %s843 = sadd.s32 %s841, %s842
      %s844 = smul.addr %s843, 8
      %s845 = scalar_lea.vmem %s3, %s844
      // Predicated region
      $region33: #{panet_forward.17} parent=31 // pred_check
        %p846 = pneg %p116
      $region34: #{panet_forward.17} parent=31 // pred_check_branch
        %848 = sbr.rel (%p846) target = $region36
      $region35: #{panet_forward.17} parent=31 // pred_region
        %s849 = smul.u32 16, %s19
      $region36: #{panet_forward.17} parent=31 // pred_fallthru
        _
    $region32: #{panet_forward.17} parent=5 // pred_fallthru
      _
    %p850 = scmp.le.s32.totalorder 2, %s9
    // Predicated region
    $region37: #{panet_forward.17} parent=5 // pred_check
      %p851 = pneg %p850
    $region38: #{panet_forward.17} parent=5 // pred_check_branch
      %853 = sbr.rel (%p851) target = $region40
    $region39: #{panet_forward.17} parent=5 // pred_region
      %s854 = ssub.s32 %s9, 2
      // Predicated region
      $region41: #{panet_forward.17} parent=39 // pred_check
        %p855 = pneg %p122
      $region42: #{panet_forward.17} parent=39 // pred_check_branch
        %857 = sbr.rel (%p855) target = $region44
      $region43: #{panet_forward.17} parent=39 // pred_region
        %s858 = smul.u32 16, %s21
        %p859 = scmp.lt.s32.totalorder %s20, 1
        %s860 = scalar_select %p859, %s20, 1
        %p861 = scmp.lt.s32.totalorder %s858, 31
        %s862 = scalar_select %p861, %s858, 31
        %s863 = smul.addr %s860, 32
        %s864 = sadd.s32 %s862, %s863
        %s865 = smul.addr %s864, 8
        %s866 = scalar_lea.vmem %s3, %s865
      $region44: #{panet_forward.17} parent=39 // pred_fallthru
        _
    $region40: #{panet_forward.17} parent=5 // pred_fallthru
      _
  $region6: #{panet_forward.17} parent=0 // loop_footer
    %s13 = sadd.s32 1, %s9
  $region7: #{panet_forward.17} parent=0 // loop_footer_branch
    %8 = sbr.rel target = $region3
  $region8: #{panet_forward.17} parent=0 // loop_exit
    _

// kernel: panet_forward.12
$region0: #{panet_forward.12}
  #allocation0 [shape = 'u32[]', space=smem, size = 0x4, offset = 0x4, fixed_abs, tag = 'smem constant byte address 0x4 - core index']
  #allocation1 [shape = 'u32[144,128]{1,0:T(1,128)}', space=vmem, size = 0x12000, scoped, tag = 'internal scratch']
  %s0 = inlined_call_operand.vmem [shape: f32[2,4,1024], index: 0, kind: input, shape index: {}]
  %s1 = inlined_call_operand.vmem [shape: f32[8,4], index: 1, kind: input, shape index: {}]
  %s2 = inlined_call_operand.vmem [shape: f32[8,1], index: 2, kind: input, shape index: {}]
  %s3 = inlined_call_operand.vmem [shape: f32[2,8,1024], index: 3, kind: output, shape index: {}]
  %s4 = sld [smem:[#allocation0]]
  $region45: #{panet_forward.12} parent=0
    _
  %s6 = ssub.s32 1, %s4
  %s7 = scalar_select 0, %s6, %s4
  loop: start=0, step=1, limit=4
  $region2: #{panet_forward.12} parent=0 // loop_pre_header
    _
  $region3: #{panet_forward.12} parent=0 // loop_header
    %s9 = sphi 0, %s13
    %p10 = scmp.ge.s32.totalorder %s9, 4
    %s16 = sphi 0, %s28
    %s17 = sphi 0, %s24
    %s18 = sphi 0, %s16
    %s19 = sphi 0, %s17
    %s20 = sphi 0, %s18
    %s21 = sphi 0, %s19
    %s33 = sphi 0, %s35
    %s36 = sphi 0, %s33
    %s37 = sphi 0, %s36
    %s53 = sphi 0, %s37
    %s57 = sphi 0, %s57
    %s59 = sphi 0, %s57
    %s60 = sphi 0, %s59
    %s74 = sphi 0, %s60
    %s78 = sphi 0, %s78
    %s80 = sphi 0, %s78
    %s81 = sphi 0, %s80
    %s95 = sphi 0, %s81
    %s103 = sphi 0, %s105
    %s106 = sphi 0, %s103
    %s107 = sphi 0, %s106
    %s123 = sphi 0, %s107
  $region4: #{panet_forward.12} parent=0 // loop_header_branch
    %12 = sbr.rel (%p10) target = $region8
  $region5: #{panet_forward.12} parent=0 // loop_body
    %s14 = ssub.s32 %s9, 1
    %s15 = ssub.s32 %s9, 2
    %s22 = sadd.s32 1, %s17
    %p23 = scmp.ge.s32.totalorder %s22, 1
    %s24 = scalar_select %p23, 0, %s22
    %s25 = sadd.s32 1, %s16
    %s26 = scalar_select %p23, %s25, %s16
    %p27 = scmp.ge.s32.totalorder %s26, 2
    %s28 = scalar_select %p27, 0, %s26
    %s29 = ssub.s32 %s16, %s28
    %s30 = ssub.s32 %s17, %s24
    %s31 = sor.u32 %s29, %s30
    %p32 = scmp.eq.s32.totalorder %s31, 0
    %s34 = sadd.s32 %s33, 1
    %s35 = scalar_select %p32, %s33, %s34
    %p38 = pneg %p32
    %p39 = scmp.eq.s32.totalorder %s9, 1
    %p40 = por %p38, %p39
    %p41 = scmp.ne.s32.totalorder %s33, %s36
    %p42 = scmp.eq.s32.totalorder %s9, 0
    %p43 = por %p41, %p42
    %p44 = scmp.ne.s32.totalorder %s33, %s36
    %p45 = scmp.eq.s32.totalorder %s14, 1
    %p46 = por %p44, %p45
    %p47 = scmp.ne.s32.totalorder %s36, %s37
    %p48 = scmp.eq.s32.totalorder %s14, 0
    %p49 = por %p47, %p48
    %p50 = scmp.ne.s32.totalorder %s36, %s37
    %p51 = scmp.eq.s32.totalorder %s15, 1
    %p52 = por %p50, %p51
    %p54 = scmp.ne.s32.totalorder %s37, %s53
    %p55 = scmp.eq.s32.totalorder %s15, 0
    %p56 = por %p54, %p55
    %s58 = sadd.s32 %s57, 1
    %p61 = scmp.eq.s32.totalorder %s9, 1
    %p62 = scmp.ne.s32.totalorder %s57, %s59
    %p63 = scmp.eq.s32.totalorder %s9, 0
    %p64 = por %p62, %p63
    %p65 = scmp.ne.s32.totalorder %s57, %s59
    %p66 = scmp.eq.s32.totalorder %s14, 1
    %p67 = por %p65, %p66
    %p68 = scmp.ne.s32.totalorder %s59, %s60
    %p69 = scmp.eq.s32.totalorder %s14, 0
    %p70 = por %p68, %p69
    %p71 = scmp.ne.s32.totalorder %s59, %s60
    %p72 = scmp.eq.s32.totalorder %s15, 1
    %p73 = por %p71, %p72
    %p75 = scmp.ne.s32.totalorder %s60, %s74
    %p76 = scmp.eq.s32.totalorder %s15, 0
    %p77 = por %p75, %p76
    %s79 = sadd.s32 %s78, 1
    %p82 = scmp.eq.s32.totalorder %s9, 1
    %p83 = scmp.ne.s32.totalorder %s78, %s80
    %p84 = scmp.eq.s32.totalorder %s9, 0
    %p85 = por %p83, %p84
    %p86 = scmp.ne.s32.totalorder %s78, %s80
    %p87 = scmp.eq.s32.totalorder %s14, 1
    %p88 = por %p86, %p87
    %p89 = scmp.ne.s32.totalorder %s80, %s81
    %p90 = scmp.eq.s32.totalorder %s14, 0
    %p91 = por %p89, %p90
    %p92 = scmp.ne.s32.totalorder %s80, %s81
    %p93 = scmp.eq.s32.totalorder %s15, 1
    %p94 = por %p92, %p93
    %p96 = scmp.ne.s32.totalorder %s81, %s95
    %p97 = scmp.eq.s32.totalorder %s15, 0
    %p98 = por %p96, %p97
    %s99 = ssub.s32 %s16, %s28
    %s100 = ssub.s32 %s17, %s24
    %s101 = sor.u32 %s99, %s100
    %p102 = scmp.eq.s32.totalorder %s101, 0
    %s104 = sadd.s32 %s103, 1
    %s105 = scalar_select %p102, %s103, %s104
    %p108 = pneg %p102
    %p109 = scmp.eq.s32.totalorder %s9, 1
    %p110 = por %p108, %p109
    %p111 = scmp.ne.s32.totalorder %s103, %s106
    %p112 = scmp.eq.s32.totalorder %s9, 0
    %p113 = por %p111, %p112
    %p114 = scmp.ne.s32.totalorder %s103, %s106
    %p115 = scmp.eq.s32.totalorder %s14, 1
    %p116 = por %p114, %p115
    %p117 = scmp.ne.s32.totalorder %s106, %s107
    %p118 = scmp.eq.s32.totalorder %s14, 0
    %p119 = por %p117, %p118
    %p120 = scmp.ne.s32.totalorder %s106, %s107
    %p121 = scmp.eq.s32.totalorder %s15, 1
    %p122 = por %p120, %p121
    %p124 = scmp.ne.s32.totalorder %s107, %s123
    %p125 = scmp.eq.s32.totalorder %s15, 0
    %p126 = por %p124, %p125
    %p127 = scmp.le.s32.totalorder 1, %s9
    %p128 = scmp.lt.s32.totalorder %s9, 3
    %p129 = pnand %p127, %p128
    %p130 = pneg %p129
    // Predicated region
    $region9: #{panet_forward.12} parent=5 // pred_check
      _
    $region10: #{panet_forward.12} parent=5 // pred_check_branch
      %132 = sbr.rel (%p129) target = $region12
    $region11: #{panet_forward.12} parent=5 // pred_region
      %s133 = ssub.s32 %s9, 1
      // Predicated region
      $region13: #{panet_forward.12} parent=11 // pred_check
        %p134 = pneg %p70
      $region14: #{panet_forward.12} parent=11 // pred_check_branch
        %136 = sbr.rel (%p134) target = $region16
      $region15: #{panet_forward.12} parent=11 // pred_region
        _
      $region16: #{panet_forward.12} parent=11 // pred_fallthru
        _
      // Predicated region
      $region17: #{panet_forward.12} parent=11 // pred_check
        %p137 = pneg %p91
      $region18: #{panet_forward.12} parent=11 // pred_check_branch
        %139 = sbr.rel (%p137) target = $region20
      $region19: #{panet_forward.12} parent=11 // pred_region
        _
      $region20: #{panet_forward.12} parent=11 // pred_fallthru
        _
    $region12: #{panet_forward.12} parent=5 // pred_fallthru
      _
    %p140 = scmp.lt.s32.totalorder %s9, 2
    // Predicated region
    $region21: #{panet_forward.12} parent=5 // pred_check
      %p141 = pneg %p140
    $region22: #{panet_forward.12} parent=5 // pred_check_branch
      %143 = sbr.rel (%p141) target = $region24
    $region23: #{panet_forward.12} parent=5 // pred_region
      // Predicated region
      $region25: #{panet_forward.12} parent=23 // pred_check
        %p144 = pneg %p43
      $region26: #{panet_forward.12} parent=23 // pred_check_branch
        %146 = sbr.rel (%p144) target = $region28
      $region27: #{panet_forward.12} parent=23 // pred_region
        %s147 = smul.u32 8, %s17
        %p148 = scmp.lt.s32.totalorder %s16, 1
        %s149 = scalar_select %p148, %s16, 1
        %p150 = scmp.lt.s32.totalorder %s147, 7
        %s151 = scalar_select %p150, %s147, 7
        %s152 = smul.addr %s149, 8
        %s153 = sadd.s32 %s151, %s152
        %s154 = smul.addr %s153, 4
        %s155 = scalar_lea.vmem %s0, %s154
        %s156 = smul.u32 8, %s17
      $region28: #{panet_forward.12} parent=23 // pred_fallthru
        _
    $region24: #{panet_forward.12} parent=5 // pred_fallthru
      _
    %p157 = scmp.le.s32.totalorder 1, %s9
    %p158 = scmp.lt.s32.totalorder %s9, 3
    %p159 = pnand %p157, %p158
    %p160 = pneg %p159
    // Predicated region
    $region29: #{panet_forward.12} parent=5 // pred_check
      _
    $region30: #{panet_forward.12} parent=5 // pred_check_branch
      %162 = sbr.rel (%p159) target = $region32
    $region31: #{panet_forward.12} parent=5 // pred_region
      %s163 = ssub.s32 %s9, 1
      %s164 = smul.u32 8, %s19
      %p165 = scmp.lt.s32.totalorder %s18, 1
      %s166 = scalar_select %p165, %s18, 1
      %p167 = scmp.lt.s32.totalorder %s164, 7
      %s168 = scalar_select %p167, %s164, 7
      %s169 = smul.addr %s166, 8
      %s170 = sadd.s32 %s168, %s169
      %s171 = smul.addr %s170, 4
      %s172 = scalar_lea.vmem %s0, %s171
      %p173 = pneg %p49
      %p174 = pneg %p46
      %p175 = pneg %p70
      %p176 = pneg %p67
      %p177 = pneg %p91
      %p178 = pneg %p88
      %p179 = pneg %p119
      %p180 = pneg %p116
      %s181 = smul.u32 8, %s19
      %p182 = scmp.lt.s32.totalorder %s18, 1
      %s183 = scalar_select %p182, %s18, 1
      %p184 = scmp.lt.s32.totalorder %s181, 7
      %s185 = scalar_select %p184, %s181, 7
      %s186 = smul.addr %s183, 8
      %s187 = sadd.s32 %s185, %s186
      %s188 = smul.addr %s187, 8
      %s189 = scalar_lea.vmem %s3, %s188
      %s190 = smul.u32 8, %s19
      %p191 = scmp.lt.s32.totalorder %s18, 1
      %s192 = scalar_select %p191, %s18, 1
      %p193 = scmp.lt.s32.totalorder %s190, 7
      %s194 = scalar_select %p193, %s190, 7
      %s195 = smul.addr %s192, 8
      %s196 = sadd.s32 %s194, %s195
      %s197 = smul.addr %s196, 4
      %s198 = scalar_lea.vmem %s0, %s197
      %s199 = smul.u32 8, %s19
      %s200 = smul.u32 8, %s19
      %p201 = scmp.lt.s32.totalorder %s18, 1
      %s202 = scalar_select %p201, %s18, 1
      %p203 = scmp.lt.s32.totalorder %s200, 7
      %s204 = scalar_select %p203, %s200, 7
      %s205 = smul.addr %s202, 8
      %s206 = sadd.s32 %s204, %s205
      %s207 = smul.addr %s206, 8
      %s208 = scalar_lea.vmem %s3, %s207
      %s209 = smul.u32 8, %s19
      %v210 = vld [vmem:[%s198] sm:$0xff]
      %v211 = vld [vmem:[%s198 + $0x8] sm:$0xff]
      %v212 = vld [vmem:[%s198 + $0x10] sm:$0xff]
      %v213 = vld [vmem:[%s198 + $0x18] sm:$0xff]
      %v214 = vld [vmem:[%s1] sm:$0xff]
      %v215 = vld [vmem:[%s2] sm:$0xff]
      %217 = vset.pattern.permute.xlu0 0
      %218 = vperm.xlu0 %217, %v215
      %v219 = vpop.permute.xlu0 %218
      %v225 = vcombine.high %v210, %v210
      %v226 = vcombine.high %v211, %v211
      %v227 = vcombine.high %v212, %v212
      %v228 = vcombine.high %v213, %v213
      %vm229 = vcmask 31744
      %v231 = vsel %vm229, %v214, 0
      %vm233 = vcmask 1043456
      %v234 = vsel %vm233, %v210, 0
      %v236 = vsel %vm233, %v225, 0
      %v238 = vsel %vm233, %v211, 0
      %v240 = vsel %vm233, %v226, 0
      %v242 = vsel %vm233, %v212, 0
      %v244 = vsel %vm233, %v227, 0
      %v246 = vsel %vm233, %v213, 0
      %v248 = vsel %vm233, %v228, 0
      %250 = vmatprep.subr.mxu0 %v236
      %251 = vmatpush1.msra.mxu0 %v234
      %252 = vmatprep.subr.mxu0 0.0
      %253 = vmatpush1.msra.mxu0 0.0
      %254 = vmatprep.subr.mxu0 0.0
      %255 = vmatpush1.msra.mxu0 0.0
      %256 = vmatprep.subr.mxu0 0.0
      %257 = vmatpush1.msra.mxu0 0.0
      %258 = vmatprep.subr.mxu0 0.0
      %259 = vmatpush1.msra.mxu0 0.0
      %260 = vmatprep.subr.mxu0 0.0
      %261 = vmatpush1.msra.mxu0 0.0
      %262 = vmatprep.subr.mxu0 0.0
      %263 = vmatpush1.msra.mxu0 0.0
      %264 = vmatprep.subr.mxu0 0.0
      %265 = vmatpush1.msra.mxu0 0.0
      %266 = vmatprep.subr.mxu0 0.0
      %267 = vmatpush1.msra.mxu0 0.0
      %268 = vmatprep.subr.mxu0 0.0
      %269 = vmatpush1.msra.mxu0 0.0
      %270 = vmatprep.subr.mxu0 0.0
      %271 = vmatpush1.msra.mxu0 0.0
      %272 = vmatprep.subr.mxu0 0.0
      %273 = vmatpush1.msra.mxu0 0.0
      %274 = vmatprep.subr.mxu0 0.0
      %275 = vmatpush1.msra.mxu0 0.0
      %276 = vmatprep.subr.mxu0 0.0
      %277 = vmatpush1.msra.mxu0 0.0
      %278 = vmatprep.subr.mxu0 0.0
      %279 = vmatpush1.msra.mxu0 0.0
      %280 = vmatprep.subr.mxu0 0.0
      %281 = vmatpush1.msra.mxu0 0.0
      %282 = vmatprep.subr.mxu0 0.0
      %283 = vmatpush1.msra.mxu0 0.0
      %284 = vmatprep.subr.mxu0 0.0
      %285 = vmatpush1.msra.mxu0 0.0
      %286 = vmatprep.subr.mxu0 0.0
      %287 = vmatpush1.msra.mxu0 0.0
      %288 = vmatprep.subr.mxu0 0.0
      %289 = vmatpush1.msra.mxu0 0.0
      %290 = vmatprep.subr.mxu0 0.0
      %291 = vmatpush1.msra.mxu0 0.0
      %292 = vmatprep.subr.mxu0 0.0
      %293 = vmatpush1.msra.mxu0 0.0
      %294 = vmatprep.subr.mxu0 0.0
      %295 = vmatpush1.msra.mxu0 0.0
      %296 = vmatprep.subr.mxu0 0.0
      %297 = vmatpush1.msra.mxu0 0.0
      %298 = vmatprep.subr.mxu0 0.0
      %299 = vmatpush1.msra.mxu0 0.0
      %300 = vmatprep.subr.mxu0 0.0
      %301 = vmatpush1.msra.mxu0 0.0
      %302 = vmatprep.subr.mxu0 0.0
      %303 = vmatpush1.msra.mxu0 0.0
      %304 = vmatprep.subr.mxu0 0.0
      %305 = vmatpush1.msra.mxu0 0.0
      %306 = vmatprep.subr.mxu0 0.0
      %307 = vmatpush1.msra.mxu0 0.0
      %308 = vmatprep.subr.mxu0 0.0
      %309 = vmatpush1.msra.mxu0 0.0
      %310 = vmatprep.subr.mxu0 0.0
      %311 = vmatpush1.msra.mxu0 0.0
      %312 = vmatprep.subr.mxu0 0.0
      %313 = vmatpush1.msra.mxu0 0.0
      %314 = vmatprep.mubr.f32.mxu0 0.0
      %315 = vmatmul.mubr.f32.gmra.mrb[0].mxu0 %v231
      %v316 = vpop.f32.mrb[0].mxu0
      %v317 = vadd.f32 %v219, %v316
      %v318 = vpop.f32.mrb[0].mxu0
      %v319 = vadd.f32 %v219, %v318
      %320 = vdwg.mxu0
      %321 = vmatprep.subr.mxu0 %v240
      %322 = vmatpush1.msra.mxu0 %v238
      %323 = vmatprep.subr.mxu0 0.0
      %324 = vmatpush1.msra.mxu0 0.0
      %325 = vmatprep.subr.mxu0 0.0
      %326 = vmatpush1.msra.mxu0 0.0
      %327 = vmatprep.subr.mxu0 0.0
      %328 = vmatpush1.msra.mxu0 0.0
      %329 = vmatprep.subr.mxu0 0.0
      %330 = vmatpush1.msra.mxu0 0.0
      %331 = vmatprep.subr.mxu0 0.0
      %332 = vmatpush1.msra.mxu0 0.0
      %333 = vmatprep.subr.mxu0 0.0
      %334 = vmatpush1.msra.mxu0 0.0
      %335 = vmatprep.subr.mxu0 0.0
      %336 = vmatpush1.msra.mxu0 0.0
      %337 = vmatprep.subr.mxu0 0.0
      %338 = vmatpush1.msra.mxu0 0.0
      %339 = vmatprep.subr.mxu0 0.0
      %340 = vmatpush1.msra.mxu0 0.0
      %341 = vmatprep.subr.mxu0 0.0
      %342 = vmatpush1.msra.mxu0 0.0
      %343 = vmatprep.subr.mxu0 0.0
      %344 = vmatpush1.msra.mxu0 0.0
      %345 = vmatprep.subr.mxu0 0.0
      %346 = vmatpush1.msra.mxu0 0.0
      %347 = vmatprep.subr.mxu0 0.0
      %348 = vmatpush1.msra.mxu0 0.0
      %349 = vmatprep.subr.mxu0 0.0
      %350 = vmatpush1.msra.mxu0 0.0
      %351 = vmatprep.subr.mxu0 0.0
      %352 = vmatpush1.msra.mxu0 0.0
      %353 = vmatprep.subr.mxu0 0.0
      %354 = vmatpush1.msra.mxu0 0.0
      %355 = vmatprep.subr.mxu0 0.0
      %356 = vmatpush1.msra.mxu0 0.0
      %357 = vmatprep.subr.mxu0 0.0
      %358 = vmatpush1.msra.mxu0 0.0
      %359 = vmatprep.subr.mxu0 0.0
      %360 = vmatpush1.msra.mxu0 0.0
      %361 = vmatprep.subr.mxu0 0.0
      %362 = vmatpush1.msra.mxu0 0.0
      %363 = vmatprep.subr.mxu0 0.0
      %364 = vmatpush1.msra.mxu0 0.0
      %365 = vmatprep.subr.mxu0 0.0
      %366 = vmatpush1.msra.mxu0 0.0
      %367 = vmatprep.subr.mxu0 0.0
      %368 = vmatpush1.msra.mxu0 0.0
      %369 = vmatprep.subr.mxu0 0.0
      %370 = vmatpush1.msra.mxu0 0.0
      %371 = vmatprep.subr.mxu0 0.0
      %372 = vmatpush1.msra.mxu0 0.0
      %373 = vmatprep.subr.mxu0 0.0
      %374 = vmatpush1.msra.mxu0 0.0
      %375 = vmatprep.subr.mxu0 0.0
      %376 = vmatpush1.msra.mxu0 0.0
      %377 = vmatprep.subr.mxu0 0.0
      %378 = vmatpush1.msra.mxu0 0.0
      %379 = vmatprep.subr.mxu0 0.0
      %380 = vmatpush1.msra.mxu0 0.0
      %381 = vmatprep.subr.mxu0 0.0
      %382 = vmatpush1.msra.mxu0 0.0
      %383 = vmatprep.subr.mxu0 0.0
      %384 = vmatpush1.msra.mxu0 0.0
      %385 = vmatprep.mubr.f32.mxu0 0.0
      %386 = vmatmul.mubr.f32.gmra.mrb[0].mxu0 %v231
      %v387 = vpop.f32.mrb[0].mxu0
      %v388 = vadd.f32 %v219, %v387
      %v389 = vpop.f32.mrb[0].mxu0
      %v390 = vadd.f32 %v219, %v389
      %391 = vdwg.mxu0
      %392 = vmatprep.subr.mxu0 %v244
      %393 = vmatpush1.msra.mxu0 %v242
      %394 = vmatprep.subr.mxu0 0.0
      %395 = vmatpush1.msra.mxu0 0.0
      %396 = vmatprep.subr.mxu0 0.0
      %397 = vmatpush1.msra.mxu0 0.0
      %398 = vmatprep.subr.mxu0 0.0
      %399 = vmatpush1.msra.mxu0 0.0
      %400 = vmatprep.subr.mxu0 0.0
      %401 = vmatpush1.msra.mxu0 0.0
      %402 = vmatprep.subr.mxu0 0.0
      %403 = vmatpush1.msra.mxu0 0.0
      %404 = vmatprep.subr.mxu0 0.0
      %405 = vmatpush1.msra.mxu0 0.0
      %406 = vmatprep.subr.mxu0 0.0
      %407 = vmatpush1.msra.mxu0 0.0
      %408 = vmatprep.subr.mxu0 0.0
      %409 = vmatpush1.msra.mxu0 0.0
      %410 = vmatprep.subr.mxu0 0.0
      %411 = vmatpush1.msra.mxu0 0.0
      %412 = vmatprep.subr.mxu0 0.0
      %413 = vmatpush1.msra.mxu0 0.0
      %414 = vmatprep.subr.mxu0 0.0
      %415 = vmatpush1.msra.mxu0 0.0
      %416 = vmatprep.subr.mxu0 0.0
      %417 = vmatpush1.msra.mxu0 0.0
      %418 = vmatprep.subr.mxu0 0.0
      %419 = vmatpush1.msra.mxu0 0.0
      %420 = vmatprep.subr.mxu0 0.0
      %421 = vmatpush1.msra.mxu0 0.0
      %422 = vmatprep.subr.mxu0 0.0
      %423 = vmatpush1.msra.mxu0 0.0
      %424 = vmatprep.subr.mxu0 0.0
      %425 = vmatpush1.msra.mxu0 0.0
      %426 = vmatprep.subr.mxu0 0.0
      %427 = vmatpush1.msra.mxu0 0.0
      %428 = vmatprep.subr.mxu0 0.0
      %429 = vmatpush1.msra.mxu0 0.0
      %430 = vmatprep.subr.mxu0 0.0
      %431 = vmatpush1.msra.mxu0 0.0
      %432 = vmatprep.subr.mxu0 0.0
      %433 = vmatpush1.msra.mxu0 0.0
      %434 = vmatprep.subr.mxu0 0.0
      %435 = vmatpush1.msra.mxu0 0.0
      %436 = vmatprep.subr.mxu0 0.0
      %437 = vmatpush1.msra.mxu0 0.0
      %438 = vmatprep.subr.mxu0 0.0
      %439 = vmatpush1.msra.mxu0 0.0
      %440 = vmatprep.subr.mxu0 0.0
      %441 = vmatpush1.msra.mxu0 0.0
      %442 = vmatprep.subr.mxu0 0.0
      %443 = vmatpush1.msra.mxu0 0.0
      %444 = vmatprep.subr.mxu0 0.0
      %445 = vmatpush1.msra.mxu0 0.0
      %446 = vmatprep.subr.mxu0 0.0
      %447 = vmatpush1.msra.mxu0 0.0
      %448 = vmatprep.subr.mxu0 0.0
      %449 = vmatpush1.msra.mxu0 0.0
      %450 = vmatprep.subr.mxu0 0.0
      %451 = vmatpush1.msra.mxu0 0.0
      %452 = vmatprep.subr.mxu0 0.0
      %453 = vmatpush1.msra.mxu0 0.0
      %454 = vmatprep.subr.mxu0 0.0
      %455 = vmatpush1.msra.mxu0 0.0
      %456 = vmatprep.mubr.f32.mxu0 0.0
      %457 = vmatmul.mubr.f32.gmra.mrb[0].mxu0 %v231
      %v458 = vpop.f32.mrb[0].mxu0
      %v459 = vadd.f32 %v219, %v458
      %v460 = vpop.f32.mrb[0].mxu0
      %v461 = vadd.f32 %v219, %v460
      %462 = vdwg.mxu0
      %463 = vmatprep.subr.mxu0 %v248
      %464 = vmatpush1.msra.mxu0 %v246
      %465 = vmatprep.subr.mxu0 0.0
      %466 = vmatpush1.msra.mxu0 0.0
      %467 = vmatprep.subr.mxu0 0.0
      %468 = vmatpush1.msra.mxu0 0.0
      %469 = vmatprep.subr.mxu0 0.0
      %470 = vmatpush1.msra.mxu0 0.0
      %471 = vmatprep.subr.mxu0 0.0
      %472 = vmatpush1.msra.mxu0 0.0
      %473 = vmatprep.subr.mxu0 0.0
      %474 = vmatpush1.msra.mxu0 0.0
      %475 = vmatprep.subr.mxu0 0.0
      %476 = vmatpush1.msra.mxu0 0.0
      %477 = vmatprep.subr.mxu0 0.0
      %478 = vmatpush1.msra.mxu0 0.0
      %479 = vmatprep.subr.mxu0 0.0
      %480 = vmatpush1.msra.mxu0 0.0
      %481 = vmatprep.subr.mxu0 0.0
      %482 = vmatpush1.msra.mxu0 0.0
      %483 = vmatprep.subr.mxu0 0.0
      %484 = vmatpush1.msra.mxu0 0.0
      %485 = vmatprep.subr.mxu0 0.0
      %486 = vmatpush1.msra.mxu0 0.0
      %487 = vmatprep.subr.mxu0 0.0
      %488 = vmatpush1.msra.mxu0 0.0
      %489 = vmatprep.subr.mxu0 0.0
      %490 = vmatpush1.msra.mxu0 0.0
      %491 = vmatprep.subr.mxu0 0.0
      %492 = vmatpush1.msra.mxu0 0.0
      %493 = vmatprep.subr.mxu0 0.0
      %494 = vmatpush1.msra.mxu0 0.0
      %495 = vmatprep.subr.mxu0 0.0
      %496 = vmatpush1.msra.mxu0 0.0
      %497 = vmatprep.subr.mxu0 0.0
      %498 = vmatpush1.msra.mxu0 0.0
      %499 = vmatprep.subr.mxu0 0.0
      %500 = vmatpush1.msra.mxu0 0.0
      %501 = vmatprep.subr.mxu0 0.0
      %502 = vmatpush1.msra.mxu0 0.0
      %503 = vmatprep.subr.mxu0 0.0
      %504 = vmatpush1.msra.mxu0 0.0
      %505 = vmatprep.subr.mxu0 0.0
      %506 = vmatpush1.msra.mxu0 0.0
      %507 = vmatprep.subr.mxu0 0.0
      %508 = vmatpush1.msra.mxu0 0.0
      %509 = vmatprep.subr.mxu0 0.0
      %510 = vmatpush1.msra.mxu0 0.0
      %511 = vmatprep.subr.mxu0 0.0
      %512 = vmatpush1.msra.mxu0 0.0
      %513 = vmatprep.subr.mxu0 0.0
      %514 = vmatpush1.msra.mxu0 0.0
      %515 = vmatprep.subr.mxu0 0.0
      %516 = vmatpush1.msra.mxu0 0.0
      %517 = vmatprep.subr.mxu0 0.0
      %518 = vmatpush1.msra.mxu0 0.0
      %519 = vmatprep.subr.mxu0 0.0
      %520 = vmatpush1.msra.mxu0 0.0
      %521 = vmatprep.subr.mxu0 0.0
      %522 = vmatpush1.msra.mxu0 0.0
      %523 = vmatprep.subr.mxu0 0.0
      %524 = vmatpush1.msra.mxu0 0.0
      %525 = vmatprep.subr.mxu0 0.0
      %526 = vmatpush1.msra.mxu0 0.0
      %527 = vmatprep.mubr.f32.mxu0 0.0
      %528 = vmatmul.mubr.f32.gmra.mrb[0].mxu0 %v231
      %v529 = vpop.f32.mrb[0].mxu0
      %v530 = vadd.f32 %v219, %v529
      %v531 = vpop.f32.mrb[0].mxu0
      %v532 = vadd.f32 %v219, %v531
      %533 = vdwg.mxu0
      %v534 = vmax.f32 %v317, 0.0
      %v535 = vmax.f32 %v319, 0.0
      %v536 = vmax.f32 %v388, 0.0
      %v537 = vmax.f32 %v390, 0.0
      %v538 = vmax.f32 %v459, 0.0
      %v539 = vmax.f32 %v461, 0.0
      %v540 = vmax.f32 %v530, 0.0
      %v541 = vmax.f32 %v532, 0.0
      %542 = vst [vmem:[%s208] sm:$0xff] %v534
      %543 = vst [vmem:[%s208 + $0x8] sm:$0xff] %v535
      %544 = vst [vmem:[%s208 + $0x10] sm:$0xff] %v536
      %545 = vst [vmem:[%s208 + $0x18] sm:$0xff] %v537
      %546 = vst [vmem:[%s208 + $0x20] sm:$0xff] %v538
      %547 = vst [vmem:[%s208 + $0x28] sm:$0xff] %v539
      %548 = vst [vmem:[%s208 + $0x30] sm:$0xff] %v540
      %549 = vst [vmem:[%s208 + $0x38] sm:$0xff] %v541
      %s550 = smul.u32 8, %s19
      %p551 = scmp.lt.s32.totalorder %s18, 1
      %s552 = scalar_select %p551, %s18, 1
      %p553 = scmp.lt.s32.totalorder %s550, 7
      %s554 = scalar_select %p553, %s550, 7
      %s555 = smul.addr %s552, 8
      %s556 = sadd.s32 %s554, %s555
      %s557 = smul.addr %s556, 8
      %s558 = scalar_lea.vmem %s3, %s557
      // Predicated region
      $region33: #{panet_forward.12} parent=31 // pred_check
        %p559 = pneg %p116
      $region34: #{panet_forward.12} parent=31 // pred_check_branch
        %561 = sbr.rel (%p559) target = $region36
      $region35: #{panet_forward.12} parent=31 // pred_region
        %s562 = smul.u32 8, %s19
      $region36: #{panet_forward.12} parent=31 // pred_fallthru
        _
    $region32: #{panet_forward.12} parent=5 // pred_fallthru
      _
    %p563 = scmp.le.s32.totalorder 2, %s9
    // Predicated region
    $region37: #{panet_forward.12} parent=5 // pred_check
      %p564 = pneg %p563
    $region38: #{panet_forward.12} parent=5 // pred_check_branch
      %566 = sbr.rel (%p564) target = $region40
    $region39: #{panet_forward.12} parent=5 // pred_region
      %s567 = ssub.s32 %s9, 2
      // Predicated region
      $region41: #{panet_forward.12} parent=39 // pred_check
        %p568 = pneg %p122
      $region42: #{panet_forward.12} parent=39 // pred_check_branch
        %570 = sbr.rel (%p568) target = $region44
      $region43: #{panet_forward.12} parent=39 // pred_region
        %s571 = smul.u32 8, %s21
        %p572 = scmp.lt.s32.totalorder %s20, 1
        %s573 = scalar_select %p572, %s20, 1
        %p574 = scmp.lt.s32.totalorder %s571, 7
        %s575 = scalar_select %p574, %s571, 7
        %s576 = smul.addr %s573, 8
        %s577 = sadd.s32 %s575, %s576
        %s578 = smul.addr %s577, 8
        %s579 = scalar_lea.vmem %s3, %s578
      $region44: #{panet_forward.12} parent=39 // pred_fallthru
        _
    $region40: #{panet_forward.12} parent=5 // pred_fallthru
      _
  $region6: #{panet_forward.12} parent=0 // loop_footer
    %s13 = sadd.s32 1, %s9
  $region7: #{panet_forward.12} parent=0 // loop_footer_branch
    %8 = sbr.rel target = $region3
  $region8: #{panet_forward.12} parent=0 // loop_exit
    _

// kernel: panet_forward.18
$region0: #{panet_forward.18}
  #allocation0 [shape = 'u32[]', space=smem, size = 0x4, offset = 0x4, fixed_abs, tag = 'smem constant byte address 0x4 - core index']
  #allocation1 [shape = 'u32[144,128]{1,0:T(1,128)}', space=vmem, size = 0x12000, scoped, tag = 'internal scratch']
  %s0 = inlined_call_operand.vmem [shape: f32[2,256,128], index: 0, kind: input, shape index: {}]
  %s1 = inlined_call_operand.vmem [shape: f32[2,256,32], index: 1, kind: input, shape index: {}]
  %s2 = inlined_call_operand.vmem [shape: f32[64,32], index: 2, kind: input, shape index: {}]
  %s3 = inlined_call_operand.vmem [shape: f32[2,256,32], index: 3, kind: output, shape index: {}]
  %s4 = sld [smem:[#allocation0]]
  $region45: #{panet_forward.18} parent=0
    _
  %s6 = ssub.s32 1, %s4
  %s7 = scalar_select 0, %s6, %s4
  loop: start=0, step=1, limit=10
  $region2: #{panet_forward.18} parent=0 // loop_pre_header
    _
  $region3: #{panet_forward.18} parent=0 // loop_header
    %s9 = sphi 0, %s13
    %p10 = scmp.ge.s32.totalorder %s9, 10
    %s16 = sphi 0, %s28
    %s17 = sphi 0, %s24
    %s18 = sphi 0, %s16
    %s19 = sphi 0, %s17
    %s20 = sphi 0, %s18
    %s21 = sphi 0, %s19
    %s33 = sphi 0, %s35
    %s36 = sphi 0, %s33
    %s37 = sphi 0, %s36
    %s53 = sphi 0, %s37
    %s61 = sphi 0, %s63
    %s64 = sphi 0, %s61
    %s65 = sphi 0, %s64
    %s81 = sphi 0, %s65
    %s85 = sphi 0, %s85
    %s87 = sphi 0, %s85
    %s88 = sphi 0, %s87
    %s102 = sphi 0, %s88
    %s110 = sphi 0, %s112
    %s113 = sphi 0, %s110
    %s114 = sphi 0, %s113
    %s130 = sphi 0, %s114
  $region4: #{panet_forward.18} parent=0 // loop_header_branch
    %12 = sbr.rel (%p10) target = $region8
  $region5: #{panet_forward.18} parent=0 // loop_body
    %s14 = ssub.s32 %s9, 1
    %s15 = ssub.s32 %s9, 2
    %s22 = sadd.s32 1, %s17
    %p23 = scmp.ge.s32.totalorder %s22, 4
    %s24 = scalar_select %p23, 0, %s22
    %s25 = sadd.s32 1, %s16
    %s26 = scalar_select %p23, %s25, %s16
    %p27 = scmp.ge.s32.totalorder %s26, 2
    %s28 = scalar_select %p27, 0, %s26
    %s29 = ssub.s32 %s16, %s28
    %s30 = ssub.s32 %s17, %s24
    %s31 = sor.u32 %s29, %s30
    %p32 = scmp.eq.s32.totalorder %s31, 0
    %s34 = sadd.s32 %s33, 1
    %s35 = scalar_select %p32, %s33, %s34
    %p38 = pneg %p32
    %p39 = scmp.eq.s32.totalorder %s9, 7
    %p40 = por %p38, %p39
    %p41 = scmp.ne.s32.totalorder %s33, %s36
    %p42 = scmp.eq.s32.totalorder %s9, 0
    %p43 = por %p41, %p42
    %p44 = scmp.ne.s32.totalorder %s33, %s36
    %p45 = scmp.eq.s32.totalorder %s14, 7
    %p46 = por %p44, %p45
    %p47 = scmp.ne.s32.totalorder %s36, %s37
    %p48 = scmp.eq.s32.totalorder %s14, 0
    %p49 = por %p47, %p48
    %p50 = scmp.ne.s32.totalorder %s36, %s37
    %p51 = scmp.eq.s32.totalorder %s15, 7
    %p52 = por %p50, %p51
    %p54 = scmp.ne.s32.totalorder %s37, %s53
    %p55 = scmp.eq.s32.totalorder %s15, 0
    %p56 = por %p54, %p55
    %s57 = ssub.s32 %s16, %s28
    %s58 = ssub.s32 %s17, %s24
    %s59 = sor.u32 %s57, %s58
    %p60 = scmp.eq.s32.totalorder %s59, 0
    %s62 = sadd.s32 %s61, 1
    %s63 = scalar_select %p60, %s61, %s62
    %p66 = pneg %p60
    %p67 = scmp.eq.s32.totalorder %s9, 7
    %p68 = por %p66, %p67
    %p69 = scmp.ne.s32.totalorder %s61, %s64
    %p70 = scmp.eq.s32.totalorder %s9, 0
    %p71 = por %p69, %p70
    %p72 = scmp.ne.s32.totalorder %s61, %s64
    %p73 = scmp.eq.s32.totalorder %s14, 7
    %p74 = por %p72, %p73
    %p75 = scmp.ne.s32.totalorder %s64, %s65
    %p76 = scmp.eq.s32.totalorder %s14, 0
    %p77 = por %p75, %p76
    %p78 = scmp.ne.s32.totalorder %s64, %s65
    %p79 = scmp.eq.s32.totalorder %s15, 7
    %p80 = por %p78, %p79
    %p82 = scmp.ne.s32.totalorder %s65, %s81
    %p83 = scmp.eq.s32.totalorder %s15, 0
    %p84 = por %p82, %p83
    %s86 = sadd.s32 %s85, 1
    %p89 = scmp.eq.s32.totalorder %s9, 7
    %p90 = scmp.ne.s32.totalorder %s85, %s87
    %p91 = scmp.eq.s32.totalorder %s9, 0
    %p92 = por %p90, %p91
    %p93 = scmp.ne.s32.totalorder %s85, %s87
    %p94 = scmp.eq.s32.totalorder %s14, 7
    %p95 = por %p93, %p94
    %p96 = scmp.ne.s32.totalorder %s87, %s88
    %p97 = scmp.eq.s32.totalorder %s14, 0
    %p98 = por %p96, %p97
    %p99 = scmp.ne.s32.totalorder %s87, %s88
    %p100 = scmp.eq.s32.totalorder %s15, 7
    %p101 = por %p99, %p100
    %p103 = scmp.ne.s32.totalorder %s88, %s102
    %p104 = scmp.eq.s32.totalorder %s15, 0
    %p105 = por %p103, %p104
    %s106 = ssub.s32 %s16, %s28
    %s107 = ssub.s32 %s17, %s24
    %s108 = sor.u32 %s106, %s107
    %p109 = scmp.eq.s32.totalorder %s108, 0
    %s111 = sadd.s32 %s110, 1
    %s112 = scalar_select %p109, %s110, %s111
    %p115 = pneg %p109
    %p116 = scmp.eq.s32.totalorder %s9, 7
    %p117 = por %p115, %p116
    %p118 = scmp.ne.s32.totalorder %s110, %s113
    %p119 = scmp.eq.s32.totalorder %s9, 0
    %p120 = por %p118, %p119
    %p121 = scmp.ne.s32.totalorder %s110, %s113
    %p122 = scmp.eq.s32.totalorder %s14, 7
    %p123 = por %p121, %p122
    %p124 = scmp.ne.s32.totalorder %s113, %s114
    %p125 = scmp.eq.s32.totalorder %s14, 0
    %p126 = por %p124, %p125
    %p127 = scmp.ne.s32.totalorder %s113, %s114
    %p128 = scmp.eq.s32.totalorder %s15, 7
    %p129 = por %p127, %p128
    %p131 = scmp.ne.s32.totalorder %s114, %s130
    %p132 = scmp.eq.s32.totalorder %s15, 0
    %p133 = por %p131, %p132
    %p134 = scmp.le.s32.totalorder 1, %s9
    %p135 = scmp.lt.s32.totalorder %s9, 9
    %p136 = pnand %p134, %p135
    %p137 = pneg %p136
    // Predicated region
    $region9: #{panet_forward.18} parent=5 // pred_check
      _
    $region10: #{panet_forward.18} parent=5 // pred_check_branch
      %139 = sbr.rel (%p136) target = $region12
    $region11: #{panet_forward.18} parent=5 // pred_region
      %s140 = ssub.s32 %s9, 1
      // Predicated region
      $region13: #{panet_forward.18} parent=11 // pred_check
        %p141 = pneg %p98
      $region14: #{panet_forward.18} parent=11 // pred_check_branch
        %143 = sbr.rel (%p141) target = $region16
      $region15: #{panet_forward.18} parent=11 // pred_region
        _
      $region16: #{panet_forward.18} parent=11 // pred_fallthru
        _
    $region12: #{panet_forward.18} parent=5 // pred_fallthru
      _
    %p144 = scmp.lt.s32.totalorder %s9, 8
    // Predicated region
    $region17: #{panet_forward.18} parent=5 // pred_check
      %p145 = pneg %p144
    $region18: #{panet_forward.18} parent=5 // pred_check_branch
      %147 = sbr.rel (%p145) target = $region20
    $region19: #{panet_forward.18} parent=5 // pred_region
      // Predicated region
      $region21: #{panet_forward.18} parent=19 // pred_check
        %p148 = pneg %p43
      $region22: #{panet_forward.18} parent=19 // pred_check_branch
        %150 = sbr.rel (%p148) target = $region24
      $region23: #{panet_forward.18} parent=19 // pred_region
        %s151 = smul.u32 8, %s17
        %p152 = scmp.lt.s32.totalorder %s16, 1
        %s153 = scalar_select %p152, %s16, 1
        %p154 = scmp.lt.s32.totalorder %s151, 31
        %s155 = scalar_select %p154, %s151, 31
        %s156 = smul.addr %s153, 32
        %s157 = sadd.s32 %s155, %s156
        %s158 = smul.addr %s157, 8
        %s159 = scalar_lea.vmem %s0, %s158
        %s160 = smul.u32 8, %s17
      $region24: #{panet_forward.18} parent=19 // pred_fallthru
        _
      // Predicated region
      $region25: #{panet_forward.18} parent=19 // pred_check
        %p161 = pneg %p71
      $region26: #{panet_forward.18} parent=19 // pred_check_branch
        %163 = sbr.rel (%p161) target = $region28
      $region27: #{panet_forward.18} parent=19 // pred_region
        %s164 = smul.u32 8, %s17
        %p165 = scmp.lt.s32.totalorder %s16, 1
        %s166 = scalar_select %p165, %s16, 1
        %p167 = scmp.lt.s32.totalorder %s164, 31
        %s168 = scalar_select %p167, %s164, 31
        %s169 = smul.addr %s166, 32
        %s170 = sadd.s32 %s168, %s169
        %s171 = smul.addr %s170, 8
        %s172 = scalar_lea.vmem %s1, %s171
        %s173 = smul.u32 8, %s17
      $region28: #{panet_forward.18} parent=19 // pred_fallthru
        _
    $region20: #{panet_forward.18} parent=5 // pred_fallthru
      _
    %p174 = scmp.le.s32.totalorder 1, %s9
    %p175 = scmp.lt.s32.totalorder %s9, 9
    %p176 = pnand %p174, %p175
    %p177 = pneg %p176
    // Predicated region
    $region29: #{panet_forward.18} parent=5 // pred_check
      _
    $region30: #{panet_forward.18} parent=5 // pred_check_branch
      %179 = sbr.rel (%p176) target = $region32
    $region31: #{panet_forward.18} parent=5 // pred_region
      %s180 = ssub.s32 %s9, 1
      %s181 = smul.u32 8, %s19
      %p182 = scmp.lt.s32.totalorder %s18, 1
      %s183 = scalar_select %p182, %s18, 1
      %p184 = scmp.lt.s32.totalorder %s181, 31
      %s185 = scalar_select %p184, %s181, 31
      %s186 = smul.addr %s183, 32
      %s187 = sadd.s32 %s185, %s186
      %s188 = smul.addr %s187, 8
      %s189 = scalar_lea.vmem %s0, %s188
      %p190 = pneg %p49
      %p191 = pneg %p46
      %s192 = smul.u32 8, %s19
      %p193 = scmp.lt.s32.totalorder %s18, 1
      %s194 = scalar_select %p193, %s18, 1
      %p195 = scmp.lt.s32.totalorder %s192, 31
      %s196 = scalar_select %p195, %s192, 31
      %s197 = smul.addr %s194, 32
      %s198 = sadd.s32 %s196, %s197
      %s199 = smul.addr %s198, 8
      %s200 = scalar_lea.vmem %s1, %s199
      %p201 = pneg %p77
      %p202 = pneg %p74
      %p203 = pneg %p98
      %p204 = pneg %p95
      %p205 = pneg %p126
      %p206 = pneg %p123
      %s207 = smul.u32 8, %s19
      %p208 = scmp.lt.s32.totalorder %s18, 1
      %s209 = scalar_select %p208, %s18, 1
      %p210 = scmp.lt.s32.totalorder %s207, 31
      %s211 = scalar_select %p210, %s207, 31
      %s212 = smul.addr %s209, 32
      %s213 = sadd.s32 %s211, %s212
      %s214 = smul.addr %s213, 8
      %s215 = scalar_lea.vmem %s3, %s214
      %s216 = smul.u32 8, %s19
      %p217 = scmp.lt.s32.totalorder %s18, 1
      %s218 = scalar_select %p217, %s18, 1
      %p219 = scmp.lt.s32.totalorder %s216, 31
      %s220 = scalar_select %p219, %s216, 31
      %s221 = smul.addr %s218, 32
      %s222 = sadd.s32 %s220, %s221
      %s223 = smul.addr %s222, 8
      %s224 = scalar_lea.vmem %s0, %s223
      %s225 = smul.u32 8, %s19
      %s226 = smul.u32 8, %s19
      %p227 = scmp.lt.s32.totalorder %s18, 1
      %s228 = scalar_select %p227, %s18, 1
      %p229 = scmp.lt.s32.totalorder %s226, 31
      %s230 = scalar_select %p229, %s226, 31
      %s231 = smul.addr %s228, 32
      %s232 = sadd.s32 %s230, %s231
      %s233 = smul.addr %s232, 8
      %s234 = scalar_lea.vmem %s1, %s233
      %s235 = smul.u32 8, %s19
      %s236 = smul.u32 8, %s19
      %p237 = scmp.lt.s32.totalorder %s18, 1
      %s238 = scalar_select %p237, %s18, 1
      %p239 = scmp.lt.s32.totalorder %s236, 31
      %s240 = scalar_select %p239, %s236, 31
      %s241 = smul.addr %s238, 32
      %s242 = sadd.s32 %s240, %s241
      %s243 = smul.addr %s242, 8
      %s244 = scalar_lea.vmem %s3, %s243
      %s245 = smul.u32 8, %s19
      %v246 = vld [vmem:[%s224] sm:$0xff]
      %v247 = vld [vmem:[%s224 + $0x8] sm:$0xff]
      %v248 = vld [vmem:[%s224 + $0x10] sm:$0xff]
      %v249 = vld [vmem:[%s224 + $0x18] sm:$0xff]
      %v250 = vld [vmem:[%s224 + $0x20] sm:$0xff]
      %v251 = vld [vmem:[%s224 + $0x28] sm:$0xff]
      %v252 = vld [vmem:[%s224 + $0x30] sm:$0xff]
      %v253 = vld [vmem:[%s224 + $0x38] sm:$0xff]
      %262 = vrot.lane.b32.xlu0 %v246, 64
      %v263 = vpop.permute.xlu0 %262
      %264 = vrot.lane.b32.xlu0 %v247, 64
      %v265 = vpop.permute.xlu0 %264
      %266 = vrot.lane.b32.xlu0 %v248, 64
      %v267 = vpop.permute.xlu0 %266
      %268 = vrot.lane.b32.xlu0 %v249, 64
      %v269 = vpop.permute.xlu0 %268
      %270 = vrot.lane.b32.xlu0 %v250, 64
      %v271 = vpop.permute.xlu0 %270
      %272 = vrot.lane.b32.xlu0 %v251, 64
      %v273 = vpop.permute.xlu0 %272
      %274 = vrot.lane.b32.xlu0 %v252, 64
      %v275 = vpop.permute.xlu0 %274
      %276 = vrot.lane.b32.xlu0 %v253, 64
      %v277 = vpop.permute.xlu0 %276
      %v286 = vmax.f32 %v246, %v263
      %v287 = vmax.f32 %v247, %v265
      %v288 = vmax.f32 %v248, %v267
      %v289 = vmax.f32 %v249, %v269
      %v290 = vmax.f32 %v250, %v271
      %v291 = vmax.f32 %v251, %v273
      %v292 = vmax.f32 %v252, %v275
      %v293 = vmax.f32 %v253, %v277
      %302 = vrot.lane.b32.xlu0 %v286, 127
      %v303 = vpop.permute.xlu0 %302
      %304 = vrot.lane.b32.xlu0 %v287, 127
      %v305 = vpop.permute.xlu0 %304
      %306 = vrot.lane.b32.xlu0 %v288, 127
      %v307 = vpop.permute.xlu0 %306
      %308 = vrot.lane.b32.xlu0 %v289, 127
      %v309 = vpop.permute.xlu0 %308
      %310 = vrot.lane.b32.xlu0 %v290, 127
      %v311 = vpop.permute.xlu0 %310
      %312 = vrot.lane.b32.xlu0 %v291, 127
      %v313 = vpop.permute.xlu0 %312
      %314 = vrot.lane.b32.xlu0 %v292, 127
      %v315 = vpop.permute.xlu0 %314
      %316 = vrot.lane.b32.xlu0 %v293, 127
      %v317 = vpop.permute.xlu0 %316
      %326 = vrot.lane.b32.xlu0 %v286, 63
      %v327 = vpop.permute.xlu0 %326
      %328 = vrot.lane.b32.xlu0 %v287, 63
      %v329 = vpop.permute.xlu0 %328
      %330 = vrot.lane.b32.xlu0 %v288, 63
      %v331 = vpop.permute.xlu0 %330
      %332 = vrot.lane.b32.xlu0 %v289, 63
      %v333 = vpop.permute.xlu0 %332
      %334 = vrot.lane.b32.xlu0 %v290, 63
      %v335 = vpop.permute.xlu0 %334
      %336 = vrot.lane.b32.xlu0 %v291, 63
      %v337 = vpop.permute.xlu0 %336
      %338 = vrot.lane.b32.xlu0 %v292, 63
      %v339 = vpop.permute.xlu0 %338
      %340 = vrot.lane.b32.xlu0 %v293, 63
      %v341 = vpop.permute.xlu0 %340
      %vm350 = vcmask 515072
      %v351 = vsel %vm350, %v303, %v327
      %v352 = vsel %vm350, %v305, %v329
      %v353 = vsel %vm350, %v307, %v331
      %v354 = vsel %vm350, %v309, %v333
      %v355 = vsel %vm350, %v311, %v335
      %v356 = vsel %vm350, %v313, %v337
      %v357 = vsel %vm350, %v315, %v339
      %v358 = vsel %vm350, %v317, %v341
      %v359 = vmax.f32 %v286, %v351
      %v360 = vmax.f32 %v287, %v352
      %v361 = vmax.f32 %v288, %v353
      %v362 = vmax.f32 %v289, %v354
      %v363 = vmax.f32 %v290, %v355
      %v364 = vmax.f32 %v291, %v356
      %v365 = vmax.f32 %v292, %v357
      %v366 = vmax.f32 %v293, %v358
      %v367 = vld [vmem:[%s2] sm:$0xff]
      %v368 = vld [vmem:[%s2 + $0x8] sm:$0xff]
      %v369 = vld [vmem:[%s2 + $0x10] sm:$0xff]
      %v370 = vld [vmem:[%s2 + $0x18] sm:$0xff]
      %v371 = vld [vmem:[%s2 + $0x20] sm:$0xff]
      %v372 = vld [vmem:[%s2 + $0x28] sm:$0xff]
      %v373 = vld [vmem:[%s2 + $0x30] sm:$0xff]
      %v374 = vld [vmem:[%s2 + $0x38] sm:$0xff]
      %v375 = vld [vmem:[%s234] sm:$0xff]
      %v376 = vld [vmem:[%s234 + $0x8] sm:$0xff]
      %v377 = vld [vmem:[%s234 + $0x10] sm:$0xff]
      %v378 = vld [vmem:[%s234 + $0x18] sm:$0xff]
      %v379 = vld [vmem:[%s234 + $0x20] sm:$0xff]
      %v380 = vld [vmem:[%s234 + $0x28] sm:$0xff]
      %v381 = vld [vmem:[%s234 + $0x30] sm:$0xff]
      %v382 = vld [vmem:[%s234 + $0x38] sm:$0xff]
      %vm383 = vcmask 523264
      %v385 = vsel %vm383, %v359, 0
      %v388 = vsel %vm383, %v360, 0
      %v391 = vsel %vm383, %v361, 0
      %v394 = vsel %vm383, %v362, 0
      %v397 = vsel %vm383, %v363, 0
      %v400 = vsel %vm383, %v364, 0
      %v403 = vsel %vm383, %v365, 0
      %v406 = vsel %vm383, %v366, 0
      %408 = vmatprep.subr.mxu0 0.0
      %409 = vmatpush1.msra.mxu0 %v367
      %410 = vmatprep.subr.mxu0 0.0
      %411 = vmatpush1.msra.mxu0 %v368
      %412 = vmatprep.subr.mxu0 0.0
      %413 = vmatpush1.msra.mxu0 %v369
      %414 = vmatprep.subr.mxu0 0.0
      %415 = vmatpush1.msra.mxu0 %v370
      %416 = vmatprep.subr.mxu0 0.0
      %417 = vmatpush1.msra.mxu0 %v371
      %418 = vmatprep.subr.mxu0 0.0
      %419 = vmatpush1.msra.mxu0 %v372
      %420 = vmatprep.subr.mxu0 0.0
      %421 = vmatpush1.msra.mxu0 %v373
      %422 = vmatprep.subr.mxu0 0.0
      %423 = vmatpush1.msra.mxu0 %v374
      %424 = vmatprep.subr.mxu0 0.0
      %425 = vmatpush1.msra.mxu0 0.0
      %426 = vmatprep.subr.mxu0 0.0
      %427 = vmatpush1.msra.mxu0 0.0
      %428 = vmatprep.subr.mxu0 0.0
      %429 = vmatpush1.msra.mxu0 0.0
      %430 = vmatprep.subr.mxu0 0.0
      %431 = vmatpush1.msra.mxu0 0.0
      %432 = vmatprep.subr.mxu0 0.0
      %433 = vmatpush1.msra.mxu0 0.0
      %434 = vmatprep.subr.mxu0 0.0
      %435 = vmatpush1.msra.mxu0 0.0
      %436 = vmatprep.subr.mxu0 0.0
      %437 = vmatpush1.msra.mxu0 0.0
      %438 = vmatprep.subr.mxu0 0.0
      %439 = vmatpush1.msra.mxu0 0.0
      %440 = vmatprep.subr.mxu0 0.0
      %441 = vmatpush1.msra.mxu0 0.0
      %442 = vmatprep.subr.mxu0 0.0
      %443 = vmatpush1.msra.mxu0 0.0
      %444 = vmatprep.subr.mxu0 0.0
      %445 = vmatpush1.msra.mxu0 0.0
      %446 = vmatprep.subr.mxu0 0.0
      %447 = vmatpush1.msra.mxu0 0.0
      %448 = vmatprep.subr.mxu0 0.0
      %449 = vmatpush1.msra.mxu0 0.0
      %450 = vmatprep.subr.mxu0 0.0
      %451 = vmatpush1.msra.mxu0 0.0
      %452 = vmatprep.subr.mxu0 0.0
      %453 = vmatpush1.msra.mxu0 0.0
      %454 = vmatprep.subr.mxu0 0.0
      %455 = vmatpush1.msra.mxu0 0.0
      %456 = vmatprep.subr.mxu0 0.0
      %457 = vmatpush1.msra.mxu0 0.0
      %458 = vmatprep.subr.mxu0 0.0
      %459 = vmatpush1.msra.mxu0 0.0
      %460 = vmatprep.subr.mxu0 0.0
      %461 = vmatpush1.msra.mxu0 0.0
      %462 = vmatprep.subr.mxu0 0.0
      %463 = vmatpush1.msra.mxu0 0.0
      %464 = vmatprep.subr.mxu0 0.0
      %465 = vmatpush1.msra.mxu0 0.0
      %466 = vmatprep.subr.mxu0 0.0
      %467 = vmatpush1.msra.mxu0 0.0
      %468 = vmatprep.subr.mxu0 0.0
      %469 = vmatpush1.msra.mxu0 0.0
      %470 = vmatprep.subr.mxu0 0.0
      %471 = vmatpush1.msra.mxu0 0.0
      %472 = vmatprep.mubr.f32.mxu0 0.0
      %473 = vmatmul.mubr.f32.gmra.mrb[0].mxu0 %v385
      %v474 = vpop.f32.mrb[0].mxu0
      %v475 = vadd.f32 %v375, %v474
      %v476 = vpop.f32.mrb[0].mxu0
      %477 = vmatprep.mubr.f32.mxu0 0.0
      %478 = vmatmul.mubr.f32.gmra.mrb[0].mxu0 %v388
      %v479 = vpop.f32.mrb[0].mxu0
      %v480 = vadd.f32 %v376, %v479
      %v481 = vpop.f32.mrb[0].mxu0
      %482 = vmatprep.mubr.f32.mxu0 0.0
      %483 = vmatmul.mubr.f32.gmra.mrb[0].mxu0 %v391
      %v484 = vpop.f32.mrb[0].mxu0
      %v485 = vadd.f32 %v377, %v484
      %v486 = vpop.f32.mrb[0].mxu0
      %487 = vmatprep.mubr.f32.mxu0 0.0
      %488 = vmatmul.mubr.f32.gmra.mrb[0].mxu0 %v394
      %v489 = vpop.f32.mrb[0].mxu0
      %v490 = vadd.f32 %v378, %v489
      %v491 = vpop.f32.mrb[0].mxu0
      %492 = vmatprep.mubr.f32.mxu0 0.0
      %493 = vmatmul.mubr.f32.gmra.mrb[0].mxu0 %v397
      %v494 = vpop.f32.mrb[0].mxu0
      %v495 = vadd.f32 %v379, %v494
      %v496 = vpop.f32.mrb[0].mxu0
      %497 = vmatprep.mubr.f32.mxu0 0.0
      %498 = vmatmul.mubr.f32.gmra.mrb[0].mxu0 %v400
      %v499 = vpop.f32.mrb[0].mxu0
      %v500 = vadd.f32 %v380, %v499
      %v501 = vpop.f32.mrb[0].mxu0
      %502 = vmatprep.mubr.f32.mxu0 0.0
      %503 = vmatmul.mubr.f32.gmra.mrb[0].mxu0 %v403
      %v504 = vpop.f32.mrb[0].mxu0
      %v505 = vadd.f32 %v381, %v504
      %v506 = vpop.f32.mrb[0].mxu0
      %507 = vmatprep.mubr.f32.mxu0 0.0
      %508 = vmatmul.mubr.f32.gmra.mrb[0].mxu0 %v406
      %v509 = vpop.f32.mrb[0].mxu0
      %v510 = vadd.f32 %v382, %v509
      %v511 = vpop.f32.mrb[0].mxu0
      %512 = vdwg.mxu0
      %vm513 = vcmask 261120
      %514 = vst.msk [vmem:[%s244] sm:$0xff] %vm513, %v475
      %515 = vst.msk [vmem:[%s244 + $0x8] sm:$0xff] %vm513, %v480
      %516 = vst.msk [vmem:[%s244 + $0x10] sm:$0xff] %vm513, %v485
      %517 = vst.msk [vmem:[%s244 + $0x18] sm:$0xff] %vm513, %v490
      %518 = vst.msk [vmem:[%s244 + $0x20] sm:$0xff] %vm513, %v495
      %519 = vst.msk [vmem:[%s244 + $0x28] sm:$0xff] %vm513, %v500
      %520 = vst.msk [vmem:[%s244 + $0x30] sm:$0xff] %vm513, %v505
      %521 = vst.msk [vmem:[%s244 + $0x38] sm:$0xff] %vm513, %v510
      %s522 = smul.u32 8, %s19
      %p523 = scmp.lt.s32.totalorder %s18, 1
      %s524 = scalar_select %p523, %s18, 1
      %p525 = scmp.lt.s32.totalorder %s522, 31
      %s526 = scalar_select %p525, %s522, 31
      %s527 = smul.addr %s524, 32
      %s528 = sadd.s32 %s526, %s527
      %s529 = smul.addr %s528, 8
      %s530 = scalar_lea.vmem %s3, %s529
      // Predicated region
      $region33: #{panet_forward.18} parent=31 // pred_check
        %p531 = pneg %p123
      $region34: #{panet_forward.18} parent=31 // pred_check_branch
        %533 = sbr.rel (%p531) target = $region36
      $region35: #{panet_forward.18} parent=31 // pred_region
        %s534 = smul.u32 8, %s19
      $region36: #{panet_forward.18} parent=31 // pred_fallthru
        _
    $region32: #{panet_forward.18} parent=5 // pred_fallthru
      _
    %p535 = scmp.le.s32.totalorder 2, %s9
    // Predicated region
    $region37: #{panet_forward.18} parent=5 // pred_check
      %p536 = pneg %p535
    $region38: #{panet_forward.18} parent=5 // pred_check_branch
      %538 = sbr.rel (%p536) target = $region40
    $region39: #{panet_forward.18} parent=5 // pred_region
      %s539 = ssub.s32 %s9, 2
      // Predicated region
      $region41: #{panet_forward.18} parent=39 // pred_check
        %p540 = pneg %p129
      $region42: #{panet_forward.18} parent=39 // pred_check_branch
        %542 = sbr.rel (%p540) target = $region44
      $region43: #{panet_forward.18} parent=39 // pred_region
        %s543 = smul.u32 8, %s21
        %p544 = scmp.lt.s32.totalorder %s20, 1
        %s545 = scalar_select %p544, %s20, 1
        %p546 = scmp.lt.s32.totalorder %s543, 31
        %s547 = scalar_select %p546, %s543, 31
        %s548 = smul.addr %s545, 32
        %s549 = sadd.s32 %s547, %s548
        %s550 = smul.addr %s549, 8
        %s551 = scalar_lea.vmem %s3, %s550
      $region44: #{panet_forward.18} parent=39 // pred_fallthru
        _
    $region40: #{panet_forward.18} parent=5 // pred_fallthru
      _
  $region6: #{panet_forward.18} parent=0 // loop_footer
    %s13 = sadd.s32 1, %s9
  $region7: #{panet_forward.18} parent=0 // loop_footer_branch
    %8 = sbr.rel target = $region3
  $region8: #{panet_forward.18} parent=0 // loop_exit
    _

// kernel: panet_forward.19
$region0: #{panet_forward.19}
  #allocation0 [shape = 'u32[]', space=smem, size = 0x4, offset = 0x4, fixed_abs, tag = 'smem constant byte address 0x4 - core index']
  #allocation1 [shape = 'u32[144,128]{1,0:T(1,128)}', space=vmem, size = 0x12000, scoped, tag = 'internal scratch']
  %s0 = inlined_call_operand.vmem [shape: f32[2,8,1024], index: 0, kind: input, shape index: {}]
  %s1 = inlined_call_operand.vmem [shape: f32[8,8], index: 1, kind: input, shape index: {}]
  %s2 = inlined_call_operand.vmem [shape: f32[8,1], index: 2, kind: input, shape index: {}]
  %s3 = inlined_call_operand.vmem [shape: f32[2,8,1024], index: 3, kind: output, shape index: {}]
  %s4 = sld [smem:[#allocation0]]
  $region45: #{panet_forward.19} parent=0
    _
  %s6 = ssub.s32 1, %s4
  %s7 = scalar_select 0, %s6, %s4
  loop: start=0, step=1, limit=4
  $region2: #{panet_forward.19} parent=0 // loop_pre_header
    _
  $region3: #{panet_forward.19} parent=0 // loop_header
    %s9 = sphi 0, %s13
    %p10 = scmp.ge.s32.totalorder %s9, 4
    %s16 = sphi 0, %s28
    %s17 = sphi 0, %s24
    %s18 = sphi 0, %s16
    %s19 = sphi 0, %s17
    %s20 = sphi 0, %s18
    %s21 = sphi 0, %s19
    %s33 = sphi 0, %s35
    %s36 = sphi 0, %s33
    %s37 = sphi 0, %s36
    %s53 = sphi 0, %s37
    %s57 = sphi 0, %s57
    %s59 = sphi 0, %s57
    %s60 = sphi 0, %s59
    %s74 = sphi 0, %s60
    %s78 = sphi 0, %s78
    %s80 = sphi 0, %s78
    %s81 = sphi 0, %s80
    %s95 = sphi 0, %s81
    %s103 = sphi 0, %s105
    %s106 = sphi 0, %s103
    %s107 = sphi 0, %s106
    %s123 = sphi 0, %s107
  $region4: #{panet_forward.19} parent=0 // loop_header_branch
    %12 = sbr.rel (%p10) target = $region8
  $region5: #{panet_forward.19} parent=0 // loop_body
    %s14 = ssub.s32 %s9, 1
    %s15 = ssub.s32 %s9, 2
    %s22 = sadd.s32 1, %s17
    %p23 = scmp.ge.s32.totalorder %s22, 1
    %s24 = scalar_select %p23, 0, %s22
    %s25 = sadd.s32 1, %s16
    %s26 = scalar_select %p23, %s25, %s16
    %p27 = scmp.ge.s32.totalorder %s26, 2
    %s28 = scalar_select %p27, 0, %s26
    %s29 = ssub.s32 %s16, %s28
    %s30 = ssub.s32 %s17, %s24
    %s31 = sor.u32 %s29, %s30
    %p32 = scmp.eq.s32.totalorder %s31, 0
    %s34 = sadd.s32 %s33, 1
    %s35 = scalar_select %p32, %s33, %s34
    %p38 = pneg %p32
    %p39 = scmp.eq.s32.totalorder %s9, 1
    %p40 = por %p38, %p39
    %p41 = scmp.ne.s32.totalorder %s33, %s36
    %p42 = scmp.eq.s32.totalorder %s9, 0
    %p43 = por %p41, %p42
    %p44 = scmp.ne.s32.totalorder %s33, %s36
    %p45 = scmp.eq.s32.totalorder %s14, 1
    %p46 = por %p44, %p45
    %p47 = scmp.ne.s32.totalorder %s36, %s37
    %p48 = scmp.eq.s32.totalorder %s14, 0
    %p49 = por %p47, %p48
    %p50 = scmp.ne.s32.totalorder %s36, %s37
    %p51 = scmp.eq.s32.totalorder %s15, 1
    %p52 = por %p50, %p51
    %p54 = scmp.ne.s32.totalorder %s37, %s53
    %p55 = scmp.eq.s32.totalorder %s15, 0
    %p56 = por %p54, %p55
    %s58 = sadd.s32 %s57, 1
    %p61 = scmp.eq.s32.totalorder %s9, 1
    %p62 = scmp.ne.s32.totalorder %s57, %s59
    %p63 = scmp.eq.s32.totalorder %s9, 0
    %p64 = por %p62, %p63
    %p65 = scmp.ne.s32.totalorder %s57, %s59
    %p66 = scmp.eq.s32.totalorder %s14, 1
    %p67 = por %p65, %p66
    %p68 = scmp.ne.s32.totalorder %s59, %s60
    %p69 = scmp.eq.s32.totalorder %s14, 0
    %p70 = por %p68, %p69
    %p71 = scmp.ne.s32.totalorder %s59, %s60
    %p72 = scmp.eq.s32.totalorder %s15, 1
    %p73 = por %p71, %p72
    %p75 = scmp.ne.s32.totalorder %s60, %s74
    %p76 = scmp.eq.s32.totalorder %s15, 0
    %p77 = por %p75, %p76
    %s79 = sadd.s32 %s78, 1
    %p82 = scmp.eq.s32.totalorder %s9, 1
    %p83 = scmp.ne.s32.totalorder %s78, %s80
    %p84 = scmp.eq.s32.totalorder %s9, 0
    %p85 = por %p83, %p84
    %p86 = scmp.ne.s32.totalorder %s78, %s80
    %p87 = scmp.eq.s32.totalorder %s14, 1
    %p88 = por %p86, %p87
    %p89 = scmp.ne.s32.totalorder %s80, %s81
    %p90 = scmp.eq.s32.totalorder %s14, 0
    %p91 = por %p89, %p90
    %p92 = scmp.ne.s32.totalorder %s80, %s81
    %p93 = scmp.eq.s32.totalorder %s15, 1
    %p94 = por %p92, %p93
    %p96 = scmp.ne.s32.totalorder %s81, %s95
    %p97 = scmp.eq.s32.totalorder %s15, 0
    %p98 = por %p96, %p97
    %s99 = ssub.s32 %s16, %s28
    %s100 = ssub.s32 %s17, %s24
    %s101 = sor.u32 %s99, %s100
    %p102 = scmp.eq.s32.totalorder %s101, 0
    %s104 = sadd.s32 %s103, 1
    %s105 = scalar_select %p102, %s103, %s104
    %p108 = pneg %p102
    %p109 = scmp.eq.s32.totalorder %s9, 1
    %p110 = por %p108, %p109
    %p111 = scmp.ne.s32.totalorder %s103, %s106
    %p112 = scmp.eq.s32.totalorder %s9, 0
    %p113 = por %p111, %p112
    %p114 = scmp.ne.s32.totalorder %s103, %s106
    %p115 = scmp.eq.s32.totalorder %s14, 1
    %p116 = por %p114, %p115
    %p117 = scmp.ne.s32.totalorder %s106, %s107
    %p118 = scmp.eq.s32.totalorder %s14, 0
    %p119 = por %p117, %p118
    %p120 = scmp.ne.s32.totalorder %s106, %s107
    %p121 = scmp.eq.s32.totalorder %s15, 1
    %p122 = por %p120, %p121
    %p124 = scmp.ne.s32.totalorder %s107, %s123
    %p125 = scmp.eq.s32.totalorder %s15, 0
    %p126 = por %p124, %p125
    %p127 = scmp.le.s32.totalorder 1, %s9
    %p128 = scmp.lt.s32.totalorder %s9, 3
    %p129 = pnand %p127, %p128
    %p130 = pneg %p129
    // Predicated region
    $region9: #{panet_forward.19} parent=5 // pred_check
      _
    $region10: #{panet_forward.19} parent=5 // pred_check_branch
      %132 = sbr.rel (%p129) target = $region12
    $region11: #{panet_forward.19} parent=5 // pred_region
      %s133 = ssub.s32 %s9, 1
      // Predicated region
      $region13: #{panet_forward.19} parent=11 // pred_check
        %p134 = pneg %p70
      $region14: #{panet_forward.19} parent=11 // pred_check_branch
        %136 = sbr.rel (%p134) target = $region16
      $region15: #{panet_forward.19} parent=11 // pred_region
        _
      $region16: #{panet_forward.19} parent=11 // pred_fallthru
        _
      // Predicated region
      $region17: #{panet_forward.19} parent=11 // pred_check
        %p137 = pneg %p91
      $region18: #{panet_forward.19} parent=11 // pred_check_branch
        %139 = sbr.rel (%p137) target = $region20
      $region19: #{panet_forward.19} parent=11 // pred_region
        _
      $region20: #{panet_forward.19} parent=11 // pred_fallthru
        _
    $region12: #{panet_forward.19} parent=5 // pred_fallthru
      _
    %p140 = scmp.lt.s32.totalorder %s9, 2
    // Predicated region
    $region21: #{panet_forward.19} parent=5 // pred_check
      %p141 = pneg %p140
    $region22: #{panet_forward.19} parent=5 // pred_check_branch
      %143 = sbr.rel (%p141) target = $region24
    $region23: #{panet_forward.19} parent=5 // pred_region
      // Predicated region
      $region25: #{panet_forward.19} parent=23 // pred_check
        %p144 = pneg %p43
      $region26: #{panet_forward.19} parent=23 // pred_check_branch
        %146 = sbr.rel (%p144) target = $region28
      $region27: #{panet_forward.19} parent=23 // pred_region
        %s147 = smul.u32 8, %s17
        %p148 = scmp.lt.s32.totalorder %s16, 1
        %s149 = scalar_select %p148, %s16, 1
        %p150 = scmp.lt.s32.totalorder %s147, 7
        %s151 = scalar_select %p150, %s147, 7
        %s152 = smul.addr %s149, 8
        %s153 = sadd.s32 %s151, %s152
        %s154 = smul.addr %s153, 8
        %s155 = scalar_lea.vmem %s0, %s154
        %s156 = smul.u32 8, %s17
      $region28: #{panet_forward.19} parent=23 // pred_fallthru
        _
    $region24: #{panet_forward.19} parent=5 // pred_fallthru
      _
    %p157 = scmp.le.s32.totalorder 1, %s9
    %p158 = scmp.lt.s32.totalorder %s9, 3
    %p159 = pnand %p157, %p158
    %p160 = pneg %p159
    // Predicated region
    $region29: #{panet_forward.19} parent=5 // pred_check
      _
    $region30: #{panet_forward.19} parent=5 // pred_check_branch
      %162 = sbr.rel (%p159) target = $region32
    $region31: #{panet_forward.19} parent=5 // pred_region
      %s163 = ssub.s32 %s9, 1
      %s164 = smul.u32 8, %s19
      %p165 = scmp.lt.s32.totalorder %s18, 1
      %s166 = scalar_select %p165, %s18, 1
      %p167 = scmp.lt.s32.totalorder %s164, 7
      %s168 = scalar_select %p167, %s164, 7
      %s169 = smul.addr %s166, 8
      %s170 = sadd.s32 %s168, %s169
      %s171 = smul.addr %s170, 8
      %s172 = scalar_lea.vmem %s0, %s171
      %p173 = pneg %p49
      %p174 = pneg %p46
      %p175 = pneg %p70
      %p176 = pneg %p67
      %p177 = pneg %p91
      %p178 = pneg %p88
      %p179 = pneg %p119
      %p180 = pneg %p116
      %s181 = smul.u32 8, %s19
      %p182 = scmp.lt.s32.totalorder %s18, 1
      %s183 = scalar_select %p182, %s18, 1
      %p184 = scmp.lt.s32.totalorder %s181, 7
      %s185 = scalar_select %p184, %s181, 7
      %s186 = smul.addr %s183, 8
      %s187 = sadd.s32 %s185, %s186
      %s188 = smul.addr %s187, 8
      %s189 = scalar_lea.vmem %s3, %s188
      %s190 = smul.u32 8, %s19
      %p191 = scmp.lt.s32.totalorder %s18, 1
      %s192 = scalar_select %p191, %s18, 1
      %p193 = scmp.lt.s32.totalorder %s190, 7
      %s194 = scalar_select %p193, %s190, 7
      %s195 = smul.addr %s192, 8
      %s196 = sadd.s32 %s194, %s195
      %s197 = smul.addr %s196, 8
      %s198 = scalar_lea.vmem %s0, %s197
      %s199 = smul.u32 8, %s19
      %s200 = smul.u32 8, %s19
      %p201 = scmp.lt.s32.totalorder %s18, 1
      %s202 = scalar_select %p201, %s18, 1
      %p203 = scmp.lt.s32.totalorder %s200, 7
      %s204 = scalar_select %p203, %s200, 7
      %s205 = smul.addr %s202, 8
      %s206 = sadd.s32 %s204, %s205
      %s207 = smul.addr %s206, 8
      %s208 = scalar_lea.vmem %s3, %s207
      %s209 = smul.u32 8, %s19
      %v210 = vld [vmem:[%s198] sm:$0xff]
      %v211 = vld [vmem:[%s198 + $0x8] sm:$0xff]
      %v212 = vld [vmem:[%s198 + $0x10] sm:$0xff]
      %v213 = vld [vmem:[%s198 + $0x18] sm:$0xff]
      %v214 = vld [vmem:[%s198 + $0x20] sm:$0xff]
      %v215 = vld [vmem:[%s198 + $0x28] sm:$0xff]
      %v216 = vld [vmem:[%s198 + $0x30] sm:$0xff]
      %v217 = vld [vmem:[%s198 + $0x38] sm:$0xff]
      %v218 = vld [vmem:[%s1] sm:$0xff]
      %v219 = vld [vmem:[%s2] sm:$0xff]
      %221 = vset.pattern.permute.xlu0 0
      %222 = vperm.xlu0 %221, %v219
      %v223 = vpop.permute.xlu0 %222
      %vm225 = vcmask 64512
      %v227 = vsel %vm225, %v218, 0
      %229 = vmatprep.subr.mxu0 %v211
      %230 = vmatpush1.msra.mxu0 %v210
      %231 = vmatprep.subr.mxu0 0.0
      %232 = vmatpush1.msra.mxu0 0.0
      %233 = vmatprep.subr.mxu0 0.0
      %234 = vmatpush1.msra.mxu0 0.0
      %235 = vmatprep.subr.mxu0 0.0
      %236 = vmatpush1.msra.mxu0 0.0
      %237 = vmatprep.subr.mxu0 0.0
      %238 = vmatpush1.msra.mxu0 0.0
      %239 = vmatprep.subr.mxu0 0.0
      %240 = vmatpush1.msra.mxu0 0.0
      %241 = vmatprep.subr.mxu0 0.0
      %242 = vmatpush1.msra.mxu0 0.0
      %243 = vmatprep.subr.mxu0 0.0
      %244 = vmatpush1.msra.mxu0 0.0
      %245 = vmatprep.subr.mxu0 0.0
      %246 = vmatpush1.msra.mxu0 0.0
      %247 = vmatprep.subr.mxu0 0.0
      %248 = vmatpush1.msra.mxu0 0.0
      %249 = vmatprep.subr.mxu0 0.0
      %250 = vmatpush1.msra.mxu0 0.0
      %251 = vmatprep.subr.mxu0 0.0
      %252 = vmatpush1.msra.mxu0 0.0
      %253 = vmatprep.subr.mxu0 0.0
      %254 = vmatpush1.msra.mxu0 0.0
      %255 = vmatprep.subr.mxu0 0.0
      %256 = vmatpush1.msra.mxu0 0.0
      %257 = vmatprep.subr.mxu0 0.0
      %258 = vmatpush1.msra.mxu0 0.0
      %259 = vmatprep.subr.mxu0 0.0
      %260 = vmatpush1.msra.mxu0 0.0
      %261 = vmatprep.subr.mxu0 0.0
      %262 = vmatpush1.msra.mxu0 0.0
      %263 = vmatprep.subr.mxu0 0.0
      %264 = vmatpush1.msra.mxu0 0.0
      %265 = vmatprep.subr.mxu0 0.0
      %266 = vmatpush1.msra.mxu0 0.0
      %267 = vmatprep.subr.mxu0 0.0
      %268 = vmatpush1.msra.mxu0 0.0
      %269 = vmatprep.subr.mxu0 0.0
      %270 = vmatpush1.msra.mxu0 0.0
      %271 = vmatprep.subr.mxu0 0.0
      %272 = vmatpush1.msra.mxu0 0.0
      %273 = vmatprep.subr.mxu0 0.0
      %274 = vmatpush1.msra.mxu0 0.0
      %275 = vmatprep.subr.mxu0 0.0
      %276 = vmatpush1.msra.mxu0 0.0
      %277 = vmatprep.subr.mxu0 0.0
      %278 = vmatpush1.msra.mxu0 0.0
      %279 = vmatprep.subr.mxu0 0.0
      %280 = vmatpush1.msra.mxu0 0.0
      %281 = vmatprep.subr.mxu0 0.0
      %282 = vmatpush1.msra.mxu0 0.0
      %283 = vmatprep.subr.mxu0 0.0
      %284 = vmatpush1.msra.mxu0 0.0
      %285 = vmatprep.subr.mxu0 0.0
      %286 = vmatpush1.msra.mxu0 0.0
      %287 = vmatprep.subr.mxu0 0.0
      %288 = vmatpush1.msra.mxu0 0.0
      %289 = vmatprep.subr.mxu0 0.0
      %290 = vmatpush1.msra.mxu0 0.0
      %291 = vmatprep.subr.mxu0 0.0
      %292 = vmatpush1.msra.mxu0 0.0
      %293 = vmatprep.mubr.f32.mxu0 0.0
      %294 = vmatmul.mubr.f32.gmra.mrb[0].mxu0 %v227
      %v295 = vpop.f32.mrb[0].mxu0
      %v296 = vadd.f32 %v223, %v295
      %v297 = vpop.f32.mrb[0].mxu0
      %v298 = vadd.f32 %v223, %v297
      %299 = vdwg.mxu0
      %300 = vmatprep.subr.mxu0 %v213
      %301 = vmatpush1.msra.mxu0 %v212
      %302 = vmatprep.subr.mxu0 0.0
      %303 = vmatpush1.msra.mxu0 0.0
      %304 = vmatprep.subr.mxu0 0.0
      %305 = vmatpush1.msra.mxu0 0.0
      %306 = vmatprep.subr.mxu0 0.0
      %307 = vmatpush1.msra.mxu0 0.0
      %308 = vmatprep.subr.mxu0 0.0
      %309 = vmatpush1.msra.mxu0 0.0
      %310 = vmatprep.subr.mxu0 0.0
      %311 = vmatpush1.msra.mxu0 0.0
      %312 = vmatprep.subr.mxu0 0.0
      %313 = vmatpush1.msra.mxu0 0.0
      %314 = vmatprep.subr.mxu0 0.0
      %315 = vmatpush1.msra.mxu0 0.0
      %316 = vmatprep.subr.mxu0 0.0
      %317 = vmatpush1.msra.mxu0 0.0
      %318 = vmatprep.subr.mxu0 0.0
      %319 = vmatpush1.msra.mxu0 0.0
      %320 = vmatprep.subr.mxu0 0.0
      %321 = vmatpush1.msra.mxu0 0.0
      %322 = vmatprep.subr.mxu0 0.0
      %323 = vmatpush1.msra.mxu0 0.0
      %324 = vmatprep.subr.mxu0 0.0
      %325 = vmatpush1.msra.mxu0 0.0
      %326 = vmatprep.subr.mxu0 0.0
      %327 = vmatpush1.msra.mxu0 0.0
      %328 = vmatprep.subr.mxu0 0.0
      %329 = vmatpush1.msra.mxu0 0.0
      %330 = vmatprep.subr.mxu0 0.0
      %331 = vmatpush1.msra.mxu0 0.0
      %332 = vmatprep.subr.mxu0 0.0
      %333 = vmatpush1.msra.mxu0 0.0
      %334 = vmatprep.subr.mxu0 0.0
      %335 = vmatpush1.msra.mxu0 0.0
      %336 = vmatprep.subr.mxu0 0.0
      %337 = vmatpush1.msra.mxu0 0.0
      %338 = vmatprep.subr.mxu0 0.0
      %339 = vmatpush1.msra.mxu0 0.0
      %340 = vmatprep.subr.mxu0 0.0
      %341 = vmatpush1.msra.mxu0 0.0
      %342 = vmatprep.subr.mxu0 0.0
      %343 = vmatpush1.msra.mxu0 0.0
      %344 = vmatprep.subr.mxu0 0.0
      %345 = vmatpush1.msra.mxu0 0.0
      %346 = vmatprep.subr.mxu0 0.0
      %347 = vmatpush1.msra.mxu0 0.0
      %348 = vmatprep.subr.mxu0 0.0
      %349 = vmatpush1.msra.mxu0 0.0
      %350 = vmatprep.subr.mxu0 0.0
      %351 = vmatpush1.msra.mxu0 0.0
      %352 = vmatprep.subr.mxu0 0.0
      %353 = vmatpush1.msra.mxu0 0.0
      %354 = vmatprep.subr.mxu0 0.0
      %355 = vmatpush1.msra.mxu0 0.0
      %356 = vmatprep.subr.mxu0 0.0
      %357 = vmatpush1.msra.mxu0 0.0
      %358 = vmatprep.subr.mxu0 0.0
      %359 = vmatpush1.msra.mxu0 0.0
      %360 = vmatprep.subr.mxu0 0.0
      %361 = vmatpush1.msra.mxu0 0.0
      %362 = vmatprep.subr.mxu0 0.0
      %363 = vmatpush1.msra.mxu0 0.0
      %364 = vmatprep.mubr.f32.mxu0 0.0
      %365 = vmatmul.mubr.f32.gmra.mrb[0].mxu0 %v227
      %v366 = vpop.f32.mrb[0].mxu0
      %v367 = vadd.f32 %v223, %v366
      %v368 = vpop.f32.mrb[0].mxu0
      %v369 = vadd.f32 %v223, %v368
      %370 = vdwg.mxu0
      %371 = vmatprep.subr.mxu0 %v215
      %372 = vmatpush1.msra.mxu0 %v214
      %373 = vmatprep.subr.mxu0 0.0
      %374 = vmatpush1.msra.mxu0 0.0
      %375 = vmatprep.subr.mxu0 0.0
      %376 = vmatpush1.msra.mxu0 0.0
      %377 = vmatprep.subr.mxu0 0.0
      %378 = vmatpush1.msra.mxu0 0.0
      %379 = vmatprep.subr.mxu0 0.0
      %380 = vmatpush1.msra.mxu0 0.0
      %381 = vmatprep.subr.mxu0 0.0
      %382 = vmatpush1.msra.mxu0 0.0
      %383 = vmatprep.subr.mxu0 0.0
      %384 = vmatpush1.msra.mxu0 0.0
      %385 = vmatprep.subr.mxu0 0.0
      %386 = vmatpush1.msra.mxu0 0.0
      %387 = vmatprep.subr.mxu0 0.0
      %388 = vmatpush1.msra.mxu0 0.0
      %389 = vmatprep.subr.mxu0 0.0
      %390 = vmatpush1.msra.mxu0 0.0
      %391 = vmatprep.subr.mxu0 0.0
      %392 = vmatpush1.msra.mxu0 0.0
      %393 = vmatprep.subr.mxu0 0.0
      %394 = vmatpush1.msra.mxu0 0.0
      %395 = vmatprep.subr.mxu0 0.0
      %396 = vmatpush1.msra.mxu0 0.0
      %397 = vmatprep.subr.mxu0 0.0
      %398 = vmatpush1.msra.mxu0 0.0
      %399 = vmatprep.subr.mxu0 0.0
      %400 = vmatpush1.msra.mxu0 0.0
      %401 = vmatprep.subr.mxu0 0.0
      %402 = vmatpush1.msra.mxu0 0.0
      %403 = vmatprep.subr.mxu0 0.0
      %404 = vmatpush1.msra.mxu0 0.0
      %405 = vmatprep.subr.mxu0 0.0
      %406 = vmatpush1.msra.mxu0 0.0
      %407 = vmatprep.subr.mxu0 0.0
      %408 = vmatpush1.msra.mxu0 0.0
      %409 = vmatprep.subr.mxu0 0.0
      %410 = vmatpush1.msra.mxu0 0.0
      %411 = vmatprep.subr.mxu0 0.0
      %412 = vmatpush1.msra.mxu0 0.0
      %413 = vmatprep.subr.mxu0 0.0
      %414 = vmatpush1.msra.mxu0 0.0
      %415 = vmatprep.subr.mxu0 0.0
      %416 = vmatpush1.msra.mxu0 0.0
      %417 = vmatprep.subr.mxu0 0.0
      %418 = vmatpush1.msra.mxu0 0.0
      %419 = vmatprep.subr.mxu0 0.0
      %420 = vmatpush1.msra.mxu0 0.0
      %421 = vmatprep.subr.mxu0 0.0
      %422 = vmatpush1.msra.mxu0 0.0
      %423 = vmatprep.subr.mxu0 0.0
      %424 = vmatpush1.msra.mxu0 0.0
      %425 = vmatprep.subr.mxu0 0.0
      %426 = vmatpush1.msra.mxu0 0.0
      %427 = vmatprep.subr.mxu0 0.0
      %428 = vmatpush1.msra.mxu0 0.0
      %429 = vmatprep.subr.mxu0 0.0
      %430 = vmatpush1.msra.mxu0 0.0
      %431 = vmatprep.subr.mxu0 0.0
      %432 = vmatpush1.msra.mxu0 0.0
      %433 = vmatprep.subr.mxu0 0.0
      %434 = vmatpush1.msra.mxu0 0.0
      %435 = vmatprep.mubr.f32.mxu0 0.0
      %436 = vmatmul.mubr.f32.gmra.mrb[0].mxu0 %v227
      %v437 = vpop.f32.mrb[0].mxu0
      %v438 = vadd.f32 %v223, %v437
      %v439 = vpop.f32.mrb[0].mxu0
      %v440 = vadd.f32 %v223, %v439
      %441 = vdwg.mxu0
      %442 = vmatprep.subr.mxu0 %v217
      %443 = vmatpush1.msra.mxu0 %v216
      %444 = vmatprep.subr.mxu0 0.0
      %445 = vmatpush1.msra.mxu0 0.0
      %446 = vmatprep.subr.mxu0 0.0
      %447 = vmatpush1.msra.mxu0 0.0
      %448 = vmatprep.subr.mxu0 0.0
      %449 = vmatpush1.msra.mxu0 0.0
      %450 = vmatprep.subr.mxu0 0.0
      %451 = vmatpush1.msra.mxu0 0.0
      %452 = vmatprep.subr.mxu0 0.0
      %453 = vmatpush1.msra.mxu0 0.0
      %454 = vmatprep.subr.mxu0 0.0
      %455 = vmatpush1.msra.mxu0 0.0
      %456 = vmatprep.subr.mxu0 0.0
      %457 = vmatpush1.msra.mxu0 0.0
      %458 = vmatprep.subr.mxu0 0.0
      %459 = vmatpush1.msra.mxu0 0.0
      %460 = vmatprep.subr.mxu0 0.0
      %461 = vmatpush1.msra.mxu0 0.0
      %462 = vmatprep.subr.mxu0 0.0
      %463 = vmatpush1.msra.mxu0 0.0
      %464 = vmatprep.subr.mxu0 0.0
      %465 = vmatpush1.msra.mxu0 0.0
      %466 = vmatprep.subr.mxu0 0.0
      %467 = vmatpush1.msra.mxu0 0.0
      %468 = vmatprep.subr.mxu0 0.0
      %469 = vmatpush1.msra.mxu0 0.0
      %470 = vmatprep.subr.mxu0 0.0
      %471 = vmatpush1.msra.mxu0 0.0
      %472 = vmatprep.subr.mxu0 0.0
      %473 = vmatpush1.msra.mxu0 0.0
      %474 = vmatprep.subr.mxu0 0.0
      %475 = vmatpush1.msra.mxu0 0.0
      %476 = vmatprep.subr.mxu0 0.0
      %477 = vmatpush1.msra.mxu0 0.0
      %478 = vmatprep.subr.mxu0 0.0
      %479 = vmatpush1.msra.mxu0 0.0
      %480 = vmatprep.subr.mxu0 0.0
      %481 = vmatpush1.msra.mxu0 0.0
      %482 = vmatprep.subr.mxu0 0.0
      %483 = vmatpush1.msra.mxu0 0.0
      %484 = vmatprep.subr.mxu0 0.0
      %485 = vmatpush1.msra.mxu0 0.0
      %486 = vmatprep.subr.mxu0 0.0
      %487 = vmatpush1.msra.mxu0 0.0
      %488 = vmatprep.subr.mxu0 0.0
      %489 = vmatpush1.msra.mxu0 0.0
      %490 = vmatprep.subr.mxu0 0.0
      %491 = vmatpush1.msra.mxu0 0.0
      %492 = vmatprep.subr.mxu0 0.0
      %493 = vmatpush1.msra.mxu0 0.0
      %494 = vmatprep.subr.mxu0 0.0
      %495 = vmatpush1.msra.mxu0 0.0
      %496 = vmatprep.subr.mxu0 0.0
      %497 = vmatpush1.msra.mxu0 0.0
      %498 = vmatprep.subr.mxu0 0.0
      %499 = vmatpush1.msra.mxu0 0.0
      %500 = vmatprep.subr.mxu0 0.0
      %501 = vmatpush1.msra.mxu0 0.0
      %502 = vmatprep.subr.mxu0 0.0
      %503 = vmatpush1.msra.mxu0 0.0
      %504 = vmatprep.subr.mxu0 0.0
      %505 = vmatpush1.msra.mxu0 0.0
      %506 = vmatprep.mubr.f32.mxu0 0.0
      %507 = vmatmul.mubr.f32.gmra.mrb[0].mxu0 %v227
      %v508 = vpop.f32.mrb[0].mxu0
      %v509 = vadd.f32 %v223, %v508
      %v510 = vpop.f32.mrb[0].mxu0
      %v511 = vadd.f32 %v223, %v510
      %512 = vdwg.mxu0
      %v513 = vmax.f32 %v296, 0.0
      %v514 = vmax.f32 %v298, 0.0
      %v515 = vmax.f32 %v367, 0.0
      %v516 = vmax.f32 %v369, 0.0
      %v517 = vmax.f32 %v438, 0.0
      %v518 = vmax.f32 %v440, 0.0
      %v519 = vmax.f32 %v509, 0.0
      %v520 = vmax.f32 %v511, 0.0
      %521 = vst [vmem:[%s208] sm:$0xff] %v513
      %522 = vst [vmem:[%s208 + $0x8] sm:$0xff] %v514
      %523 = vst [vmem:[%s208 + $0x10] sm:$0xff] %v515
      %524 = vst [vmem:[%s208 + $0x18] sm:$0xff] %v516
      %525 = vst [vmem:[%s208 + $0x20] sm:$0xff] %v517
      %526 = vst [vmem:[%s208 + $0x28] sm:$0xff] %v518
      %527 = vst [vmem:[%s208 + $0x30] sm:$0xff] %v519
      %528 = vst [vmem:[%s208 + $0x38] sm:$0xff] %v520
      %s529 = smul.u32 8, %s19
      %p530 = scmp.lt.s32.totalorder %s18, 1
      %s531 = scalar_select %p530, %s18, 1
      %p532 = scmp.lt.s32.totalorder %s529, 7
      %s533 = scalar_select %p532, %s529, 7
      %s534 = smul.addr %s531, 8
      %s535 = sadd.s32 %s533, %s534
      %s536 = smul.addr %s535, 8
      %s537 = scalar_lea.vmem %s3, %s536
      // Predicated region
      $region33: #{panet_forward.19} parent=31 // pred_check
        %p538 = pneg %p116
      $region34: #{panet_forward.19} parent=31 // pred_check_branch
        %540 = sbr.rel (%p538) target = $region36
      $region35: #{panet_forward.19} parent=31 // pred_region
        %s541 = smul.u32 8, %s19
      $region36: #{panet_forward.19} parent=31 // pred_fallthru
        _
    $region32: #{panet_forward.19} parent=5 // pred_fallthru
      _
    %p542 = scmp.le.s32.totalorder 2, %s9
    // Predicated region
    $region37: #{panet_forward.19} parent=5 // pred_check
      %p543 = pneg %p542
    $region38: #{panet_forward.19} parent=5 // pred_check_branch
      %545 = sbr.rel (%p543) target = $region40
    $region39: #{panet_forward.19} parent=5 // pred_region
      %s546 = ssub.s32 %s9, 2
      // Predicated region
      $region41: #{panet_forward.19} parent=39 // pred_check
        %p547 = pneg %p122
      $region42: #{panet_forward.19} parent=39 // pred_check_branch
        %549 = sbr.rel (%p547) target = $region44
      $region43: #{panet_forward.19} parent=39 // pred_region
        %s550 = smul.u32 8, %s21
        %p551 = scmp.lt.s32.totalorder %s20, 1
        %s552 = scalar_select %p551, %s20, 1
        %p553 = scmp.lt.s32.totalorder %s550, 7
        %s554 = scalar_select %p553, %s550, 7
        %s555 = smul.addr %s552, 8
        %s556 = sadd.s32 %s554, %s555
        %s557 = smul.addr %s556, 8
        %s558 = scalar_lea.vmem %s3, %s557
      $region44: #{panet_forward.19} parent=39 // pred_fallthru
        _
    $region40: #{panet_forward.19} parent=5 // pred_fallthru
      _
  $region6: #{panet_forward.19} parent=0 // loop_footer
    %s13 = sadd.s32 1, %s9
  $region7: #{panet_forward.19} parent=0 // loop_footer_branch
    %8 = sbr.rel target = $region3
  $region8: #{panet_forward.19} parent=0 // loop_exit
    _

// kernel: panet_forward.11
$region0: #{panet_forward.11}
  #allocation0 [shape = 'u32[]', space=smem, size = 0x4, offset = 0x4, fixed_abs, tag = 'smem constant byte address 0x4 - core index']
  #allocation1 [shape = 'u32[144,128]{1,0:T(1,128)}', space=vmem, size = 0x12000, scoped, tag = 'internal scratch']
  %s0 = inlined_call_operand.vmem [shape: f32[2,4,256], index: 0, kind: input, shape index: {}]
  %s1 = inlined_call_operand.vmem [shape: f32[8,4], index: 1, kind: input, shape index: {}]
  %s2 = inlined_call_operand.vmem [shape: f32[8,1], index: 2, kind: input, shape index: {}]
  %s3 = inlined_call_operand.vmem [shape: f32[2,8,256], index: 3, kind: output, shape index: {}]
  %s4 = sld [smem:[#allocation0]]
  $region45: #{panet_forward.11} parent=0
    _
  %s6 = ssub.s32 1, %s4
  %s7 = scalar_select 0, %s6, %s4
  loop: start=0, step=1, limit=4
  $region2: #{panet_forward.11} parent=0 // loop_pre_header
    _
  $region3: #{panet_forward.11} parent=0 // loop_header
    %s9 = sphi 0, %s13
    %p10 = scmp.ge.s32.totalorder %s9, 4
    %s16 = sphi 0, %s28
    %s17 = sphi 0, %s24
    %s18 = sphi 0, %s16
    %s19 = sphi 0, %s17
    %s20 = sphi 0, %s18
    %s21 = sphi 0, %s19
    %s33 = sphi 0, %s35
    %s36 = sphi 0, %s33
    %s37 = sphi 0, %s36
    %s53 = sphi 0, %s37
    %s57 = sphi 0, %s57
    %s59 = sphi 0, %s57
    %s60 = sphi 0, %s59
    %s74 = sphi 0, %s60
    %s78 = sphi 0, %s78
    %s80 = sphi 0, %s78
    %s81 = sphi 0, %s80
    %s95 = sphi 0, %s81
    %s103 = sphi 0, %s105
    %s106 = sphi 0, %s103
    %s107 = sphi 0, %s106
    %s123 = sphi 0, %s107
  $region4: #{panet_forward.11} parent=0 // loop_header_branch
    %12 = sbr.rel (%p10) target = $region8
  $region5: #{panet_forward.11} parent=0 // loop_body
    %s14 = ssub.s32 %s9, 1
    %s15 = ssub.s32 %s9, 2
    %s22 = sadd.s32 1, %s17
    %p23 = scmp.ge.s32.totalorder %s22, 1
    %s24 = scalar_select %p23, 0, %s22
    %s25 = sadd.s32 1, %s16
    %s26 = scalar_select %p23, %s25, %s16
    %p27 = scmp.ge.s32.totalorder %s26, 2
    %s28 = scalar_select %p27, 0, %s26
    %s29 = ssub.s32 %s16, %s28
    %s30 = ssub.s32 %s17, %s24
    %s31 = sor.u32 %s29, %s30
    %p32 = scmp.eq.s32.totalorder %s31, 0
    %s34 = sadd.s32 %s33, 1
    %s35 = scalar_select %p32, %s33, %s34
    %p38 = pneg %p32
    %p39 = scmp.eq.s32.totalorder %s9, 1
    %p40 = por %p38, %p39
    %p41 = scmp.ne.s32.totalorder %s33, %s36
    %p42 = scmp.eq.s32.totalorder %s9, 0
    %p43 = por %p41, %p42
    %p44 = scmp.ne.s32.totalorder %s33, %s36
    %p45 = scmp.eq.s32.totalorder %s14, 1
    %p46 = por %p44, %p45
    %p47 = scmp.ne.s32.totalorder %s36, %s37
    %p48 = scmp.eq.s32.totalorder %s14, 0
    %p49 = por %p47, %p48
    %p50 = scmp.ne.s32.totalorder %s36, %s37
    %p51 = scmp.eq.s32.totalorder %s15, 1
    %p52 = por %p50, %p51
    %p54 = scmp.ne.s32.totalorder %s37, %s53
    %p55 = scmp.eq.s32.totalorder %s15, 0
    %p56 = por %p54, %p55
    %s58 = sadd.s32 %s57, 1
    %p61 = scmp.eq.s32.totalorder %s9, 1
    %p62 = scmp.ne.s32.totalorder %s57, %s59
    %p63 = scmp.eq.s32.totalorder %s9, 0
    %p64 = por %p62, %p63
    %p65 = scmp.ne.s32.totalorder %s57, %s59
    %p66 = scmp.eq.s32.totalorder %s14, 1
    %p67 = por %p65, %p66
    %p68 = scmp.ne.s32.totalorder %s59, %s60
    %p69 = scmp.eq.s32.totalorder %s14, 0
    %p70 = por %p68, %p69
    %p71 = scmp.ne.s32.totalorder %s59, %s60
    %p72 = scmp.eq.s32.totalorder %s15, 1
    %p73 = por %p71, %p72
    %p75 = scmp.ne.s32.totalorder %s60, %s74
    %p76 = scmp.eq.s32.totalorder %s15, 0
    %p77 = por %p75, %p76
    %s79 = sadd.s32 %s78, 1
    %p82 = scmp.eq.s32.totalorder %s9, 1
    %p83 = scmp.ne.s32.totalorder %s78, %s80
    %p84 = scmp.eq.s32.totalorder %s9, 0
    %p85 = por %p83, %p84
    %p86 = scmp.ne.s32.totalorder %s78, %s80
    %p87 = scmp.eq.s32.totalorder %s14, 1
    %p88 = por %p86, %p87
    %p89 = scmp.ne.s32.totalorder %s80, %s81
    %p90 = scmp.eq.s32.totalorder %s14, 0
    %p91 = por %p89, %p90
    %p92 = scmp.ne.s32.totalorder %s80, %s81
    %p93 = scmp.eq.s32.totalorder %s15, 1
    %p94 = por %p92, %p93
    %p96 = scmp.ne.s32.totalorder %s81, %s95
    %p97 = scmp.eq.s32.totalorder %s15, 0
    %p98 = por %p96, %p97
    %s99 = ssub.s32 %s16, %s28
    %s100 = ssub.s32 %s17, %s24
    %s101 = sor.u32 %s99, %s100
    %p102 = scmp.eq.s32.totalorder %s101, 0
    %s104 = sadd.s32 %s103, 1
    %s105 = scalar_select %p102, %s103, %s104
    %p108 = pneg %p102
    %p109 = scmp.eq.s32.totalorder %s9, 1
    %p110 = por %p108, %p109
    %p111 = scmp.ne.s32.totalorder %s103, %s106
    %p112 = scmp.eq.s32.totalorder %s9, 0
    %p113 = por %p111, %p112
    %p114 = scmp.ne.s32.totalorder %s103, %s106
    %p115 = scmp.eq.s32.totalorder %s14, 1
    %p116 = por %p114, %p115
    %p117 = scmp.ne.s32.totalorder %s106, %s107
    %p118 = scmp.eq.s32.totalorder %s14, 0
    %p119 = por %p117, %p118
    %p120 = scmp.ne.s32.totalorder %s106, %s107
    %p121 = scmp.eq.s32.totalorder %s15, 1
    %p122 = por %p120, %p121
    %p124 = scmp.ne.s32.totalorder %s107, %s123
    %p125 = scmp.eq.s32.totalorder %s15, 0
    %p126 = por %p124, %p125
    %p127 = scmp.le.s32.totalorder 1, %s9
    %p128 = scmp.lt.s32.totalorder %s9, 3
    %p129 = pnand %p127, %p128
    %p130 = pneg %p129
    // Predicated region
    $region9: #{panet_forward.11} parent=5 // pred_check
      _
    $region10: #{panet_forward.11} parent=5 // pred_check_branch
      %132 = sbr.rel (%p129) target = $region12
    $region11: #{panet_forward.11} parent=5 // pred_region
      %s133 = ssub.s32 %s9, 1
      // Predicated region
      $region13: #{panet_forward.11} parent=11 // pred_check
        %p134 = pneg %p70
      $region14: #{panet_forward.11} parent=11 // pred_check_branch
        %136 = sbr.rel (%p134) target = $region16
      $region15: #{panet_forward.11} parent=11 // pred_region
        _
      $region16: #{panet_forward.11} parent=11 // pred_fallthru
        _
      // Predicated region
      $region17: #{panet_forward.11} parent=11 // pred_check
        %p137 = pneg %p91
      $region18: #{panet_forward.11} parent=11 // pred_check_branch
        %139 = sbr.rel (%p137) target = $region20
      $region19: #{panet_forward.11} parent=11 // pred_region
        _
      $region20: #{panet_forward.11} parent=11 // pred_fallthru
        _
    $region12: #{panet_forward.11} parent=5 // pred_fallthru
      _
    %p140 = scmp.lt.s32.totalorder %s9, 2
    // Predicated region
    $region21: #{panet_forward.11} parent=5 // pred_check
      %p141 = pneg %p140
    $region22: #{panet_forward.11} parent=5 // pred_check_branch
      %143 = sbr.rel (%p141) target = $region24
    $region23: #{panet_forward.11} parent=5 // pred_region
      // Predicated region
      $region25: #{panet_forward.11} parent=23 // pred_check
        %p144 = pneg %p43
      $region26: #{panet_forward.11} parent=23 // pred_check_branch
        %146 = sbr.rel (%p144) target = $region28
      $region27: #{panet_forward.11} parent=23 // pred_region
        %s147 = smul.u32 2, %s17
        %p148 = scmp.lt.s32.totalorder %s16, 1
        %s149 = scalar_select %p148, %s16, 1
        %p150 = scmp.lt.s32.totalorder %s147, 1
        %s151 = scalar_select %p150, %s147, 1
        %s152 = smul.addr %s149, 2
        %s153 = sadd.s32 %s151, %s152
        %s154 = smul.addr %s153, 4
        %s155 = scalar_lea.vmem %s0, %s154
        %s156 = smul.u32 2, %s17
      $region28: #{panet_forward.11} parent=23 // pred_fallthru
        _
    $region24: #{panet_forward.11} parent=5 // pred_fallthru
      _
    %p157 = scmp.le.s32.totalorder 1, %s9
    %p158 = scmp.lt.s32.totalorder %s9, 3
    %p159 = pnand %p157, %p158
    %p160 = pneg %p159
    // Predicated region
    $region29: #{panet_forward.11} parent=5 // pred_check
      _
    $region30: #{panet_forward.11} parent=5 // pred_check_branch
      %162 = sbr.rel (%p159) target = $region32
    $region31: #{panet_forward.11} parent=5 // pred_region
      %s163 = ssub.s32 %s9, 1
      %s164 = smul.u32 2, %s19
      %p165 = scmp.lt.s32.totalorder %s18, 1
      %s166 = scalar_select %p165, %s18, 1
      %p167 = scmp.lt.s32.totalorder %s164, 1
      %s168 = scalar_select %p167, %s164, 1
      %s169 = smul.addr %s166, 2
      %s170 = sadd.s32 %s168, %s169
      %s171 = smul.addr %s170, 4
      %s172 = scalar_lea.vmem %s0, %s171
      %p173 = pneg %p49
      %p174 = pneg %p46
      %p175 = pneg %p70
      %p176 = pneg %p67
      %p177 = pneg %p91
      %p178 = pneg %p88
      %p179 = pneg %p119
      %p180 = pneg %p116
      %s181 = smul.u32 2, %s19
      %p182 = scmp.lt.s32.totalorder %s18, 1
      %s183 = scalar_select %p182, %s18, 1
      %p184 = scmp.lt.s32.totalorder %s181, 1
      %s185 = scalar_select %p184, %s181, 1
      %s186 = smul.addr %s183, 2
      %s187 = sadd.s32 %s185, %s186
      %s188 = smul.addr %s187, 8
      %s189 = scalar_lea.vmem %s3, %s188
      %s190 = smul.u32 2, %s19
      %p191 = scmp.lt.s32.totalorder %s18, 1
      %s192 = scalar_select %p191, %s18, 1
      %p193 = scmp.lt.s32.totalorder %s190, 1
      %s194 = scalar_select %p193, %s190, 1
      %s195 = smul.addr %s192, 2
      %s196 = sadd.s32 %s194, %s195
      %s197 = smul.addr %s196, 4
      %s198 = scalar_lea.vmem %s0, %s197
      %s199 = smul.u32 2, %s19
      %s200 = smul.u32 2, %s19
      %p201 = scmp.lt.s32.totalorder %s18, 1
      %s202 = scalar_select %p201, %s18, 1
      %p203 = scmp.lt.s32.totalorder %s200, 1
      %s204 = scalar_select %p203, %s200, 1
      %s205 = smul.addr %s202, 2
      %s206 = sadd.s32 %s204, %s205
      %s207 = smul.addr %s206, 8
      %s208 = scalar_lea.vmem %s3, %s207
      %s209 = smul.u32 2, %s19
      %v210 = vld [vmem:[%s198] sm:$0xff]
      %v211 = vld [vmem:[%s1] sm:$0xff]
      %v212 = vld [vmem:[%s2] sm:$0xff]
      %214 = vset.pattern.permute.xlu0 0
      %215 = vperm.xlu0 %214, %v212
      %v216 = vpop.permute.xlu0 %215
      %v219 = vcombine.high %v210, %v210
      %vm220 = vcmask 31744
      %v222 = vsel %vm220, %v211, 0
      %vm224 = vcmask 1043456
      %v225 = vsel %vm224, %v210, 0
      %v227 = vsel %vm224, %v219, 0
      %229 = vmatprep.subr.mxu0 %v227
      %230 = vmatpush1.msra.mxu0 %v225
      %231 = vmatprep.subr.mxu0 0.0
      %232 = vmatpush1.msra.mxu0 0.0
      %233 = vmatprep.subr.mxu0 0.0
      %234 = vmatpush1.msra.mxu0 0.0
      %235 = vmatprep.subr.mxu0 0.0
      %236 = vmatpush1.msra.mxu0 0.0
      %237 = vmatprep.subr.mxu0 0.0
      %238 = vmatpush1.msra.mxu0 0.0
      %239 = vmatprep.subr.mxu0 0.0
      %240 = vmatpush1.msra.mxu0 0.0
      %241 = vmatprep.subr.mxu0 0.0
      %242 = vmatpush1.msra.mxu0 0.0
      %243 = vmatprep.subr.mxu0 0.0
      %244 = vmatpush1.msra.mxu0 0.0
      %245 = vmatprep.subr.mxu0 0.0
      %246 = vmatpush1.msra.mxu0 0.0
      %247 = vmatprep.subr.mxu0 0.0
      %248 = vmatpush1.msra.mxu0 0.0
      %249 = vmatprep.subr.mxu0 0.0
      %250 = vmatpush1.msra.mxu0 0.0
      %251 = vmatprep.subr.mxu0 0.0
      %252 = vmatpush1.msra.mxu0 0.0
      %253 = vmatprep.subr.mxu0 0.0
      %254 = vmatpush1.msra.mxu0 0.0
      %255 = vmatprep.subr.mxu0 0.0
      %256 = vmatpush1.msra.mxu0 0.0
      %257 = vmatprep.subr.mxu0 0.0
      %258 = vmatpush1.msra.mxu0 0.0
      %259 = vmatprep.subr.mxu0 0.0
      %260 = vmatpush1.msra.mxu0 0.0
      %261 = vmatprep.subr.mxu0 0.0
      %262 = vmatpush1.msra.mxu0 0.0
      %263 = vmatprep.subr.mxu0 0.0
      %264 = vmatpush1.msra.mxu0 0.0
      %265 = vmatprep.subr.mxu0 0.0
      %266 = vmatpush1.msra.mxu0 0.0
      %267 = vmatprep.subr.mxu0 0.0
      %268 = vmatpush1.msra.mxu0 0.0
      %269 = vmatprep.subr.mxu0 0.0
      %270 = vmatpush1.msra.mxu0 0.0
      %271 = vmatprep.subr.mxu0 0.0
      %272 = vmatpush1.msra.mxu0 0.0
      %273 = vmatprep.subr.mxu0 0.0
      %274 = vmatpush1.msra.mxu0 0.0
      %275 = vmatprep.subr.mxu0 0.0
      %276 = vmatpush1.msra.mxu0 0.0
      %277 = vmatprep.subr.mxu0 0.0
      %278 = vmatpush1.msra.mxu0 0.0
      %279 = vmatprep.subr.mxu0 0.0
      %280 = vmatpush1.msra.mxu0 0.0
      %281 = vmatprep.subr.mxu0 0.0
      %282 = vmatpush1.msra.mxu0 0.0
      %283 = vmatprep.subr.mxu0 0.0
      %284 = vmatpush1.msra.mxu0 0.0
      %285 = vmatprep.subr.mxu0 0.0
      %286 = vmatpush1.msra.mxu0 0.0
      %287 = vmatprep.subr.mxu0 0.0
      %288 = vmatpush1.msra.mxu0 0.0
      %289 = vmatprep.subr.mxu0 0.0
      %290 = vmatpush1.msra.mxu0 0.0
      %291 = vmatprep.subr.mxu0 0.0
      %292 = vmatpush1.msra.mxu0 0.0
      %293 = vmatprep.mubr.f32.mxu0 0.0
      %294 = vmatmul.mubr.f32.gmra.mrb[0].mxu0 %v222
      %v295 = vpop.f32.mrb[0].mxu0
      %v296 = vadd.f32 %v216, %v295
      %v297 = vpop.f32.mrb[0].mxu0
      %v298 = vadd.f32 %v216, %v297
      %299 = vdwg.mxu0
      %v300 = vmax.f32 %v296, 0.0
      %v301 = vmax.f32 %v298, 0.0
      %302 = vst [vmem:[%s208] sm:$0xff] %v300
      %303 = vst [vmem:[%s208 + $0x8] sm:$0xff] %v301
      %s304 = smul.u32 2, %s19
      %p305 = scmp.lt.s32.totalorder %s18, 1
      %s306 = scalar_select %p305, %s18, 1
      %p307 = scmp.lt.s32.totalorder %s304, 1
      %s308 = scalar_select %p307, %s304, 1
      %s309 = smul.addr %s306, 2
      %s310 = sadd.s32 %s308, %s309
      %s311 = smul.addr %s310, 8
      %s312 = scalar_lea.vmem %s3, %s311
      // Predicated region
      $region33: #{panet_forward.11} parent=31 // pred_check
        %p313 = pneg %p116
      $region34: #{panet_forward.11} parent=31 // pred_check_branch
        %315 = sbr.rel (%p313) target = $region36
      $region35: #{panet_forward.11} parent=31 // pred_region
        %s316 = smul.u32 2, %s19
      $region36: #{panet_forward.11} parent=31 // pred_fallthru
        _
    $region32: #{panet_forward.11} parent=5 // pred_fallthru
      _
    %p317 = scmp.le.s32.totalorder 2, %s9
    // Predicated region
    $region37: #{panet_forward.11} parent=5 // pred_check
      %p318 = pneg %p317
    $region38: #{panet_forward.11} parent=5 // pred_check_branch
      %320 = sbr.rel (%p318) target = $region40
    $region39: #{panet_forward.11} parent=5 // pred_region
      %s321 = ssub.s32 %s9, 2
      // Predicated region
      $region41: #{panet_forward.11} parent=39 // pred_check
        %p322 = pneg %p122
      $region42: #{panet_forward.11} parent=39 // pred_check_branch
        %324 = sbr.rel (%p322) target = $region44
      $region43: #{panet_forward.11} parent=39 // pred_region
        %s325 = smul.u32 2, %s21
        %p326 = scmp.lt.s32.totalorder %s20, 1
        %s327 = scalar_select %p326, %s20, 1
        %p328 = scmp.lt.s32.totalorder %s325, 1
        %s329 = scalar_select %p328, %s325, 1
        %s330 = smul.addr %s327, 2
        %s331 = sadd.s32 %s329, %s330
        %s332 = smul.addr %s331, 8
        %s333 = scalar_lea.vmem %s3, %s332
      $region44: #{panet_forward.11} parent=39 // pred_fallthru
        _
    $region40: #{panet_forward.11} parent=5 // pred_fallthru
      _
  $region6: #{panet_forward.11} parent=0 // loop_footer
    %s13 = sadd.s32 1, %s9
  $region7: #{panet_forward.11} parent=0 // loop_footer_branch
    %8 = sbr.rel target = $region3
  $region8: #{panet_forward.11} parent=0 // loop_exit
    _

// kernel: panet_forward.20
$region0: #{panet_forward.20}
  #allocation0 [shape = 'u32[]', space=smem, size = 0x4, offset = 0x4, fixed_abs, tag = 'smem constant byte address 0x4 - core index']
  #allocation1 [shape = 'u32[144,128]{1,0:T(1,128)}', space=vmem, size = 0x12000, scoped, tag = 'internal scratch']
  %s0 = inlined_call_operand.vmem [shape: f32[2,128,64], index: 0, kind: input, shape index: {}]
  %s1 = inlined_call_operand.vmem [shape: f32[2,128,16], index: 1, kind: input, shape index: {}]
  %s2 = inlined_call_operand.vmem [shape: f32[32,16], index: 2, kind: input, shape index: {}]
  %s3 = inlined_call_operand.vmem [shape: f32[2,128,16], index: 3, kind: output, shape index: {}]
  %s4 = sld [smem:[#allocation0]]
  $region45: #{panet_forward.20} parent=0
    _
  %s6 = ssub.s32 1, %s4
  %s7 = scalar_select 0, %s6, %s4
  loop: start=0, step=1, limit=6
  $region2: #{panet_forward.20} parent=0 // loop_pre_header
    _
  $region3: #{panet_forward.20} parent=0 // loop_header
    %s9 = sphi 0, %s13
    %p10 = scmp.ge.s32.totalorder %s9, 6
    %s16 = sphi 0, %s28
    %s17 = sphi 0, %s24
    %s18 = sphi 0, %s16
    %s19 = sphi 0, %s17
    %s20 = sphi 0, %s18
    %s21 = sphi 0, %s19
    %s33 = sphi 0, %s35
    %s36 = sphi 0, %s33
    %s37 = sphi 0, %s36
    %s53 = sphi 0, %s37
    %s61 = sphi 0, %s63
    %s64 = sphi 0, %s61
    %s65 = sphi 0, %s64
    %s81 = sphi 0, %s65
    %s85 = sphi 0, %s85
    %s87 = sphi 0, %s85
    %s88 = sphi 0, %s87
    %s102 = sphi 0, %s88
    %s110 = sphi 0, %s112
    %s113 = sphi 0, %s110
    %s114 = sphi 0, %s113
    %s130 = sphi 0, %s114
  $region4: #{panet_forward.20} parent=0 // loop_header_branch
    %12 = sbr.rel (%p10) target = $region8
  $region5: #{panet_forward.20} parent=0 // loop_body
    %s14 = ssub.s32 %s9, 1
    %s15 = ssub.s32 %s9, 2
    %s22 = sadd.s32 1, %s17
    %p23 = scmp.ge.s32.totalorder %s22, 2
    %s24 = scalar_select %p23, 0, %s22
    %s25 = sadd.s32 1, %s16
    %s26 = scalar_select %p23, %s25, %s16
    %p27 = scmp.ge.s32.totalorder %s26, 2
    %s28 = scalar_select %p27, 0, %s26
    %s29 = ssub.s32 %s16, %s28
    %s30 = ssub.s32 %s17, %s24
    %s31 = sor.u32 %s29, %s30
    %p32 = scmp.eq.s32.totalorder %s31, 0
    %s34 = sadd.s32 %s33, 1
    %s35 = scalar_select %p32, %s33, %s34
    %p38 = pneg %p32
    %p39 = scmp.eq.s32.totalorder %s9, 3
    %p40 = por %p38, %p39
    %p41 = scmp.ne.s32.totalorder %s33, %s36
    %p42 = scmp.eq.s32.totalorder %s9, 0
    %p43 = por %p41, %p42
    %p44 = scmp.ne.s32.totalorder %s33, %s36
    %p45 = scmp.eq.s32.totalorder %s14, 3
    %p46 = por %p44, %p45
    %p47 = scmp.ne.s32.totalorder %s36, %s37
    %p48 = scmp.eq.s32.totalorder %s14, 0
    %p49 = por %p47, %p48
    %p50 = scmp.ne.s32.totalorder %s36, %s37
    %p51 = scmp.eq.s32.totalorder %s15, 3
    %p52 = por %p50, %p51
    %p54 = scmp.ne.s32.totalorder %s37, %s53
    %p55 = scmp.eq.s32.totalorder %s15, 0
    %p56 = por %p54, %p55
    %s57 = ssub.s32 %s16, %s28
    %s58 = ssub.s32 %s17, %s24
    %s59 = sor.u32 %s57, %s58
    %p60 = scmp.eq.s32.totalorder %s59, 0
    %s62 = sadd.s32 %s61, 1
    %s63 = scalar_select %p60, %s61, %s62
    %p66 = pneg %p60
    %p67 = scmp.eq.s32.totalorder %s9, 3
    %p68 = por %p66, %p67
    %p69 = scmp.ne.s32.totalorder %s61, %s64
    %p70 = scmp.eq.s32.totalorder %s9, 0
    %p71 = por %p69, %p70
    %p72 = scmp.ne.s32.totalorder %s61, %s64
    %p73 = scmp.eq.s32.totalorder %s14, 3
    %p74 = por %p72, %p73
    %p75 = scmp.ne.s32.totalorder %s64, %s65
    %p76 = scmp.eq.s32.totalorder %s14, 0
    %p77 = por %p75, %p76
    %p78 = scmp.ne.s32.totalorder %s64, %s65
    %p79 = scmp.eq.s32.totalorder %s15, 3
    %p80 = por %p78, %p79
    %p82 = scmp.ne.s32.totalorder %s65, %s81
    %p83 = scmp.eq.s32.totalorder %s15, 0
    %p84 = por %p82, %p83
    %s86 = sadd.s32 %s85, 1
    %p89 = scmp.eq.s32.totalorder %s9, 3
    %p90 = scmp.ne.s32.totalorder %s85, %s87
    %p91 = scmp.eq.s32.totalorder %s9, 0
    %p92 = por %p90, %p91
    %p93 = scmp.ne.s32.totalorder %s85, %s87
    %p94 = scmp.eq.s32.totalorder %s14, 3
    %p95 = por %p93, %p94
    %p96 = scmp.ne.s32.totalorder %s87, %s88
    %p97 = scmp.eq.s32.totalorder %s14, 0
    %p98 = por %p96, %p97
    %p99 = scmp.ne.s32.totalorder %s87, %s88
    %p100 = scmp.eq.s32.totalorder %s15, 3
    %p101 = por %p99, %p100
    %p103 = scmp.ne.s32.totalorder %s88, %s102
    %p104 = scmp.eq.s32.totalorder %s15, 0
    %p105 = por %p103, %p104
    %s106 = ssub.s32 %s16, %s28
    %s107 = ssub.s32 %s17, %s24
    %s108 = sor.u32 %s106, %s107
    %p109 = scmp.eq.s32.totalorder %s108, 0
    %s111 = sadd.s32 %s110, 1
    %s112 = scalar_select %p109, %s110, %s111
    %p115 = pneg %p109
    %p116 = scmp.eq.s32.totalorder %s9, 3
    %p117 = por %p115, %p116
    %p118 = scmp.ne.s32.totalorder %s110, %s113
    %p119 = scmp.eq.s32.totalorder %s9, 0
    %p120 = por %p118, %p119
    %p121 = scmp.ne.s32.totalorder %s110, %s113
    %p122 = scmp.eq.s32.totalorder %s14, 3
    %p123 = por %p121, %p122
    %p124 = scmp.ne.s32.totalorder %s113, %s114
    %p125 = scmp.eq.s32.totalorder %s14, 0
    %p126 = por %p124, %p125
    %p127 = scmp.ne.s32.totalorder %s113, %s114
    %p128 = scmp.eq.s32.totalorder %s15, 3
    %p129 = por %p127, %p128
    %p131 = scmp.ne.s32.totalorder %s114, %s130
    %p132 = scmp.eq.s32.totalorder %s15, 0
    %p133 = por %p131, %p132
    %p134 = scmp.le.s32.totalorder 1, %s9
    %p135 = scmp.lt.s32.totalorder %s9, 5
    %p136 = pnand %p134, %p135
    %p137 = pneg %p136
    // Predicated region
    $region9: #{panet_forward.20} parent=5 // pred_check
      _
    $region10: #{panet_forward.20} parent=5 // pred_check_branch
      %139 = sbr.rel (%p136) target = $region12
    $region11: #{panet_forward.20} parent=5 // pred_region
      %s140 = ssub.s32 %s9, 1
      // Predicated region
      $region13: #{panet_forward.20} parent=11 // pred_check
        %p141 = pneg %p98
      $region14: #{panet_forward.20} parent=11 // pred_check_branch
        %143 = sbr.rel (%p141) target = $region16
      $region15: #{panet_forward.20} parent=11 // pred_region
        _
      $region16: #{panet_forward.20} parent=11 // pred_fallthru
        _
    $region12: #{panet_forward.20} parent=5 // pred_fallthru
      _
    %p144 = scmp.lt.s32.totalorder %s9, 4
    // Predicated region
    $region17: #{panet_forward.20} parent=5 // pred_check
      %p145 = pneg %p144
    $region18: #{panet_forward.20} parent=5 // pred_check_branch
      %147 = sbr.rel (%p145) target = $region20
    $region19: #{panet_forward.20} parent=5 // pred_region
      // Predicated region
      $region21: #{panet_forward.20} parent=19 // pred_check
        %p148 = pneg %p43
      $region22: #{panet_forward.20} parent=19 // pred_check_branch
        %150 = sbr.rel (%p148) target = $region24
      $region23: #{panet_forward.20} parent=19 // pred_region
        %s151 = smul.u32 8, %s17
        %p152 = scmp.lt.s32.totalorder %s16, 1
        %s153 = scalar_select %p152, %s16, 1
        %p154 = scmp.lt.s32.totalorder %s151, 15
        %s155 = scalar_select %p154, %s151, 15
        %s156 = smul.addr %s153, 16
        %s157 = sadd.s32 %s155, %s156
        %s158 = smul.addr %s157, 8
        %s159 = scalar_lea.vmem %s0, %s158
        %s160 = smul.u32 8, %s17
      $region24: #{panet_forward.20} parent=19 // pred_fallthru
        _
      // Predicated region
      $region25: #{panet_forward.20} parent=19 // pred_check
        %p161 = pneg %p71
      $region26: #{panet_forward.20} parent=19 // pred_check_branch
        %163 = sbr.rel (%p161) target = $region28
      $region27: #{panet_forward.20} parent=19 // pred_region
        %s164 = smul.u32 8, %s17
        %p165 = scmp.lt.s32.totalorder %s16, 1
        %s166 = scalar_select %p165, %s16, 1
        %p167 = scmp.lt.s32.totalorder %s164, 15
        %s168 = scalar_select %p167, %s164, 15
        %s169 = smul.addr %s166, 16
        %s170 = sadd.s32 %s168, %s169
        %s171 = smul.addr %s170, 8
        %s172 = scalar_lea.vmem %s1, %s171
        %s173 = smul.u32 8, %s17
      $region28: #{panet_forward.20} parent=19 // pred_fallthru
        _
    $region20: #{panet_forward.20} parent=5 // pred_fallthru
      _
    %p174 = scmp.le.s32.totalorder 1, %s9
    %p175 = scmp.lt.s32.totalorder %s9, 5
    %p176 = pnand %p174, %p175
    %p177 = pneg %p176
    // Predicated region
    $region29: #{panet_forward.20} parent=5 // pred_check
      _
    $region30: #{panet_forward.20} parent=5 // pred_check_branch
      %179 = sbr.rel (%p176) target = $region32
    $region31: #{panet_forward.20} parent=5 // pred_region
      %s180 = ssub.s32 %s9, 1
      %s181 = smul.u32 8, %s19
      %p182 = scmp.lt.s32.totalorder %s18, 1
      %s183 = scalar_select %p182, %s18, 1
      %p184 = scmp.lt.s32.totalorder %s181, 15
      %s185 = scalar_select %p184, %s181, 15
      %s186 = smul.addr %s183, 16
      %s187 = sadd.s32 %s185, %s186
      %s188 = smul.addr %s187, 8
      %s189 = scalar_lea.vmem %s0, %s188
      %p190 = pneg %p49
      %p191 = pneg %p46
      %s192 = smul.u32 8, %s19
      %p193 = scmp.lt.s32.totalorder %s18, 1
      %s194 = scalar_select %p193, %s18, 1
      %p195 = scmp.lt.s32.totalorder %s192, 15
      %s196 = scalar_select %p195, %s192, 15
      %s197 = smul.addr %s194, 16
      %s198 = sadd.s32 %s196, %s197
      %s199 = smul.addr %s198, 8
      %s200 = scalar_lea.vmem %s1, %s199
      %p201 = pneg %p77
      %p202 = pneg %p74
      %p203 = pneg %p98
      %p204 = pneg %p95
      %p205 = pneg %p126
      %p206 = pneg %p123
      %s207 = smul.u32 8, %s19
      %p208 = scmp.lt.s32.totalorder %s18, 1
      %s209 = scalar_select %p208, %s18, 1
      %p210 = scmp.lt.s32.totalorder %s207, 15
      %s211 = scalar_select %p210, %s207, 15
      %s212 = smul.addr %s209, 16
      %s213 = sadd.s32 %s211, %s212
      %s214 = smul.addr %s213, 8
      %s215 = scalar_lea.vmem %s3, %s214
      %s216 = smul.u32 8, %s19
      %p217 = scmp.lt.s32.totalorder %s18, 1
      %s218 = scalar_select %p217, %s18, 1
      %p219 = scmp.lt.s32.totalorder %s216, 15
      %s220 = scalar_select %p219, %s216, 15
      %s221 = smul.addr %s218, 16
      %s222 = sadd.s32 %s220, %s221
      %s223 = smul.addr %s222, 8
      %s224 = scalar_lea.vmem %s0, %s223
      %s225 = smul.u32 8, %s19
      %s226 = smul.u32 8, %s19
      %p227 = scmp.lt.s32.totalorder %s18, 1
      %s228 = scalar_select %p227, %s18, 1
      %p229 = scmp.lt.s32.totalorder %s226, 15
      %s230 = scalar_select %p229, %s226, 15
      %s231 = smul.addr %s228, 16
      %s232 = sadd.s32 %s230, %s231
      %s233 = smul.addr %s232, 8
      %s234 = scalar_lea.vmem %s1, %s233
      %s235 = smul.u32 8, %s19
      %s236 = smul.u32 8, %s19
      %p237 = scmp.lt.s32.totalorder %s18, 1
      %s238 = scalar_select %p237, %s18, 1
      %p239 = scmp.lt.s32.totalorder %s236, 15
      %s240 = scalar_select %p239, %s236, 15
      %s241 = smul.addr %s238, 16
      %s242 = sadd.s32 %s240, %s241
      %s243 = smul.addr %s242, 8
      %s244 = scalar_lea.vmem %s3, %s243
      %s245 = smul.u32 8, %s19
      %v246 = vld [vmem:[%s224] sm:$0xff]
      %v247 = vld [vmem:[%s224 + $0x8] sm:$0xff]
      %v248 = vld [vmem:[%s224 + $0x10] sm:$0xff]
      %v249 = vld [vmem:[%s224 + $0x18] sm:$0xff]
      %v250 = vld [vmem:[%s224 + $0x20] sm:$0xff]
      %v251 = vld [vmem:[%s224 + $0x28] sm:$0xff]
      %v252 = vld [vmem:[%s224 + $0x30] sm:$0xff]
      %v253 = vld [vmem:[%s224 + $0x38] sm:$0xff]
      %262 = vrot.lane.b32.xlu0 %v246, 96
      %v263 = vpop.permute.xlu0 %262
      %264 = vrot.lane.b32.xlu0 %v247, 96
      %v265 = vpop.permute.xlu0 %264
      %266 = vrot.lane.b32.xlu0 %v248, 96
      %v267 = vpop.permute.xlu0 %266
      %268 = vrot.lane.b32.xlu0 %v249, 96
      %v269 = vpop.permute.xlu0 %268
      %270 = vrot.lane.b32.xlu0 %v250, 96
      %v271 = vpop.permute.xlu0 %270
      %272 = vrot.lane.b32.xlu0 %v251, 96
      %v273 = vpop.permute.xlu0 %272
      %274 = vrot.lane.b32.xlu0 %v252, 96
      %v275 = vpop.permute.xlu0 %274
      %276 = vrot.lane.b32.xlu0 %v253, 96
      %v277 = vpop.permute.xlu0 %276
      %v286 = vmax.f32 %v246, %v263
      %v287 = vmax.f32 %v247, %v265
      %v288 = vmax.f32 %v248, %v267
      %v289 = vmax.f32 %v249, %v269
      %v290 = vmax.f32 %v250, %v271
      %v291 = vmax.f32 %v251, %v273
      %v292 = vmax.f32 %v252, %v275
      %v293 = vmax.f32 %v253, %v277
      %302 = vrot.lane.b32.xlu0 %v286, 127
      %v303 = vpop.permute.xlu0 %302
      %304 = vrot.lane.b32.xlu0 %v287, 127
      %v305 = vpop.permute.xlu0 %304
      %306 = vrot.lane.b32.xlu0 %v288, 127
      %v307 = vpop.permute.xlu0 %306
      %308 = vrot.lane.b32.xlu0 %v289, 127
      %v309 = vpop.permute.xlu0 %308
      %310 = vrot.lane.b32.xlu0 %v290, 127
      %v311 = vpop.permute.xlu0 %310
      %312 = vrot.lane.b32.xlu0 %v291, 127
      %v313 = vpop.permute.xlu0 %312
      %314 = vrot.lane.b32.xlu0 %v292, 127
      %v315 = vpop.permute.xlu0 %314
      %316 = vrot.lane.b32.xlu0 %v293, 127
      %v317 = vpop.permute.xlu0 %316
      %326 = vrot.lane.b32.xlu0 %v286, 31
      %v327 = vpop.permute.xlu0 %326
      %328 = vrot.lane.b32.xlu0 %v287, 31
      %v329 = vpop.permute.xlu0 %328
      %330 = vrot.lane.b32.xlu0 %v288, 31
      %v331 = vpop.permute.xlu0 %330
      %332 = vrot.lane.b32.xlu0 %v289, 31
      %v333 = vpop.permute.xlu0 %332
      %334 = vrot.lane.b32.xlu0 %v290, 31
      %v335 = vpop.permute.xlu0 %334
      %336 = vrot.lane.b32.xlu0 %v291, 31
      %v337 = vpop.permute.xlu0 %336
      %338 = vrot.lane.b32.xlu0 %v292, 31
      %v339 = vpop.permute.xlu0 %338
      %340 = vrot.lane.b32.xlu0 %v293, 31
      %v341 = vpop.permute.xlu0 %340
      %vm350 = vcmask 252928
      %v351 = vsel %vm350, %v303, %v327
      %v352 = vsel %vm350, %v305, %v329
      %v353 = vsel %vm350, %v307, %v331
      %v354 = vsel %vm350, %v309, %v333
      %v355 = vsel %vm350, %v311, %v335
      %v356 = vsel %vm350, %v313, %v337
      %v357 = vsel %vm350, %v315, %v339
      %v358 = vsel %vm350, %v317, %v341
      %v359 = vmax.f32 %v286, %v351
      %v360 = vmax.f32 %v287, %v352
      %v361 = vmax.f32 %v288, %v353
      %v362 = vmax.f32 %v289, %v354
      %v363 = vmax.f32 %v290, %v355
      %v364 = vmax.f32 %v291, %v356
      %v365 = vmax.f32 %v292, %v357
      %v366 = vmax.f32 %v293, %v358
      %v367 = vld [vmem:[%s2] sm:$0xff]
      %v368 = vld [vmem:[%s2 + $0x8] sm:$0xff]
      %v369 = vld [vmem:[%s2 + $0x10] sm:$0xff]
      %v370 = vld [vmem:[%s2 + $0x18] sm:$0xff]
      %v371 = vld [vmem:[%s234] sm:$0xff]
      %v372 = vld [vmem:[%s234 + $0x8] sm:$0xff]
      %v373 = vld [vmem:[%s234 + $0x10] sm:$0xff]
      %v374 = vld [vmem:[%s234 + $0x18] sm:$0xff]
      %v375 = vld [vmem:[%s234 + $0x20] sm:$0xff]
      %v376 = vld [vmem:[%s234 + $0x28] sm:$0xff]
      %v377 = vld [vmem:[%s234 + $0x30] sm:$0xff]
      %v378 = vld [vmem:[%s234 + $0x38] sm:$0xff]
      %vm379 = vcmask 261120
      %v381 = vsel %vm379, %v359, 0
      %v384 = vsel %vm379, %v360, 0
      %v387 = vsel %vm379, %v361, 0
      %v390 = vsel %vm379, %v362, 0
      %v393 = vsel %vm379, %v363, 0
      %v396 = vsel %vm379, %v364, 0
      %v399 = vsel %vm379, %v365, 0
      %v402 = vsel %vm379, %v366, 0
      %404 = vmatprep.subr.mxu0 0.0
      %405 = vmatpush1.msra.mxu0 %v367
      %406 = vmatprep.subr.mxu0 0.0
      %407 = vmatpush1.msra.mxu0 %v368
      %408 = vmatprep.subr.mxu0 0.0
      %409 = vmatpush1.msra.mxu0 %v369
      %410 = vmatprep.subr.mxu0 0.0
      %411 = vmatpush1.msra.mxu0 %v370
      %412 = vmatprep.subr.mxu0 0.0
      %413 = vmatpush1.msra.mxu0 0.0
      %414 = vmatprep.subr.mxu0 0.0
      %415 = vmatpush1.msra.mxu0 0.0
      %416 = vmatprep.subr.mxu0 0.0
      %417 = vmatpush1.msra.mxu0 0.0
      %418 = vmatprep.subr.mxu0 0.0
      %419 = vmatpush1.msra.mxu0 0.0
      %420 = vmatprep.subr.mxu0 0.0
      %421 = vmatpush1.msra.mxu0 0.0
      %422 = vmatprep.subr.mxu0 0.0
      %423 = vmatpush1.msra.mxu0 0.0
      %424 = vmatprep.subr.mxu0 0.0
      %425 = vmatpush1.msra.mxu0 0.0
      %426 = vmatprep.subr.mxu0 0.0
      %427 = vmatpush1.msra.mxu0 0.0
      %428 = vmatprep.subr.mxu0 0.0
      %429 = vmatpush1.msra.mxu0 0.0
      %430 = vmatprep.subr.mxu0 0.0
      %431 = vmatpush1.msra.mxu0 0.0
      %432 = vmatprep.subr.mxu0 0.0
      %433 = vmatpush1.msra.mxu0 0.0
      %434 = vmatprep.subr.mxu0 0.0
      %435 = vmatpush1.msra.mxu0 0.0
      %436 = vmatprep.subr.mxu0 0.0
      %437 = vmatpush1.msra.mxu0 0.0
      %438 = vmatprep.subr.mxu0 0.0
      %439 = vmatpush1.msra.mxu0 0.0
      %440 = vmatprep.subr.mxu0 0.0
      %441 = vmatpush1.msra.mxu0 0.0
      %442 = vmatprep.subr.mxu0 0.0
      %443 = vmatpush1.msra.mxu0 0.0
      %444 = vmatprep.subr.mxu0 0.0
      %445 = vmatpush1.msra.mxu0 0.0
      %446 = vmatprep.subr.mxu0 0.0
      %447 = vmatpush1.msra.mxu0 0.0
      %448 = vmatprep.subr.mxu0 0.0
      %449 = vmatpush1.msra.mxu0 0.0
      %450 = vmatprep.subr.mxu0 0.0
      %451 = vmatpush1.msra.mxu0 0.0
      %452 = vmatprep.subr.mxu0 0.0
      %453 = vmatpush1.msra.mxu0 0.0
      %454 = vmatprep.subr.mxu0 0.0
      %455 = vmatpush1.msra.mxu0 0.0
      %456 = vmatprep.subr.mxu0 0.0
      %457 = vmatpush1.msra.mxu0 0.0
      %458 = vmatprep.subr.mxu0 0.0
      %459 = vmatpush1.msra.mxu0 0.0
      %460 = vmatprep.subr.mxu0 0.0
      %461 = vmatpush1.msra.mxu0 0.0
      %462 = vmatprep.subr.mxu0 0.0
      %463 = vmatpush1.msra.mxu0 0.0
      %464 = vmatprep.subr.mxu0 0.0
      %465 = vmatpush1.msra.mxu0 0.0
      %466 = vmatprep.subr.mxu0 0.0
      %467 = vmatpush1.msra.mxu0 0.0
      %468 = vmatprep.mubr.f32.mxu0 0.0
      %469 = vmatmul.mubr.f32.gmra.mrb[0].mxu0 %v381
      %v470 = vpop.f32.mrb[0].mxu0
      %v471 = vadd.f32 %v371, %v470
      %v472 = vpop.f32.mrb[0].mxu0
      %473 = vmatprep.mubr.f32.mxu0 0.0
      %474 = vmatmul.mubr.f32.gmra.mrb[0].mxu0 %v384
      %v475 = vpop.f32.mrb[0].mxu0
      %v476 = vadd.f32 %v372, %v475
      %v477 = vpop.f32.mrb[0].mxu0
      %478 = vmatprep.mubr.f32.mxu0 0.0
      %479 = vmatmul.mubr.f32.gmra.mrb[0].mxu0 %v387
      %v480 = vpop.f32.mrb[0].mxu0
      %v481 = vadd.f32 %v373, %v480
      %v482 = vpop.f32.mrb[0].mxu0
      %483 = vmatprep.mubr.f32.mxu0 0.0
      %484 = vmatmul.mubr.f32.gmra.mrb[0].mxu0 %v390
      %v485 = vpop.f32.mrb[0].mxu0
      %v486 = vadd.f32 %v374, %v485
      %v487 = vpop.f32.mrb[0].mxu0
      %488 = vmatprep.mubr.f32.mxu0 0.0
      %489 = vmatmul.mubr.f32.gmra.mrb[0].mxu0 %v393
      %v490 = vpop.f32.mrb[0].mxu0
      %v491 = vadd.f32 %v375, %v490
      %v492 = vpop.f32.mrb[0].mxu0
      %493 = vmatprep.mubr.f32.mxu0 0.0
      %494 = vmatmul.mubr.f32.gmra.mrb[0].mxu0 %v396
      %v495 = vpop.f32.mrb[0].mxu0
      %v496 = vadd.f32 %v376, %v495
      %v497 = vpop.f32.mrb[0].mxu0
      %498 = vmatprep.mubr.f32.mxu0 0.0
      %499 = vmatmul.mubr.f32.gmra.mrb[0].mxu0 %v399
      %v500 = vpop.f32.mrb[0].mxu0
      %v501 = vadd.f32 %v377, %v500
      %v502 = vpop.f32.mrb[0].mxu0
      %503 = vmatprep.mubr.f32.mxu0 0.0
      %504 = vmatmul.mubr.f32.gmra.mrb[0].mxu0 %v402
      %v505 = vpop.f32.mrb[0].mxu0
      %v506 = vadd.f32 %v378, %v505
      %v507 = vpop.f32.mrb[0].mxu0
      %508 = vdwg.mxu0
      %vm509 = vcmask 130048
      %510 = vst.msk [vmem:[%s244] sm:$0xff] %vm509, %v471
      %511 = vst.msk [vmem:[%s244 + $0x8] sm:$0xff] %vm509, %v476
      %512 = vst.msk [vmem:[%s244 + $0x10] sm:$0xff] %vm509, %v481
      %513 = vst.msk [vmem:[%s244 + $0x18] sm:$0xff] %vm509, %v486
      %514 = vst.msk [vmem:[%s244 + $0x20] sm:$0xff] %vm509, %v491
      %515 = vst.msk [vmem:[%s244 + $0x28] sm:$0xff] %vm509, %v496
      %516 = vst.msk [vmem:[%s244 + $0x30] sm:$0xff] %vm509, %v501
      %517 = vst.msk [vmem:[%s244 + $0x38] sm:$0xff] %vm509, %v506
      %s518 = smul.u32 8, %s19
      %p519 = scmp.lt.s32.totalorder %s18, 1
      %s520 = scalar_select %p519, %s18, 1
      %p521 = scmp.lt.s32.totalorder %s518, 15
      %s522 = scalar_select %p521, %s518, 15
      %s523 = smul.addr %s520, 16
      %s524 = sadd.s32 %s522, %s523
      %s525 = smul.addr %s524, 8
      %s526 = scalar_lea.vmem %s3, %s525
      // Predicated region
      $region33: #{panet_forward.20} parent=31 // pred_check
        %p527 = pneg %p123
      $region34: #{panet_forward.20} parent=31 // pred_check_branch
        %529 = sbr.rel (%p527) target = $region36
      $region35: #{panet_forward.20} parent=31 // pred_region
        %s530 = smul.u32 8, %s19
      $region36: #{panet_forward.20} parent=31 // pred_fallthru
        _
    $region32: #{panet_forward.20} parent=5 // pred_fallthru
      _
    %p531 = scmp.le.s32.totalorder 2, %s9
    // Predicated region
    $region37: #{panet_forward.20} parent=5 // pred_check
      %p532 = pneg %p531
    $region38: #{panet_forward.20} parent=5 // pred_check_branch
      %534 = sbr.rel (%p532) target = $region40
    $region39: #{panet_forward.20} parent=5 // pred_region
      %s535 = ssub.s32 %s9, 2
      // Predicated region
      $region41: #{panet_forward.20} parent=39 // pred_check
        %p536 = pneg %p129
      $region42: #{panet_forward.20} parent=39 // pred_check_branch
        %538 = sbr.rel (%p536) target = $region44
      $region43: #{panet_forward.20} parent=39 // pred_region
        %s539 = smul.u32 8, %s21
        %p540 = scmp.lt.s32.totalorder %s20, 1
        %s541 = scalar_select %p540, %s20, 1
        %p542 = scmp.lt.s32.totalorder %s539, 15
        %s543 = scalar_select %p542, %s539, 15
        %s544 = smul.addr %s541, 16
        %s545 = sadd.s32 %s543, %s544
        %s546 = smul.addr %s545, 8
        %s547 = scalar_lea.vmem %s3, %s546
      $region44: #{panet_forward.20} parent=39 // pred_fallthru
        _
    $region40: #{panet_forward.20} parent=5 // pred_fallthru
      _
  $region6: #{panet_forward.20} parent=0 // loop_footer
    %s13 = sadd.s32 1, %s9
  $region7: #{panet_forward.20} parent=0 // loop_footer_branch
    %8 = sbr.rel target = $region3
  $region8: #{panet_forward.20} parent=0 // loop_exit
    _

// kernel: panet_forward.21
$region0: #{panet_forward.21}
  #allocation0 [shape = 'u32[]', space=smem, size = 0x4, offset = 0x4, fixed_abs, tag = 'smem constant byte address 0x4 - core index']
  #allocation1 [shape = 'u32[144,128]{1,0:T(1,128)}', space=vmem, size = 0x12000, scoped, tag = 'internal scratch']
  #allocation2 [shape = 'f32[2,512]{1,0:T(2,128)}', space=vmem, size = 0x1000, scoped, tag = 'scratch operand']
  %s0 = inlined_call_operand.vmem [shape: f32[2,8,256], index: 0, kind: input, shape index: {}]
  %s1 = inlined_call_operand.vmem [shape: f32[2,8,256], index: 1, kind: input, shape index: {}]
  %s2 = inlined_call_operand.vmem [shape: f32[5,256], index: 2, kind: input, shape index: {}]
  %s3 = inlined_call_operand.vmem [shape: f32[50], index: 3, kind: input, shape index: {}]
  %s4 = inlined_call_operand.vmem [shape: f32[2,8,256], index: 4, kind: output, shape index: {}]
  %s5 = sld [smem:[#allocation0]]
  $region57: #{panet_forward.21} parent=0
    _
  %s7 = ssub.s32 1, %s5
  %s8 = scalar_select 0, %s7, %s5
  $region1: #{panet_forward.21} parent=0
    #allocation3 [shape = 'u8[512]{0}', space=smem, size = 0x200, scoped, tag = 'input window, operand 3, single buffered']
    #allocation4 [shape = 's32[2]{0}', space=sflag, size = 0x8, scoped, tag = 'scoped memory for panet_forward.21']
    %9 = vsyncpa [#allocation4], 0
    loop: start=0, step=1, limit=4
    $region2: #{panet_forward.21} parent=1 // loop_pre_header
      _
    $region3: #{panet_forward.21} parent=1 // loop_header
      %s11 = sphi 0, %s15
      %p12 = scmp.ge.s32.totalorder %s11, 4
      %s21 = sphi 0, %s23
      %s24 = sphi 0, %s21
      %s25 = sphi 0, %s24
      %s41 = sphi 0, %s25
      %s47 = sphi 0, %s49
      %s50 = sphi 0, %s47
      %s51 = sphi 0, %s50
      %s67 = sphi 0, %s51
      %s71 = sphi 0, %s71
      %s73 = sphi 0, %s71
      %s74 = sphi 0, %s73
      %s88 = sphi 0, %s74
      %s92 = sphi 0, %s92
      %s94 = sphi 0, %s92
      %s95 = sphi 0, %s94
      %s109 = sphi 0, %s95
      %s115 = sphi 0, %s117
      %s118 = sphi 0, %s115
      %s119 = sphi 0, %s118
      %s135 = sphi 0, %s119
    $region4: #{panet_forward.21} parent=1 // loop_header_branch
      %14 = sbr.rel (%p12) target = $region8
    $region5: #{panet_forward.21} parent=1 // loop_body
      %s16 = ssub.s32 %s11, 1
      %s17 = ssub.s32 %s11, 2
      %s18 = sadd.s32 %s11, 1
      %s19 = ssub.s32 %s11, %s18
      %p20 = scmp.eq.s32.totalorder %s19, 0
      %s22 = sadd.s32 %s21, 1
      %s23 = scalar_select %p20, %s21, %s22
      %p26 = pneg %p20
      %p27 = scmp.eq.s32.totalorder %s11, 1
      %p28 = por %p26, %p27
      %p29 = scmp.ne.s32.totalorder %s21, %s24
      %p30 = scmp.eq.s32.totalorder %s11, 0
      %p31 = por %p29, %p30
      %p32 = scmp.ne.s32.totalorder %s21, %s24
      %p33 = scmp.eq.s32.totalorder %s16, 1
      %p34 = por %p32, %p33
      %p35 = scmp.ne.s32.totalorder %s24, %s25
      %p36 = scmp.eq.s32.totalorder %s16, 0
      %p37 = por %p35, %p36
      %p38 = scmp.ne.s32.totalorder %s24, %s25
      %p39 = scmp.eq.s32.totalorder %s17, 1
      %p40 = por %p38, %p39
      %p42 = scmp.ne.s32.totalorder %s25, %s41
      %p43 = scmp.eq.s32.totalorder %s17, 0
      %p44 = por %p42, %p43
      %s45 = ssub.s32 %s11, %s18
      %p46 = scmp.eq.s32.totalorder %s45, 0
      %s48 = sadd.s32 %s47, 1
      %s49 = scalar_select %p46, %s47, %s48
      %p52 = pneg %p46
      %p53 = scmp.eq.s32.totalorder %s11, 1
      %p54 = por %p52, %p53
      %p55 = scmp.ne.s32.totalorder %s47, %s50
      %p56 = scmp.eq.s32.totalorder %s11, 0
      %p57 = por %p55, %p56
      %p58 = scmp.ne.s32.totalorder %s47, %s50
      %p59 = scmp.eq.s32.totalorder %s16, 1
      %p60 = por %p58, %p59
      %p61 = scmp.ne.s32.totalorder %s50, %s51
      %p62 = scmp.eq.s32.totalorder %s16, 0
      %p63 = por %p61, %p62
      %p64 = scmp.ne.s32.totalorder %s50, %s51
      %p65 = scmp.eq.s32.totalorder %s17, 1
      %p66 = por %p64, %p65
      %p68 = scmp.ne.s32.totalorder %s51, %s67
      %p69 = scmp.eq.s32.totalorder %s17, 0
      %p70 = por %p68, %p69
      %s72 = sadd.s32 %s71, 1
      %p75 = scmp.eq.s32.totalorder %s11, 1
      %p76 = scmp.ne.s32.totalorder %s71, %s73
      %p77 = scmp.eq.s32.totalorder %s11, 0
      %p78 = por %p76, %p77
      %p79 = scmp.ne.s32.totalorder %s71, %s73
      %p80 = scmp.eq.s32.totalorder %s16, 1
      %p81 = por %p79, %p80
      %p82 = scmp.ne.s32.totalorder %s73, %s74
      %p83 = scmp.eq.s32.totalorder %s16, 0
      %p84 = por %p82, %p83
      %p85 = scmp.ne.s32.totalorder %s73, %s74
      %p86 = scmp.eq.s32.totalorder %s17, 1
      %p87 = por %p85, %p86
      %p89 = scmp.ne.s32.totalorder %s74, %s88
      %p90 = scmp.eq.s32.totalorder %s17, 0
      %p91 = por %p89, %p90
      %s93 = sadd.s32 %s92, 1
      %p96 = scmp.eq.s32.totalorder %s11, 1
      %p97 = scmp.ne.s32.totalorder %s92, %s94
      %p98 = scmp.eq.s32.totalorder %s11, 0
      %p99 = por %p97, %p98
      %p100 = scmp.ne.s32.totalorder %s92, %s94
      %p101 = scmp.eq.s32.totalorder %s16, 1
      %p102 = por %p100, %p101
      %p103 = scmp.ne.s32.totalorder %s94, %s95
      %p104 = scmp.eq.s32.totalorder %s16, 0
      %p105 = por %p103, %p104
      %p106 = scmp.ne.s32.totalorder %s94, %s95
      %p107 = scmp.eq.s32.totalorder %s17, 1
      %p108 = por %p106, %p107
      %p110 = scmp.ne.s32.totalorder %s95, %s109
      %p111 = scmp.eq.s32.totalorder %s17, 0
      %p112 = por %p110, %p111
      %s113 = ssub.s32 %s11, %s18
      %p114 = scmp.eq.s32.totalorder %s113, 0
      %s116 = sadd.s32 %s115, 1
      %s117 = scalar_select %p114, %s115, %s116
      %p120 = pneg %p114
      %p121 = scmp.eq.s32.totalorder %s11, 1
      %p122 = por %p120, %p121
      %p123 = scmp.ne.s32.totalorder %s115, %s118
      %p124 = scmp.eq.s32.totalorder %s11, 0
      %p125 = por %p123, %p124
      %p126 = scmp.ne.s32.totalorder %s115, %s118
      %p127 = scmp.eq.s32.totalorder %s16, 1
      %p128 = por %p126, %p127
      %p129 = scmp.ne.s32.totalorder %s118, %s119
      %p130 = scmp.eq.s32.totalorder %s16, 0
      %p131 = por %p129, %p130
      %p132 = scmp.ne.s32.totalorder %s118, %s119
      %p133 = scmp.eq.s32.totalorder %s17, 1
      %p134 = por %p132, %p133
      %p136 = scmp.ne.s32.totalorder %s119, %s135
      %p137 = scmp.eq.s32.totalorder %s17, 0
      %p138 = por %p136, %p137
      %p139 = scmp.le.s32.totalorder 1, %s11
      %p140 = scmp.lt.s32.totalorder %s11, 3
      %p141 = pnand %p139, %p140
      %p142 = pneg %p141
      // Predicated region
      $region9: #{panet_forward.21} parent=5 // pred_check
        _
      $region10: #{panet_forward.21} parent=5 // pred_check_branch
        %144 = sbr.rel (%p141) target = $region12
      $region11: #{panet_forward.21} parent=5 // pred_region
        %s145 = ssub.s32 %s11, 1
        // Predicated region
        $region13: #{panet_forward.21} parent=11 // pred_check
          %p146 = pneg %p84
        $region14: #{panet_forward.21} parent=11 // pred_check_branch
          %148 = sbr.rel (%p146) target = $region16
        $region15: #{panet_forward.21} parent=11 // pred_region
          _
        $region16: #{panet_forward.21} parent=11 // pred_fallthru
          _
        // Predicated region
        $region17: #{panet_forward.21} parent=11 // pred_check
          %p149 = pneg %p105
        $region18: #{panet_forward.21} parent=11 // pred_check_branch
          %151 = sbr.rel (%p149) target = $region20
        $region19: #{panet_forward.21} parent=11 // pred_region
          %s153 = ssub.s32 16, 16
          %154 = vsyncadd [#allocation4], %s153
          %s156 = sshll.u32 %s3, 4
          %s157 = int_to_ptr.vmem [resolvable:$true] %s156
          %159 = dma.vmem_to_smem %s157, 16, [#allocation3], [#allocation4]
        $region20: #{panet_forward.21} parent=11 // pred_fallthru
          _
      $region12: #{panet_forward.21} parent=5 // pred_fallthru
        _
      %p160 = scmp.lt.s32.totalorder %s11, 2
      // Predicated region
      $region21: #{panet_forward.21} parent=5 // pred_check
        %p161 = pneg %p160
      $region22: #{panet_forward.21} parent=5 // pred_check_branch
        %163 = sbr.rel (%p161) target = $region24
      $region23: #{panet_forward.21} parent=5 // pred_region
        // Predicated region
        $region25: #{panet_forward.21} parent=23 // pred_check
          %p164 = pneg %p31
        $region26: #{panet_forward.21} parent=23 // pred_check_branch
          %166 = sbr.rel (%p164) target = $region28
        $region27: #{panet_forward.21} parent=23 // pred_region
          %p167 = scmp.lt.s32.totalorder %s11, 1
          %s168 = scalar_select %p167, %s11, 1
          %s169 = smul.addr %s168, 2
          %s170 = smul.addr %s169, 8
          %s171 = scalar_lea.vmem %s0, %s170
        $region28: #{panet_forward.21} parent=23 // pred_fallthru
          _
        // Predicated region
        $region29: #{panet_forward.21} parent=23 // pred_check
          %p172 = pneg %p57
        $region30: #{panet_forward.21} parent=23 // pred_check_branch
          %174 = sbr.rel (%p172) target = $region32
        $region31: #{panet_forward.21} parent=23 // pred_region
          %p175 = scmp.lt.s32.totalorder %s11, 1
          %s176 = scalar_select %p175, %s11, 1
          %s177 = smul.addr %s176, 2
          %s178 = smul.addr %s177, 8
          %s179 = scalar_lea.vmem %s1, %s178
        $region32: #{panet_forward.21} parent=23 // pred_fallthru
          _
      $region24: #{panet_forward.21} parent=5 // pred_fallthru
        _
      %p180 = scmp.le.s32.totalorder 1, %s11
      %p181 = scmp.lt.s32.totalorder %s11, 3
      %p182 = pnand %p180, %p181
      %p183 = pneg %p182
      // Predicated region
      $region33: #{panet_forward.21} parent=5 // pred_check
        _
      $region34: #{panet_forward.21} parent=5 // pred_check_branch
        %185 = sbr.rel (%p182) target = $region36
      $region35: #{panet_forward.21} parent=5 // pred_region
        %s186 = ssub.s32 %s11, 1
        // Predicated region
        $region37: #{panet_forward.21} parent=35 // pred_check
          %p187 = pneg %p105
        $region38: #{panet_forward.21} parent=35 // pred_check_branch
          %189 = sbr.rel (%p187) target = $region40
        $region39: #{panet_forward.21} parent=35 // pred_region
          %190 = dma.done [#allocation4], 16
        $region40: #{panet_forward.21} parent=35 // pred_fallthru
          _
        %191 = sfence
        %p192 = scmp.lt.s32.totalorder %s16, 1
        %s193 = scalar_select %p192, %s16, 1
        %s194 = smul.addr %s193, 2
        %s195 = smul.addr %s194, 8
        %s196 = scalar_lea.vmem %s0, %s195
        %p197 = pneg %p37
        %p198 = pneg %p34
        %p199 = scmp.lt.s32.totalorder %s16, 1
        %s200 = scalar_select %p199, %s16, 1
        %s201 = smul.addr %s200, 2
        %s202 = smul.addr %s201, 8
        %s203 = scalar_lea.vmem %s1, %s202
        %p204 = pneg %p63
        %p205 = pneg %p60
        %p206 = pneg %p84
        %p207 = pneg %p81
        %p208 = pneg %p105
        %p209 = pneg %p102
        %p210 = pneg %p131
        %p211 = pneg %p128
        %p212 = scmp.lt.s32.totalorder %s16, 1
        %s213 = scalar_select %p212, %s16, 1
        %s214 = smul.addr %s213, 2
        %s215 = smul.addr %s214, 8
        %s216 = scalar_lea.vmem %s4, %s215
        %p217 = scmp.lt.s32.totalorder %s16, 1
        %s218 = scalar_select %p217, %s16, 1
        %s219 = smul.addr %s218, 2
        %s220 = smul.addr %s219, 8
        %s221 = scalar_lea.vmem %s0, %s220
        %p222 = scmp.lt.s32.totalorder %s16, 1
        %s223 = scalar_select %p222, %s16, 1
        %s224 = smul.addr %s223, 2
        %s225 = smul.addr %s224, 8
        %s226 = scalar_lea.vmem %s1, %s225
        %p227 = scmp.lt.s32.totalorder %s16, 1
        %s228 = scalar_select %p227, %s16, 1
        %s229 = smul.addr %s228, 2
        %s230 = smul.addr %s229, 8
        %s231 = scalar_lea.vmem %s4, %s230
        %s232 = sld [smem:[#allocation3]]
        %s233 = sld [smem:[#allocation3 + $0x1]]
        %s234 = sld [smem:[#allocation3 + $0x2]]
        %s235 = sld [smem:[#allocation3 + $0x3]]
        %s236 = sld [smem:[#allocation3 + $0x4]]
        %s237 = sld [smem:[#allocation3 + $0x5]]
        %s238 = sld [smem:[#allocation3 + $0x6]]
        %s239 = sld [smem:[#allocation3 + $0x7]]
        %s240 = sld [smem:[#allocation3 + $0x8]]
        %s241 = sld [smem:[#allocation3 + $0x9]]
        %s242 = sld [smem:[#allocation3 + $0xa]]
        %s243 = sld [smem:[#allocation3 + $0xb]]
        %s244 = sld [smem:[#allocation3 + $0xc]]
        %s245 = sld [smem:[#allocation3 + $0xd]]
        %s246 = sld [smem:[#allocation3 + $0xe]]
        %s247 = sld [smem:[#allocation3 + $0xf]]
        %s248 = sld [smem:[#allocation3 + $0x10]]
        %s249 = sld [smem:[#allocation3 + $0x11]]
        %s250 = sld [smem:[#allocation3 + $0x12]]
        %s251 = sld [smem:[#allocation3 + $0x13]]
        %s252 = sld [smem:[#allocation3 + $0x14]]
        %s253 = sld [smem:[#allocation3 + $0x15]]
        %s254 = sld [smem:[#allocation3 + $0x16]]
        %s255 = sld [smem:[#allocation3 + $0x17]]
        %s256 = sld [smem:[#allocation3 + $0x18]]
        %s257 = sld [smem:[#allocation3 + $0x19]]
        %s258 = sld [smem:[#allocation3 + $0x1a]]
        %s259 = sld [smem:[#allocation3 + $0x1b]]
        %s260 = sld [smem:[#allocation3 + $0x1c]]
        %s261 = sld [smem:[#allocation3 + $0x1d]]
        %s262 = sld [smem:[#allocation3 + $0x1e]]
        %s263 = sld [smem:[#allocation3 + $0x1f]]
        %s264 = sld [smem:[#allocation3 + $0x20]]
        %s265 = sld [smem:[#allocation3 + $0x21]]
        %s266 = sld [smem:[#allocation3 + $0x22]]
        %s267 = sld [smem:[#allocation3 + $0x23]]
        %s268 = sld [smem:[#allocation3 + $0x24]]
        %s269 = sld [smem:[#allocation3 + $0x25]]
        %s270 = sld [smem:[#allocation3 + $0x26]]
        %s271 = sld [smem:[#allocation3 + $0x27]]
        %s272 = sld [smem:[#allocation3 + $0x28]]
        %s273 = sld [smem:[#allocation3 + $0x29]]
        %s274 = sld [smem:[#allocation3 + $0x2a]]
        %s275 = sld [smem:[#allocation3 + $0x2b]]
        %s276 = sld [smem:[#allocation3 + $0x2c]]
        %s277 = sld [smem:[#allocation3 + $0x2d]]
        %s278 = sld [smem:[#allocation3 + $0x2e]]
        %s279 = sld [smem:[#allocation3 + $0x2f]]
        %s280 = sld [smem:[#allocation3 + $0x30]]
        %s281 = sld [smem:[#allocation3 + $0x31]]
        %v282 = vld [vmem:[%s2] sm:$0x1f]
        %v283 = vld [vmem:[%s2 + $0x8] sm:$0x1f]
        %p284 = scmp.eq.s32.totalorder %s16, 0
        // Predicated region
        $region41: #{panet_forward.21} parent=35 // pred_check
          %p285 = pneg %p284
        $region42: #{panet_forward.21} parent=35 // pred_check_branch
          %287 = sbr.rel (%p285) target = $region44
        $region43: #{panet_forward.21} parent=35 // pred_region
          %288 = vst [vmem:[#allocation2] sm:$0xff] 0.0
        $region44: #{panet_forward.21} parent=35 // pred_fallthru
          _
        %s289 = smul.u32 0, 2
        %s290 = smul.addr %s289, 8
        %s291 = scalar_lea.vmem %s221, %s290
        %v292 = vld [vmem:[%s291] sm:$0xff]
        %v293 = vld [vmem:[%s291 + $0x8] sm:$0xff]
        %v294 = vrot.slane %v292, 4
        %v295 = vadd.f32 %v292, %v294
        %v296 = vrot.slane %v295, 2
        %v297 = vadd.f32 %v295, %v296
        %v298 = vrot.slane %v297, 1
        %v299 = vadd.f32 %v297, %v298
        %v300 = vrot.slane %v293, 4
        %v301 = vadd.f32 %v293, %v300
        %v302 = vrot.slane %v301, 2
        %v303 = vadd.f32 %v301, %v302
        %v304 = vrot.slane %v303, 1
        %v305 = vadd.f32 %v303, %v304
        %v306 = vadd.f32 %v299, 0.0
        %v307 = vadd.f32 %v305, 0.0
        %v308 = vrot.slane %v292, 4
        %v309 = vmax.f32 %v292, %v308
        %v310 = vrot.slane %v309, 2
        %v311 = vmax.f32 %v309, %v310
        %v312 = vrot.slane %v311, 1
        %v313 = vmax.f32 %v311, %v312
        %v314 = vrot.slane %v293, 4
        %v315 = vmax.f32 %v293, %v314
        %v316 = vrot.slane %v315, 2
        %v317 = vmax.f32 %v315, %v316
        %v318 = vrot.slane %v317, 1
        %v319 = vmax.f32 %v317, %v318
        %v320 = vmul.f32 %v306, 0.125
        %v321 = vmul.f32 %v307, 0.125
        %v324 = vcombine.low %v320, %v321
        %v326 = vunpack.c.l.s4 1966171168
        %v327 = vunpack.c.0.s8 %v326
        %v328 = vlaneseq
        %v329 = vshrl.u32 %v328, 7
        %v330 = vsub.s32 %v327, %v329
        %v331 = vrot.slane %v324, %v330
        %v333 = vunpack.c.l.s4 1966171168
        %v334 = vunpack.c.0.s8 %v333
        %v335 = vlaneseq
        %v336 = vshrl.u32 %v335, 7
        %v337 = vsub.s32 %v334, %v336
        %v338 = vrot.slane %v331, %v337
        %v340 = vlaneseq
        %vm341 = vcmp.ge.s32.totalorder %v340, 0
        %vm342 = vcmp.lt.s32.totalorder %v340, 256
        %vm343 = vmand %vm341, %vm342
        %s344 = scalar_lea.vmem [#allocation2], 2
        %345 = vst.msk [vmem:[%s344] ss:$2 sm:$0x3] %vm343, %v338
        %v348 = vcombine.low %v313, %v319
        %v350 = vunpack.c.l.s4 1966171168
        %v351 = vunpack.c.0.s8 %v350
        %v352 = vlaneseq
        %v353 = vshrl.u32 %v352, 7
        %v354 = vsub.s32 %v351, %v353
        %v355 = vrot.slane %v348, %v354
        %v357 = vunpack.c.l.s4 1966171168
        %v358 = vunpack.c.0.s8 %v357
        %v359 = vlaneseq
        %v360 = vshrl.u32 %v359, 7
        %v361 = vsub.s32 %v358, %v360
        %v362 = vrot.slane %v355, %v361
        %s364 = scalar_lea.vmem [#allocation2], 3
        %365 = vst.msk [vmem:[%s364] ss:$2 sm:$0x3] %vm343, %v362
        %v366 = vld [vmem:[#allocation2] ss:$2 sm:$0xf]
        %s367 = scalar_lea.vmem [#allocation2], 1
        %v368 = vld [vmem:[%s367] ss:$2 sm:$0xf]
        %v369 = vstv %s232
        %v370 = vmul.f32 %v369, %v366
        %v371 = vadd.f32 %v370, 0.0
        %v372 = vstv %s257
        %v373 = vmul.f32 %v372, %v368
        %v374 = vadd.f32 %v371, %v373
        %v375 = vstv %s237
        %v376 = vmul.f32 %v375, %v366
        %378 = vrot.lane.b32.xlu0 %v376, 112
        %v379 = vpop.permute.xlu0 %378
        %v380 = vrot.slane %v379, 1
        %vm381 = vcmask 916480
        %v382 = vsel %vm381, %v379, %v380
        %v384 = vadd.f32 %v374, %v382
        %v385 = vstv %s262
        %v386 = vmul.f32 %v385, %v368
        %388 = vrot.lane.b32.xlu0 %v386, 112
        %v389 = vpop.permute.xlu0 %388
        %v390 = vrot.slane %v389, 1
        %v391 = vsel %vm381, %v389, %v390
        %v393 = vadd.f32 %v384, %v391
        %v394 = vstv %s242
        %v395 = vmul.f32 %v394, %v366
        %397 = vrot.lane.b32.xlu0 %v395, 96
        %v398 = vpop.permute.xlu0 %397
        %v399 = vrot.slane %v398, 1
        %vm400 = vcmask 785408
        %v401 = vsel %vm400, %v398, %v399
        %v403 = vadd.f32 %v393, %v401
        %v404 = vstv %s267
        %v405 = vmul.f32 %v404, %v368
        %407 = vrot.lane.b32.xlu0 %v405, 96
        %v408 = vpop.permute.xlu0 %407
        %v409 = vrot.slane %v408, 1
        %v410 = vsel %vm400, %v408, %v409
        %v412 = vadd.f32 %v403, %v410
        %v413 = vstv %s247
        %415 = vrot.lane.b32.xlu0 %v366, 114
        %v416 = vpop.permute.xlu0 %415
        %v417 = vrot.slane %v416, 1
        %v418 = vrot.slane %v416, 2
        %vm419 = vcmask 932864
        %v420 = vsel %vm419, %v417, %v418
        %v422 = vmul.f32 %v413, %v420
        %424 = vrot.lane.b32.xlu0 %v422, 94
        %v425 = vpop.permute.xlu0 %424
        %v426 = vrot.slane %v425, 7
        %vm427 = vcmask 769024
        %v428 = vsel %vm427, %v426, %v425
        %v430 = vadd.f32 %v412, %v428
        %v431 = vstv %s272
        %433 = vrot.lane.b32.xlu0 %v368, 114
        %v434 = vpop.permute.xlu0 %433
        %v435 = vrot.slane %v434, 1
        %v436 = vrot.slane %v434, 2
        %v437 = vsel %vm419, %v435, %v436
        %v439 = vmul.f32 %v431, %v437
        %441 = vrot.lane.b32.xlu0 %v439, 94
        %v442 = vpop.permute.xlu0 %441
        %v443 = vrot.slane %v442, 7
        %v444 = vsel %vm427, %v443, %v442
        %v446 = vadd.f32 %v430, %v444
        %v447 = vstv %s252
        %448 = vrot.lane.b32.xlu0 %v366, 98
        %v449 = vpop.permute.xlu0 %448
        %v450 = vrot.slane %v449, 1
        %v451 = vrot.slane %v449, 2
        %vm452 = vcmask 801792
        %v453 = vsel %vm452, %v450, %v451
        %v455 = vmul.f32 %v447, %v453
        %457 = vrot.lane.b32.xlu0 %v455, 94
        %v458 = vpop.permute.xlu0 %457
        %v459 = vrot.slane %v458, 7
        %v460 = vsel %vm427, %v459, %v458
        %v462 = vadd.f32 %v446, %v460
        %v463 = vstv %s277
        %464 = vrot.lane.b32.xlu0 %v368, 98
        %v465 = vpop.permute.xlu0 %464
        %v466 = vrot.slane %v465, 1
        %v467 = vrot.slane %v465, 2
        %v468 = vsel %vm452, %v466, %v467
        %v470 = vmul.f32 %v463, %v468
        %472 = vrot.lane.b32.xlu0 %v470, 94
        %v473 = vpop.permute.xlu0 %472
        %v474 = vrot.slane %v473, 7
        %v475 = vsel %vm427, %v474, %v473
        %v477 = vadd.f32 %v462, %v475
        %v479 = vlaneseq
        %v480 = vshrl.u32 %v479, 7
        %v481 = vsub.s32 0, %v480
        %v482 = vrot.slane %v477, %v481
        %v483 = vlaneseq
        %v484 = vshrl.u32 %v483, 7
        %v485 = vsub.s32 1, %v484
        %v486 = vrot.slane %v477, %v485
        %v487 = vlaneseq
        %v488 = vshrl.u32 %v487, 7
        %v489 = vsub.s32 2, %v488
        %v490 = vrot.slane %v477, %v489
        %491 = vrot.lane.b32.xlu0 %v482, 34
        %v492 = vpop.permute.xlu0 %491
        %493 = vrot.lane.b32.xlu0 %v486, 34
        %v494 = vpop.permute.xlu0 %493
        %495 = vrot.lane.b32.xlu0 %v490, 34
        %v496 = vpop.permute.xlu0 %495
        %vm497 = vcmask 277504
        %v498 = vsel %vm497, %v492, %v494
        %v499 = vsel %vm497, %v494, %v496
        %v502 = vmul.f32 %v282, %v498
        %v503 = vmul.f32 %v283, %v499
        %v504 = vadd.f32 %v502, 0.0
        %v505 = vadd.f32 %v503, 0.0
        %v506 = vstv %s233
        %v507 = vmul.f32 %v506, %v366
        %v508 = vadd.f32 %v507, 0.0
        %v509 = vstv %s258
        %v510 = vmul.f32 %v509, %v368
        %v511 = vadd.f32 %v508, %v510
        %v512 = vstv %s238
        %v513 = vmul.f32 %v512, %v366
        %515 = vrot.lane.b32.xlu0 %v513, 112
        %v516 = vpop.permute.xlu0 %515
        %v517 = vrot.slane %v516, 1
        %v518 = vsel %vm381, %v516, %v517
        %v520 = vadd.f32 %v511, %v518
        %v521 = vstv %s263
        %v522 = vmul.f32 %v521, %v368
        %524 = vrot.lane.b32.xlu0 %v522, 112
        %v525 = vpop.permute.xlu0 %524
        %v526 = vrot.slane %v525, 1
        %v527 = vsel %vm381, %v525, %v526
        %v529 = vadd.f32 %v520, %v527
        %v530 = vstv %s243
        %v531 = vmul.f32 %v530, %v366
        %533 = vrot.lane.b32.xlu0 %v531, 96
        %v534 = vpop.permute.xlu0 %533
        %v535 = vrot.slane %v534, 1
        %v536 = vsel %vm400, %v534, %v535
        %v538 = vadd.f32 %v529, %v536
        %v539 = vstv %s268
        %v540 = vmul.f32 %v539, %v368
        %542 = vrot.lane.b32.xlu0 %v540, 96
        %v543 = vpop.permute.xlu0 %542
        %v544 = vrot.slane %v543, 1
        %v545 = vsel %vm400, %v543, %v544
        %v547 = vadd.f32 %v538, %v545
        %v548 = vstv %s248
        %549 = vrot.lane.b32.xlu0 %v366, 113
        %v550 = vpop.permute.xlu0 %549
        %v551 = vrot.slane %v550, 1
        %v552 = vrot.slane %v550, 2
        %vm553 = vcmask 924672
        %v554 = vsel %vm553, %v551, %v552
        %v556 = vmul.f32 %v548, %v554
        %558 = vrot.lane.b32.xlu0 %v556, 95
        %v559 = vpop.permute.xlu0 %558
        %v560 = vrot.slane %v559, 7
        %vm561 = vcmask 777216
        %v562 = vsel %vm561, %v560, %v559
        %v564 = vadd.f32 %v547, %v562
        %v565 = vstv %s273
        %566 = vrot.lane.b32.xlu0 %v368, 113
        %v567 = vpop.permute.xlu0 %566
        %v568 = vrot.slane %v567, 1
        %v569 = vrot.slane %v567, 2
        %v570 = vsel %vm553, %v568, %v569
        %v572 = vmul.f32 %v565, %v570
        %574 = vrot.lane.b32.xlu0 %v572, 95
        %v575 = vpop.permute.xlu0 %574
        %v576 = vrot.slane %v575, 7
        %v577 = vsel %vm561, %v576, %v575
        %v579 = vadd.f32 %v564, %v577
        %v580 = vstv %s253
        %581 = vrot.lane.b32.xlu0 %v366, 97
        %v582 = vpop.permute.xlu0 %581
        %v583 = vrot.slane %v582, 1
        %v584 = vrot.slane %v582, 2
        %vm585 = vcmask 793600
        %v586 = vsel %vm585, %v583, %v584
        %v588 = vmul.f32 %v580, %v586
        %590 = vrot.lane.b32.xlu0 %v588, 95
        %v591 = vpop.permute.xlu0 %590
        %v592 = vrot.slane %v591, 7
        %v593 = vsel %vm561, %v592, %v591
        %v595 = vadd.f32 %v579, %v593
        %v596 = vstv %s278
        %597 = vrot.lane.b32.xlu0 %v368, 97
        %v598 = vpop.permute.xlu0 %597
        %v599 = vrot.slane %v598, 1
        %v600 = vrot.slane %v598, 2
        %v601 = vsel %vm585, %v599, %v600
        %v603 = vmul.f32 %v596, %v601
        %605 = vrot.lane.b32.xlu0 %v603, 95
        %v606 = vpop.permute.xlu0 %605
        %v607 = vrot.slane %v606, 7
        %v608 = vsel %vm561, %v607, %v606
        %v610 = vadd.f32 %v595, %v608
        %v612 = vlaneseq
        %v613 = vshrl.u32 %v612, 7
        %v614 = vsub.s32 0, %v613
        %v615 = vrot.slane %v610, %v614
        %v616 = vlaneseq
        %v617 = vshrl.u32 %v616, 7
        %v618 = vsub.s32 1, %v617
        %v619 = vrot.slane %v610, %v618
        %v620 = vlaneseq
        %v621 = vshrl.u32 %v620, 7
        %v622 = vsub.s32 2, %v621
        %v623 = vrot.slane %v610, %v622
        %624 = vrot.lane.b32.xlu0 %v615, 33
        %v625 = vpop.permute.xlu0 %624
        %626 = vrot.lane.b32.xlu0 %v619, 33
        %v627 = vpop.permute.xlu0 %626
        %628 = vrot.lane.b32.xlu0 %v623, 33
        %v629 = vpop.permute.xlu0 %628
        %vm630 = vcmask 269312
        %v631 = vsel %vm630, %v625, %v627
        %v632 = vsel %vm630, %v627, %v629
        %v635 = vmul.f32 %v282, %v631
        %v636 = vmul.f32 %v283, %v632
        %v639 = vrot.slane %v635, 1
        %v640 = vrot.slane %v636, 1
        %v643 = vadd.f32 %v504, %v639
        %v644 = vadd.f32 %v505, %v640
        %v645 = vstv %s234
        %v646 = vmul.f32 %v645, %v366
        %v647 = vadd.f32 %v646, 0.0
        %v648 = vstv %s259
        %v649 = vmul.f32 %v648, %v368
        %v650 = vadd.f32 %v647, %v649
        %v651 = vstv %s239
        %v652 = vmul.f32 %v651, %v366
        %654 = vrot.lane.b32.xlu0 %v652, 112
        %v655 = vpop.permute.xlu0 %654
        %v656 = vrot.slane %v655, 1
        %v657 = vsel %vm381, %v655, %v656
        %v659 = vadd.f32 %v650, %v657
        %v660 = vstv %s264
        %v661 = vmul.f32 %v660, %v368
        %663 = vrot.lane.b32.xlu0 %v661, 112
        %v664 = vpop.permute.xlu0 %663
        %v665 = vrot.slane %v664, 1
        %v666 = vsel %vm381, %v664, %v665
        %v668 = vadd.f32 %v659, %v666
        %v669 = vstv %s244
        %v670 = vrot.slane %v366, 1
        %v672 = vmul.f32 %v669, %v670
        %674 = vrot.lane.b32.xlu0 %v672, 96
        %v675 = vpop.permute.xlu0 %674
        %v676 = vrot.slane %v675, 7
        %v677 = vsel %vm400, %v676, %v675
        %v679 = vadd.f32 %v668, %v677
        %v680 = vstv %s269
        %v681 = vrot.slane %v368, 1
        %v683 = vmul.f32 %v680, %v681
        %685 = vrot.lane.b32.xlu0 %v683, 96
        %v686 = vpop.permute.xlu0 %685
        %v687 = vrot.slane %v686, 7
        %v688 = vsel %vm400, %v687, %v686
        %v690 = vadd.f32 %v679, %v688
        %v691 = vstv %s249
        %692 = vrot.lane.b32.xlu0 %v366, 112
        %v693 = vpop.permute.xlu0 %692
        %v694 = vrot.slane %v693, 1
        %v695 = vrot.slane %v693, 2
        %v696 = vsel %vm381, %v694, %v695
        %v698 = vmul.f32 %v691, %v696
        %700 = vrot.lane.b32.xlu0 %v698, 96
        %v701 = vpop.permute.xlu0 %700
        %v702 = vrot.slane %v701, 7
        %v703 = vsel %vm400, %v702, %v701
        %v705 = vadd.f32 %v690, %v703
        %v706 = vstv %s274
        %707 = vrot.lane.b32.xlu0 %v368, 112
        %v708 = vpop.permute.xlu0 %707
        %v709 = vrot.slane %v708, 1
        %v710 = vrot.slane %v708, 2
        %v711 = vsel %vm381, %v709, %v710
        %v713 = vmul.f32 %v706, %v711
        %715 = vrot.lane.b32.xlu0 %v713, 96
        %v716 = vpop.permute.xlu0 %715
        %v717 = vrot.slane %v716, 7
        %v718 = vsel %vm400, %v717, %v716
        %v720 = vadd.f32 %v705, %v718
        %v721 = vstv %s254
        %722 = vrot.lane.b32.xlu0 %v366, 96
        %v723 = vpop.permute.xlu0 %722
        %v724 = vrot.slane %v723, 1
        %v725 = vrot.slane %v723, 2
        %v726 = vsel %vm400, %v724, %v725
        %v728 = vmul.f32 %v721, %v726
        %730 = vrot.lane.b32.xlu0 %v728, 96
        %v731 = vpop.permute.xlu0 %730
        %v732 = vrot.slane %v731, 7
        %v733 = vsel %vm400, %v732, %v731
        %v735 = vadd.f32 %v720, %v733
        %v736 = vstv %s279
        %737 = vrot.lane.b32.xlu0 %v368, 96
        %v738 = vpop.permute.xlu0 %737
        %v739 = vrot.slane %v738, 1
        %v740 = vrot.slane %v738, 2
        %v741 = vsel %vm400, %v739, %v740
        %v743 = vmul.f32 %v736, %v741
        %745 = vrot.lane.b32.xlu0 %v743, 96
        %v746 = vpop.permute.xlu0 %745
        %v747 = vrot.slane %v746, 7
        %v748 = vsel %vm400, %v747, %v746
        %v750 = vadd.f32 %v735, %v748
        %v752 = vlaneseq
        %v753 = vshrl.u32 %v752, 7
        %v754 = vsub.s32 0, %v753
        %v755 = vrot.slane %v750, %v754
        %v756 = vlaneseq
        %v757 = vshrl.u32 %v756, 7
        %v758 = vsub.s32 1, %v757
        %v759 = vrot.slane %v750, %v758
        %v760 = vlaneseq
        %v761 = vshrl.u32 %v760, 7
        %v762 = vsub.s32 2, %v761
        %v763 = vrot.slane %v750, %v762
        %764 = vrot.lane.b32.xlu0 %v755, 32
        %v765 = vpop.permute.xlu0 %764
        %766 = vrot.lane.b32.xlu0 %v759, 32
        %v767 = vpop.permute.xlu0 %766
        %768 = vrot.lane.b32.xlu0 %v763, 32
        %v769 = vpop.permute.xlu0 %768
        %vm770 = vcmask 261120
        %v771 = vsel %vm770, %v765, %v767
        %v772 = vsel %vm770, %v767, %v769
        %v775 = vmul.f32 %v282, %v771
        %v776 = vmul.f32 %v283, %v772
        %v779 = vrot.slane %v775, 2
        %v780 = vrot.slane %v776, 2
        %v783 = vadd.f32 %v643, %v779
        %v784 = vadd.f32 %v644, %v780
        %v785 = vstv %s235
        %v786 = vmul.f32 %v785, %v366
        %v787 = vadd.f32 %v786, 0.0
        %v788 = vstv %s260
        %v789 = vmul.f32 %v788, %v368
        %v790 = vadd.f32 %v787, %v789
        %v791 = vstv %s240
        %v792 = vmul.f32 %v791, %v366
        %794 = vrot.lane.b32.xlu0 %v792, 112
        %v795 = vpop.permute.xlu0 %794
        %v796 = vrot.slane %v795, 1
        %v797 = vsel %vm381, %v795, %v796
        %v799 = vadd.f32 %v790, %v797
        %v800 = vstv %s265
        %v801 = vmul.f32 %v800, %v368
        %803 = vrot.lane.b32.xlu0 %v801, 112
        %v804 = vpop.permute.xlu0 %803
        %v805 = vrot.slane %v804, 1
        %v806 = vsel %vm381, %v804, %v805
        %v808 = vadd.f32 %v799, %v806
        %v809 = vstv %s245
        %810 = vrot.lane.b32.xlu0 %v366, 127
        %v811 = vpop.permute.xlu0 %810
        %v812 = vrot.slane %v811, 1
        %v813 = vrot.slane %v811, 2
        %vm814 = vcmask 1039360
        %v815 = vsel %vm814, %v812, %v813
        %v817 = vmul.f32 %v809, %v815
        %819 = vrot.lane.b32.xlu0 %v817, 97
        %v820 = vpop.permute.xlu0 %819
        %v821 = vrot.slane %v820, 7
        %v822 = vsel %vm585, %v821, %v820
        %v824 = vadd.f32 %v808, %v822
        %v825 = vstv %s270
        %826 = vrot.lane.b32.xlu0 %v368, 127
        %v827 = vpop.permute.xlu0 %826
        %v828 = vrot.slane %v827, 1
        %v829 = vrot.slane %v827, 2
        %v830 = vsel %vm814, %v828, %v829
        %v832 = vmul.f32 %v825, %v830
        %834 = vrot.lane.b32.xlu0 %v832, 97
        %v835 = vpop.permute.xlu0 %834
        %v836 = vrot.slane %v835, 7
        %v837 = vsel %vm585, %v836, %v835
        %v839 = vadd.f32 %v824, %v837
        %v840 = vstv %s250
        %841 = vrot.lane.b32.xlu0 %v366, 111
        %v842 = vpop.permute.xlu0 %841
        %v843 = vrot.slane %v842, 1
        %v844 = vrot.slane %v842, 2
        %vm845 = vcmask 908288
        %v846 = vsel %vm845, %v843, %v844
        %v848 = vmul.f32 %v840, %v846
        %850 = vrot.lane.b32.xlu0 %v848, 97
        %v851 = vpop.permute.xlu0 %850
        %v852 = vrot.slane %v851, 7
        %v853 = vsel %vm585, %v852, %v851
        %v855 = vadd.f32 %v839, %v853
        %v856 = vstv %s275
        %857 = vrot.lane.b32.xlu0 %v368, 111
        %v858 = vpop.permute.xlu0 %857
        %v859 = vrot.slane %v858, 1
        %v860 = vrot.slane %v858, 2
        %v861 = vsel %vm845, %v859, %v860
        %v863 = vmul.f32 %v856, %v861
        %865 = vrot.lane.b32.xlu0 %v863, 97
        %v866 = vpop.permute.xlu0 %865
        %v867 = vrot.slane %v866, 7
        %v868 = vsel %vm585, %v867, %v866
        %v870 = vadd.f32 %v855, %v868
        %v871 = vstv %s255
        %872 = vrot.lane.b32.xlu0 %v366, 95
        %v873 = vpop.permute.xlu0 %872
        %v874 = vrot.slane %v873, 1
        %v875 = vrot.slane %v873, 2
        %v876 = vsel %vm561, %v874, %v875
        %v878 = vmul.f32 %v871, %v876
        %880 = vrot.lane.b32.xlu0 %v878, 97
        %v881 = vpop.permute.xlu0 %880
        %v882 = vrot.slane %v881, 7
        %v883 = vsel %vm585, %v882, %v881
        %v885 = vadd.f32 %v870, %v883
        %v886 = vstv %s280
        %887 = vrot.lane.b32.xlu0 %v368, 95
        %v888 = vpop.permute.xlu0 %887
        %v889 = vrot.slane %v888, 1
        %v890 = vrot.slane %v888, 2
        %v891 = vsel %vm561, %v889, %v890
        %v893 = vmul.f32 %v886, %v891
        %895 = vrot.lane.b32.xlu0 %v893, 97
        %v896 = vpop.permute.xlu0 %895
        %v897 = vrot.slane %v896, 7
        %v898 = vsel %vm585, %v897, %v896
        %v900 = vadd.f32 %v885, %v898
        %v902 = vlaneseq
        %v903 = vshrl.u32 %v902, 7
        %v904 = vsub.s32 0, %v903
        %v905 = vrot.slane %v900, %v904
        %v906 = vlaneseq
        %v907 = vshrl.u32 %v906, 7
        %v908 = vsub.s32 1, %v907
        %v909 = vrot.slane %v900, %v908
        %v910 = vlaneseq
        %v911 = vshrl.u32 %v910, 7
        %v912 = vsub.s32 2, %v911
        %v913 = vrot.slane %v900, %v912
        %914 = vrot.lane.b32.xlu0 %v905, 31
        %v915 = vpop.permute.xlu0 %914
        %916 = vrot.lane.b32.xlu0 %v909, 31
        %v917 = vpop.permute.xlu0 %916
        %918 = vrot.lane.b32.xlu0 %v913, 31
        %v919 = vpop.permute.xlu0 %918
        %vm920 = vcmask 252928
        %v921 = vsel %vm920, %v915, %v917
        %v922 = vsel %vm920, %v917, %v919
        %v925 = vmul.f32 %v282, %v921
        %v926 = vmul.f32 %v283, %v922
        %v929 = vrot.slane %v925, 3
        %v930 = vrot.slane %v926, 3
        %v933 = vadd.f32 %v783, %v929
        %v934 = vadd.f32 %v784, %v930
        %v935 = vstv %s236
        %v936 = vmul.f32 %v935, %v366
        %v937 = vadd.f32 %v936, 0.0
        %v938 = vstv %s261
        %v939 = vmul.f32 %v938, %v368
        %v940 = vadd.f32 %v937, %v939
        %v941 = vstv %s241
        %v942 = vmul.f32 %v941, %v366
        %944 = vrot.lane.b32.xlu0 %v942, 112
        %v945 = vpop.permute.xlu0 %944
        %v946 = vrot.slane %v945, 1
        %v947 = vsel %vm381, %v945, %v946
        %v949 = vadd.f32 %v940, %v947
        %v950 = vstv %s266
        %v951 = vmul.f32 %v950, %v368
        %953 = vrot.lane.b32.xlu0 %v951, 112
        %v954 = vpop.permute.xlu0 %953
        %v955 = vrot.slane %v954, 1
        %v956 = vsel %vm381, %v954, %v955
        %v958 = vadd.f32 %v949, %v956
        %v959 = vstv %s246
        %960 = vrot.lane.b32.xlu0 %v366, 126
        %v961 = vpop.permute.xlu0 %960
        %v962 = vrot.slane %v961, 1
        %v963 = vrot.slane %v961, 2
        %vm964 = vcmask 1031168
        %v965 = vsel %vm964, %v962, %v963
        %v967 = vmul.f32 %v959, %v965
        %969 = vrot.lane.b32.xlu0 %v967, 98
        %v970 = vpop.permute.xlu0 %969
        %v971 = vrot.slane %v970, 7
        %v972 = vsel %vm452, %v971, %v970
        %v974 = vadd.f32 %v958, %v972
        %v975 = vstv %s271
        %976 = vrot.lane.b32.xlu0 %v368, 126
        %v977 = vpop.permute.xlu0 %976
        %v978 = vrot.slane %v977, 1
        %v979 = vrot.slane %v977, 2
        %v980 = vsel %vm964, %v978, %v979
        %v982 = vmul.f32 %v975, %v980
        %984 = vrot.lane.b32.xlu0 %v982, 98
        %v985 = vpop.permute.xlu0 %984
        %v986 = vrot.slane %v985, 7
        %v987 = vsel %vm452, %v986, %v985
        %v989 = vadd.f32 %v974, %v987
        %v990 = vstv %s251
        %991 = vrot.lane.b32.xlu0 %v366, 110
        %v992 = vpop.permute.xlu0 %991
        %v993 = vrot.slane %v992, 1
        %v994 = vrot.slane %v992, 2
        %vm995 = vcmask 900096
        %v996 = vsel %vm995, %v993, %v994
        %v998 = vmul.f32 %v990, %v996
        %1000 = vrot.lane.b32.xlu0 %v998, 98
        %v1001 = vpop.permute.xlu0 %1000
        %v1002 = vrot.slane %v1001, 7
        %v1003 = vsel %vm452, %v1002, %v1001
        %v1005 = vadd.f32 %v989, %v1003
        %v1006 = vstv %s276
        %1007 = vrot.lane.b32.xlu0 %v368, 110
        %v1008 = vpop.permute.xlu0 %1007
        %v1009 = vrot.slane %v1008, 1
        %v1010 = vrot.slane %v1008, 2
        %v1011 = vsel %vm995, %v1009, %v1010
        %v1013 = vmul.f32 %v1006, %v1011
        %1015 = vrot.lane.b32.xlu0 %v1013, 98
        %v1016 = vpop.permute.xlu0 %1015
        %v1017 = vrot.slane %v1016, 7
        %v1018 = vsel %vm452, %v1017, %v1016
        %v1020 = vadd.f32 %v1005, %v1018
        %v1021 = vstv %s256
        %1022 = vrot.lane.b32.xlu0 %v366, 94
        %v1023 = vpop.permute.xlu0 %1022
        %v1024 = vrot.slane %v1023, 1
        %v1025 = vrot.slane %v1023, 2
        %v1026 = vsel %vm427, %v1024, %v1025
        %v1028 = vmul.f32 %v1021, %v1026
        %1030 = vrot.lane.b32.xlu0 %v1028, 98
        %v1031 = vpop.permute.xlu0 %1030
        %v1032 = vrot.slane %v1031, 7
        %v1033 = vsel %vm452, %v1032, %v1031
        %v1035 = vadd.f32 %v1020, %v1033
        %v1036 = vstv %s281
        %1037 = vrot.lane.b32.xlu0 %v368, 94
        %v1038 = vpop.permute.xlu0 %1037
        %v1039 = vrot.slane %v1038, 1
        %v1040 = vrot.slane %v1038, 2
        %v1041 = vsel %vm427, %v1039, %v1040
        %v1043 = vmul.f32 %v1036, %v1041
        %1045 = vrot.lane.b32.xlu0 %v1043, 98
        %v1046 = vpop.permute.xlu0 %1045
        %v1047 = vrot.slane %v1046, 7
        %v1048 = vsel %vm452, %v1047, %v1046
        %v1050 = vadd.f32 %v1035, %v1048
        %v1052 = vlaneseq
        %v1053 = vshrl.u32 %v1052, 7
        %v1054 = vsub.s32 0, %v1053
        %v1055 = vrot.slane %v1050, %v1054
        %v1056 = vlaneseq
        %v1057 = vshrl.u32 %v1056, 7
        %v1058 = vsub.s32 1, %v1057
        %v1059 = vrot.slane %v1050, %v1058
        %v1060 = vlaneseq
        %v1061 = vshrl.u32 %v1060, 7
        %v1062 = vsub.s32 2, %v1061
        %v1063 = vrot.slane %v1050, %v1062
        %1064 = vrot.lane.b32.xlu0 %v1055, 30
        %v1065 = vpop.permute.xlu0 %1064
        %1066 = vrot.lane.b32.xlu0 %v1059, 30
        %v1067 = vpop.permute.xlu0 %1066
        %1068 = vrot.lane.b32.xlu0 %v1063, 30
        %v1069 = vpop.permute.xlu0 %1068
        %vm1070 = vcmask 244736
        %v1071 = vsel %vm1070, %v1065, %v1067
        %v1072 = vsel %vm1070, %v1067, %v1069
        %v1075 = vmul.f32 %v282, %v1071
        %v1076 = vmul.f32 %v283, %v1072
        %v1079 = vrot.slane %v1075, 4
        %v1080 = vrot.slane %v1076, 4
        %v1083 = vadd.f32 %v933, %v1079
        %v1084 = vadd.f32 %v934, %v1080
        %v1085 = vxor.u32 %v1083, 2147483648
        %v1086 = vxor.u32 %v1084, 2147483648
        %v1087 = vmul.f32 %v1085, 1.442695
        %v1088 = vpow.pop %v1087
        %v1089 = vmul.f32 %v1086, 1.442695
        %v1090 = vpow.pop %v1089
        %v1091 = vadd.f32 %v1088, 1.0
        %v1092 = vadd.f32 %v1090, 1.0
        %v1093 = vrcp.pop %v1091
        %v1094 = vmul.f32 1.0, %v1093
        %v1095 = vrcp.pop %v1092
        %v1096 = vmul.f32 1.0, %v1095
        %v1097 = vlaneseq
        %v1098 = vshrl.u32 %v1097, 7
        %v1099 = vsub.s32 0, %v1098
        %v1100 = vrot.slane %v1094, %v1099
        %v1101 = vlaneseq
        %v1102 = vshrl.u32 %v1101, 7
        %v1103 = vsub.s32 0, %v1102
        %v1104 = vrot.slane %v1096, %v1103
        %v1105 = vld [vmem:[%s291] sm:$0xff]
        %v1106 = vld [vmem:[%s291 + $0x8] sm:$0xff]
        %s1107 = smul.addr %s289, 8
        %s1108 = scalar_lea.vmem %s226, %s1107
        %v1109 = vld [vmem:[%s1108] sm:$0xff]
        %v1110 = vld [vmem:[%s1108 + $0x8] sm:$0xff]
        %v1111 = vmul.f32 %v1100, %v1105
        %v1112 = vmul.f32 %v1104, %v1106
        %v1113 = vadd.f32 %v1109, %v1111
        %v1114 = vadd.f32 %v1110, %v1112
        %s1115 = smul.addr %s289, 8
        %s1116 = scalar_lea.vmem %s231, %s1115
        %1117 = vst [vmem:[%s1116] sm:$0xff] %v1113
        %1118 = vst [vmem:[%s1116 + $0x8] sm:$0xff] %v1114
        %p1119 = scmp.lt.s32.totalorder %s16, 1
        %s1120 = scalar_select %p1119, %s16, 1
        %s1121 = smul.addr %s1120, 2
        %s1122 = smul.addr %s1121, 8
        %s1123 = scalar_lea.vmem %s4, %s1122
        // Predicated region
        $region45: #{panet_forward.21} parent=35 // pred_check
          %p1124 = pneg %p128
        $region46: #{panet_forward.21} parent=35 // pred_check_branch
          %1126 = sbr.rel (%p1124) target = $region48
        $region47: #{panet_forward.21} parent=35 // pred_region
          _
        $region48: #{panet_forward.21} parent=35 // pred_fallthru
          _
      $region36: #{panet_forward.21} parent=5 // pred_fallthru
        _
      %p1127 = scmp.le.s32.totalorder 2, %s11
      // Predicated region
      $region49: #{panet_forward.21} parent=5 // pred_check
        %p1128 = pneg %p1127
      $region50: #{panet_forward.21} parent=5 // pred_check_branch
        %1130 = sbr.rel (%p1128) target = $region52
      $region51: #{panet_forward.21} parent=5 // pred_region
        %s1131 = ssub.s32 %s11, 2
        // Predicated region
        $region53: #{panet_forward.21} parent=51 // pred_check
          %p1132 = pneg %p134
        $region54: #{panet_forward.21} parent=51 // pred_check_branch
          %1134 = sbr.rel (%p1132) target = $region56
        $region55: #{panet_forward.21} parent=51 // pred_region
          %p1135 = scmp.lt.s32.totalorder %s17, 1
          %s1136 = scalar_select %p1135, %s17, 1
          %s1137 = smul.addr %s1136, 2
          %s1138 = smul.addr %s1137, 8
          %s1139 = scalar_lea.vmem %s4, %s1138
        $region56: #{panet_forward.21} parent=51 // pred_fallthru
          _
      $region52: #{panet_forward.21} parent=5 // pred_fallthru
        _
    $region6: #{panet_forward.21} parent=1 // loop_footer
      %s15 = sadd.s32 1, %s11
    $region7: #{panet_forward.21} parent=1 // loop_footer_branch
      %10 = sbr.rel target = $region3
    $region8: #{panet_forward.21} parent=1 // loop_exit
      _
    %1140 = vsyncpa [#allocation4], 1
    %s1141 = scalar_lea.sflag [#allocation4], 1
    %1142 = vsyncpa %s1141, 1

</llo_original>
